<compile_context>
chip_gen: v5e
topology: v5e:2x2
jax: 0.10.0
libtpu: 0.0.40
codegen_flags: <defaults>
</compile_context>

<pallas_src>
import functools

import jax
import jax.numpy as jnp
from jax.experimental import pallas as pl
from jax.experimental.pallas import tpu as pltpu

_BN_EPS = 1e-5
_VMEM_LIMIT = 32 * 1024 * 1024      # scoped VMEM request (safe on v5e/v6e/v7x)
_FL_BUDGET = 24 * 1024 * 1024       # double-buffered footprint target (tiled matmul)
_MLP_BUDGET = 20 * 1024 * 1024      # whole-stack-resident budget for fused_mlp


def _detect_multi_tc():
    # v7x / v5p / v4 have 2 TensorCores per chip (megacore); v5e/v6e have 1.
    try:
        kind = jax.devices()[0].device_kind.lower()
        return any(t in kind for t in ("v7", "v5p", "v4"))
    except Exception:
        return False


_MULTI_TC = _detect_multi_tc()


# ----------------------------------------------------------------------------
# Kernels
# ----------------------------------------------------------------------------
def _linear_k1_kernel(x_ref, w_ref, b_ref, o_ref, *, slope):
    # Whole K resident: no accumulator scratch, single epilogue.
    y = jnp.dot(x_ref[...], w_ref[...], preferred_element_type=jnp.float32)
    y = y + b_ref[...]
    if slope != 1.0:                             # static; skipped for heads
        y = jnp.where(y >= 0, y, slope * y)      # LeakyReLU
    o_ref[...] = y.astype(o_ref.dtype)


def _linear_kacc_kernel(x_ref, w_ref, b_ref, o_ref, acc_ref, *, slope):
    k = pl.program_id(2)

    @pl.when(k == 0)
    def _():
        acc_ref[...] = jnp.zeros_like(acc_ref)

    acc_ref[...] += jnp.dot(x_ref[...], w_ref[...],
                            preferred_element_type=jnp.float32)

    @pl.when(k == pl.num_programs(2) - 1)
    def _():
        y = acc_ref[...] + b_ref[...]            # bias (BN already folded)
        if slope != 1.0:
            y = jnp.where(y >= 0, y, slope * y)
        o_ref[...] = y.astype(o_ref.dtype)


def _mlp_kernel(*refs, slopes):
    # refs = (x, w0, b0, w1, b1, ..., out); whole arrays resident in VMEM.
    n = len(slopes)
    x_ref = refs[0]
    o_ref = refs[1 + 2 * n]
    h = x_ref[...]
    for l in range(n):
        w_ref = refs[1 + 2 * l]
        b_ref = refs[2 + 2 * l]
        z = jnp.dot(h.astype(jnp.bfloat16), w_ref[...],
                    preferred_element_type=jnp.float32) + b_ref[...]
        if slopes[l] != 1.0:
            z = jnp.where(z >= 0, z, slopes[l] * z)
        h = z
    o_ref[...] = h.astype(o_ref.dtype)


# ----------------------------------------------------------------------------
# Tiling helpers
# ----------------------------------------------------------------------------
def _round_up(x, m):
    return ((x + m - 1) // m) * m


def _largest_tile(total, cap):
    """Largest multiple-of-128 divisor of `total` that is <= cap (>=128)."""
    best = 128
    d = 128
    while d <= min(total, cap):
        if total % d == 0:
            best = d
        d += 128
    return best


def _pick_tn(n_pad):
    if _MULTI_TC and n_pad >= 256:
        # One j-block per TensorCore.
        return _largest_tile(n_pad, min(n_pad // 2, 2048))
    # Single TensorCore: as few grid steps as possible.
    return _largest_tile(n_pad, 3072)


def _pick_tk(k_pad):
    return _largest_tile(k_pad, 2048)


# ----------------------------------------------------------------------------
# Fused Linear (+ LeakyReLU) on pre-packed (padded, bf16, BN-folded) weights.
# ----------------------------------------------------------------------------
def fused_linear(x, layer, *, slope, out_dtype, bias_override=None):
    """y = leaky_relu(x @ W + b, slope).

    layer: dict(w=[K_pad, N_pad] bf16, b=[1, N_pad] f32) produced by
    _pack_linear.  Returns the padded output [M_pad, N_pad]; padded columns
    are exactly zero, so outputs chain into the next layer without slicing.
    """
    w = layer["w"]
    b = layer["b"] if bias_override is None else bias_override
    K_pad, N_pad = w.shape
    M, Kx = x.shape

    x = x.astype(jnp.bfloat16)
    if Kx != K_pad:
        x = jnp.pad(x, ((0, 0), (0, K_pad - Kx)))

    # M tiling: multiple of 16 (packed bf16 tiles); balanced split above 1024
    # so weights are never re-streamed for an almost-empty extra M tile.
    M16 = _round_up(M, 16)
    n_m = -(-M16 // 1024)
    tm = _round_up(-(-M16 // n_m), 16)
    M_pad = tm * n_m
    if M_pad != M:
        x = jnp.pad(x, ((0, M_pad - M), (0, 0)))

    tn = _pick_tn(N_pad)
    tk = _pick_tk(K_pad)
    out_bytes = jnp.dtype(out_dtype).itemsize

    def _footprint(tk_, tn_):
        acc = tm * tn_ * 4 if (K_pad // tk_) > 1 else 0
        return 2 * (tm * tk_ * 2 + tk_ * tn_ * 2 + tn_ * 4
                    + tm * tn_ * out_bytes) + acc

    while _footprint(tk, tn) > _FL_BUDGET and (tk > 512 or tn > 512):
        if tk >= tn and tk > 512:
            tk = _largest_tile(K_pad, tk // 2)
        elif tn > 512:
            tn = _largest_tile(N_pad, tn // 2)
        else:
            break

    grid_k = K_pad // tk
    out_shape = jax.ShapeDtypeStruct((M_pad, N_pad), out_dtype)

    if grid_k == 1:
        kern = functools.partial(_linear_k1_kernel, slope=float(slope))
        return pl.pallas_call(
            kern,
            out_shape=out_shape,
            grid_spec=pltpu.PrefetchScalarGridSpec(
                num_scalar_prefetch=0,
                grid=(M_pad // tm, N_pad // tn),
                in_specs=[
                    pl.BlockSpec((tm, K_pad), lambda i, j: (i, 0)),
                    pl.BlockSpec((K_pad, tn), lambda i, j: (0, j)),
                    pl.BlockSpec((1, tn), lambda i, j: (0, j)),
                ],
                out_specs=pl.BlockSpec((tm, tn), lambda i, j: (i, j)),
            ),
            compiler_params=pltpu.CompilerParams(
                dimension_semantics=("parallel", "parallel"),
                vmem_limit_bytes=_VMEM_LIMIT),
        )(x, w, b)

    kern = functools.partial(_linear_kacc_kernel, slope=float(slope))
    return pl.pallas_call(
        kern,
        out_shape=out_shape,
        grid_spec=pltpu.PrefetchScalarGridSpec(
            num_scalar_prefetch=0,
            grid=(M_pad // tm, N_pad // tn, grid_k),
            in_specs=[
                pl.BlockSpec((tm, tk), lambda i, j, k: (i, k)),
                pl.BlockSpec((tk, tn), lambda i, j, k: (k, j)),
                pl.BlockSpec((1, tn), lambda i, j, k: (0, j)),
            ],
            out_specs=pl.BlockSpec((tm, tn), lambda i, j, k: (i, j)),
            scratch_shapes=[pltpu.VMEM((tm, tn), jnp.float32)],
        ),
        compiler_params=pltpu.CompilerParams(
            dimension_semantics=("parallel", "parallel", "arbitrary"),
            vmem_limit_bytes=_VMEM_LIMIT),
    )(x, w, b)


# ----------------------------------------------------------------------------
# Fused multi-layer fc_stack: whole (small) stack in one pallas_call.
# ----------------------------------------------------------------------------
def fused_mlp(x, layers, slopes, *, out_dtype):
    M, Kx = x.shape
    K0_pad = layers[0]["w"].shape[0]
    N_out_pad = layers[-1]["w"].shape[1]

    x = x.astype(jnp.bfloat16)
    if Kx != K0_pad:
        x = jnp.pad(x, ((0, 0), (0, K0_pad - Kx)))
    M_pad = _round_up(M, 16)
    if M_pad != M:
        x = jnp.pad(x, ((0, M_pad - M), (0, 0)))

    out_bytes = jnp.dtype(out_dtype).itemsize
    widest = max(l["w"].shape[1] for l in layers)
    total = (x.size * 2
             + sum(l["w"].size * 2 + l["b"].size * 4 for l in layers)
             + M_pad * N_out_pad * out_bytes
             + 2 * M_pad * widest * 4)          # intermediate activations
    if total > _MLP_BUDGET:
        # Too big to keep resident: one tiled matmul per layer instead.
        h = x
        for idx, (lyr, s) in enumerate(zip(layers, slopes)):
            dt = out_dtype if idx == len(layers) - 1 else jnp.bfloat16
            h = fused_linear(h, lyr, slope=s, out_dtype=dt)
        return h

    operands = [x]
    for lyr in layers:
        operands.append(lyr["w"])
        operands.append(lyr["b"])

    kern = functools.partial(_mlp_kernel,
                             slopes=tuple(float(s) for s in slopes))
    return pl.pallas_call(
        kern,
        out_shape=jax.ShapeDtypeStruct((M_pad, N_out_pad), out_dtype),
        in_specs=[pl.BlockSpec(memory_space=pltpu.MemorySpace.VMEM)]
        * len(operands),
        out_specs=pl.BlockSpec(memory_space=pltpu.MemorySpace.VMEM),
        compiler_params=pltpu.CompilerParams(vmem_limit_bytes=_VMEM_LIMIT),
    )(*operands)


# ----------------------------------------------------------------------------
# Parameter construction (matches fc_stack / net_init); BN folded, pre-padded.
# ----------------------------------------------------------------------------
def _pack_linear(w, b):
    """w: [K, N] f32 (BN already folded), b: [N] f32 -> padded bf16 / f32."""
    K, N = w.shape
    K_pad, N_pad = _round_up(K, 128), _round_up(N, 128)
    w_p = jnp.pad(w, ((0, K_pad - K), (0, N_pad - N))).astype(jnp.bfloat16)
    b_p = jnp.pad(b, (0, N_pad - N)).reshape(1, N_pad).astype(jnp.float32)
    return dict(w=w_p, b=b_p)


def _fold_bn(raw):
    """Fold eval-mode BatchNorm1d (default stats) into the Linear layer."""
    s = 1.0 / jnp.sqrt(1.0 + _BN_EPS)            # gamma=1, beta=0, mean=0, var=1
    return raw["w"].T * s, raw["b"] * s          # -> [in, out], [out]


def init_fc_stack_raw(key, nc_inp, nc_out, nlayers):
    """fc_stack(nc_inp, nc_out, nlayers, use_bn=True) + net_init() raw params."""
    layers = []
    for _ in range(nlayers):
        key, kw = jax.random.split(key)
        layers.append(dict(
            w=jax.random.normal(kw, (nc_out, nc_inp), jnp.float32) * 0.02,
            b=jnp.zeros((nc_out,), jnp.float32)))
        nc_inp = nc_out
    return key, layers


def init_predictor_raw(key, k_in, num_classes):
    key, k1, k2 = jax.random.split(key, 3)
    cls = dict(w=jax.random.normal(k1, (num_classes, k_in), jnp.float32) * 0.01,
               b=jnp.zeros((num_classes,), jnp.float32))
    box = dict(w=jax.random.normal(k2, (num_classes * 4, k_in),
                                   jnp.float32) * 0.001,
               b=jnp.zeros((num_classes * 4,), jnp.float32))
    return key, cls, box


def build_params(raw, *, d_fine, nz, nz_joint):
    """Fold BN, split encoder_joint layer 1, pad/cast everything ONCE (outside jit)."""
    assert d_fine + 2 * nz == nz_joint, "fine/coarse/bbox row split mismatch"

    ec1_w, ec1_b = _fold_bn(raw["enc_coarse"][0])
    ec2_w, ec2_b = _fold_bn(raw["enc_coarse"][1])

    j1_w, j1_b = _fold_bn(raw["enc_joint"][0])           # [nz_joint, nz_joint]
    w_fine = j1_w[:d_fine]
    w_coarse = j1_w[d_fine:d_fine + nz]
    w_bbox = j1_w[d_fine + nz:]
    joint_l1 = _pack_linear(jnp.concatenate([w_fine, w_bbox], axis=0), j1_b)
    j2_w, j2_b = _fold_bn(raw["enc_joint"][1])

    # Coarse tail: enc_coarse layer 2 followed by the coarse-rows projection of
    # joint layer 1 (its single-row output becomes a bias for every ROI).
    coarse_tail = [
        _pack_linear(ec2_w, ec2_b),
        _pack_linear(w_coarse, jnp.zeros((nz_joint,), jnp.float32)),
    ]

    bbox_mlp = [_pack_linear(*_fold_bn(l)) for l in raw["enc_bbox"]]

    w_pred = jnp.concatenate([raw["pred_cls"]["w"].T, raw["pred_box"]["w"].T],
                             axis=1)                      # [K, 5C]
    b_pred = jnp.concatenate([raw["pred_cls"]["b"], raw["pred_box"]["b"]])

    return dict(enc_coarse_l1=_pack_linear(ec1_w, ec1_b),
                coarse_tail=coarse_tail,
                bbox_mlp=bbox_mlp,
                joint_l1=joint_l1,
                joint_l2=_pack_linear(j2_w, j2_b),
                predictor=_pack_linear(w_pred, b_pred))


# ----------------------------------------------------------------------------
# ROIBoxHead forward (rgb_on=True, coarse=True, bbox=True, depth_on=False,
#                     eval mode, single-image proposal list)
# ----------------------------------------------------------------------------
def roi_box_head_forward(params, x_roi, coarse_flat, bboxes, *,
                         num_classes, nz, nz_joint):
    # x_roi:       [R, D_fine]   feature_extractor output, flattened (external)
    # coarse_flat: [1, D_coarse] ResNetConv output, flattened (external)
    # bboxes:      [R, 4]        proposal boxes in pixels
    R = x_roi.shape[0]
    assert coarse_flat.shape[0] == 1, "coarse bias fold assumes one coarse image"
    R16 = _round_up(R, 16)
    x_roi_p = jnp.pad(x_roi, ((0, R16 - R), (0, 0))).astype(jnp.bfloat16)
    bboxes_p = jnp.pad(bboxes, ((0, R16 - R), (0, 0)))

    # --- RoiEncoder: coarse branch -----------------------------------------
    h_c = fused_linear(coarse_flat, params["enc_coarse_l1"], slope=0.2,
                       out_dtype=jnp.bfloat16)
    coarse_proj = fused_mlp(h_c, params["coarse_tail"], (0.2, 1.0),
                            out_dtype=jnp.float32)
    # The coarse feature is identical for every ROI row -> fold it into the
    # joint layer-1 bias instead of tiling it R times.
    b1 = params["joint_l1"]["b"] + coarse_proj[0:1, :]

    # --- RoiEncoder: bbox branch (3 layers fused in one kernel) -------------
    feat_bbox = fused_mlp(bboxes_p / 480.0, params["bbox_mlp"],
                          (0.2, 0.2, 0.2), out_dtype=jnp.bfloat16)
    feat_bbox = feat_bbox[:, :nz]

    # --- encoder_joint (layer 1 contracts only [fine | bbox]) ---------------
    x_fb = jnp.concatenate([x_roi_p, feat_bbox], axis=1)
    h = fused_linear(x_fb, params["joint_l1"], slope=0.2,
                     out_dtype=jnp.bfloat16, bias_override=b1)
    x_rgb = fused_linear(h, params["joint_l2"], slope=0.2,
                         out_dtype=jnp.bfloat16)

    # --- predictor (cls_score + bbox_pred fused, lane-dense N) --------------
    y = fused_linear(x_rgb, params["predictor"], slope=1.0,
                     out_dtype=jnp.float32)

    x_out = x_rgb[:R, :nz_joint].astype(jnp.float32)
    class_logits = y[:R, :num_classes]
    box_regression = y[:R, num_classes:num_classes * 5]
    # TODO(synk): post_processor (box decode / NMS) is external; raw heads returned.
    return x_out, class_logits, box_regression


# ----------------------------------------------------------------------------
# Pure-JAX f32 reference of the original module math (Linear->BN(eval)->Leaky)
# ----------------------------------------------------------------------------
def reference_forward(raw, x_roi, coarse_flat, bboxes, *, num_classes):
    s = 1.0 / jnp.sqrt(1.0 + _BN_EPS)

    def run_stack(x, layers):
        for l in layers:
            y = (x @ l["w"].T + l["b"]) * s
            x = jnp.where(y >= 0, y, 0.2 * y)
        return x

    R = x_roi.shape[0]
    feat_coarse = run_stack(coarse_flat, raw["enc_coarse"])
    feat_bbox = run_stack(bboxes / 480.0, raw["enc_bbox"])
    feat_coarse_rep = jnp.tile(feat_coarse[0:1], (R, 1))
    img_feat = jnp.concatenate([x_roi, feat_coarse_rep, feat_bbox], axis=1)
    x_rgb = run_stack(img_feat, raw["enc_joint"])
    cls = x_rgb @ raw["pred_cls"]["w"].T + raw["pred_cls"]["b"]
    box = x_rgb @ raw["pred_box"]["w"].T + raw["pred_box"]["b"]
    return x_rgb, cls, box


# ----------------------------------------------------------------------------
if __name__ == "__main__":
    # Small shapes consistent with the module structure (scaled down from
    # D_fine=1024, D_coarse=512*4*8=16384, nz=1024, nz_joint=3072, C=81).
    R = 8               # number of ROIs / proposals
    D_FINE = 256        # 256 * roi_size * roi_size             (scaled)
    D_COARSE = 2560     # 512 * (128//32) * (256//32)           (scaled; K-tiled)
    NZ = 256            # nz_coarse = nz_box                    (scaled)
    NZ_JOINT = 3 * NZ   # COARSE_ON and BBOXFeature_ON -> fine + coarse + bbox
    NUM_CLASSES = 8

    key = jax.random.PRNGKey(0)
    key, enc_coarse = init_fc_stack_raw(key, D_COARSE, NZ, 2)     # encoder_coarse
    key, enc_bbox = init_fc_stack_raw(key, 4, NZ, 3)              # encoder_bbox
    key, enc_joint = init_fc_stack_raw(key, NZ_JOINT, NZ_JOINT, 2)
    key, pred_cls, pred_box = init_predictor_raw(key, NZ_JOINT, NUM_CLASSES)
    raw = dict(enc_coarse=enc_coarse, enc_bbox=enc_bbox, enc_joint=enc_joint,
               pred_cls=pred_cls, pred_box=pred_box)
    params = build_params(raw, d_fine=D_FINE, nz=NZ, nz_joint=NZ_JOINT)

    key, k1, k2, k3 = jax.random.split(key, 4)
    x_roi = jax.random.normal(k1, (R, D_FINE), jnp.float32)
    coarse_flat = jax.random.normal(k2, (1, D_COARSE), jnp.float32)
    bboxes = jax.random.uniform(k3, (R, 4), jnp.float32) * 480.0

    fwd = jax.jit(functools.partial(roi_box_head_forward,
                                    num_classes=NUM_CLASSES,
                                    nz=NZ, nz_joint=NZ_JOINT))
    x_out, class_logits, box_regression = fwd(params, x_roi, coarse_flat,
                                              bboxes)
    jax.block_until_ready((x_out, class_logits, box_regression))

    assert x_out.shape == (R, NZ_JOINT)
    assert class_logits.shape == (R, NUM_CLASSES)
    assert box_regression.shape == (R, NUM_CLASSES * 4)

    # Validate against the pure-JAX f32 reference (bf16 streaming tolerance).
    x_ref, cls_ref, box_ref = reference_forward(
        raw, x_roi, coarse_flat, bboxes, num_classes=NUM_CLASSES)
    assert bool(jnp.allclose(x_out, x_ref, rtol=5e-2, atol=2e-2))
    assert bool(jnp.allclose(class_logits, cls_ref, rtol=5e-2, atol=2e-2))
    assert bool(jnp.allclose(box_regression, box_ref, rtol=5e-2, atol=2e-2))

    print("KERNEL_OK")
</pallas_src>

<mosaic_0001>
module attributes {stable_mosaic.version = 11 : i64} {
  func.func @_mlp_kernel(%arg0: memref<16x256xbf16, #tpu.memory_space<vmem>>, %arg1: memref<256x256xbf16, #tpu.memory_space<vmem>>, %arg2: memref<1x256xf32, #tpu.memory_space<vmem>>, %arg3: memref<256x768xbf16, #tpu.memory_space<vmem>>, %arg4: memref<1x768xf32, #tpu.memory_space<vmem>>, %arg5: memref<16x768xf32, #tpu.memory_space<vmem>>) attributes {dimension_semantics = [], scalar_prefetch = 0 : i64, scratch_operands = 0 : i64, tpu.core_type = #tpu.core_type<tc>} {
    %c0 = arith.constant 0 : index
    %c0_0 = arith.constant 0 : index
    %0 = vector.load %arg0[%c0, %c0_0] : memref<16x256xbf16, #tpu.memory_space<vmem>>, vector<16x256xbf16>
    %c0_1 = arith.constant 0 : index
    %c0_2 = arith.constant 0 : index
    %1 = vector.load %arg1[%c0_1, %c0_2] : memref<256x256xbf16, #tpu.memory_space<vmem>>, vector<256x256xbf16>
    %cst = arith.constant dense<0.000000e+00> : vector<16x256xf32>
    %2 = tpu.matmul %0, %1, %cst {dimension_numbers = #tpu.dot_dimension_numbers<[1], [0], [0], [1], [0, 0, 1, 1], [], []>} : vector<16x256xbf16>, vector<256x256xbf16>, vector<16x256xf32> -> vector<16x256xf32>
    %c0_3 = arith.constant 0 : index
    %c0_4 = arith.constant 0 : index
    %3 = vector.load %arg2[%c0_3, %c0_4] : memref<1x256xf32, #tpu.memory_space<vmem>>, vector<1x256xf32>
    %4 = vector.broadcast %3 : vector<1x256xf32> to vector<16x256xf32>
    %5 = arith.addf %2, %4 : vector<16x256xf32>
    %cst_5 = arith.constant 0.000000e+00 : f32
    %6 = vector.broadcast %cst_5 : f32 to vector<16x256xf32>
    %7 = arith.cmpf oge, %5, %6 : vector<16x256xf32>
    %cst_6 = arith.constant 2.000000e-01 : f32
    %8 = vector.broadcast %cst_6 : f32 to vector<16x256xf32>
    %9 = arith.mulf %8, %5 : vector<16x256xf32>
    %10 = arith.select %7, %5, %9 : vector<16x256xi1>, vector<16x256xf32>
    %11 = arith.truncf %10 : vector<16x256xf32> to vector<16x256xbf16>
    %c0_7 = arith.constant 0 : index
    %c0_8 = arith.constant 0 : index
    %12 = vector.load %arg3[%c0_7, %c0_8] : memref<256x768xbf16, #tpu.memory_space<vmem>>, vector<256x768xbf16>
    %cst_9 = arith.constant dense<0.000000e+00> : vector<16x768xf32>
    %13 = tpu.matmul %11, %12, %cst_9 {dimension_numbers = #tpu.dot_dimension_numbers<[1], [0], [0], [1], [0, 0, 1, 1], [], []>} : vector<16x256xbf16>, vector<256x768xbf16>, vector<16x768xf32> -> vector<16x768xf32>
    %c0_10 = arith.constant 0 : index
    %c0_11 = arith.constant 0 : index
    %14 = vector.load %arg4[%c0_10, %c0_11] : memref<1x768xf32, #tpu.memory_space<vmem>>, vector<1x768xf32>
    %15 = vector.broadcast %14 : vector<1x768xf32> to vector<16x768xf32>
    %16 = arith.addf %13, %15 : vector<16x768xf32>
    %c0_12 = arith.constant 0 : index
    %c0_13 = arith.constant 0 : index
    %17 = vector.load %arg5[%c0_12, %c0_13] : memref<16x768xf32, #tpu.memory_space<vmem>>, vector<16x768xf32>
    tpu.vector_store %arg5[%c0_12, %c0_13], %16 {strides = array<i32>} : memref<16x768xf32, #tpu.memory_space<vmem>>, vector<16x768xf32>,
    return
  }
}

module attributes {stable_mosaic.version = 11 : i64} {
  func.func @_linear_kacc_kernel(%arg0: i32, %arg1: i32, %arg2: i32, %arg3: memref<16x1280xbf16, #tpu.memory_space<vmem>>, %arg4: memref<1280x256xbf16, #tpu.memory_space<vmem>>, %arg5: memref<1x256xf32, #tpu.memory_space<vmem>>, %arg6: memref<16x256xbf16, #tpu.memory_space<vmem>>, %arg7: memref<16x256xf32, #tpu.memory_space<vmem>>) attributes {dimension_semantics = [#tpu.dimension_semantics<parallel>, #tpu.dimension_semantics<parallel>, #tpu.dimension_semantics<arbitrary>], iteration_bounds = array<i64: 1, 1, 2>, scalar_prefetch = 0 : i64, scratch_operands = 1 : i64, tpu.core_type = #tpu.core_type<tc>, window_params = [{transform_indices = @transform_0, window_bounds = array<i64: 16, 1280>}, {transform_indices = @transform_1, window_bounds = array<i64: 1280, 256>}, {transform_indices = @transform_2, window_bounds = array<i64: 1, 256>}, {transform_indices = @transform_3, window_bounds = array<i64: 16, 256>}]} {
    %c0_i32 = arith.constant 0 : i32
    %0 = arith.cmpi eq, %arg2, %c0_i32 : i32
    %1 = arith.extui %0 : i1 to i32
    %c0_i32_0 = arith.constant 0 : i32
    %2 = arith.cmpi ne, %1, %c0_i32_0 : i32
    scf.if %2 {
      %cst_9 = arith.constant 0.000000e+00 : f32
      %12 = vector.broadcast %cst_9 : f32 to vector<16x256xf32>
      %c0_10 = arith.constant 0 : index
      %c0_11 = arith.constant 0 : index
      %13 = vector.load %arg7[%c0_10, %c0_11] : memref<16x256xf32, #tpu.memory_space<vmem>>, vector<16x256xf32>
      tpu.vector_store %arg7[%c0_10, %c0_11], %12 {strides = array<i32>} : memref<16x256xf32, #tpu.memory_space<vmem>>, vector<16x256xf32>,
    } else {
    }
    %c0 = arith.constant 0 : index
    %c0_1 = arith.constant 0 : index
    %3 = vector.load %arg7[%c0, %c0_1] : memref<16x256xf32, #tpu.memory_space<vmem>>, vector<16x256xf32>
    %c0_2 = arith.constant 0 : index
    %c0_3 = arith.constant 0 : index
    %4 = vector.load %arg3[%c0_2, %c0_3] : memref<16x1280xbf16, #tpu.memory_space<vmem>>, vector<16x1280xbf16>
    %c0_4 = arith.constant 0 : index
    %c0_5 = arith.constant 0 : index
    %5 = vector.load %arg4[%c0_4, %c0_5] : memref<1280x256xbf16, #tpu.memory_space<vmem>>, vector<1280x256xbf16>
    %cst = arith.constant dense<0.000000e+00> : vector<16x256xf32>
    %6 = tpu.matmul %4, %5, %cst {dimension_numbers = #tpu.dot_dimension_numbers<[1], [0], [0], [1], [0, 0, 1, 1], [], []>} : vector<16x1280xbf16>, vector<1280x256xbf16>, vector<16x256xf32> -> vector<16x256xf32>
    %7 = arith.addf %3, %6 : vector<16x256xf32>
    %c0_6 = arith.constant 0 : index
    %c0_7 = arith.constant 0 : index
    %8 = vector.load %arg7[%c0_6, %c0_7] : memref<16x256xf32, #tpu.memory_space<vmem>>, vector<16x256xf32>
    tpu.vector_store %arg7[%c0_6, %c0_7], %7 {strides = array<i32>} : memref<16x256xf32, #tpu.memory_space<vmem>>, vector<16x256xf32>,
    %c1_i32 = arith.constant 1 : i32
    %9 = arith.cmpi eq, %arg2, %c1_i32 : i32
    %10 = arith.extui %9 : i1 to i32
    %c0_i32_8 = arith.constant 0 : i32
    %11 = arith.cmpi ne, %10, %c0_i32_8 : i32
    scf.if %11 {
      %c0_9 = arith.constant 0 : index
      %c0_10 = arith.constant 0 : index
      %12 = vector.load %arg7[%c0_9, %c0_10] : memref<16x256xf32, #tpu.memory_space<vmem>>, vector<16x256xf32>
      %c0_11 = arith.constant 0 : index
      %c0_12 = arith.constant 0 : index
      %13 = vector.load %arg5[%c0_11, %c0_12] : memref<1x256xf32, #tpu.memory_space<vmem>>, vector<1x256xf32>
      %14 = vector.broadcast %13 : vector<1x256xf32> to vector<16x256xf32>
      %15 = arith.addf %12, %14 : vector<16x256xf32>
      %cst_13 = arith.constant 0.000000e+00 : f32
      %16 = vector.broadcast %cst_13 : f32 to vector<16x256xf32>
      %17 = arith.cmpf oge, %15, %16 : vector<16x256xf32>
      %cst_14 = arith.constant 2.000000e-01 : f32
      %18 = vector.broadcast %cst_14 : f32 to vector<16x256xf32>
      %19 = arith.mulf %18, %15 : vector<16x256xf32>
      %20 = arith.select %17, %15, %19 : vector<16x256xi1>, vector<16x256xf32>
      %21 = arith.truncf %20 : vector<16x256xf32> to vector<16x256xbf16>
      %c0_15 = arith.constant 0 : index
      %c0_16 = arith.constant 0 : index
      %22 = vector.load %arg6[%c0_15, %c0_16] : memref<16x256xbf16, #tpu.memory_space<vmem>>, vector<16x256xbf16>
      tpu.vector_store %arg6[%c0_15, %c0_16], %21 {strides = array<i32>} : memref<16x256xbf16, #tpu.memory_space<vmem>>, vector<16x256xbf16>,
    } else {
    }
    return
  }
  func.func @transform_0(%arg0: i32, %arg1: i32, %arg2: i32) -> (i32, i32) {
    %c0_i32 = arith.constant 0 : i32
    return %arg0, %arg2 : i32, i32
  }
  func.func @transform_1(%arg0: i32, %arg1: i32, %arg2: i32) -> (i32, i32) {
    %c0_i32 = arith.constant 0 : i32
    return %arg2, %arg1 : i32, i32
  }
  func.func @transform_2(%arg0: i32, %arg1: i32, %arg2: i32) -> (i32, i32) {
    %c0_i32 = arith.constant 0 : i32
    %c0_i32_0 = arith.constant 0 : i32
    return %c0_i32, %arg1 : i32, i32
  }
  func.func @transform_3(%arg0: i32, %arg1: i32, %arg2: i32) -> (i32, i32) {
    %c0_i32 = arith.constant 0 : i32
    return %arg0, %arg1 : i32, i32
  }
}

module attributes {stable_mosaic.version = 11 : i64} {
  func.func @_mlp_kernel(%arg0: memref<16x128xbf16, #tpu.memory_space<vmem>>, %arg1: memref<128x256xbf16, #tpu.memory_space<vmem>>, %arg2: memref<1x256xf32, #tpu.memory_space<vmem>>, %arg3: memref<256x256xbf16, #tpu.memory_space<vmem>>, %arg4: memref<1x256xf32, #tpu.memory_space<vmem>>, %arg5: memref<256x256xbf16, #tpu.memory_space<vmem>>, %arg6: memref<1x256xf32, #tpu.memory_space<vmem>>, %arg7: memref<16x256xbf16, #tpu.memory_space<vmem>>) attributes {dimension_semantics = [], scalar_prefetch = 0 : i64, scratch_operands = 0 : i64, tpu.core_type = #tpu.core_type<tc>} {
    %c0 = arith.constant 0 : index
    %c0_0 = arith.constant 0 : index
    %0 = vector.load %arg0[%c0, %c0_0] : memref<16x128xbf16, #tpu.memory_space<vmem>>, vector<16x128xbf16>
    %c0_1 = arith.constant 0 : index
    %c0_2 = arith.constant 0 : index
    %1 = vector.load %arg1[%c0_1, %c0_2] : memref<128x256xbf16, #tpu.memory_space<vmem>>, vector<128x256xbf16>
    %cst = arith.constant dense<0.000000e+00> : vector<16x256xf32>
    %2 = tpu.matmul %0, %1, %cst {dimension_numbers = #tpu.dot_dimension_numbers<[1], [0], [0], [1], [0, 0, 1, 1], [], []>} : vector<16x128xbf16>, vector<128x256xbf16>, vector<16x256xf32> -> vector<16x256xf32>
    %c0_3 = arith.constant 0 : index
    %c0_4 = arith.constant 0 : index
    %3 = vector.load %arg2[%c0_3, %c0_4] : memref<1x256xf32, #tpu.memory_space<vmem>>, vector<1x256xf32>
    %4 = vector.broadcast %3 : vector<1x256xf32> to vector<16x256xf32>
    %5 = arith.addf %2, %4 : vector<16x256xf32>
    %cst_5 = arith.constant 0.000000e+00 : f32
    %6 = vector.broadcast %cst_5 : f32 to vector<16x256xf32>
    %7 = arith.cmpf oge, %5, %6 : vector<16x256xf32>
    %cst_6 = arith.constant 2.000000e-01 : f32
    %8 = vector.broadcast %cst_6 : f32 to vector<16x256xf32>
    %9 = arith.mulf %8, %5 : vector<16x256xf32>
    %10 = arith.select %7, %5, %9 : vector<16x256xi1>, vector<16x256xf32>
    %11 = arith.truncf %10 : vector<16x256xf32> to vector<16x256xbf16>
    %c0_7 = arith.constant 0 : index
    %c0_8 = arith.constant 0 : index
    %12 = vector.load %arg3[%c0_7, %c0_8] : memref<256x256xbf16, #tpu.memory_space<vmem>>, vector<256x256xbf16>
    %cst_9 = arith.constant dense<0.000000e+00> : vector<16x256xf32>
    %13 = tpu.matmul %11, %12, %cst_9 {dimension_numbers = #tpu.dot_dimension_numbers<[1], [0], [0], [1], [0, 0, 1, 1], [], []>} : vector<16x256xbf16>, vector<256x256xbf16>, vector<16x256xf32> -> vector<16x256xf32>
    %c0_10 = arith.constant 0 : index
    %c0_11 = arith.constant 0 : index
    %14 = vector.load %arg4[%c0_10, %c0_11] : memref<1x256xf32, #tpu.memory_space<vmem>>, vector<1x256xf32>
    %15 = vector.broadcast %14 : vector<1x256xf32> to vector<16x256xf32>
    %16 = arith.addf %13, %15 : vector<16x256xf32>
    %cst_12 = arith.constant 0.000000e+00 : f32
    %17 = vector.broadcast %cst_12 : f32 to vector<16x256xf32>
    %18 = arith.cmpf oge, %16, %17 : vector<16x256xf32>
    %cst_13 = arith.constant 2.000000e-01 : f32
    %19 = vector.broadcast %cst_13 : f32 to vector<16x256xf32>
    %20 = arith.mulf %19, %16 : vector<16x256xf32>
    %21 = arith.select %18, %16, %20 : vector<16x256xi1>, vector<16x256xf32>
    %22 = arith.truncf %21 : vector<16x256xf32> to vector<16x256xbf16>
    %c0_14 = arith.constant 0 : index
    %c0_15 = arith.constant 0 : index
    %23 = vector.load %arg5[%c0_14, %c0_15] : memref<256x256xbf16, #tpu.memory_space<vmem>>, vector<256x256xbf16>
    %cst_16 = arith.constant dense<0.000000e+00> : vector<16x256xf32>
    %24 = tpu.matmul %22, %23, %cst_16 {dimension_numbers = #tpu.dot_dimension_numbers<[1], [0], [0], [1], [0, 0, 1, 1], [], []>} : vector<16x256xbf16>, vector<256x256xbf16>, vector<16x256xf32> -> vector<16x256xf32>
    %c0_17 = arith.constant 0 : index
    %c0_18 = arith.constant 0 : index
    %25 = vector.load %arg6[%c0_17, %c0_18] : memref<1x256xf32, #tpu.memory_space<vmem>>, vector<1x256xf32>
    %26 = vector.broadcast %25 : vector<1x256xf32> to vector<16x256xf32>
    %27 = arith.addf %24, %26 : vector<16x256xf32>
    %cst_19 = arith.constant 0.000000e+00 : f32
    %28 = vector.broadcast %cst_19 : f32 to vector<16x256xf32>
    %29 = arith.cmpf oge, %27, %28 : vector<16x256xf32>
    %cst_20 = arith.constant 2.000000e-01 : f32
    %30 = vector.broadcast %cst_20 : f32 to vector<16x256xf32>
    %31 = arith.mulf %30, %27 : vector<16x256xf32>
    %32 = arith.select %29, %27, %31 : vector<16x256xi1>, vector<16x256xf32>
    %33 = arith.truncf %32 : vector<16x256xf32> to vector<16x256xbf16>
    %c0_21 = arith.constant 0 : index
    %c0_22 = arith.constant 0 : index
    %34 = vector.load %arg7[%c0_21, %c0_22] : memref<16x256xbf16, #tpu.memory_space<vmem>>, vector<16x256xbf16>
    tpu.vector_store %arg7[%c0_21, %c0_22], %33 {strides = array<i32>} : memref<16x256xbf16, #tpu.memory_space<vmem>>, vector<16x256xbf16>,
    return
  }
}

module attributes {stable_mosaic.version = 11 : i64} {
  func.func @_linear_k1_kernel(%arg0: i32, %arg1: i32, %arg2: memref<16x512xbf16, #tpu.memory_space<vmem>>, %arg3: memref<512x768xbf16, #tpu.memory_space<vmem>>, %arg4: memref<1x768xf32, #tpu.memory_space<vmem>>, %arg5: memref<16x768xbf16, #tpu.memory_space<vmem>>) attributes {dimension_semantics = [#tpu.dimension_semantics<parallel>, #tpu.dimension_semantics<parallel>], iteration_bounds = array<i64: 1, 1>, scalar_prefetch = 0 : i64, scratch_operands = 0 : i64, tpu.core_type = #tpu.core_type<tc>, window_params = [{transform_indices = @transform_0, window_bounds = array<i64: 16, 512>}, {transform_indices = @transform_1, window_bounds = array<i64: 512, 768>}, {transform_indices = @transform_2, window_bounds = array<i64: 1, 768>}, {transform_indices = @transform_3, window_bounds = array<i64: 16, 768>}]} {
    %c0 = arith.constant 0 : index
    %c0_0 = arith.constant 0 : index
    %0 = vector.load %arg2[%c0, %c0_0] : memref<16x512xbf16, #tpu.memory_space<vmem>>, vector<16x512xbf16>
    %c0_1 = arith.constant 0 : index
    %c0_2 = arith.constant 0 : index
    %1 = vector.load %arg3[%c0_1, %c0_2] : memref<512x768xbf16, #tpu.memory_space<vmem>>, vector<512x768xbf16>
    %cst = arith.constant dense<0.000000e+00> : vector<16x768xf32>
    %2 = tpu.matmul %0, %1, %cst {dimension_numbers = #tpu.dot_dimension_numbers<[1], [0], [0], [1], [0, 0, 1, 1], [], []>} : vector<16x512xbf16>, vector<512x768xbf16>, vector<16x768xf32> -> vector<16x768xf32>
    %c0_3 = arith.constant 0 : index
    %c0_4 = arith.constant 0 : index
    %3 = vector.load %arg4[%c0_3, %c0_4] : memref<1x768xf32, #tpu.memory_space<vmem>>, vector<1x768xf32>
    %4 = vector.broadcast %3 : vector<1x768xf32> to vector<16x768xf32>
    %5 = arith.addf %2, %4 : vector<16x768xf32>
    %cst_5 = arith.constant 0.000000e+00 : f32
    %6 = vector.broadcast %cst_5 : f32 to vector<16x768xf32>
    %7 = arith.cmpf oge, %5, %6 : vector<16x768xf32>
    %cst_6 = arith.constant 2.000000e-01 : f32
    %8 = vector.broadcast %cst_6 : f32 to vector<16x768xf32>
    %9 = arith.mulf %8, %5 : vector<16x768xf32>
    %10 = arith.select %7, %5, %9 : vector<16x768xi1>, vector<16x768xf32>
    %11 = arith.truncf %10 : vector<16x768xf32> to vector<16x768xbf16>
    %c0_7 = arith.constant 0 : index
    %c0_8 = arith.constant 0 : index
    %12 = vector.load %arg5[%c0_7, %c0_8] : memref<16x768xbf16, #tpu.memory_space<vmem>>, vector<16x768xbf16>
    tpu.vector_store %arg5[%c0_7, %c0_8], %11 {strides = array<i32>} : memref<16x768xbf16, #tpu.memory_space<vmem>>, vector<16x768xbf16>,
    return
  }
  func.func @transform_0(%arg0: i32, %arg1: i32) -> (i32, i32) {
    %c0_i32 = arith.constant 0 : i32
    %c0_i32_0 = arith.constant 0 : i32
    return %arg0, %c0_i32 : i32, i32
  }
  func.func @transform_1(%arg0: i32, %arg1: i32) -> (i32, i32) {
    %c0_i32 = arith.constant 0 : i32
    %c0_i32_0 = arith.constant 0 : i32
    return %c0_i32, %arg1 : i32, i32
  }
  func.func @transform_2(%arg0: i32, %arg1: i32) -> (i32, i32) {
    %c0_i32 = arith.constant 0 : i32
    %c0_i32_0 = arith.constant 0 : i32
    return %c0_i32, %arg1 : i32, i32
  }
  func.func @transform_3(%arg0: i32, %arg1: i32) -> (i32, i32) {
    %c0_i32 = arith.constant 0 : i32
    return %arg0, %arg1 : i32, i32
  }
}

module attributes {stable_mosaic.version = 11 : i64} {
  func.func @_linear_k1_kernel(%arg0: i32, %arg1: i32, %arg2: memref<16x768xbf16, #tpu.memory_space<vmem>>, %arg3: memref<768x768xbf16, #tpu.memory_space<vmem>>, %arg4: memref<1x768xf32, #tpu.memory_space<vmem>>, %arg5: memref<16x768xbf16, #tpu.memory_space<vmem>>) attributes {dimension_semantics = [#tpu.dimension_semantics<parallel>, #tpu.dimension_semantics<parallel>], iteration_bounds = array<i64: 1, 1>, scalar_prefetch = 0 : i64, scratch_operands = 0 : i64, tpu.core_type = #tpu.core_type<tc>, window_params = [{transform_indices = @transform_0, window_bounds = array<i64: 16, 768>}, {transform_indices = @transform_1, window_bounds = array<i64: 768, 768>}, {transform_indices = @transform_2, window_bounds = array<i64: 1, 768>}, {transform_indices = @transform_3, window_bounds = array<i64: 16, 768>}]} {
    %c0 = arith.constant 0 : index
    %c0_0 = arith.constant 0 : index
    %0 = vector.load %arg2[%c0, %c0_0] : memref<16x768xbf16, #tpu.memory_space<vmem>>, vector<16x768xbf16>
    %c0_1 = arith.constant 0 : index
    %c0_2 = arith.constant 0 : index
    %1 = vector.load %arg3[%c0_1, %c0_2] : memref<768x768xbf16, #tpu.memory_space<vmem>>, vector<768x768xbf16>
    %cst = arith.constant dense<0.000000e+00> : vector<16x768xf32>
    %2 = tpu.matmul %0, %1, %cst {dimension_numbers = #tpu.dot_dimension_numbers<[1], [0], [0], [1], [0, 0, 1, 1], [], []>} : vector<16x768xbf16>, vector<768x768xbf16>, vector<16x768xf32> -> vector<16x768xf32>
    %c0_3 = arith.constant 0 : index
    %c0_4 = arith.constant 0 : index
    %3 = vector.load %arg4[%c0_3, %c0_4] : memref<1x768xf32, #tpu.memory_space<vmem>>, vector<1x768xf32>
    %4 = vector.broadcast %3 : vector<1x768xf32> to vector<16x768xf32>
    %5 = arith.addf %2, %4 : vector<16x768xf32>
    %cst_5 = arith.constant 0.000000e+00 : f32
    %6 = vector.broadcast %cst_5 : f32 to vector<16x768xf32>
    %7 = arith.cmpf oge, %5, %6 : vector<16x768xf32>
    %cst_6 = arith.constant 2.000000e-01 : f32
    %8 = vector.broadcast %cst_6 : f32 to vector<16x768xf32>
    %9 = arith.mulf %8, %5 : vector<16x768xf32>
    %10 = arith.select %7, %5, %9 : vector<16x768xi1>, vector<16x768xf32>
    %11 = arith.truncf %10 : vector<16x768xf32> to vector<16x768xbf16>
    %c0_7 = arith.constant 0 : index
    %c0_8 = arith.constant 0 : index
    %12 = vector.load %arg5[%c0_7, %c0_8] : memref<16x768xbf16, #tpu.memory_space<vmem>>, vector<16x768xbf16>
    tpu.vector_store %arg5[%c0_7, %c0_8], %11 {strides = array<i32>} : memref<16x768xbf16, #tpu.memory_space<vmem>>, vector<16x768xbf16>,
    return
  }
  func.func @transform_0(%arg0: i32, %arg1: i32) -> (i32, i32) {
    %c0_i32 = arith.constant 0 : i32
    %c0_i32_0 = arith.constant 0 : i32
    return %arg0, %c0_i32 : i32, i32
  }
  func.func @transform_1(%arg0: i32, %arg1: i32) -> (i32, i32) {
    %c0_i32 = arith.constant 0 : i32
    %c0_i32_0 = arith.constant 0 : i32
    return %c0_i32, %arg1 : i32, i32
  }
  func.func @transform_2(%arg0: i32, %arg1: i32) -> (i32, i32) {
    %c0_i32 = arith.constant 0 : i32
    %c0_i32_0 = arith.constant 0 : i32
    return %c0_i32, %arg1 : i32, i32
  }
  func.func @transform_3(%arg0: i32, %arg1: i32) -> (i32, i32) {
    %c0_i32 = arith.constant 0 : i32
    return %arg0, %arg1 : i32, i32
  }
}

module attributes {stable_mosaic.version = 11 : i64} {
  func.func @_linear_k1_kernel(%arg0: i32, %arg1: i32, %arg2: memref<16x768xbf16, #tpu.memory_space<vmem>>, %arg3: memref<768x128xbf16, #tpu.memory_space<vmem>>, %arg4: memref<1x128xf32, #tpu.memory_space<vmem>>, %arg5: memref<16x128xf32, #tpu.memory_space<vmem>>) attributes {dimension_semantics = [#tpu.dimension_semantics<parallel>, #tpu.dimension_semantics<parallel>], iteration_bounds = array<i64: 1, 1>, scalar_prefetch = 0 : i64, scratch_operands = 0 : i64, tpu.core_type = #tpu.core_type<tc>, window_params = [{transform_indices = @transform_0, window_bounds = array<i64: 16, 768>}, {transform_indices = @transform_1, window_bounds = array<i64: 768, 128>}, {transform_indices = @transform_2, window_bounds = array<i64: 1, 128>}, {transform_indices = @transform_3, window_bounds = array<i64: 16, 128>}]} {
    %c0 = arith.constant 0 : index
    %c0_0 = arith.constant 0 : index
    %0 = vector.load %arg2[%c0, %c0_0] : memref<16x768xbf16, #tpu.memory_space<vmem>>, vector<16x768xbf16>
    %c0_1 = arith.constant 0 : index
    %c0_2 = arith.constant 0 : index
    %1 = vector.load %arg3[%c0_1, %c0_2] : memref<768x128xbf16, #tpu.memory_space<vmem>>, vector<768x128xbf16>
    %cst = arith.constant dense<0.000000e+00> : vector<16x128xf32>
    %2 = tpu.matmul %0, %1, %cst {dimension_numbers = #tpu.dot_dimension_numbers<[1], [0], [0], [1], [0, 0, 1, 1], [], []>} : vector<16x768xbf16>, vector<768x128xbf16>, vector<16x128xf32> -> vector<16x128xf32>
    %c0_3 = arith.constant 0 : index
    %c0_4 = arith.constant 0 : index
    %3 = vector.load %arg4[%c0_3, %c0_4] : memref<1x128xf32, #tpu.memory_space<vmem>>, vector<1x128xf32>
    %4 = vector.broadcast %3 : vector<1x128xf32> to vector<16x128xf32>
    %5 = arith.addf %2, %4 : vector<16x128xf32>
    %c0_5 = arith.constant 0 : index
    %c0_6 = arith.constant 0 : index
    %6 = vector.load %arg5[%c0_5, %c0_6] : memref<16x128xf32, #tpu.memory_space<vmem>>, vector<16x128xf32>
    tpu.vector_store %arg5[%c0_5, %c0_6], %5 {strides = array<i32>} : memref<16x128xf32, #tpu.memory_space<vmem>>, vector<16x128xf32>,
    return
  }
  func.func @transform_0(%arg0: i32, %arg1: i32) -> (i32, i32) {
    %c0_i32 = arith.constant 0 : i32
    %c0_i32_0 = arith.constant 0 : i32
    return %arg0, %c0_i32 : i32, i32
  }
  func.func @transform_1(%arg0: i32, %arg1: i32) -> (i32, i32) {
    %c0_i32 = arith.constant 0 : i32
    %c0_i32_0 = arith.constant 0 : i32
    return %c0_i32, %arg1 : i32, i32
  }
  func.func @transform_2(%arg0: i32, %arg1: i32) -> (i32, i32) {
    %c0_i32 = arith.constant 0 : i32
    %c0_i32_0 = arith.constant 0 : i32
    return %c0_i32, %arg1 : i32, i32
  }
  func.func @transform_3(%arg0: i32, %arg1: i32) -> (i32, i32) {
    %c0_i32 = arith.constant 0 : i32
    return %arg0, %arg1 : i32, i32
  }
}

</mosaic_0001>

<llo_original>
// kernel: roi_box_head_forward.7
$region0: #{roi_box_head_forward.7}
  #allocation0 [shape = 'u32[]', space=smem, size = 0x4, offset = 0x4, fixed_abs, tag = 'smem constant byte address 0x4 - core index']
  #allocation1 [shape = 'u32[72,128]{1,0:T(1,128)}', space=vmem, size = 0x9000, scoped, tag = 'internal scratch']
  %s0 = inlined_call_operand.vmem [shape: bf16[16,256], index: 0, kind: input, shape index: {}]
  %s1 = inlined_call_operand.hbm [shape: bf16[256,256], index: 1, kind: input, shape index: {}]
  %s2 = inlined_call_operand.hbm [shape: f32[1,256], index: 2, kind: input, shape index: {}]
  %s3 = inlined_call_operand.hbm [shape: bf16[256,768], index: 3, kind: input, shape index: {}]
  %s4 = inlined_call_operand.hbm [shape: f32[1,768], index: 4, kind: input, shape index: {}]
  %s5 = inlined_call_operand.vmem [shape: f32[16,768], index: 5, kind: output, shape index: {}]
  %s6 = sld [smem:[#allocation0]]
  $region46: #{roi_box_head_forward.7} parent=0
    _
  %s8 = ssub.s32 1, %s6
  %s9 = scalar_select 0, %s8, %s6
  $region1: #{roi_box_head_forward.7} parent=0
    #allocation2 [shape = 'u8[131072]{0}', space=vmem, size = 0x20000, scoped, tag = 'input window, operand 1, single buffered']
    #allocation3 [shape = 's32[1]{0}', space=sflag, size = 0x4, scoped, tag = 'scoped memory for roi_box_head_forward.7']
    #allocation4 [shape = 'u8[1024]{0}', space=vmem, size = 0x400, scoped, tag = 'input window, operand 2, single buffered']
    #allocation5 [shape = 's32[1]{0}', space=sflag, size = 0x4, scoped, tag = 'scoped memory for roi_box_head_forward.7']
    #allocation6 [shape = 'u8[393216]{0}', space=vmem, size = 0x60000, scoped, tag = 'input window, operand 3, single buffered']
    #allocation7 [shape = 'u8[3072]{0}', space=vmem, size = 0xc00, scoped, tag = 'input window, operand 4, single buffered']
    #allocation8 [shape = 's32[1]{0}', space=sflag, size = 0x4, scoped, tag = 'scoped memory for roi_box_head_forward.7']
    %10 = vsyncpa [#allocation3], 0
    %11 = vsyncpa [#allocation5], 0
    %12 = vsyncpa [#allocation8], 0
    // Predicated region
    $region2: #{roi_box_head_forward.7} parent=1 // pred_check
      _
    $region3: #{roi_box_head_forward.7} parent=1 // pred_check_branch
      %14 = sbr.rel (0) target = $region5
    $region4: #{roi_box_head_forward.7} parent=1 // pred_region
      _
    $region5: #{roi_box_head_forward.7} parent=1 // pred_fallthru
      _
    // Predicated region
    $region6: #{roi_box_head_forward.7} parent=1 // pred_check
      _
    $region7: #{roi_box_head_forward.7} parent=1 // pred_check_branch
      %16 = sbr.rel (0) target = $region9
    $region8: #{roi_box_head_forward.7} parent=1 // pred_region
      %18 = vsyncadd [#allocation3], 0
      %s19 = sshll.u32 %s1, 4
      %s20 = int_to_ptr.hbm [resolvable:$true] %s19
      %s21 = sshll.u32 [#allocation2], 4
      %s22 = int_to_ptr.vmem [resolvable:$true] %s21
      %27 = dma.hbm_to_vmem [thread:$0]  %s20, 4096, %s22, [#allocation3], 128, 128, 8
    $region9: #{roi_box_head_forward.7} parent=1 // pred_fallthru
      _
    // Predicated region
    $region10: #{roi_box_head_forward.7} parent=1 // pred_check
      _
    $region11: #{roi_box_head_forward.7} parent=1 // pred_check_branch
      %29 = sbr.rel (0) target = $region13
    $region12: #{roi_box_head_forward.7} parent=1 // pred_region
      %31 = vsyncadd [#allocation5], 0
      %s33 = sshll.u32 %s2, 4
      %s34 = int_to_ptr.hbm [resolvable:$true] %s33
      %s35 = sshll.u32 [#allocation4], 4
      %s36 = int_to_ptr.vmem [resolvable:$true] %s35
      %38 = dma.hbm_to_vmem [thread:$0]  %s34, 32, %s36, [#allocation5]
    $region13: #{roi_box_head_forward.7} parent=1 // pred_fallthru
      _
    // Predicated region
    $region14: #{roi_box_head_forward.7} parent=1 // pred_check
      _
    $region15: #{roi_box_head_forward.7} parent=1 // pred_check_branch
      %40 = sbr.rel (0) target = $region17
    $region16: #{roi_box_head_forward.7} parent=1 // pred_region
      %42 = vsyncadd [#allocation5], 0
      %s43 = sshll.u32 %s3, 4
      %s44 = int_to_ptr.hbm [resolvable:$true] %s43
      %s45 = sshll.u32 [#allocation6], 4
      %s46 = int_to_ptr.vmem [resolvable:$true] %s45
      %51 = dma.hbm_to_vmem [thread:$0]  %s44, 12288, %s46, [#allocation5], 384, 384, 24
    $region17: #{roi_box_head_forward.7} parent=1 // pred_fallthru
      _
    // Predicated region
    $region18: #{roi_box_head_forward.7} parent=1 // pred_check
      _
    $region19: #{roi_box_head_forward.7} parent=1 // pred_check_branch
      %53 = sbr.rel (0) target = $region21
    $region20: #{roi_box_head_forward.7} parent=1 // pred_region
      %55 = vsyncadd [#allocation8], 0
      %s57 = sshll.u32 %s4, 4
      %s58 = int_to_ptr.hbm [resolvable:$true] %s57
      %s59 = sshll.u32 [#allocation7], 4
      %s60 = int_to_ptr.vmem [resolvable:$true] %s59
      %62 = dma.hbm_to_vmem [thread:$0]  %s58, 96, %s60, [#allocation8]
    $region21: #{roi_box_head_forward.7} parent=1 // pred_fallthru
      _
    // Predicated region
    $region22: #{roi_box_head_forward.7} parent=1 // pred_check
      _
    $region23: #{roi_box_head_forward.7} parent=1 // pred_check_branch
      %64 = sbr.rel (0) target = $region25
    $region24: #{roi_box_head_forward.7} parent=1 // pred_region
      %66 = dma.done [#allocation3], 4096
    $region25: #{roi_box_head_forward.7} parent=1 // pred_fallthru
      _
    // Predicated region
    $region26: #{roi_box_head_forward.7} parent=1 // pred_check
      _
    $region27: #{roi_box_head_forward.7} parent=1 // pred_check_branch
      %68 = sbr.rel (0) target = $region29
    $region28: #{roi_box_head_forward.7} parent=1 // pred_region
      %70 = dma.done [#allocation5], 32
    $region29: #{roi_box_head_forward.7} parent=1 // pred_fallthru
      _
    // Predicated region
    $region30: #{roi_box_head_forward.7} parent=1 // pred_check
      _
    $region31: #{roi_box_head_forward.7} parent=1 // pred_check_branch
      %72 = sbr.rel (0) target = $region33
    $region32: #{roi_box_head_forward.7} parent=1 // pred_region
      %74 = dma.done [#allocation5], 12288
    $region33: #{roi_box_head_forward.7} parent=1 // pred_fallthru
      _
    // Predicated region
    $region34: #{roi_box_head_forward.7} parent=1 // pred_check
      _
    $region35: #{roi_box_head_forward.7} parent=1 // pred_check_branch
      %76 = sbr.rel (0) target = $region37
    $region36: #{roi_box_head_forward.7} parent=1 // pred_region
      %78 = dma.done [#allocation8], 96
    $region37: #{roi_box_head_forward.7} parent=1 // pred_fallthru
      _
    %v79 = vld [vmem:[%s0] sm:$0xff]
    %v80 = vld [vmem:[%s0 + $0x8] sm:$0xff]
    %v81 = vld [vmem:[#allocation2] sm:$0xff]
    %v82 = vld [vmem:[#allocation2 + $0x8] sm:$0xff]
    %v83 = vld [vmem:[#allocation2 + $0x10] sm:$0xff]
    %v84 = vld [vmem:[#allocation2 + $0x18] sm:$0xff]
    %v85 = vld [vmem:[#allocation2 + $0x20] sm:$0xff]
    %v86 = vld [vmem:[#allocation2 + $0x28] sm:$0xff]
    %v87 = vld [vmem:[#allocation2 + $0x30] sm:$0xff]
    %v88 = vld [vmem:[#allocation2 + $0x38] sm:$0xff]
    %v89 = vld [vmem:[#allocation2 + $0x40] sm:$0xff]
    %v90 = vld [vmem:[#allocation2 + $0x48] sm:$0xff]
    %v91 = vld [vmem:[#allocation2 + $0x50] sm:$0xff]
    %v92 = vld [vmem:[#allocation2 + $0x58] sm:$0xff]
    %v93 = vld [vmem:[#allocation2 + $0x60] sm:$0xff]
    %v94 = vld [vmem:[#allocation2 + $0x68] sm:$0xff]
    %v95 = vld [vmem:[#allocation2 + $0x70] sm:$0xff]
    %v96 = vld [vmem:[#allocation2 + $0x78] sm:$0xff]
    %v97 = vld [vmem:[#allocation2 + $0x80] sm:$0xff]
    %v98 = vld [vmem:[#allocation2 + $0x88] sm:$0xff]
    %v99 = vld [vmem:[#allocation2 + $0x90] sm:$0xff]
    %v100 = vld [vmem:[#allocation2 + $0x98] sm:$0xff]
    %v101 = vld [vmem:[#allocation2 + $0xa0] sm:$0xff]
    %v102 = vld [vmem:[#allocation2 + $0xa8] sm:$0xff]
    %v103 = vld [vmem:[#allocation2 + $0xb0] sm:$0xff]
    %v104 = vld [vmem:[#allocation2 + $0xb8] sm:$0xff]
    %v105 = vld [vmem:[#allocation2 + $0xc0] sm:$0xff]
    %v106 = vld [vmem:[#allocation2 + $0xc8] sm:$0xff]
    %v107 = vld [vmem:[#allocation2 + $0xd0] sm:$0xff]
    %v108 = vld [vmem:[#allocation2 + $0xd8] sm:$0xff]
    %v109 = vld [vmem:[#allocation2 + $0xe0] sm:$0xff]
    %v110 = vld [vmem:[#allocation2 + $0xe8] sm:$0xff]
    %v111 = vld [vmem:[#allocation2 + $0xf0] sm:$0xff]
    %v112 = vld [vmem:[#allocation2 + $0xf8] sm:$0xff]
    %v113 = vld [vmem:[#allocation4] sm:$0x3]
    %v115 = vperm.slane %v113, 0
    %v116 = vperm.slane %v113, 1
    %v121 = vunpack.c.l.b16 %v79
    %v122 = vunpack.c.h.b16 %v79
    %v123 = vunpack.c.l.b16 %v80
    %v124 = vunpack.c.h.b16 %v80
    %v125 = vpack.c.b16 %v123, %v121
    %v126 = vpack.c.b16 %v124, %v122
    %v161 = vunpack.c.l.b16 %v81
    %v162 = vunpack.c.h.b16 %v81
    %v163 = vunpack.c.l.b16 %v82
    %v164 = vunpack.c.h.b16 %v82
    %v165 = vunpack.c.l.b16 %v83
    %v166 = vunpack.c.h.b16 %v83
    %v167 = vunpack.c.l.b16 %v84
    %v168 = vunpack.c.h.b16 %v84
    %v169 = vunpack.c.l.b16 %v85
    %v170 = vunpack.c.h.b16 %v85
    %v171 = vunpack.c.l.b16 %v86
    %v172 = vunpack.c.h.b16 %v86
    %v173 = vunpack.c.l.b16 %v87
    %v174 = vunpack.c.h.b16 %v87
    %v175 = vunpack.c.l.b16 %v88
    %v176 = vunpack.c.h.b16 %v88
    %v177 = vunpack.c.l.b16 %v89
    %v178 = vunpack.c.h.b16 %v89
    %v179 = vunpack.c.l.b16 %v90
    %v180 = vunpack.c.h.b16 %v90
    %v181 = vunpack.c.l.b16 %v91
    %v182 = vunpack.c.h.b16 %v91
    %v183 = vunpack.c.l.b16 %v92
    %v184 = vunpack.c.h.b16 %v92
    %v185 = vunpack.c.l.b16 %v93
    %v186 = vunpack.c.h.b16 %v93
    %v187 = vunpack.c.l.b16 %v94
    %v188 = vunpack.c.h.b16 %v94
    %v189 = vunpack.c.l.b16 %v95
    %v190 = vunpack.c.h.b16 %v95
    %v191 = vunpack.c.l.b16 %v96
    %v192 = vunpack.c.h.b16 %v96
    %v193 = vunpack.c.l.b16 %v97
    %v194 = vunpack.c.h.b16 %v97
    %v195 = vunpack.c.l.b16 %v98
    %v196 = vunpack.c.h.b16 %v98
    %v197 = vunpack.c.l.b16 %v99
    %v198 = vunpack.c.h.b16 %v99
    %v199 = vunpack.c.l.b16 %v100
    %v200 = vunpack.c.h.b16 %v100
    %v201 = vunpack.c.l.b16 %v101
    %v202 = vunpack.c.h.b16 %v101
    %v203 = vunpack.c.l.b16 %v102
    %v204 = vunpack.c.h.b16 %v102
    %v205 = vunpack.c.l.b16 %v103
    %v206 = vunpack.c.h.b16 %v103
    %v207 = vunpack.c.l.b16 %v104
    %v208 = vunpack.c.h.b16 %v104
    %v209 = vunpack.c.l.b16 %v105
    %v210 = vunpack.c.h.b16 %v105
    %v211 = vunpack.c.l.b16 %v106
    %v212 = vunpack.c.h.b16 %v106
    %v213 = vunpack.c.l.b16 %v107
    %v214 = vunpack.c.h.b16 %v107
    %v215 = vunpack.c.l.b16 %v108
    %v216 = vunpack.c.h.b16 %v108
    %v217 = vunpack.c.l.b16 %v109
    %v218 = vunpack.c.h.b16 %v109
    %v219 = vunpack.c.l.b16 %v110
    %v220 = vunpack.c.h.b16 %v110
    %v221 = vunpack.c.l.b16 %v111
    %v222 = vunpack.c.h.b16 %v111
    %v223 = vunpack.c.l.b16 %v112
    %v224 = vunpack.c.h.b16 %v112
    %v225 = vpack.c.b16 %v163, %v161
    %v226 = vpack.c.b16 %v164, %v162
    %v227 = vpack.c.b16 %v167, %v165
    %v228 = vpack.c.b16 %v168, %v166
    %v229 = vpack.c.b16 %v171, %v169
    %v230 = vpack.c.b16 %v172, %v170
    %v231 = vpack.c.b16 %v175, %v173
    %v232 = vpack.c.b16 %v176, %v174
    %v233 = vpack.c.b16 %v179, %v177
    %v234 = vpack.c.b16 %v180, %v178
    %v235 = vpack.c.b16 %v183, %v181
    %v236 = vpack.c.b16 %v184, %v182
    %v237 = vpack.c.b16 %v187, %v185
    %v238 = vpack.c.b16 %v188, %v186
    %v239 = vpack.c.b16 %v191, %v189
    %v240 = vpack.c.b16 %v192, %v190
    %v241 = vpack.c.b16 %v195, %v193
    %v242 = vpack.c.b16 %v196, %v194
    %v243 = vpack.c.b16 %v199, %v197
    %v244 = vpack.c.b16 %v200, %v198
    %v245 = vpack.c.b16 %v203, %v201
    %v246 = vpack.c.b16 %v204, %v202
    %v247 = vpack.c.b16 %v207, %v205
    %v248 = vpack.c.b16 %v208, %v206
    %v249 = vpack.c.b16 %v211, %v209
    %v250 = vpack.c.b16 %v212, %v210
    %v251 = vpack.c.b16 %v215, %v213
    %v252 = vpack.c.b16 %v216, %v214
    %v253 = vpack.c.b16 %v219, %v217
    %v254 = vpack.c.b16 %v220, %v218
    %v255 = vpack.c.b16 %v223, %v221
    %v256 = vpack.c.b16 %v224, %v222
    %289 = vmatpush.bf16.msra.mxu0 %v239
    %290 = vmatpush.bf16.msra.mxu0 %v237
    %291 = vmatpush.bf16.msra.mxu0 %v235
    %292 = vmatpush.bf16.msra.mxu0 %v233
    %293 = vmatpush.bf16.msra.mxu0 %v231
    %294 = vmatpush.bf16.msra.mxu0 %v229
    %295 = vmatpush.bf16.msra.mxu0 %v227
    %296 = vmatpush.bf16.msra.mxu0 %v225
    %297 = vmatmul.bf16.gmra.mxu0 %v125
    %v298 = vpop.f32.mrf.mxu0
    %v299 = vadd.f32 %v115, %v298
    %v300 = vpop.f32.mrf.mxu0
    %v301 = vadd.f32 %v115, %v300
    %302 = vdwg.mxu0
    %303 = vmatpush.bf16.msra.mxu0 %v255
    %304 = vmatpush.bf16.msra.mxu0 %v253
    %305 = vmatpush.bf16.msra.mxu0 %v251
    %306 = vmatpush.bf16.msra.mxu0 %v249
    %307 = vmatpush.bf16.msra.mxu0 %v247
    %308 = vmatpush.bf16.msra.mxu0 %v245
    %309 = vmatpush.bf16.msra.mxu0 %v243
    %310 = vmatpush.bf16.msra.mxu0 %v241
    %311 = vmatmul.bf16.gmra.mxu0 %v126
    %v312 = vpop.f32.mrf.mxu0
    %v313 = vadd.f32 %v299, %v312
    %v314 = vpop.f32.mrf.mxu0
    %v315 = vadd.f32 %v301, %v314
    %316 = vdwg.mxu0
    %317 = vmatpush.bf16.msra.mxu0 %v240
    %318 = vmatpush.bf16.msra.mxu0 %v238
    %319 = vmatpush.bf16.msra.mxu0 %v236
    %320 = vmatpush.bf16.msra.mxu0 %v234
    %321 = vmatpush.bf16.msra.mxu0 %v232
    %322 = vmatpush.bf16.msra.mxu0 %v230
    %323 = vmatpush.bf16.msra.mxu0 %v228
    %324 = vmatpush.bf16.msra.mxu0 %v226
    %325 = vmatmul.bf16.gmra.mxu0 %v125
    %v326 = vpop.f32.mrf.mxu0
    %v327 = vadd.f32 %v116, %v326
    %v328 = vpop.f32.mrf.mxu0
    %v329 = vadd.f32 %v116, %v328
    %330 = vdwg.mxu0
    %331 = vmatpush.bf16.msra.mxu0 %v256
    %332 = vmatpush.bf16.msra.mxu0 %v254
    %333 = vmatpush.bf16.msra.mxu0 %v252
    %334 = vmatpush.bf16.msra.mxu0 %v250
    %335 = vmatpush.bf16.msra.mxu0 %v248
    %336 = vmatpush.bf16.msra.mxu0 %v246
    %337 = vmatpush.bf16.msra.mxu0 %v244
    %338 = vmatpush.bf16.msra.mxu0 %v242
    %339 = vmatmul.bf16.gmra.mxu0 %v126
    %v340 = vpop.f32.mrf.mxu0
    %v341 = vadd.f32 %v327, %v340
    %v342 = vpop.f32.mrf.mxu0
    %v343 = vadd.f32 %v329, %v342
    %344 = vdwg.mxu0
    %vm345 = vcmp.ge.f32.partialorder %v313, 0.0
    %vm346 = vcmp.ge.f32.partialorder %v341, 0.0
    %vm347 = vcmp.ge.f32.partialorder %v315, 0.0
    %vm348 = vcmp.ge.f32.partialorder %v343, 0.0
    %v349 = vmul.f32 %v313, 0.2
    %v350 = vmul.f32 %v341, 0.2
    %v351 = vmul.f32 %v315, 0.2
    %v352 = vmul.f32 %v343, 0.2
    %v353 = vsel %vm345, %v313, %v349
    %v354 = vsel %vm346, %v341, %v350
    %v355 = vsel %vm347, %v315, %v351
    %v356 = vsel %vm348, %v343, %v352
    %v357 = vpack.c.bf16 %v355, %v353
    %v358 = vpack.c.bf16 %v356, %v354
    %v359 = vld [vmem:[#allocation6] sm:$0xff]
    %v360 = vld [vmem:[#allocation6 + $0x8] sm:$0xff]
    %v361 = vld [vmem:[#allocation6 + $0x10] sm:$0xff]
    %v362 = vld [vmem:[#allocation6 + $0x18] sm:$0xff]
    %v363 = vld [vmem:[#allocation6 + $0x20] sm:$0xff]
    %v364 = vld [vmem:[#allocation6 + $0x28] sm:$0xff]
    %v365 = vld [vmem:[#allocation6 + $0x30] sm:$0xff]
    %v366 = vld [vmem:[#allocation6 + $0x38] sm:$0xff]
    %v367 = vld [vmem:[#allocation6 + $0x40] sm:$0xff]
    %v368 = vld [vmem:[#allocation6 + $0x48] sm:$0xff]
    %v369 = vld [vmem:[#allocation6 + $0x50] sm:$0xff]
    %v370 = vld [vmem:[#allocation6 + $0x58] sm:$0xff]
    %v371 = vld [vmem:[#allocation6 + $0x60] sm:$0xff]
    %v372 = vld [vmem:[#allocation6 + $0x68] sm:$0xff]
    %v373 = vld [vmem:[#allocation6 + $0x70] sm:$0xff]
    %v374 = vld [vmem:[#allocation6 + $0x78] sm:$0xff]
    %v375 = vld [vmem:[#allocation6 + $0x80] sm:$0xff]
    %v376 = vld [vmem:[#allocation6 + $0x88] sm:$0xff]
    %v377 = vld [vmem:[#allocation6 + $0x90] sm:$0xff]
    %v378 = vld [vmem:[#allocation6 + $0x98] sm:$0xff]
    %v379 = vld [vmem:[#allocation6 + $0xa0] sm:$0xff]
    %v380 = vld [vmem:[#allocation6 + $0xa8] sm:$0xff]
    %v381 = vld [vmem:[#allocation6 + $0xb0] sm:$0xff]
    %v382 = vld [vmem:[#allocation6 + $0xb8] sm:$0xff]
    %v383 = vld [vmem:[#allocation6 + $0xc0] sm:$0xff]
    %v384 = vld [vmem:[#allocation6 + $0xc8] sm:$0xff]
    %v385 = vld [vmem:[#allocation6 + $0xd0] sm:$0xff]
    %v386 = vld [vmem:[#allocation6 + $0xd8] sm:$0xff]
    %v387 = vld [vmem:[#allocation6 + $0xe0] sm:$0xff]
    %v388 = vld [vmem:[#allocation6 + $0xe8] sm:$0xff]
    %v389 = vld [vmem:[#allocation6 + $0xf0] sm:$0xff]
    %v390 = vld [vmem:[#allocation6 + $0xf8] sm:$0xff]
    %v391 = vld [vmem:[#allocation6 + $0x100] sm:$0xff]
    %v392 = vld [vmem:[#allocation6 + $0x108] sm:$0xff]
    %v393 = vld [vmem:[#allocation6 + $0x110] sm:$0xff]
    %v394 = vld [vmem:[#allocation6 + $0x118] sm:$0xff]
    %v395 = vld [vmem:[#allocation6 + $0x120] sm:$0xff]
    %v396 = vld [vmem:[#allocation6 + $0x128] sm:$0xff]
    %v397 = vld [vmem:[#allocation6 + $0x130] sm:$0xff]
    %v398 = vld [vmem:[#allocation6 + $0x138] sm:$0xff]
    %v399 = vld [vmem:[#allocation6 + $0x140] sm:$0xff]
    %v400 = vld [vmem:[#allocation6 + $0x148] sm:$0xff]
    %v401 = vld [vmem:[#allocation6 + $0x150] sm:$0xff]
    %v402 = vld [vmem:[#allocation6 + $0x158] sm:$0xff]
    %v403 = vld [vmem:[#allocation6 + $0x160] sm:$0xff]
    %v404 = vld [vmem:[#allocation6 + $0x168] sm:$0xff]
    %v405 = vld [vmem:[#allocation6 + $0x170] sm:$0xff]
    %v406 = vld [vmem:[#allocation6 + $0x178] sm:$0xff]
    %v407 = vld [vmem:[#allocation6 + $0x180] sm:$0xff]
    %v408 = vld [vmem:[#allocation6 + $0x188] sm:$0xff]
    %v409 = vld [vmem:[#allocation6 + $0x190] sm:$0xff]
    %v410 = vld [vmem:[#allocation6 + $0x198] sm:$0xff]
    %v411 = vld [vmem:[#allocation6 + $0x1a0] sm:$0xff]
    %v412 = vld [vmem:[#allocation6 + $0x1a8] sm:$0xff]
    %v413 = vld [vmem:[#allocation6 + $0x1b0] sm:$0xff]
    %v414 = vld [vmem:[#allocation6 + $0x1b8] sm:$0xff]
    %v415 = vld [vmem:[#allocation6 + $0x1c0] sm:$0xff]
    %v416 = vld [vmem:[#allocation6 + $0x1c8] sm:$0xff]
    %v417 = vld [vmem:[#allocation6 + $0x1d0] sm:$0xff]
    %v418 = vld [vmem:[#allocation6 + $0x1d8] sm:$0xff]
    %v419 = vld [vmem:[#allocation6 + $0x1e0] sm:$0xff]
    %v420 = vld [vmem:[#allocation6 + $0x1e8] sm:$0xff]
    %v421 = vld [vmem:[#allocation6 + $0x1f0] sm:$0xff]
    %v422 = vld [vmem:[#allocation6 + $0x1f8] sm:$0xff]
    %v423 = vld [vmem:[#allocation6 + $0x200] sm:$0xff]
    %v424 = vld [vmem:[#allocation6 + $0x208] sm:$0xff]
    %v425 = vld [vmem:[#allocation6 + $0x210] sm:$0xff]
    %v426 = vld [vmem:[#allocation6 + $0x218] sm:$0xff]
    %v427 = vld [vmem:[#allocation6 + $0x220] sm:$0xff]
    %v428 = vld [vmem:[#allocation6 + $0x228] sm:$0xff]
    %v429 = vld [vmem:[#allocation6 + $0x230] sm:$0xff]
    %v430 = vld [vmem:[#allocation6 + $0x238] sm:$0xff]
    %v431 = vld [vmem:[#allocation6 + $0x240] sm:$0xff]
    %v432 = vld [vmem:[#allocation6 + $0x248] sm:$0xff]
    %v433 = vld [vmem:[#allocation6 + $0x250] sm:$0xff]
    %v434 = vld [vmem:[#allocation6 + $0x258] sm:$0xff]
    %v435 = vld [vmem:[#allocation6 + $0x260] sm:$0xff]
    %v436 = vld [vmem:[#allocation6 + $0x268] sm:$0xff]
    %v437 = vld [vmem:[#allocation6 + $0x270] sm:$0xff]
    %v438 = vld [vmem:[#allocation6 + $0x278] sm:$0xff]
    %v439 = vld [vmem:[#allocation6 + $0x280] sm:$0xff]
    %v440 = vld [vmem:[#allocation6 + $0x288] sm:$0xff]
    %v441 = vld [vmem:[#allocation6 + $0x290] sm:$0xff]
    %v442 = vld [vmem:[#allocation6 + $0x298] sm:$0xff]
    %v443 = vld [vmem:[#allocation6 + $0x2a0] sm:$0xff]
    %v444 = vld [vmem:[#allocation6 + $0x2a8] sm:$0xff]
    %v445 = vld [vmem:[#allocation6 + $0x2b0] sm:$0xff]
    %v446 = vld [vmem:[#allocation6 + $0x2b8] sm:$0xff]
    %v447 = vld [vmem:[#allocation6 + $0x2c0] sm:$0xff]
    %v448 = vld [vmem:[#allocation6 + $0x2c8] sm:$0xff]
    %v449 = vld [vmem:[#allocation6 + $0x2d0] sm:$0xff]
    %v450 = vld [vmem:[#allocation6 + $0x2d8] sm:$0xff]
    %v451 = vld [vmem:[#allocation6 + $0x2e0] sm:$0xff]
    %v452 = vld [vmem:[#allocation6 + $0x2e8] sm:$0xff]
    %v453 = vld [vmem:[#allocation6 + $0x2f0] sm:$0xff]
    %v454 = vld [vmem:[#allocation6 + $0x2f8] sm:$0xff]
    %v455 = vld [vmem:[#allocation7] sm:$0x3f]
    %v457 = vperm.slane %v455, 0
    %v458 = vperm.slane %v455, 1
    %v459 = vperm.slane %v455, 2
    %v460 = vperm.slane %v455, 3
    %v461 = vperm.slane %v455, 4
    %v462 = vperm.slane %v455, 5
    %v565 = vunpack.c.l.b16 %v359
    %v566 = vunpack.c.h.b16 %v359
    %v567 = vunpack.c.l.b16 %v360
    %v568 = vunpack.c.h.b16 %v360
    %v569 = vunpack.c.l.b16 %v361
    %v570 = vunpack.c.h.b16 %v361
    %v571 = vunpack.c.l.b16 %v362
    %v572 = vunpack.c.h.b16 %v362
    %v573 = vunpack.c.l.b16 %v363
    %v574 = vunpack.c.h.b16 %v363
    %v575 = vunpack.c.l.b16 %v364
    %v576 = vunpack.c.h.b16 %v364
    %v577 = vunpack.c.l.b16 %v365
    %v578 = vunpack.c.h.b16 %v365
    %v579 = vunpack.c.l.b16 %v366
    %v580 = vunpack.c.h.b16 %v366
    %v581 = vunpack.c.l.b16 %v367
    %v582 = vunpack.c.h.b16 %v367
    %v583 = vunpack.c.l.b16 %v368
    %v584 = vunpack.c.h.b16 %v368
    %v585 = vunpack.c.l.b16 %v369
    %v586 = vunpack.c.h.b16 %v369
    %v587 = vunpack.c.l.b16 %v370
    %v588 = vunpack.c.h.b16 %v370
    %v589 = vunpack.c.l.b16 %v371
    %v590 = vunpack.c.h.b16 %v371
    %v591 = vunpack.c.l.b16 %v372
    %v592 = vunpack.c.h.b16 %v372
    %v593 = vunpack.c.l.b16 %v373
    %v594 = vunpack.c.h.b16 %v373
    %v595 = vunpack.c.l.b16 %v374
    %v596 = vunpack.c.h.b16 %v374
    %v597 = vunpack.c.l.b16 %v375
    %v598 = vunpack.c.h.b16 %v375
    %v599 = vunpack.c.l.b16 %v376
    %v600 = vunpack.c.h.b16 %v376
    %v601 = vunpack.c.l.b16 %v377
    %v602 = vunpack.c.h.b16 %v377
    %v603 = vunpack.c.l.b16 %v378
    %v604 = vunpack.c.h.b16 %v378
    %v605 = vunpack.c.l.b16 %v379
    %v606 = vunpack.c.h.b16 %v379
    %v607 = vunpack.c.l.b16 %v380
    %v608 = vunpack.c.h.b16 %v380
    %v609 = vunpack.c.l.b16 %v381
    %v610 = vunpack.c.h.b16 %v381
    %v611 = vunpack.c.l.b16 %v382
    %v612 = vunpack.c.h.b16 %v382
    %v613 = vunpack.c.l.b16 %v383
    %v614 = vunpack.c.h.b16 %v383
    %v615 = vunpack.c.l.b16 %v384
    %v616 = vunpack.c.h.b16 %v384
    %v617 = vunpack.c.l.b16 %v385
    %v618 = vunpack.c.h.b16 %v385
    %v619 = vunpack.c.l.b16 %v386
    %v620 = vunpack.c.h.b16 %v386
    %v621 = vunpack.c.l.b16 %v387
    %v622 = vunpack.c.h.b16 %v387
    %v623 = vunpack.c.l.b16 %v388
    %v624 = vunpack.c.h.b16 %v388
    %v625 = vunpack.c.l.b16 %v389
    %v626 = vunpack.c.h.b16 %v389
    %v627 = vunpack.c.l.b16 %v390
    %v628 = vunpack.c.h.b16 %v390
    %v629 = vunpack.c.l.b16 %v391
    %v630 = vunpack.c.h.b16 %v391
    %v631 = vunpack.c.l.b16 %v392
    %v632 = vunpack.c.h.b16 %v392
    %v633 = vunpack.c.l.b16 %v393
    %v634 = vunpack.c.h.b16 %v393
    %v635 = vunpack.c.l.b16 %v394
    %v636 = vunpack.c.h.b16 %v394
    %v637 = vunpack.c.l.b16 %v395
    %v638 = vunpack.c.h.b16 %v395
    %v639 = vunpack.c.l.b16 %v396
    %v640 = vunpack.c.h.b16 %v396
    %v641 = vunpack.c.l.b16 %v397
    %v642 = vunpack.c.h.b16 %v397
    %v643 = vunpack.c.l.b16 %v398
    %v644 = vunpack.c.h.b16 %v398
    %v645 = vunpack.c.l.b16 %v399
    %v646 = vunpack.c.h.b16 %v399
    %v647 = vunpack.c.l.b16 %v400
    %v648 = vunpack.c.h.b16 %v400
    %v649 = vunpack.c.l.b16 %v401
    %v650 = vunpack.c.h.b16 %v401
    %v651 = vunpack.c.l.b16 %v402
    %v652 = vunpack.c.h.b16 %v402
    %v653 = vunpack.c.l.b16 %v403
    %v654 = vunpack.c.h.b16 %v403
    %v655 = vunpack.c.l.b16 %v404
    %v656 = vunpack.c.h.b16 %v404
    %v657 = vunpack.c.l.b16 %v405
    %v658 = vunpack.c.h.b16 %v405
    %v659 = vunpack.c.l.b16 %v406
    %v660 = vunpack.c.h.b16 %v406
    %v661 = vunpack.c.l.b16 %v407
    %v662 = vunpack.c.h.b16 %v407
    %v663 = vunpack.c.l.b16 %v408
    %v664 = vunpack.c.h.b16 %v408
    %v665 = vunpack.c.l.b16 %v409
    %v666 = vunpack.c.h.b16 %v409
    %v667 = vunpack.c.l.b16 %v410
    %v668 = vunpack.c.h.b16 %v410
    %v669 = vunpack.c.l.b16 %v411
    %v670 = vunpack.c.h.b16 %v411
    %v671 = vunpack.c.l.b16 %v412
    %v672 = vunpack.c.h.b16 %v412
    %v673 = vunpack.c.l.b16 %v413
    %v674 = vunpack.c.h.b16 %v413
    %v675 = vunpack.c.l.b16 %v414
    %v676 = vunpack.c.h.b16 %v414
    %v677 = vunpack.c.l.b16 %v415
    %v678 = vunpack.c.h.b16 %v415
    %v679 = vunpack.c.l.b16 %v416
    %v680 = vunpack.c.h.b16 %v416
    %v681 = vunpack.c.l.b16 %v417
    %v682 = vunpack.c.h.b16 %v417
    %v683 = vunpack.c.l.b16 %v418
    %v684 = vunpack.c.h.b16 %v418
    %v685 = vunpack.c.l.b16 %v419
    %v686 = vunpack.c.h.b16 %v419
    %v687 = vunpack.c.l.b16 %v420
    %v688 = vunpack.c.h.b16 %v420
    %v689 = vunpack.c.l.b16 %v421
    %v690 = vunpack.c.h.b16 %v421
    %v691 = vunpack.c.l.b16 %v422
    %v692 = vunpack.c.h.b16 %v422
    %v693 = vunpack.c.l.b16 %v423
    %v694 = vunpack.c.h.b16 %v423
    %v695 = vunpack.c.l.b16 %v424
    %v696 = vunpack.c.h.b16 %v424
    %v697 = vunpack.c.l.b16 %v425
    %v698 = vunpack.c.h.b16 %v425
    %v699 = vunpack.c.l.b16 %v426
    %v700 = vunpack.c.h.b16 %v426
    %v701 = vunpack.c.l.b16 %v427
    %v702 = vunpack.c.h.b16 %v427
    %v703 = vunpack.c.l.b16 %v428
    %v704 = vunpack.c.h.b16 %v428
    %v705 = vunpack.c.l.b16 %v429
    %v706 = vunpack.c.h.b16 %v429
    %v707 = vunpack.c.l.b16 %v430
    %v708 = vunpack.c.h.b16 %v430
    %v709 = vunpack.c.l.b16 %v431
    %v710 = vunpack.c.h.b16 %v431
    %v711 = vunpack.c.l.b16 %v432
    %v712 = vunpack.c.h.b16 %v432
    %v713 = vunpack.c.l.b16 %v433
    %v714 = vunpack.c.h.b16 %v433
    %v715 = vunpack.c.l.b16 %v434
    %v716 = vunpack.c.h.b16 %v434
    %v717 = vunpack.c.l.b16 %v435
    %v718 = vunpack.c.h.b16 %v435
    %v719 = vunpack.c.l.b16 %v436
    %v720 = vunpack.c.h.b16 %v436
    %v721 = vunpack.c.l.b16 %v437
    %v722 = vunpack.c.h.b16 %v437
    %v723 = vunpack.c.l.b16 %v438
    %v724 = vunpack.c.h.b16 %v438
    %v725 = vunpack.c.l.b16 %v439
    %v726 = vunpack.c.h.b16 %v439
    %v727 = vunpack.c.l.b16 %v440
    %v728 = vunpack.c.h.b16 %v440
    %v729 = vunpack.c.l.b16 %v441
    %v730 = vunpack.c.h.b16 %v441
    %v731 = vunpack.c.l.b16 %v442
    %v732 = vunpack.c.h.b16 %v442
    %v733 = vunpack.c.l.b16 %v443
    %v734 = vunpack.c.h.b16 %v443
    %v735 = vunpack.c.l.b16 %v444
    %v736 = vunpack.c.h.b16 %v444
    %v737 = vunpack.c.l.b16 %v445
    %v738 = vunpack.c.h.b16 %v445
    %v739 = vunpack.c.l.b16 %v446
    %v740 = vunpack.c.h.b16 %v446
    %v741 = vunpack.c.l.b16 %v447
    %v742 = vunpack.c.h.b16 %v447
    %v743 = vunpack.c.l.b16 %v448
    %v744 = vunpack.c.h.b16 %v448
    %v745 = vunpack.c.l.b16 %v449
    %v746 = vunpack.c.h.b16 %v449
    %v747 = vunpack.c.l.b16 %v450
    %v748 = vunpack.c.h.b16 %v450
    %v749 = vunpack.c.l.b16 %v451
    %v750 = vunpack.c.h.b16 %v451
    %v751 = vunpack.c.l.b16 %v452
    %v752 = vunpack.c.h.b16 %v452
    %v753 = vunpack.c.l.b16 %v453
    %v754 = vunpack.c.h.b16 %v453
    %v755 = vunpack.c.l.b16 %v454
    %v756 = vunpack.c.h.b16 %v454
    %v757 = vpack.c.b16 %v571, %v565
    %v758 = vpack.c.b16 %v572, %v566
    %v759 = vpack.c.b16 %v573, %v567
    %v760 = vpack.c.b16 %v574, %v568
    %v761 = vpack.c.b16 %v575, %v569
    %v762 = vpack.c.b16 %v576, %v570
    %v763 = vpack.c.b16 %v583, %v577
    %v764 = vpack.c.b16 %v584, %v578
    %v765 = vpack.c.b16 %v585, %v579
    %v766 = vpack.c.b16 %v586, %v580
    %v767 = vpack.c.b16 %v587, %v581
    %v768 = vpack.c.b16 %v588, %v582
    %v769 = vpack.c.b16 %v595, %v589
    %v770 = vpack.c.b16 %v596, %v590
    %v771 = vpack.c.b16 %v597, %v591
    %v772 = vpack.c.b16 %v598, %v592
    %v773 = vpack.c.b16 %v599, %v593
    %v774 = vpack.c.b16 %v600, %v594
    %v775 = vpack.c.b16 %v607, %v601
    %v776 = vpack.c.b16 %v608, %v602
    %v777 = vpack.c.b16 %v609, %v603
    %v778 = vpack.c.b16 %v610, %v604
    %v779 = vpack.c.b16 %v611, %v605
    %v780 = vpack.c.b16 %v612, %v606
    %v781 = vpack.c.b16 %v619, %v613
    %v782 = vpack.c.b16 %v620, %v614
    %v783 = vpack.c.b16 %v621, %v615
    %v784 = vpack.c.b16 %v622, %v616
    %v785 = vpack.c.b16 %v623, %v617
    %v786 = vpack.c.b16 %v624, %v618
    %v787 = vpack.c.b16 %v631, %v625
    %v788 = vpack.c.b16 %v632, %v626
    %v789 = vpack.c.b16 %v633, %v627
    %v790 = vpack.c.b16 %v634, %v628
    %v791 = vpack.c.b16 %v635, %v629
    %v792 = vpack.c.b16 %v636, %v630
    %v793 = vpack.c.b16 %v643, %v637
    %v794 = vpack.c.b16 %v644, %v638
    %v795 = vpack.c.b16 %v645, %v639
    %v796 = vpack.c.b16 %v646, %v640
    %v797 = vpack.c.b16 %v647, %v641
    %v798 = vpack.c.b16 %v648, %v642
    %v799 = vpack.c.b16 %v655, %v649
    %v800 = vpack.c.b16 %v656, %v650
    %v801 = vpack.c.b16 %v657, %v651
    %v802 = vpack.c.b16 %v658, %v652
    %v803 = vpack.c.b16 %v659, %v653
    %v804 = vpack.c.b16 %v660, %v654
    %v805 = vpack.c.b16 %v667, %v661
    %v806 = vpack.c.b16 %v668, %v662
    %v807 = vpack.c.b16 %v669, %v663
    %v808 = vpack.c.b16 %v670, %v664
    %v809 = vpack.c.b16 %v671, %v665
    %v810 = vpack.c.b16 %v672, %v666
    %v811 = vpack.c.b16 %v679, %v673
    %v812 = vpack.c.b16 %v680, %v674
    %v813 = vpack.c.b16 %v681, %v675
    %v814 = vpack.c.b16 %v682, %v676
    %v815 = vpack.c.b16 %v683, %v677
    %v816 = vpack.c.b16 %v684, %v678
    %v817 = vpack.c.b16 %v691, %v685
    %v818 = vpack.c.b16 %v692, %v686
    %v819 = vpack.c.b16 %v693, %v687
    %v820 = vpack.c.b16 %v694, %v688
    %v821 = vpack.c.b16 %v695, %v689
    %v822 = vpack.c.b16 %v696, %v690
    %v823 = vpack.c.b16 %v703, %v697
    %v824 = vpack.c.b16 %v704, %v698
    %v825 = vpack.c.b16 %v705, %v699
    %v826 = vpack.c.b16 %v706, %v700
    %v827 = vpack.c.b16 %v707, %v701
    %v828 = vpack.c.b16 %v708, %v702
    %v829 = vpack.c.b16 %v715, %v709
    %v830 = vpack.c.b16 %v716, %v710
    %v831 = vpack.c.b16 %v717, %v711
    %v832 = vpack.c.b16 %v718, %v712
    %v833 = vpack.c.b16 %v719, %v713
    %v834 = vpack.c.b16 %v720, %v714
    %v835 = vpack.c.b16 %v727, %v721
    %v836 = vpack.c.b16 %v728, %v722
    %v837 = vpack.c.b16 %v729, %v723
    %v838 = vpack.c.b16 %v730, %v724
    %v839 = vpack.c.b16 %v731, %v725
    %v840 = vpack.c.b16 %v732, %v726
    %v841 = vpack.c.b16 %v739, %v733
    %v842 = vpack.c.b16 %v740, %v734
    %v843 = vpack.c.b16 %v741, %v735
    %v844 = vpack.c.b16 %v742, %v736
    %v845 = vpack.c.b16 %v743, %v737
    %v846 = vpack.c.b16 %v744, %v738
    %v847 = vpack.c.b16 %v751, %v745
    %v848 = vpack.c.b16 %v752, %v746
    %v849 = vpack.c.b16 %v753, %v747
    %v850 = vpack.c.b16 %v754, %v748
    %v851 = vpack.c.b16 %v755, %v749
    %v852 = vpack.c.b16 %v756, %v750
    %949 = vmatpush.bf16.msra.mxu0 %v799
    %950 = vmatpush.bf16.msra.mxu0 %v793
    %951 = vmatpush.bf16.msra.mxu0 %v787
    %952 = vmatpush.bf16.msra.mxu0 %v781
    %953 = vmatpush.bf16.msra.mxu0 %v775
    %954 = vmatpush.bf16.msra.mxu0 %v769
    %955 = vmatpush.bf16.msra.mxu0 %v763
    %956 = vmatpush.bf16.msra.mxu0 %v757
    %957 = vmatmul.bf16.gmra.mxu0 %v357
    %v958 = vpop.f32.mrf.mxu0
    %v959 = vadd.f32 %v457, %v958
    %v960 = vpop.f32.mrf.mxu0
    %v961 = vadd.f32 %v457, %v960
    %962 = vdwg.mxu0
    %963 = vmatpush.bf16.msra.mxu0 %v847
    %964 = vmatpush.bf16.msra.mxu0 %v841
    %965 = vmatpush.bf16.msra.mxu0 %v835
    %966 = vmatpush.bf16.msra.mxu0 %v829
    %967 = vmatpush.bf16.msra.mxu0 %v823
    %968 = vmatpush.bf16.msra.mxu0 %v817
    %969 = vmatpush.bf16.msra.mxu0 %v811
    %970 = vmatpush.bf16.msra.mxu0 %v805
    %971 = vmatmul.bf16.gmra.mxu0 %v358
    %v972 = vpop.f32.mrf.mxu0
    %v973 = vadd.f32 %v959, %v972
    %v974 = vpop.f32.mrf.mxu0
    %v975 = vadd.f32 %v961, %v974
    %976 = vdwg.mxu0
    %977 = vmatpush.bf16.msra.mxu0 %v800
    %978 = vmatpush.bf16.msra.mxu0 %v794
    %979 = vmatpush.bf16.msra.mxu0 %v788
    %980 = vmatpush.bf16.msra.mxu0 %v782
    %981 = vmatpush.bf16.msra.mxu0 %v776
    %982 = vmatpush.bf16.msra.mxu0 %v770
    %983 = vmatpush.bf16.msra.mxu0 %v764
    %984 = vmatpush.bf16.msra.mxu0 %v758
    %985 = vmatmul.bf16.gmra.mxu0 %v357
    %v986 = vpop.f32.mrf.mxu0
    %v987 = vadd.f32 %v458, %v986
    %v988 = vpop.f32.mrf.mxu0
    %v989 = vadd.f32 %v458, %v988
    %990 = vdwg.mxu0
    %991 = vmatpush.bf16.msra.mxu0 %v848
    %992 = vmatpush.bf16.msra.mxu0 %v842
    %993 = vmatpush.bf16.msra.mxu0 %v836
    %994 = vmatpush.bf16.msra.mxu0 %v830
    %995 = vmatpush.bf16.msra.mxu0 %v824
    %996 = vmatpush.bf16.msra.mxu0 %v818
    %997 = vmatpush.bf16.msra.mxu0 %v812
    %998 = vmatpush.bf16.msra.mxu0 %v806
    %999 = vmatmul.bf16.gmra.mxu0 %v358
    %v1000 = vpop.f32.mrf.mxu0
    %v1001 = vadd.f32 %v987, %v1000
    %v1002 = vpop.f32.mrf.mxu0
    %v1003 = vadd.f32 %v989, %v1002
    %1004 = vdwg.mxu0
    %1005 = vmatpush.bf16.msra.mxu0 %v801
    %1006 = vmatpush.bf16.msra.mxu0 %v795
    %1007 = vmatpush.bf16.msra.mxu0 %v789
    %1008 = vmatpush.bf16.msra.mxu0 %v783
    %1009 = vmatpush.bf16.msra.mxu0 %v777
    %1010 = vmatpush.bf16.msra.mxu0 %v771
    %1011 = vmatpush.bf16.msra.mxu0 %v765
    %1012 = vmatpush.bf16.msra.mxu0 %v759
    %1013 = vmatmul.bf16.gmra.mxu0 %v357
    %v1014 = vpop.f32.mrf.mxu0
    %v1015 = vadd.f32 %v459, %v1014
    %v1016 = vpop.f32.mrf.mxu0
    %v1017 = vadd.f32 %v459, %v1016
    %1018 = vdwg.mxu0
    %1019 = vmatpush.bf16.msra.mxu0 %v849
    %1020 = vmatpush.bf16.msra.mxu0 %v843
    %1021 = vmatpush.bf16.msra.mxu0 %v837
    %1022 = vmatpush.bf16.msra.mxu0 %v831
    %1023 = vmatpush.bf16.msra.mxu0 %v825
    %1024 = vmatpush.bf16.msra.mxu0 %v819
    %1025 = vmatpush.bf16.msra.mxu0 %v813
    %1026 = vmatpush.bf16.msra.mxu0 %v807
    %1027 = vmatmul.bf16.gmra.mxu0 %v358
    %v1028 = vpop.f32.mrf.mxu0
    %v1029 = vadd.f32 %v1015, %v1028
    %v1030 = vpop.f32.mrf.mxu0
    %v1031 = vadd.f32 %v1017, %v1030
    %1032 = vdwg.mxu0
    %1033 = vmatpush.bf16.msra.mxu0 %v802
    %1034 = vmatpush.bf16.msra.mxu0 %v796
    %1035 = vmatpush.bf16.msra.mxu0 %v790
    %1036 = vmatpush.bf16.msra.mxu0 %v784
    %1037 = vmatpush.bf16.msra.mxu0 %v778
    %1038 = vmatpush.bf16.msra.mxu0 %v772
    %1039 = vmatpush.bf16.msra.mxu0 %v766
    %1040 = vmatpush.bf16.msra.mxu0 %v760
    %1041 = vmatmul.bf16.gmra.mxu0 %v357
    %v1042 = vpop.f32.mrf.mxu0
    %v1043 = vadd.f32 %v460, %v1042
    %v1044 = vpop.f32.mrf.mxu0
    %v1045 = vadd.f32 %v460, %v1044
    %1046 = vdwg.mxu0
    %1047 = vmatpush.bf16.msra.mxu0 %v850
    %1048 = vmatpush.bf16.msra.mxu0 %v844
    %1049 = vmatpush.bf16.msra.mxu0 %v838
    %1050 = vmatpush.bf16.msra.mxu0 %v832
    %1051 = vmatpush.bf16.msra.mxu0 %v826
    %1052 = vmatpush.bf16.msra.mxu0 %v820
    %1053 = vmatpush.bf16.msra.mxu0 %v814
    %1054 = vmatpush.bf16.msra.mxu0 %v808
    %1055 = vmatmul.bf16.gmra.mxu0 %v358
    %v1056 = vpop.f32.mrf.mxu0
    %v1057 = vadd.f32 %v1043, %v1056
    %v1058 = vpop.f32.mrf.mxu0
    %v1059 = vadd.f32 %v1045, %v1058
    %1060 = vdwg.mxu0
    %1061 = vmatpush.bf16.msra.mxu0 %v803
    %1062 = vmatpush.bf16.msra.mxu0 %v797
    %1063 = vmatpush.bf16.msra.mxu0 %v791
    %1064 = vmatpush.bf16.msra.mxu0 %v785
    %1065 = vmatpush.bf16.msra.mxu0 %v779
    %1066 = vmatpush.bf16.msra.mxu0 %v773
    %1067 = vmatpush.bf16.msra.mxu0 %v767
    %1068 = vmatpush.bf16.msra.mxu0 %v761
    %1069 = vmatmul.bf16.gmra.mxu0 %v357
    %v1070 = vpop.f32.mrf.mxu0
    %v1071 = vadd.f32 %v461, %v1070
    %v1072 = vpop.f32.mrf.mxu0
    %v1073 = vadd.f32 %v461, %v1072
    %1074 = vdwg.mxu0
    %1075 = vmatpush.bf16.msra.mxu0 %v851
    %1076 = vmatpush.bf16.msra.mxu0 %v845
    %1077 = vmatpush.bf16.msra.mxu0 %v839
    %1078 = vmatpush.bf16.msra.mxu0 %v833
    %1079 = vmatpush.bf16.msra.mxu0 %v827
    %1080 = vmatpush.bf16.msra.mxu0 %v821
    %1081 = vmatpush.bf16.msra.mxu0 %v815
    %1082 = vmatpush.bf16.msra.mxu0 %v809
    %1083 = vmatmul.bf16.gmra.mxu0 %v358
    %v1084 = vpop.f32.mrf.mxu0
    %v1085 = vadd.f32 %v1071, %v1084
    %v1086 = vpop.f32.mrf.mxu0
    %v1087 = vadd.f32 %v1073, %v1086
    %1088 = vdwg.mxu0
    %1089 = vmatpush.bf16.msra.mxu0 %v804
    %1090 = vmatpush.bf16.msra.mxu0 %v798
    %1091 = vmatpush.bf16.msra.mxu0 %v792
    %1092 = vmatpush.bf16.msra.mxu0 %v786
    %1093 = vmatpush.bf16.msra.mxu0 %v780
    %1094 = vmatpush.bf16.msra.mxu0 %v774
    %1095 = vmatpush.bf16.msra.mxu0 %v768
    %1096 = vmatpush.bf16.msra.mxu0 %v762
    %1097 = vmatmul.bf16.gmra.mxu0 %v357
    %v1098 = vpop.f32.mrf.mxu0
    %v1099 = vadd.f32 %v462, %v1098
    %v1100 = vpop.f32.mrf.mxu0
    %v1101 = vadd.f32 %v462, %v1100
    %1102 = vdwg.mxu0
    %1103 = vmatpush.bf16.msra.mxu0 %v852
    %1104 = vmatpush.bf16.msra.mxu0 %v846
    %1105 = vmatpush.bf16.msra.mxu0 %v840
    %1106 = vmatpush.bf16.msra.mxu0 %v834
    %1107 = vmatpush.bf16.msra.mxu0 %v828
    %1108 = vmatpush.bf16.msra.mxu0 %v822
    %1109 = vmatpush.bf16.msra.mxu0 %v816
    %1110 = vmatpush.bf16.msra.mxu0 %v810
    %1111 = vmatmul.bf16.gmra.mxu0 %v358
    %v1112 = vpop.f32.mrf.mxu0
    %v1113 = vadd.f32 %v1099, %v1112
    %v1114 = vpop.f32.mrf.mxu0
    %v1115 = vadd.f32 %v1101, %v1114
    %1116 = vdwg.mxu0
    %1117 = vst [vmem:[%s5] sm:$0xff] %v973
    %1118 = vst [vmem:[%s5 + $0x8] sm:$0xff] %v1001
    %1119 = vst [vmem:[%s5 + $0x10] sm:$0xff] %v1029
    %1120 = vst [vmem:[%s5 + $0x18] sm:$0xff] %v1057
    %1121 = vst [vmem:[%s5 + $0x20] sm:$0xff] %v1085
    %1122 = vst [vmem:[%s5 + $0x28] sm:$0xff] %v1113
    %1123 = vst [vmem:[%s5 + $0x30] sm:$0xff] %v975
    %1124 = vst [vmem:[%s5 + $0x38] sm:$0xff] %v1003
    %1125 = vst [vmem:[%s5 + $0x40] sm:$0xff] %v1031
    %1126 = vst [vmem:[%s5 + $0x48] sm:$0xff] %v1059
    %1127 = vst [vmem:[%s5 + $0x50] sm:$0xff] %v1087
    %1128 = vst [vmem:[%s5 + $0x58] sm:$0xff] %v1115
    // Predicated region
    $region38: #{roi_box_head_forward.7} parent=1 // pred_check
      _
    $region39: #{roi_box_head_forward.7} parent=1 // pred_check_branch
      %1130 = sbr.rel (0) target = $region41
    $region40: #{roi_box_head_forward.7} parent=1 // pred_region
      _
    $region41: #{roi_box_head_forward.7} parent=1 // pred_fallthru
      _
    // Predicated region
    $region42: #{roi_box_head_forward.7} parent=1 // pred_check
      _
    $region43: #{roi_box_head_forward.7} parent=1 // pred_check_branch
      %1132 = sbr.rel (0) target = $region45
    $region44: #{roi_box_head_forward.7} parent=1 // pred_region
      _
    $region45: #{roi_box_head_forward.7} parent=1 // pred_fallthru
      _
    %1133 = vsyncpa [#allocation3], 1
    %1134 = vsyncpa [#allocation5], 1
    %1135 = vsyncpa [#allocation8], 1

// kernel: roi_box_head_forward.6
$region0: #{roi_box_head_forward.6}
  #allocation0 [shape = 'u32[]', space=smem, size = 0x4, offset = 0x4, fixed_abs, tag = 'smem constant byte address 0x4 - core index']
  #allocation1 [shape = 'u32[72,128]{1,0:T(1,128)}', space=vmem, size = 0x9000, scoped, tag = 'internal scratch']
  #allocation2 [shape = 'f32[16,256]{1,0:T(8,128)}', space=vmem, size = 0x4000, scoped, tag = 'scratch operand']
  %s0 = inlined_call_operand.vmem [shape: bf16[16,2560], index: 0, kind: input, shape index: {}]
  %s1 = inlined_call_operand.hbm [shape: bf16[2560,256], index: 1, kind: input, shape index: {}]
  %s2 = inlined_call_operand.hbm [shape: f32[1,256], index: 2, kind: input, shape index: {}]
  %s3 = inlined_call_operand.vmem [shape: bf16[16,256], index: 3, kind: output, shape index: {}]
  %s4 = sld [smem:[#allocation0]]
  $region84: #{roi_box_head_forward.6} parent=0
    _
  %s6 = ssub.s32 1, %s4
  %s7 = scalar_select 0, %s6, %s4
  $region1: #{roi_box_head_forward.6} parent=0
    #allocation3 [shape = 'u8[81920]{0}', space=vmem, size = 0x14000, scoped, tag = 'input window, operand 0']
    #allocation4 [shape = 'u8[1310720]{0}', space=vmem, size = 0x140000, scoped, tag = 'input window, operand 1']
    #allocation5 [shape = 's32[2]{0}', space=sflag, size = 0x8, scoped, tag = 'scoped memory for roi_box_head_forward.6']
    #allocation6 [shape = 'u8[1024]{0}', space=vmem, size = 0x400, scoped, tag = 'input window, operand 2, single buffered']
    #allocation7 [shape = 's32[1]{0}', space=sflag, size = 0x4, scoped, tag = 'scoped memory for roi_box_head_forward.6']
    %8 = vsyncpa [#allocation5], 0
    %s9 = scalar_lea.sflag [#allocation5], 1
    %10 = vsyncpa %s9, 0
    %11 = vsyncpa [#allocation7], 0
    loop: start=0, step=1, limit=4
    $region2: #{roi_box_head_forward.6} parent=1 // loop_pre_header
      _
    $region3: #{roi_box_head_forward.6} parent=1 // loop_header
      %s13 = sphi 0, %s17
      %p14 = scmp.ge.s32.totalorder %s13, 4
      %s20 = sphi 0, %s39
      %s21 = sphi 0, %s35
      %s22 = sphi 0, %s31
      %s23 = sphi 0, %s20
      %s24 = sphi 0, %s21
      %s25 = sphi 0, %s22
      %s26 = sphi 0, %s23
      %s27 = sphi 0, %s24
      %s28 = sphi 0, %s25
      %s44 = sphi 0, %s46
      %s47 = sphi 0, %s44
      %s48 = sphi 0, %s47
      %s64 = sphi 0, %s48
      %s72 = sphi 0, %s74
      %s75 = sphi 0, %s72
      %s76 = sphi 0, %s75
      %s92 = sphi 0, %s76
      %s98 = sphi 0, %s100
      %s101 = sphi 0, %s98
      %s102 = sphi 0, %s101
      %s118 = sphi 0, %s102
      %s126 = sphi 0, %s128
      %s129 = sphi 0, %s126
      %s130 = sphi 0, %s129
      %s146 = sphi 0, %s130
    $region4: #{roi_box_head_forward.6} parent=1 // loop_header_branch
      %16 = sbr.rel (%p14) target = $region8
    $region5: #{roi_box_head_forward.6} parent=1 // loop_body
      %s18 = ssub.s32 %s13, 1
      %s19 = ssub.s32 %s13, 2
      %s29 = sadd.s32 1, %s22
      %p30 = scmp.ge.s32.totalorder %s29, 2
      %s31 = scalar_select %p30, 0, %s29
      %s32 = sadd.s32 1, %s21
      %s33 = scalar_select %p30, %s32, %s21
      %p34 = scmp.ge.s32.totalorder %s33, 1
      %s35 = scalar_select %p34, 0, %s33
      %s36 = sadd.s32 1, %s20
      %s37 = scalar_select %p34, %s36, %s20
      %p38 = scmp.ge.s32.totalorder %s37, 1
      %s39 = scalar_select %p38, 0, %s37
      %s40 = ssub.s32 %s20, %s39
      %s41 = ssub.s32 %s22, %s31
      %s42 = sor.u32 %s40, %s41
      %p43 = scmp.eq.s32.totalorder %s42, 0
      %s45 = sadd.s32 %s44, 1
      %s46 = scalar_select %p43, %s44, %s45
      %p49 = pneg %p43
      %p50 = scmp.eq.s32.totalorder %s13, 1
      %p51 = por %p49, %p50
      %p52 = scmp.ne.s32.totalorder %s44, %s47
      %p53 = scmp.eq.s32.totalorder %s13, 0
      %p54 = por %p52, %p53
      %p55 = scmp.ne.s32.totalorder %s44, %s47
      %p56 = scmp.eq.s32.totalorder %s18, 1
      %p57 = por %p55, %p56
      %p58 = scmp.ne.s32.totalorder %s47, %s48
      %p59 = scmp.eq.s32.totalorder %s18, 0
      %p60 = por %p58, %p59
      %p61 = scmp.ne.s32.totalorder %s47, %s48
      %p62 = scmp.eq.s32.totalorder %s19, 1
      %p63 = por %p61, %p62
      %p65 = scmp.ne.s32.totalorder %s48, %s64
      %p66 = scmp.eq.s32.totalorder %s19, 0
      %p67 = por %p65, %p66
      %s68 = ssub.s32 %s22, %s31
      %s69 = ssub.s32 %s21, %s35
      %s70 = sor.u32 %s68, %s69
      %p71 = scmp.eq.s32.totalorder %s70, 0
      %s73 = sadd.s32 %s72, 1
      %s74 = scalar_select %p71, %s72, %s73
      %p77 = pneg %p71
      %p78 = scmp.eq.s32.totalorder %s13, 1
      %p79 = por %p77, %p78
      %p80 = scmp.ne.s32.totalorder %s72, %s75
      %p81 = scmp.eq.s32.totalorder %s13, 0
      %p82 = por %p80, %p81
      %p83 = scmp.ne.s32.totalorder %s72, %s75
      %p84 = scmp.eq.s32.totalorder %s18, 1
      %p85 = por %p83, %p84
      %p86 = scmp.ne.s32.totalorder %s75, %s76
      %p87 = scmp.eq.s32.totalorder %s18, 0
      %p88 = por %p86, %p87
      %p89 = scmp.ne.s32.totalorder %s75, %s76
      %p90 = scmp.eq.s32.totalorder %s19, 1
      %p91 = por %p89, %p90
      %p93 = scmp.ne.s32.totalorder %s76, %s92
      %p94 = scmp.eq.s32.totalorder %s19, 0
      %p95 = por %p93, %p94
      %s96 = ssub.s32 %s21, %s35
      %p97 = scmp.eq.s32.totalorder %s96, 0
      %s99 = sadd.s32 %s98, 1
      %s100 = scalar_select %p97, %s98, %s99
      %p103 = pneg %p97
      %p104 = scmp.eq.s32.totalorder %s13, 1
      %p105 = por %p103, %p104
      %p106 = scmp.ne.s32.totalorder %s98, %s101
      %p107 = scmp.eq.s32.totalorder %s13, 0
      %p108 = por %p106, %p107
      %p109 = scmp.ne.s32.totalorder %s98, %s101
      %p110 = scmp.eq.s32.totalorder %s18, 1
      %p111 = por %p109, %p110
      %p112 = scmp.ne.s32.totalorder %s101, %s102
      %p113 = scmp.eq.s32.totalorder %s18, 0
      %p114 = por %p112, %p113
      %p115 = scmp.ne.s32.totalorder %s101, %s102
      %p116 = scmp.eq.s32.totalorder %s19, 1
      %p117 = por %p115, %p116
      %p119 = scmp.ne.s32.totalorder %s102, %s118
      %p120 = scmp.eq.s32.totalorder %s19, 0
      %p121 = por %p119, %p120
      %s122 = ssub.s32 %s20, %s39
      %s123 = ssub.s32 %s21, %s35
      %s124 = sor.u32 %s122, %s123
      %p125 = scmp.eq.s32.totalorder %s124, 0
      %s127 = sadd.s32 %s126, 1
      %s128 = scalar_select %p125, %s126, %s127
      %p131 = pneg %p125
      %p132 = scmp.eq.s32.totalorder %s13, 1
      %p133 = por %p131, %p132
      %p134 = scmp.ne.s32.totalorder %s126, %s129
      %p135 = scmp.eq.s32.totalorder %s13, 0
      %p136 = por %p134, %p135
      %p137 = scmp.ne.s32.totalorder %s126, %s129
      %p138 = scmp.eq.s32.totalorder %s18, 1
      %p139 = por %p137, %p138
      %p140 = scmp.ne.s32.totalorder %s129, %s130
      %p141 = scmp.eq.s32.totalorder %s18, 0
      %p142 = por %p140, %p141
      %p143 = scmp.ne.s32.totalorder %s129, %s130
      %p144 = scmp.eq.s32.totalorder %s19, 1
      %p145 = por %p143, %p144
      %p147 = scmp.ne.s32.totalorder %s130, %s146
      %p148 = scmp.eq.s32.totalorder %s19, 0
      %p149 = por %p147, %p148
      %p150 = scmp.le.s32.totalorder 1, %s13
      %p151 = scmp.lt.s32.totalorder %s13, 3
      %p152 = pnand %p150, %p151
      %p153 = pneg %p152
      // Predicated region
      $region9: #{roi_box_head_forward.6} parent=5 // pred_check
        _
      $region10: #{roi_box_head_forward.6} parent=5 // pred_check_branch
        %155 = sbr.rel (%p152) target = $region12
      $region11: #{roi_box_head_forward.6} parent=5 // pred_region
        %s156 = ssub.s32 %s13, 1
        // Predicated region
        $region13: #{roi_box_head_forward.6} parent=11 // pred_check
          %p157 = pneg %p114
        $region14: #{roi_box_head_forward.6} parent=11 // pred_check_branch
          %159 = sbr.rel (%p157) target = $region16
        $region15: #{roi_box_head_forward.6} parent=11 // pred_region
          %s160 = smul.u32 2, %s24
          %162 = vsyncadd [#allocation7], 0
          %s163 = scalar_lea.hbm %s2, %s160
          %s165 = sshll.u32 %s163, 4
          %s166 = int_to_ptr.hbm [resolvable:$true] %s165
          %s167 = sshll.u32 [#allocation6], 4
          %s168 = int_to_ptr.vmem [resolvable:$true] %s167
          %170 = dma.hbm_to_vmem [thread:$0]  %s166, 32, %s168, [#allocation7]
        $region16: #{roi_box_head_forward.6} parent=11 // pred_fallthru
          _
      $region12: #{roi_box_head_forward.6} parent=5 // pred_fallthru
        _
      %p171 = scmp.lt.s32.totalorder %s13, 2
      // Predicated region
      $region17: #{roi_box_head_forward.6} parent=5 // pred_check
        %p172 = pneg %p171
      $region18: #{roi_box_head_forward.6} parent=5 // pred_check_branch
        %174 = sbr.rel (%p172) target = $region20
      $region19: #{roi_box_head_forward.6} parent=5 // pred_region
        // Predicated region
        $region21: #{roi_box_head_forward.6} parent=19 // pred_check
          %p175 = pneg %p54
        $region22: #{roi_box_head_forward.6} parent=19 // pred_check_branch
          %177 = sbr.rel (%p175) target = $region24
        $region23: #{roi_box_head_forward.6} parent=19 // pred_region
          %s178 = sand.u32 %s44, 1
          %s179 = sand.u32 %s44, 1
          %s180 = smul.addr %s179, 80
          %s181 = scalar_lea.vmem [#allocation3], %s180
          %s182 = smul.u32 2, %s20
          %s183 = smul.u32 10, %s22
          %s184 = smul.addr %s182, 20
          %s185 = sadd.s32 %s183, %s184
          %s186 = smul.addr %s185, 4
          %s187 = scalar_lea.vmem %s0, %s186
          // Predicated region
          $region25: #{roi_box_head_forward.6} parent=23 // pred_check
            _
          $region26: #{roi_box_head_forward.6} parent=23 // pred_check_branch
            %189 = sbr.rel (0) target = $region28
          $region27: #{roi_box_head_forward.6} parent=23 // pred_region
            // Predicated region
            $region29: #{roi_box_head_forward.6} parent=27 // pred_check
              _
            $region30: #{roi_box_head_forward.6} parent=27 // pred_check_branch
              %191 = sbr.rel (0) target = $region32
            $region31: #{roi_box_head_forward.6} parent=27 // pred_region
              loop: start=0, step=1, limit=1
              $region33: #{roi_box_head_forward.6} parent=31 // loop_pre_header
                _
              $region34: #{roi_box_head_forward.6} parent=31 // loop_header
                %s193 = sphi 0, %s197
                %p194 = scmp.ge.s32.totalorder %s193, 1
                %s198 = sphi %s187, %s187
                %s199 = sphi %s181, %s181
              $region35: #{roi_box_head_forward.6} parent=31 // loop_header_branch
                %196 = sbr.rel (%p194) target = $region39
              $region36: #{roi_box_head_forward.6} parent=31 // loop_body
                %v200 = vld [vmem:[%s198] sm:$0xff]
                %201 = vst [vmem:[%s199] sm:$0xff] %v200
                %v202 = vld [vmem:[%s198 + $0x8] sm:$0xff]
                %203 = vst [vmem:[%s199 + $0x8] sm:$0xff] %v202
                %v204 = vld [vmem:[%s198 + $0x10] sm:$0xff]
                %205 = vst [vmem:[%s199 + $0x10] sm:$0xff] %v204
                %v206 = vld [vmem:[%s198 + $0x18] sm:$0xff]
                %207 = vst [vmem:[%s199 + $0x18] sm:$0xff] %v206
                %v208 = vld [vmem:[%s198 + $0x20] sm:$0xff]
                %209 = vst [vmem:[%s199 + $0x20] sm:$0xff] %v208
                %v210 = vld [vmem:[%s198 + $0x50] sm:$0xff]
                %211 = vst [vmem:[%s199 + $0x28] sm:$0xff] %v210
                %v212 = vld [vmem:[%s198 + $0x58] sm:$0xff]
                %213 = vst [vmem:[%s199 + $0x30] sm:$0xff] %v212
                %v214 = vld [vmem:[%s198 + $0x60] sm:$0xff]
                %215 = vst [vmem:[%s199 + $0x38] sm:$0xff] %v214
                %v216 = vld [vmem:[%s198 + $0x68] sm:$0xff]
                %217 = vst [vmem:[%s199 + $0x40] sm:$0xff] %v216
                %v218 = vld [vmem:[%s198 + $0x70] sm:$0xff]
                %219 = vst [vmem:[%s199 + $0x48] sm:$0xff] %v218
              $region37: #{roi_box_head_forward.6} parent=31 // loop_footer
                %s197 = sadd.s32 1, %s193
              $region38: #{roi_box_head_forward.6} parent=31 // loop_footer_branch
                %192 = sbr.rel target = $region34
              $region39: #{roi_box_head_forward.6} parent=31 // loop_exit
                _
            $region32: #{roi_box_head_forward.6} parent=27 // pred_fallthru
              _
            // Predicated region
            $region40: #{roi_box_head_forward.6} parent=27 // pred_check
              _
            $region41: #{roi_box_head_forward.6} parent=27 // pred_check_branch
              %221 = sbr.rel target = $region43
            $region42: #{roi_box_head_forward.6} parent=27 // pred_region
              _
            $region43: #{roi_box_head_forward.6} parent=27 // pred_fallthru
              _
          $region28: #{roi_box_head_forward.6} parent=23 // pred_fallthru
            _
          %222 = vnop
        $region24: #{roi_box_head_forward.6} parent=19 // pred_fallthru
          _
        // Predicated region
        $region44: #{roi_box_head_forward.6} parent=19 // pred_check
          %p223 = pneg %p82
        $region45: #{roi_box_head_forward.6} parent=19 // pred_check_branch
          %225 = sbr.rel (%p223) target = $region47
        $region46: #{roi_box_head_forward.6} parent=19 // pred_region
          %s226 = sand.u32 %s72, 1
          %s227 = scalar_lea.sflag [#allocation5], %s226
          %s228 = sand.u32 %s72, 1
          %s229 = smul.addr %s228, 1280
          %s230 = scalar_lea.vmem [#allocation4], %s229
          %s231 = smul.u32 160, %s22
          %s232 = smul.u32 2, %s21
          %234 = vsyncadd %s227, 0
          %s235 = smul.addr %s231, 2
          %s236 = sadd.s32 %s232, %s235
          %s237 = smul.addr %s236, 4
          %s238 = scalar_lea.hbm %s1, %s237
          %s239 = sshll.u32 %s238, 4
          %s240 = int_to_ptr.hbm [resolvable:$true] %s239
          %s241 = sshll.u32 %s230, 4
          %s242 = int_to_ptr.vmem [resolvable:$true] %s241
          %247 = dma.hbm_to_vmem [thread:$0]  %s240, 20480, %s242, %s227, 128, 128, 8
        $region47: #{roi_box_head_forward.6} parent=19 // pred_fallthru
          _
      $region20: #{roi_box_head_forward.6} parent=5 // pred_fallthru
        _
      %p248 = scmp.le.s32.totalorder 1, %s13
      %p249 = scmp.lt.s32.totalorder %s13, 3
      %p250 = pnand %p248, %p249
      %p251 = pneg %p250
      // Predicated region
      $region48: #{roi_box_head_forward.6} parent=5 // pred_check
        _
      $region49: #{roi_box_head_forward.6} parent=5 // pred_check_branch
        %253 = sbr.rel (%p250) target = $region51
      $region50: #{roi_box_head_forward.6} parent=5 // pred_region
        %s254 = ssub.s32 %s13, 1
        %s255 = sand.u32 %s47, 1
        %s256 = sand.u32 %s47, 1
        %s257 = smul.addr %s256, 80
        %s258 = scalar_lea.vmem [#allocation3], %s257
        // Predicated region
        $region52: #{roi_box_head_forward.6} parent=50 // pred_check
          %p259 = pneg %p60
        $region53: #{roi_box_head_forward.6} parent=50 // pred_check_branch
          %261 = sbr.rel (%p259) target = $region55
        $region54: #{roi_box_head_forward.6} parent=50 // pred_region
          _
        $region55: #{roi_box_head_forward.6} parent=50 // pred_fallthru
          _
        %s262 = sand.u32 %s75, 1
        %s263 = scalar_lea.sflag [#allocation5], %s262
        %s264 = sand.u32 %s75, 1
        %s265 = smul.addr %s264, 1280
        %s266 = scalar_lea.vmem [#allocation4], %s265
        // Predicated region
        $region56: #{roi_box_head_forward.6} parent=50 // pred_check
          %p267 = pneg %p88
        $region57: #{roi_box_head_forward.6} parent=50 // pred_check_branch
          %269 = sbr.rel (%p267) target = $region59
        $region58: #{roi_box_head_forward.6} parent=50 // pred_region
          %271 = dma.done %s263, 20480
        $region59: #{roi_box_head_forward.6} parent=50 // pred_fallthru
          _
        // Predicated region
        $region60: #{roi_box_head_forward.6} parent=50 // pred_check
          %p272 = pneg %p114
        $region61: #{roi_box_head_forward.6} parent=50 // pred_check_branch
          %274 = sbr.rel (%p272) target = $region63
        $region62: #{roi_box_head_forward.6} parent=50 // pred_region
          %276 = dma.done [#allocation7], 32
        $region63: #{roi_box_head_forward.6} parent=50 // pred_fallthru
          _
        %s277 = sand.u32 %s47, 1
        %s278 = sand.u32 %s47, 1
        %s279 = smul.addr %s278, 80
        %s280 = scalar_lea.vmem [#allocation3], %s279
        %p281 = pneg %p60
        %p282 = pneg %p57
        %s283 = sand.u32 %s75, 1
        %s284 = scalar_lea.sflag [#allocation5], %s283
        %s285 = sand.u32 %s75, 1
        %s286 = smul.addr %s285, 1280
        %s287 = scalar_lea.vmem [#allocation4], %s286
        %p288 = pneg %p88
        %p289 = pneg %p85
        %p290 = pneg %p114
        %p291 = pneg %p111
        %p292 = pneg %p142
        %p293 = pneg %p139
        %s294 = smul.u32 2, %s23
        %s295 = smul.u32 2, %s24
        %p296 = scmp.lt.s32.totalorder %s294, 1
        %s297 = scalar_select %p296, %s294, 1
        %p298 = scmp.lt.s32.totalorder %s295, 1
        %s299 = scalar_select %p298, %s295, 1
        %s300 = smul.addr %s297, 2
        %s301 = sadd.s32 %s299, %s300
        %s302 = smul.addr %s301, 4
        %s303 = scalar_lea.vmem %s3, %s302
        %s304 = smul.u32 2, %s23
        %s305 = smul.u32 10, %s25
        %s306 = smul.u32 160, %s25
        %s307 = smul.u32 2, %s24
        %s308 = smul.u32 2, %s24
        %s309 = smul.u32 2, %s23
        %s310 = smul.u32 2, %s24
        %p311 = scmp.lt.s32.totalorder %s309, 1
        %s312 = scalar_select %p311, %s309, 1
        %p313 = scmp.lt.s32.totalorder %s310, 1
        %s314 = scalar_select %p313, %s310, 1
        %s315 = smul.addr %s312, 2
        %s316 = sadd.s32 %s314, %s315
        %s317 = smul.addr %s316, 4
        %s318 = scalar_lea.vmem %s3, %s317
        %s319 = smul.u32 2, %s23
        %s320 = smul.u32 2, %s24
        %p321 = scmp.eq.s32.totalorder %s25, 0
        // Predicated region
        $region64: #{roi_box_head_forward.6} parent=50 // pred_check
          %p322 = pneg %p321
        $region65: #{roi_box_head_forward.6} parent=50 // pred_check_branch
          %324 = sbr.rel (%p322) target = $region67
        $region66: #{roi_box_head_forward.6} parent=50 // pred_region
          %325 = vst [vmem:[#allocation2] sm:$0xff] 0.0
          %326 = vst [vmem:[#allocation2 + $0x8] sm:$0xff] 0.0
          %327 = vst [vmem:[#allocation2 + $0x10] sm:$0xff] 0.0
          %328 = vst [vmem:[#allocation2 + $0x18] sm:$0xff] 0.0
        $region67: #{roi_box_head_forward.6} parent=50 // pred_fallthru
          _
        %v329 = vld [vmem:[#allocation2] sm:$0xff]
        %v330 = vld [vmem:[#allocation2 + $0x8] sm:$0xff]
        %v331 = vld [vmem:[#allocation2 + $0x10] sm:$0xff]
        %v332 = vld [vmem:[#allocation2 + $0x18] sm:$0xff]
        %v333 = vld [vmem:[%s258] sm:$0xff]
        %v334 = vld [vmem:[%s258 + $0x8] sm:$0xff]
        %v335 = vld [vmem:[%s258 + $0x10] sm:$0xff]
        %v336 = vld [vmem:[%s258 + $0x18] sm:$0xff]
        %v337 = vld [vmem:[%s258 + $0x20] sm:$0xff]
        %v338 = vld [vmem:[%s258 + $0x28] sm:$0xff]
        %v339 = vld [vmem:[%s258 + $0x30] sm:$0xff]
        %v340 = vld [vmem:[%s258 + $0x38] sm:$0xff]
        %v341 = vld [vmem:[%s258 + $0x40] sm:$0xff]
        %v342 = vld [vmem:[%s258 + $0x48] sm:$0xff]
        %v343 = vld [vmem:[%s266] sm:$0xff]
        %v344 = vld [vmem:[%s266 + $0x8] sm:$0xff]
        %v345 = vld [vmem:[%s266 + $0x10] sm:$0xff]
        %v346 = vld [vmem:[%s266 + $0x18] sm:$0xff]
        %v347 = vld [vmem:[%s266 + $0x20] sm:$0xff]
        %v348 = vld [vmem:[%s266 + $0x28] sm:$0xff]
        %v349 = vld [vmem:[%s266 + $0x30] sm:$0xff]
        %v350 = vld [vmem:[%s266 + $0x38] sm:$0xff]
        %v351 = vld [vmem:[%s266 + $0x40] sm:$0xff]
        %v352 = vld [vmem:[%s266 + $0x48] sm:$0xff]
        %v353 = vld [vmem:[%s266 + $0x50] sm:$0xff]
        %v354 = vld [vmem:[%s266 + $0x58] sm:$0xff]
        %v355 = vld [vmem:[%s266 + $0x60] sm:$0xff]
        %v356 = vld [vmem:[%s266 + $0x68] sm:$0xff]
        %v357 = vld [vmem:[%s266 + $0x70] sm:$0xff]
        %v358 = vld [vmem:[%s266 + $0x78] sm:$0xff]
        %v359 = vld [vmem:[%s266 + $0x80] sm:$0xff]
        %v360 = vld [vmem:[%s266 + $0x88] sm:$0xff]
        %v361 = vld [vmem:[%s266 + $0x90] sm:$0xff]
        %v362 = vld [vmem:[%s266 + $0x98] sm:$0xff]
        %v363 = vld [vmem:[%s266 + $0xa0] sm:$0xff]
        %v364 = vld [vmem:[%s266 + $0xa8] sm:$0xff]
        %v365 = vld [vmem:[%s266 + $0xb0] sm:$0xff]
        %v366 = vld [vmem:[%s266 + $0xb8] sm:$0xff]
        %v367 = vld [vmem:[%s266 + $0xc0] sm:$0xff]
        %v368 = vld [vmem:[%s266 + $0xc8] sm:$0xff]
        %v369 = vld [vmem:[%s266 + $0xd0] sm:$0xff]
        %v370 = vld [vmem:[%s266 + $0xd8] sm:$0xff]
        %v371 = vld [vmem:[%s266 + $0xe0] sm:$0xff]
        %v372 = vld [vmem:[%s266 + $0xe8] sm:$0xff]
        %v373 = vld [vmem:[%s266 + $0xf0] sm:$0xff]
        %v374 = vld [vmem:[%s266 + $0xf8] sm:$0xff]
        %v375 = vld [vmem:[%s266 + $0x100] sm:$0xff]
        %v376 = vld [vmem:[%s266 + $0x108] sm:$0xff]
        %v377 = vld [vmem:[%s266 + $0x110] sm:$0xff]
        %v378 = vld [vmem:[%s266 + $0x118] sm:$0xff]
        %v379 = vld [vmem:[%s266 + $0x120] sm:$0xff]
        %v380 = vld [vmem:[%s266 + $0x128] sm:$0xff]
        %v381 = vld [vmem:[%s266 + $0x130] sm:$0xff]
        %v382 = vld [vmem:[%s266 + $0x138] sm:$0xff]
        %v383 = vld [vmem:[%s266 + $0x140] sm:$0xff]
        %v384 = vld [vmem:[%s266 + $0x148] sm:$0xff]
        %v385 = vld [vmem:[%s266 + $0x150] sm:$0xff]
        %v386 = vld [vmem:[%s266 + $0x158] sm:$0xff]
        %v387 = vld [vmem:[%s266 + $0x160] sm:$0xff]
        %v388 = vld [vmem:[%s266 + $0x168] sm:$0xff]
        %v389 = vld [vmem:[%s266 + $0x170] sm:$0xff]
        %v390 = vld [vmem:[%s266 + $0x178] sm:$0xff]
        %v391 = vld [vmem:[%s266 + $0x180] sm:$0xff]
        %v392 = vld [vmem:[%s266 + $0x188] sm:$0xff]
        %v393 = vld [vmem:[%s266 + $0x190] sm:$0xff]
        %v394 = vld [vmem:[%s266 + $0x198] sm:$0xff]
        %v395 = vld [vmem:[%s266 + $0x1a0] sm:$0xff]
        %v396 = vld [vmem:[%s266 + $0x1a8] sm:$0xff]
        %v397 = vld [vmem:[%s266 + $0x1b0] sm:$0xff]
        %v398 = vld [vmem:[%s266 + $0x1b8] sm:$0xff]
        %v399 = vld [vmem:[%s266 + $0x1c0] sm:$0xff]
        %v400 = vld [vmem:[%s266 + $0x1c8] sm:$0xff]
        %v401 = vld [vmem:[%s266 + $0x1d0] sm:$0xff]
        %v402 = vld [vmem:[%s266 + $0x1d8] sm:$0xff]
        %v403 = vld [vmem:[%s266 + $0x1e0] sm:$0xff]
        %v404 = vld [vmem:[%s266 + $0x1e8] sm:$0xff]
        %v405 = vld [vmem:[%s266 + $0x1f0] sm:$0xff]
        %v406 = vld [vmem:[%s266 + $0x1f8] sm:$0xff]
        %v407 = vld [vmem:[%s266 + $0x200] sm:$0xff]
        %v408 = vld [vmem:[%s266 + $0x208] sm:$0xff]
        %v409 = vld [vmem:[%s266 + $0x210] sm:$0xff]
        %v410 = vld [vmem:[%s266 + $0x218] sm:$0xff]
        %v411 = vld [vmem:[%s266 + $0x220] sm:$0xff]
        %v412 = vld [vmem:[%s266 + $0x228] sm:$0xff]
        %v413 = vld [vmem:[%s266 + $0x230] sm:$0xff]
        %v414 = vld [vmem:[%s266 + $0x238] sm:$0xff]
        %v415 = vld [vmem:[%s266 + $0x240] sm:$0xff]
        %v416 = vld [vmem:[%s266 + $0x248] sm:$0xff]
        %v417 = vld [vmem:[%s266 + $0x250] sm:$0xff]
        %v418 = vld [vmem:[%s266 + $0x258] sm:$0xff]
        %v419 = vld [vmem:[%s266 + $0x260] sm:$0xff]
        %v420 = vld [vmem:[%s266 + $0x268] sm:$0xff]
        %v421 = vld [vmem:[%s266 + $0x270] sm:$0xff]
        %v422 = vld [vmem:[%s266 + $0x278] sm:$0xff]
        %v423 = vld [vmem:[%s266 + $0x280] sm:$0xff]
        %v424 = vld [vmem:[%s266 + $0x288] sm:$0xff]
        %v425 = vld [vmem:[%s266 + $0x290] sm:$0xff]
        %v426 = vld [vmem:[%s266 + $0x298] sm:$0xff]
        %v427 = vld [vmem:[%s266 + $0x2a0] sm:$0xff]
        %v428 = vld [vmem:[%s266 + $0x2a8] sm:$0xff]
        %v429 = vld [vmem:[%s266 + $0x2b0] sm:$0xff]
        %v430 = vld [vmem:[%s266 + $0x2b8] sm:$0xff]
        %v431 = vld [vmem:[%s266 + $0x2c0] sm:$0xff]
        %v432 = vld [vmem:[%s266 + $0x2c8] sm:$0xff]
        %v433 = vld [vmem:[%s266 + $0x2d0] sm:$0xff]
        %v434 = vld [vmem:[%s266 + $0x2d8] sm:$0xff]
        %v435 = vld [vmem:[%s266 + $0x2e0] sm:$0xff]
        %v436 = vld [vmem:[%s266 + $0x2e8] sm:$0xff]
        %v437 = vld [vmem:[%s266 + $0x2f0] sm:$0xff]
        %v438 = vld [vmem:[%s266 + $0x2f8] sm:$0xff]
        %v439 = vld [vmem:[%s266 + $0x300] sm:$0xff]
        %v440 = vld [vmem:[%s266 + $0x308] sm:$0xff]
        %v441 = vld [vmem:[%s266 + $0x310] sm:$0xff]
        %v442 = vld [vmem:[%s266 + $0x318] sm:$0xff]
        %v443 = vld [vmem:[%s266 + $0x320] sm:$0xff]
        %v444 = vld [vmem:[%s266 + $0x328] sm:$0xff]
        %v445 = vld [vmem:[%s266 + $0x330] sm:$0xff]
        %v446 = vld [vmem:[%s266 + $0x338] sm:$0xff]
        %v447 = vld [vmem:[%s266 + $0x340] sm:$0xff]
        %v448 = vld [vmem:[%s266 + $0x348] sm:$0xff]
        %v449 = vld [vmem:[%s266 + $0x350] sm:$0xff]
        %v450 = vld [vmem:[%s266 + $0x358] sm:$0xff]
        %v451 = vld [vmem:[%s266 + $0x360] sm:$0xff]
        %v452 = vld [vmem:[%s266 + $0x368] sm:$0xff]
        %v453 = vld [vmem:[%s266 + $0x370] sm:$0xff]
        %v454 = vld [vmem:[%s266 + $0x378] sm:$0xff]
        %v455 = vld [vmem:[%s266 + $0x380] sm:$0xff]
        %v456 = vld [vmem:[%s266 + $0x388] sm:$0xff]
        %v457 = vld [vmem:[%s266 + $0x390] sm:$0xff]
        %v458 = vld [vmem:[%s266 + $0x398] sm:$0xff]
        %v459 = vld [vmem:[%s266 + $0x3a0] sm:$0xff]
        %v460 = vld [vmem:[%s266 + $0x3a8] sm:$0xff]
        %v461 = vld [vmem:[%s266 + $0x3b0] sm:$0xff]
        %v462 = vld [vmem:[%s266 + $0x3b8] sm:$0xff]
        %v463 = vld [vmem:[%s266 + $0x3c0] sm:$0xff]
        %v464 = vld [vmem:[%s266 + $0x3c8] sm:$0xff]
        %v465 = vld [vmem:[%s266 + $0x3d0] sm:$0xff]
        %v466 = vld [vmem:[%s266 + $0x3d8] sm:$0xff]
        %v467 = vld [vmem:[%s266 + $0x3e0] sm:$0xff]
        %v468 = vld [vmem:[%s266 + $0x3e8] sm:$0xff]
        %v469 = vld [vmem:[%s266 + $0x3f0] sm:$0xff]
        %v470 = vld [vmem:[%s266 + $0x3f8] sm:$0xff]
        %v471 = vld [vmem:[%s266 + $0x400] sm:$0xff]
        %v472 = vld [vmem:[%s266 + $0x408] sm:$0xff]
        %v473 = vld [vmem:[%s266 + $0x410] sm:$0xff]
        %v474 = vld [vmem:[%s266 + $0x418] sm:$0xff]
        %v475 = vld [vmem:[%s266 + $0x420] sm:$0xff]
        %v476 = vld [vmem:[%s266 + $0x428] sm:$0xff]
        %v477 = vld [vmem:[%s266 + $0x430] sm:$0xff]
        %v478 = vld [vmem:[%s266 + $0x438] sm:$0xff]
        %v479 = vld [vmem:[%s266 + $0x440] sm:$0xff]
        %v480 = vld [vmem:[%s266 + $0x448] sm:$0xff]
        %v481 = vld [vmem:[%s266 + $0x450] sm:$0xff]
        %v482 = vld [vmem:[%s266 + $0x458] sm:$0xff]
        %v483 = vld [vmem:[%s266 + $0x460] sm:$0xff]
        %v484 = vld [vmem:[%s266 + $0x468] sm:$0xff]
        %v485 = vld [vmem:[%s266 + $0x470] sm:$0xff]
        %v486 = vld [vmem:[%s266 + $0x478] sm:$0xff]
        %v487 = vld [vmem:[%s266 + $0x480] sm:$0xff]
        %v488 = vld [vmem:[%s266 + $0x488] sm:$0xff]
        %v489 = vld [vmem:[%s266 + $0x490] sm:$0xff]
        %v490 = vld [vmem:[%s266 + $0x498] sm:$0xff]
        %v491 = vld [vmem:[%s266 + $0x4a0] sm:$0xff]
        %v492 = vld [vmem:[%s266 + $0x4a8] sm:$0xff]
        %v493 = vld [vmem:[%s266 + $0x4b0] sm:$0xff]
        %v494 = vld [vmem:[%s266 + $0x4b8] sm:$0xff]
        %v495 = vld [vmem:[%s266 + $0x4c0] sm:$0xff]
        %v496 = vld [vmem:[%s266 + $0x4c8] sm:$0xff]
        %v497 = vld [vmem:[%s266 + $0x4d0] sm:$0xff]
        %v498 = vld [vmem:[%s266 + $0x4d8] sm:$0xff]
        %v499 = vld [vmem:[%s266 + $0x4e0] sm:$0xff]
        %v500 = vld [vmem:[%s266 + $0x4e8] sm:$0xff]
        %v501 = vld [vmem:[%s266 + $0x4f0] sm:$0xff]
        %v502 = vld [vmem:[%s266 + $0x4f8] sm:$0xff]
        %v513 = vunpack.c.l.b16 %v333
        %v514 = vunpack.c.h.b16 %v333
        %v515 = vunpack.c.l.b16 %v334
        %v516 = vunpack.c.h.b16 %v334
        %v517 = vunpack.c.l.b16 %v335
        %v518 = vunpack.c.h.b16 %v335
        %v519 = vunpack.c.l.b16 %v336
        %v520 = vunpack.c.h.b16 %v336
        %v521 = vunpack.c.l.b16 %v337
        %v522 = vunpack.c.h.b16 %v337
        %v523 = vunpack.c.l.b16 %v338
        %v524 = vunpack.c.h.b16 %v338
        %v525 = vunpack.c.l.b16 %v339
        %v526 = vunpack.c.h.b16 %v339
        %v527 = vunpack.c.l.b16 %v340
        %v528 = vunpack.c.h.b16 %v340
        %v529 = vunpack.c.l.b16 %v341
        %v530 = vunpack.c.h.b16 %v341
        %v531 = vunpack.c.l.b16 %v342
        %v532 = vunpack.c.h.b16 %v342
        %v533 = vpack.c.b16 %v523, %v513
        %v534 = vpack.c.b16 %v524, %v514
        %v535 = vpack.c.b16 %v525, %v515
        %v536 = vpack.c.b16 %v526, %v516
        %v537 = vpack.c.b16 %v527, %v517
        %v538 = vpack.c.b16 %v528, %v518
        %v539 = vpack.c.b16 %v529, %v519
        %v540 = vpack.c.b16 %v530, %v520
        %v541 = vpack.c.b16 %v531, %v521
        %v542 = vpack.c.b16 %v532, %v522
        %v713 = vunpack.c.l.b16 %v343
        %v714 = vunpack.c.h.b16 %v343
        %v715 = vunpack.c.l.b16 %v344
        %v716 = vunpack.c.h.b16 %v344
        %v717 = vunpack.c.l.b16 %v345
        %v718 = vunpack.c.h.b16 %v345
        %v719 = vunpack.c.l.b16 %v346
        %v720 = vunpack.c.h.b16 %v346
        %v721 = vunpack.c.l.b16 %v347
        %v722 = vunpack.c.h.b16 %v347
        %v723 = vunpack.c.l.b16 %v348
        %v724 = vunpack.c.h.b16 %v348
        %v725 = vunpack.c.l.b16 %v349
        %v726 = vunpack.c.h.b16 %v349
        %v727 = vunpack.c.l.b16 %v350
        %v728 = vunpack.c.h.b16 %v350
        %v729 = vunpack.c.l.b16 %v351
        %v730 = vunpack.c.h.b16 %v351
        %v731 = vunpack.c.l.b16 %v352
        %v732 = vunpack.c.h.b16 %v352
        %v733 = vunpack.c.l.b16 %v353
        %v734 = vunpack.c.h.b16 %v353
        %v735 = vunpack.c.l.b16 %v354
        %v736 = vunpack.c.h.b16 %v354
        %v737 = vunpack.c.l.b16 %v355
        %v738 = vunpack.c.h.b16 %v355
        %v739 = vunpack.c.l.b16 %v356
        %v740 = vunpack.c.h.b16 %v356
        %v741 = vunpack.c.l.b16 %v357
        %v742 = vunpack.c.h.b16 %v357
        %v743 = vunpack.c.l.b16 %v358
        %v744 = vunpack.c.h.b16 %v358
        %v745 = vunpack.c.l.b16 %v359
        %v746 = vunpack.c.h.b16 %v359
        %v747 = vunpack.c.l.b16 %v360
        %v748 = vunpack.c.h.b16 %v360
        %v749 = vunpack.c.l.b16 %v361
        %v750 = vunpack.c.h.b16 %v361
        %v751 = vunpack.c.l.b16 %v362
        %v752 = vunpack.c.h.b16 %v362
        %v753 = vunpack.c.l.b16 %v363
        %v754 = vunpack.c.h.b16 %v363
        %v755 = vunpack.c.l.b16 %v364
        %v756 = vunpack.c.h.b16 %v364
        %v757 = vunpack.c.l.b16 %v365
        %v758 = vunpack.c.h.b16 %v365
        %v759 = vunpack.c.l.b16 %v366
        %v760 = vunpack.c.h.b16 %v366
        %v761 = vunpack.c.l.b16 %v367
        %v762 = vunpack.c.h.b16 %v367
        %v763 = vunpack.c.l.b16 %v368
        %v764 = vunpack.c.h.b16 %v368
        %v765 = vunpack.c.l.b16 %v369
        %v766 = vunpack.c.h.b16 %v369
        %v767 = vunpack.c.l.b16 %v370
        %v768 = vunpack.c.h.b16 %v370
        %v769 = vunpack.c.l.b16 %v371
        %v770 = vunpack.c.h.b16 %v371
        %v771 = vunpack.c.l.b16 %v372
        %v772 = vunpack.c.h.b16 %v372
        %v773 = vunpack.c.l.b16 %v373
        %v774 = vunpack.c.h.b16 %v373
        %v775 = vunpack.c.l.b16 %v374
        %v776 = vunpack.c.h.b16 %v374
        %v777 = vunpack.c.l.b16 %v375
        %v778 = vunpack.c.h.b16 %v375
        %v779 = vunpack.c.l.b16 %v376
        %v780 = vunpack.c.h.b16 %v376
        %v781 = vunpack.c.l.b16 %v377
        %v782 = vunpack.c.h.b16 %v377
        %v783 = vunpack.c.l.b16 %v378
        %v784 = vunpack.c.h.b16 %v378
        %v785 = vunpack.c.l.b16 %v379
        %v786 = vunpack.c.h.b16 %v379
        %v787 = vunpack.c.l.b16 %v380
        %v788 = vunpack.c.h.b16 %v380
        %v789 = vunpack.c.l.b16 %v381
        %v790 = vunpack.c.h.b16 %v381
        %v791 = vunpack.c.l.b16 %v382
        %v792 = vunpack.c.h.b16 %v382
        %v793 = vunpack.c.l.b16 %v383
        %v794 = vunpack.c.h.b16 %v383
        %v795 = vunpack.c.l.b16 %v384
        %v796 = vunpack.c.h.b16 %v384
        %v797 = vunpack.c.l.b16 %v385
        %v798 = vunpack.c.h.b16 %v385
        %v799 = vunpack.c.l.b16 %v386
        %v800 = vunpack.c.h.b16 %v386
        %v801 = vunpack.c.l.b16 %v387
        %v802 = vunpack.c.h.b16 %v387
        %v803 = vunpack.c.l.b16 %v388
        %v804 = vunpack.c.h.b16 %v388
        %v805 = vunpack.c.l.b16 %v389
        %v806 = vunpack.c.h.b16 %v389
        %v807 = vunpack.c.l.b16 %v390
        %v808 = vunpack.c.h.b16 %v390
        %v809 = vunpack.c.l.b16 %v391
        %v810 = vunpack.c.h.b16 %v391
        %v811 = vunpack.c.l.b16 %v392
        %v812 = vunpack.c.h.b16 %v392
        %v813 = vunpack.c.l.b16 %v393
        %v814 = vunpack.c.h.b16 %v393
        %v815 = vunpack.c.l.b16 %v394
        %v816 = vunpack.c.h.b16 %v394
        %v817 = vunpack.c.l.b16 %v395
        %v818 = vunpack.c.h.b16 %v395
        %v819 = vunpack.c.l.b16 %v396
        %v820 = vunpack.c.h.b16 %v396
        %v821 = vunpack.c.l.b16 %v397
        %v822 = vunpack.c.h.b16 %v397
        %v823 = vunpack.c.l.b16 %v398
        %v824 = vunpack.c.h.b16 %v398
        %v825 = vunpack.c.l.b16 %v399
        %v826 = vunpack.c.h.b16 %v399
        %v827 = vunpack.c.l.b16 %v400
        %v828 = vunpack.c.h.b16 %v400
        %v829 = vunpack.c.l.b16 %v401
        %v830 = vunpack.c.h.b16 %v401
        %v831 = vunpack.c.l.b16 %v402
        %v832 = vunpack.c.h.b16 %v402
        %v833 = vunpack.c.l.b16 %v403
        %v834 = vunpack.c.h.b16 %v403
        %v835 = vunpack.c.l.b16 %v404
        %v836 = vunpack.c.h.b16 %v404
        %v837 = vunpack.c.l.b16 %v405
        %v838 = vunpack.c.h.b16 %v405
        %v839 = vunpack.c.l.b16 %v406
        %v840 = vunpack.c.h.b16 %v406
        %v841 = vunpack.c.l.b16 %v407
        %v842 = vunpack.c.h.b16 %v407
        %v843 = vunpack.c.l.b16 %v408
        %v844 = vunpack.c.h.b16 %v408
        %v845 = vunpack.c.l.b16 %v409
        %v846 = vunpack.c.h.b16 %v409
        %v847 = vunpack.c.l.b16 %v410
        %v848 = vunpack.c.h.b16 %v410
        %v849 = vunpack.c.l.b16 %v411
        %v850 = vunpack.c.h.b16 %v411
        %v851 = vunpack.c.l.b16 %v412
        %v852 = vunpack.c.h.b16 %v412
        %v853 = vunpack.c.l.b16 %v413
        %v854 = vunpack.c.h.b16 %v413
        %v855 = vunpack.c.l.b16 %v414
        %v856 = vunpack.c.h.b16 %v414
        %v857 = vunpack.c.l.b16 %v415
        %v858 = vunpack.c.h.b16 %v415
        %v859 = vunpack.c.l.b16 %v416
        %v860 = vunpack.c.h.b16 %v416
        %v861 = vunpack.c.l.b16 %v417
        %v862 = vunpack.c.h.b16 %v417
        %v863 = vunpack.c.l.b16 %v418
        %v864 = vunpack.c.h.b16 %v418
        %v865 = vunpack.c.l.b16 %v419
        %v866 = vunpack.c.h.b16 %v419
        %v867 = vunpack.c.l.b16 %v420
        %v868 = vunpack.c.h.b16 %v420
        %v869 = vunpack.c.l.b16 %v421
        %v870 = vunpack.c.h.b16 %v421
        %v871 = vunpack.c.l.b16 %v422
        %v872 = vunpack.c.h.b16 %v422
        %v873 = vunpack.c.l.b16 %v423
        %v874 = vunpack.c.h.b16 %v423
        %v875 = vunpack.c.l.b16 %v424
        %v876 = vunpack.c.h.b16 %v424
        %v877 = vunpack.c.l.b16 %v425
        %v878 = vunpack.c.h.b16 %v425
        %v879 = vunpack.c.l.b16 %v426
        %v880 = vunpack.c.h.b16 %v426
        %v881 = vunpack.c.l.b16 %v427
        %v882 = vunpack.c.h.b16 %v427
        %v883 = vunpack.c.l.b16 %v428
        %v884 = vunpack.c.h.b16 %v428
        %v885 = vunpack.c.l.b16 %v429
        %v886 = vunpack.c.h.b16 %v429
        %v887 = vunpack.c.l.b16 %v430
        %v888 = vunpack.c.h.b16 %v430
        %v889 = vunpack.c.l.b16 %v431
        %v890 = vunpack.c.h.b16 %v431
        %v891 = vunpack.c.l.b16 %v432
        %v892 = vunpack.c.h.b16 %v432
        %v893 = vunpack.c.l.b16 %v433
        %v894 = vunpack.c.h.b16 %v433
        %v895 = vunpack.c.l.b16 %v434
        %v896 = vunpack.c.h.b16 %v434
        %v897 = vunpack.c.l.b16 %v435
        %v898 = vunpack.c.h.b16 %v435
        %v899 = vunpack.c.l.b16 %v436
        %v900 = vunpack.c.h.b16 %v436
        %v901 = vunpack.c.l.b16 %v437
        %v902 = vunpack.c.h.b16 %v437
        %v903 = vunpack.c.l.b16 %v438
        %v904 = vunpack.c.h.b16 %v438
        %v905 = vunpack.c.l.b16 %v439
        %v906 = vunpack.c.h.b16 %v439
        %v907 = vunpack.c.l.b16 %v440
        %v908 = vunpack.c.h.b16 %v440
        %v909 = vunpack.c.l.b16 %v441
        %v910 = vunpack.c.h.b16 %v441
        %v911 = vunpack.c.l.b16 %v442
        %v912 = vunpack.c.h.b16 %v442
        %v913 = vunpack.c.l.b16 %v443
        %v914 = vunpack.c.h.b16 %v443
        %v915 = vunpack.c.l.b16 %v444
        %v916 = vunpack.c.h.b16 %v444
        %v917 = vunpack.c.l.b16 %v445
        %v918 = vunpack.c.h.b16 %v445
        %v919 = vunpack.c.l.b16 %v446
        %v920 = vunpack.c.h.b16 %v446
        %v921 = vunpack.c.l.b16 %v447
        %v922 = vunpack.c.h.b16 %v447
        %v923 = vunpack.c.l.b16 %v448
        %v924 = vunpack.c.h.b16 %v448
        %v925 = vunpack.c.l.b16 %v449
        %v926 = vunpack.c.h.b16 %v449
        %v927 = vunpack.c.l.b16 %v450
        %v928 = vunpack.c.h.b16 %v450
        %v929 = vunpack.c.l.b16 %v451
        %v930 = vunpack.c.h.b16 %v451
        %v931 = vunpack.c.l.b16 %v452
        %v932 = vunpack.c.h.b16 %v452
        %v933 = vunpack.c.l.b16 %v453
        %v934 = vunpack.c.h.b16 %v453
        %v935 = vunpack.c.l.b16 %v454
        %v936 = vunpack.c.h.b16 %v454
        %v937 = vunpack.c.l.b16 %v455
        %v938 = vunpack.c.h.b16 %v455
        %v939 = vunpack.c.l.b16 %v456
        %v940 = vunpack.c.h.b16 %v456
        %v941 = vunpack.c.l.b16 %v457
        %v942 = vunpack.c.h.b16 %v457
        %v943 = vunpack.c.l.b16 %v458
        %v944 = vunpack.c.h.b16 %v458
        %v945 = vunpack.c.l.b16 %v459
        %v946 = vunpack.c.h.b16 %v459
        %v947 = vunpack.c.l.b16 %v460
        %v948 = vunpack.c.h.b16 %v460
        %v949 = vunpack.c.l.b16 %v461
        %v950 = vunpack.c.h.b16 %v461
        %v951 = vunpack.c.l.b16 %v462
        %v952 = vunpack.c.h.b16 %v462
        %v953 = vunpack.c.l.b16 %v463
        %v954 = vunpack.c.h.b16 %v463
        %v955 = vunpack.c.l.b16 %v464
        %v956 = vunpack.c.h.b16 %v464
        %v957 = vunpack.c.l.b16 %v465
        %v958 = vunpack.c.h.b16 %v465
        %v959 = vunpack.c.l.b16 %v466
        %v960 = vunpack.c.h.b16 %v466
        %v961 = vunpack.c.l.b16 %v467
        %v962 = vunpack.c.h.b16 %v467
        %v963 = vunpack.c.l.b16 %v468
        %v964 = vunpack.c.h.b16 %v468
        %v965 = vunpack.c.l.b16 %v469
        %v966 = vunpack.c.h.b16 %v469
        %v967 = vunpack.c.l.b16 %v470
        %v968 = vunpack.c.h.b16 %v470
        %v969 = vunpack.c.l.b16 %v471
        %v970 = vunpack.c.h.b16 %v471
        %v971 = vunpack.c.l.b16 %v472
        %v972 = vunpack.c.h.b16 %v472
        %v973 = vunpack.c.l.b16 %v473
        %v974 = vunpack.c.h.b16 %v473
        %v975 = vunpack.c.l.b16 %v474
        %v976 = vunpack.c.h.b16 %v474
        %v977 = vunpack.c.l.b16 %v475
        %v978 = vunpack.c.h.b16 %v475
        %v979 = vunpack.c.l.b16 %v476
        %v980 = vunpack.c.h.b16 %v476
        %v981 = vunpack.c.l.b16 %v477
        %v982 = vunpack.c.h.b16 %v477
        %v983 = vunpack.c.l.b16 %v478
        %v984 = vunpack.c.h.b16 %v478
        %v985 = vunpack.c.l.b16 %v479
        %v986 = vunpack.c.h.b16 %v479
        %v987 = vunpack.c.l.b16 %v480
        %v988 = vunpack.c.h.b16 %v480
        %v989 = vunpack.c.l.b16 %v481
        %v990 = vunpack.c.h.b16 %v481
        %v991 = vunpack.c.l.b16 %v482
        %v992 = vunpack.c.h.b16 %v482
        %v993 = vunpack.c.l.b16 %v483
        %v994 = vunpack.c.h.b16 %v483
        %v995 = vunpack.c.l.b16 %v484
        %v996 = vunpack.c.h.b16 %v484
        %v997 = vunpack.c.l.b16 %v485
        %v998 = vunpack.c.h.b16 %v485
        %v999 = vunpack.c.l.b16 %v486
        %v1000 = vunpack.c.h.b16 %v486
        %v1001 = vunpack.c.l.b16 %v487
        %v1002 = vunpack.c.h.b16 %v487
        %v1003 = vunpack.c.l.b16 %v488
        %v1004 = vunpack.c.h.b16 %v488
        %v1005 = vunpack.c.l.b16 %v489
        %v1006 = vunpack.c.h.b16 %v489
        %v1007 = vunpack.c.l.b16 %v490
        %v1008 = vunpack.c.h.b16 %v490
        %v1009 = vunpack.c.l.b16 %v491
        %v1010 = vunpack.c.h.b16 %v491
        %v1011 = vunpack.c.l.b16 %v492
        %v1012 = vunpack.c.h.b16 %v492
        %v1013 = vunpack.c.l.b16 %v493
        %v1014 = vunpack.c.h.b16 %v493
        %v1015 = vunpack.c.l.b16 %v494
        %v1016 = vunpack.c.h.b16 %v494
        %v1017 = vunpack.c.l.b16 %v495
        %v1018 = vunpack.c.h.b16 %v495
        %v1019 = vunpack.c.l.b16 %v496
        %v1020 = vunpack.c.h.b16 %v496
        %v1021 = vunpack.c.l.b16 %v497
        %v1022 = vunpack.c.h.b16 %v497
        %v1023 = vunpack.c.l.b16 %v498
        %v1024 = vunpack.c.h.b16 %v498
        %v1025 = vunpack.c.l.b16 %v499
        %v1026 = vunpack.c.h.b16 %v499
        %v1027 = vunpack.c.l.b16 %v500
        %v1028 = vunpack.c.h.b16 %v500
        %v1029 = vunpack.c.l.b16 %v501
        %v1030 = vunpack.c.h.b16 %v501
        %v1031 = vunpack.c.l.b16 %v502
        %v1032 = vunpack.c.h.b16 %v502
        %v1033 = vpack.c.b16 %v715, %v713
        %v1034 = vpack.c.b16 %v716, %v714
        %v1035 = vpack.c.b16 %v719, %v717
        %v1036 = vpack.c.b16 %v720, %v718
        %v1037 = vpack.c.b16 %v723, %v721
        %v1038 = vpack.c.b16 %v724, %v722
        %v1039 = vpack.c.b16 %v727, %v725
        %v1040 = vpack.c.b16 %v728, %v726
        %v1041 = vpack.c.b16 %v731, %v729
        %v1042 = vpack.c.b16 %v732, %v730
        %v1043 = vpack.c.b16 %v735, %v733
        %v1044 = vpack.c.b16 %v736, %v734
        %v1045 = vpack.c.b16 %v739, %v737
        %v1046 = vpack.c.b16 %v740, %v738
        %v1047 = vpack.c.b16 %v743, %v741
        %v1048 = vpack.c.b16 %v744, %v742
        %v1049 = vpack.c.b16 %v747, %v745
        %v1050 = vpack.c.b16 %v748, %v746
        %v1051 = vpack.c.b16 %v751, %v749
        %v1052 = vpack.c.b16 %v752, %v750
        %v1053 = vpack.c.b16 %v755, %v753
        %v1054 = vpack.c.b16 %v756, %v754
        %v1055 = vpack.c.b16 %v759, %v757
        %v1056 = vpack.c.b16 %v760, %v758
        %v1057 = vpack.c.b16 %v763, %v761
        %v1058 = vpack.c.b16 %v764, %v762
        %v1059 = vpack.c.b16 %v767, %v765
        %v1060 = vpack.c.b16 %v768, %v766
        %v1061 = vpack.c.b16 %v771, %v769
        %v1062 = vpack.c.b16 %v772, %v770
        %v1063 = vpack.c.b16 %v775, %v773
        %v1064 = vpack.c.b16 %v776, %v774
        %v1065 = vpack.c.b16 %v779, %v777
        %v1066 = vpack.c.b16 %v780, %v778
        %v1067 = vpack.c.b16 %v783, %v781
        %v1068 = vpack.c.b16 %v784, %v782
        %v1069 = vpack.c.b16 %v787, %v785
        %v1070 = vpack.c.b16 %v788, %v786
        %v1071 = vpack.c.b16 %v791, %v789
        %v1072 = vpack.c.b16 %v792, %v790
        %v1073 = vpack.c.b16 %v795, %v793
        %v1074 = vpack.c.b16 %v796, %v794
        %v1075 = vpack.c.b16 %v799, %v797
        %v1076 = vpack.c.b16 %v800, %v798
        %v1077 = vpack.c.b16 %v803, %v801
        %v1078 = vpack.c.b16 %v804, %v802
        %v1079 = vpack.c.b16 %v807, %v805
        %v1080 = vpack.c.b16 %v808, %v806
        %v1081 = vpack.c.b16 %v811, %v809
        %v1082 = vpack.c.b16 %v812, %v810
        %v1083 = vpack.c.b16 %v815, %v813
        %v1084 = vpack.c.b16 %v816, %v814
        %v1085 = vpack.c.b16 %v819, %v817
        %v1086 = vpack.c.b16 %v820, %v818
        %v1087 = vpack.c.b16 %v823, %v821
        %v1088 = vpack.c.b16 %v824, %v822
        %v1089 = vpack.c.b16 %v827, %v825
        %v1090 = vpack.c.b16 %v828, %v826
        %v1091 = vpack.c.b16 %v831, %v829
        %v1092 = vpack.c.b16 %v832, %v830
        %v1093 = vpack.c.b16 %v835, %v833
        %v1094 = vpack.c.b16 %v836, %v834
        %v1095 = vpack.c.b16 %v839, %v837
        %v1096 = vpack.c.b16 %v840, %v838
        %v1097 = vpack.c.b16 %v843, %v841
        %v1098 = vpack.c.b16 %v844, %v842
        %v1099 = vpack.c.b16 %v847, %v845
        %v1100 = vpack.c.b16 %v848, %v846
        %v1101 = vpack.c.b16 %v851, %v849
        %v1102 = vpack.c.b16 %v852, %v850
        %v1103 = vpack.c.b16 %v855, %v853
        %v1104 = vpack.c.b16 %v856, %v854
        %v1105 = vpack.c.b16 %v859, %v857
        %v1106 = vpack.c.b16 %v860, %v858
        %v1107 = vpack.c.b16 %v863, %v861
        %v1108 = vpack.c.b16 %v864, %v862
        %v1109 = vpack.c.b16 %v867, %v865
        %v1110 = vpack.c.b16 %v868, %v866
        %v1111 = vpack.c.b16 %v871, %v869
        %v1112 = vpack.c.b16 %v872, %v870
        %v1113 = vpack.c.b16 %v875, %v873
        %v1114 = vpack.c.b16 %v876, %v874
        %v1115 = vpack.c.b16 %v879, %v877
        %v1116 = vpack.c.b16 %v880, %v878
        %v1117 = vpack.c.b16 %v883, %v881
        %v1118 = vpack.c.b16 %v884, %v882
        %v1119 = vpack.c.b16 %v887, %v885
        %v1120 = vpack.c.b16 %v888, %v886
        %v1121 = vpack.c.b16 %v891, %v889
        %v1122 = vpack.c.b16 %v892, %v890
        %v1123 = vpack.c.b16 %v895, %v893
        %v1124 = vpack.c.b16 %v896, %v894
        %v1125 = vpack.c.b16 %v899, %v897
        %v1126 = vpack.c.b16 %v900, %v898
        %v1127 = vpack.c.b16 %v903, %v901
        %v1128 = vpack.c.b16 %v904, %v902
        %v1129 = vpack.c.b16 %v907, %v905
        %v1130 = vpack.c.b16 %v908, %v906
        %v1131 = vpack.c.b16 %v911, %v909
        %v1132 = vpack.c.b16 %v912, %v910
        %v1133 = vpack.c.b16 %v915, %v913
        %v1134 = vpack.c.b16 %v916, %v914
        %v1135 = vpack.c.b16 %v919, %v917
        %v1136 = vpack.c.b16 %v920, %v918
        %v1137 = vpack.c.b16 %v923, %v921
        %v1138 = vpack.c.b16 %v924, %v922
        %v1139 = vpack.c.b16 %v927, %v925
        %v1140 = vpack.c.b16 %v928, %v926
        %v1141 = vpack.c.b16 %v931, %v929
        %v1142 = vpack.c.b16 %v932, %v930
        %v1143 = vpack.c.b16 %v935, %v933
        %v1144 = vpack.c.b16 %v936, %v934
        %v1145 = vpack.c.b16 %v939, %v937
        %v1146 = vpack.c.b16 %v940, %v938
        %v1147 = vpack.c.b16 %v943, %v941
        %v1148 = vpack.c.b16 %v944, %v942
        %v1149 = vpack.c.b16 %v947, %v945
        %v1150 = vpack.c.b16 %v948, %v946
        %v1151 = vpack.c.b16 %v951, %v949
        %v1152 = vpack.c.b16 %v952, %v950
        %v1153 = vpack.c.b16 %v955, %v953
        %v1154 = vpack.c.b16 %v956, %v954
        %v1155 = vpack.c.b16 %v959, %v957
        %v1156 = vpack.c.b16 %v960, %v958
        %v1157 = vpack.c.b16 %v963, %v961
        %v1158 = vpack.c.b16 %v964, %v962
        %v1159 = vpack.c.b16 %v967, %v965
        %v1160 = vpack.c.b16 %v968, %v966
        %v1161 = vpack.c.b16 %v971, %v969
        %v1162 = vpack.c.b16 %v972, %v970
        %v1163 = vpack.c.b16 %v975, %v973
        %v1164 = vpack.c.b16 %v976, %v974
        %v1165 = vpack.c.b16 %v979, %v977
        %v1166 = vpack.c.b16 %v980, %v978
        %v1167 = vpack.c.b16 %v983, %v981
        %v1168 = vpack.c.b16 %v984, %v982
        %v1169 = vpack.c.b16 %v987, %v985
        %v1170 = vpack.c.b16 %v988, %v986
        %v1171 = vpack.c.b16 %v991, %v989
        %v1172 = vpack.c.b16 %v992, %v990
        %v1173 = vpack.c.b16 %v995, %v993
        %v1174 = vpack.c.b16 %v996, %v994
        %v1175 = vpack.c.b16 %v999, %v997
        %v1176 = vpack.c.b16 %v1000, %v998
        %v1177 = vpack.c.b16 %v1003, %v1001
        %v1178 = vpack.c.b16 %v1004, %v1002
        %v1179 = vpack.c.b16 %v1007, %v1005
        %v1180 = vpack.c.b16 %v1008, %v1006
        %v1181 = vpack.c.b16 %v1011, %v1009
        %v1182 = vpack.c.b16 %v1012, %v1010
        %v1183 = vpack.c.b16 %v1015, %v1013
        %v1184 = vpack.c.b16 %v1016, %v1014
        %v1185 = vpack.c.b16 %v1019, %v1017
        %v1186 = vpack.c.b16 %v1020, %v1018
        %v1187 = vpack.c.b16 %v1023, %v1021
        %v1188 = vpack.c.b16 %v1024, %v1022
        %v1189 = vpack.c.b16 %v1027, %v1025
        %v1190 = vpack.c.b16 %v1028, %v1026
        %v1191 = vpack.c.b16 %v1031, %v1029
        %v1192 = vpack.c.b16 %v1032, %v1030
        %1353 = vmatpush.bf16.msra.mxu0 %v1047
        %1354 = vmatpush.bf16.msra.mxu0 %v1045
        %1355 = vmatpush.bf16.msra.mxu0 %v1043
        %1356 = vmatpush.bf16.msra.mxu0 %v1041
        %1357 = vmatpush.bf16.msra.mxu0 %v1039
        %1358 = vmatpush.bf16.msra.mxu0 %v1037
        %1359 = vmatpush.bf16.msra.mxu0 %v1035
        %1360 = vmatpush.bf16.msra.mxu0 %v1033
        %1361 = vmatmul.bf16.gmra.mxu0 %v533
        %v1362 = vpop.f32.mrf.mxu0
        %v1363 = vadd.f32 0.0, %v1362
        %v1364 = vpop.f32.mrf.mxu0
        %v1365 = vadd.f32 0.0, %v1364
        %1366 = vdwg.mxu0
        %1367 = vmatpush.bf16.msra.mxu0 %v1063
        %1368 = vmatpush.bf16.msra.mxu0 %v1061
        %1369 = vmatpush.bf16.msra.mxu0 %v1059
        %1370 = vmatpush.bf16.msra.mxu0 %v1057
        %1371 = vmatpush.bf16.msra.mxu0 %v1055
        %1372 = vmatpush.bf16.msra.mxu0 %v1053
        %1373 = vmatpush.bf16.msra.mxu0 %v1051
        %1374 = vmatpush.bf16.msra.mxu0 %v1049
        %1375 = vmatmul.bf16.gmra.mxu0 %v534
        %v1376 = vpop.f32.mrf.mxu0
        %v1377 = vadd.f32 %v1363, %v1376
        %v1378 = vpop.f32.mrf.mxu0
        %v1379 = vadd.f32 %v1365, %v1378
        %1380 = vdwg.mxu0
        %1381 = vmatpush.bf16.msra.mxu0 %v1079
        %1382 = vmatpush.bf16.msra.mxu0 %v1077
        %1383 = vmatpush.bf16.msra.mxu0 %v1075
        %1384 = vmatpush.bf16.msra.mxu0 %v1073
        %1385 = vmatpush.bf16.msra.mxu0 %v1071
        %1386 = vmatpush.bf16.msra.mxu0 %v1069
        %1387 = vmatpush.bf16.msra.mxu0 %v1067
        %1388 = vmatpush.bf16.msra.mxu0 %v1065
        %1389 = vmatmul.bf16.gmra.mxu0 %v535
        %v1390 = vpop.f32.mrf.mxu0
        %v1391 = vadd.f32 %v1377, %v1390
        %v1392 = vpop.f32.mrf.mxu0
        %v1393 = vadd.f32 %v1379, %v1392
        %1394 = vdwg.mxu0
        %1395 = vmatpush.bf16.msra.mxu0 %v1095
        %1396 = vmatpush.bf16.msra.mxu0 %v1093
        %1397 = vmatpush.bf16.msra.mxu0 %v1091
        %1398 = vmatpush.bf16.msra.mxu0 %v1089
        %1399 = vmatpush.bf16.msra.mxu0 %v1087
        %1400 = vmatpush.bf16.msra.mxu0 %v1085
        %1401 = vmatpush.bf16.msra.mxu0 %v1083
        %1402 = vmatpush.bf16.msra.mxu0 %v1081
        %1403 = vmatmul.bf16.gmra.mxu0 %v536
        %v1404 = vpop.f32.mrf.mxu0
        %v1405 = vadd.f32 %v1391, %v1404
        %v1406 = vpop.f32.mrf.mxu0
        %v1407 = vadd.f32 %v1393, %v1406
        %1408 = vdwg.mxu0
        %1409 = vmatpush.bf16.msra.mxu0 %v1111
        %1410 = vmatpush.bf16.msra.mxu0 %v1109
        %1411 = vmatpush.bf16.msra.mxu0 %v1107
        %1412 = vmatpush.bf16.msra.mxu0 %v1105
        %1413 = vmatpush.bf16.msra.mxu0 %v1103
        %1414 = vmatpush.bf16.msra.mxu0 %v1101
        %1415 = vmatpush.bf16.msra.mxu0 %v1099
        %1416 = vmatpush.bf16.msra.mxu0 %v1097
        %1417 = vmatmul.bf16.gmra.mxu0 %v537
        %v1418 = vpop.f32.mrf.mxu0
        %v1419 = vadd.f32 %v1405, %v1418
        %v1420 = vpop.f32.mrf.mxu0
        %v1421 = vadd.f32 %v1407, %v1420
        %1422 = vdwg.mxu0
        %1423 = vmatpush.bf16.msra.mxu0 %v1127
        %1424 = vmatpush.bf16.msra.mxu0 %v1125
        %1425 = vmatpush.bf16.msra.mxu0 %v1123
        %1426 = vmatpush.bf16.msra.mxu0 %v1121
        %1427 = vmatpush.bf16.msra.mxu0 %v1119
        %1428 = vmatpush.bf16.msra.mxu0 %v1117
        %1429 = vmatpush.bf16.msra.mxu0 %v1115
        %1430 = vmatpush.bf16.msra.mxu0 %v1113
        %1431 = vmatmul.bf16.gmra.mxu0 %v538
        %v1432 = vpop.f32.mrf.mxu0
        %v1433 = vadd.f32 %v1419, %v1432
        %v1434 = vpop.f32.mrf.mxu0
        %v1435 = vadd.f32 %v1421, %v1434
        %1436 = vdwg.mxu0
        %1437 = vmatpush.bf16.msra.mxu0 %v1143
        %1438 = vmatpush.bf16.msra.mxu0 %v1141
        %1439 = vmatpush.bf16.msra.mxu0 %v1139
        %1440 = vmatpush.bf16.msra.mxu0 %v1137
        %1441 = vmatpush.bf16.msra.mxu0 %v1135
        %1442 = vmatpush.bf16.msra.mxu0 %v1133
        %1443 = vmatpush.bf16.msra.mxu0 %v1131
        %1444 = vmatpush.bf16.msra.mxu0 %v1129
        %1445 = vmatmul.bf16.gmra.mxu0 %v539
        %v1446 = vpop.f32.mrf.mxu0
        %v1447 = vadd.f32 %v1433, %v1446
        %v1448 = vpop.f32.mrf.mxu0
        %v1449 = vadd.f32 %v1435, %v1448
        %1450 = vdwg.mxu0
        %1451 = vmatpush.bf16.msra.mxu0 %v1159
        %1452 = vmatpush.bf16.msra.mxu0 %v1157
        %1453 = vmatpush.bf16.msra.mxu0 %v1155
        %1454 = vmatpush.bf16.msra.mxu0 %v1153
        %1455 = vmatpush.bf16.msra.mxu0 %v1151
        %1456 = vmatpush.bf16.msra.mxu0 %v1149
        %1457 = vmatpush.bf16.msra.mxu0 %v1147
        %1458 = vmatpush.bf16.msra.mxu0 %v1145
        %1459 = vmatmul.bf16.gmra.mxu0 %v540
        %v1460 = vpop.f32.mrf.mxu0
        %v1461 = vadd.f32 %v1447, %v1460
        %v1462 = vpop.f32.mrf.mxu0
        %v1463 = vadd.f32 %v1449, %v1462
        %1464 = vdwg.mxu0
        %1465 = vmatpush.bf16.msra.mxu0 %v1175
        %1466 = vmatpush.bf16.msra.mxu0 %v1173
        %1467 = vmatpush.bf16.msra.mxu0 %v1171
        %1468 = vmatpush.bf16.msra.mxu0 %v1169
        %1469 = vmatpush.bf16.msra.mxu0 %v1167
        %1470 = vmatpush.bf16.msra.mxu0 %v1165
        %1471 = vmatpush.bf16.msra.mxu0 %v1163
        %1472 = vmatpush.bf16.msra.mxu0 %v1161
        %1473 = vmatmul.bf16.gmra.mxu0 %v541
        %v1474 = vpop.f32.mrf.mxu0
        %v1475 = vadd.f32 %v1461, %v1474
        %v1476 = vpop.f32.mrf.mxu0
        %v1477 = vadd.f32 %v1463, %v1476
        %1478 = vdwg.mxu0
        %1479 = vmatpush.bf16.msra.mxu0 %v1191
        %1480 = vmatpush.bf16.msra.mxu0 %v1189
        %1481 = vmatpush.bf16.msra.mxu0 %v1187
        %1482 = vmatpush.bf16.msra.mxu0 %v1185
        %1483 = vmatpush.bf16.msra.mxu0 %v1183
        %1484 = vmatpush.bf16.msra.mxu0 %v1181
        %1485 = vmatpush.bf16.msra.mxu0 %v1179
        %1486 = vmatpush.bf16.msra.mxu0 %v1177
        %1487 = vmatmul.bf16.gmra.mxu0 %v542
        %v1488 = vpop.f32.mrf.mxu0
        %v1489 = vadd.f32 %v1475, %v1488
        %v1490 = vpop.f32.mrf.mxu0
        %v1491 = vadd.f32 %v1477, %v1490
        %1492 = vdwg.mxu0
        %1493 = vmatpush.bf16.msra.mxu0 %v1048
        %1494 = vmatpush.bf16.msra.mxu0 %v1046
        %1495 = vmatpush.bf16.msra.mxu0 %v1044
        %1496 = vmatpush.bf16.msra.mxu0 %v1042
        %1497 = vmatpush.bf16.msra.mxu0 %v1040
        %1498 = vmatpush.bf16.msra.mxu0 %v1038
        %1499 = vmatpush.bf16.msra.mxu0 %v1036
        %1500 = vmatpush.bf16.msra.mxu0 %v1034
        %1501 = vmatmul.bf16.gmra.mxu0 %v533
        %v1502 = vpop.f32.mrf.mxu0
        %v1503 = vadd.f32 0.0, %v1502
        %v1504 = vpop.f32.mrf.mxu0
        %v1505 = vadd.f32 0.0, %v1504
        %1506 = vdwg.mxu0
        %1507 = vmatpush.bf16.msra.mxu0 %v1064
        %1508 = vmatpush.bf16.msra.mxu0 %v1062
        %1509 = vmatpush.bf16.msra.mxu0 %v1060
        %1510 = vmatpush.bf16.msra.mxu0 %v1058
        %1511 = vmatpush.bf16.msra.mxu0 %v1056
        %1512 = vmatpush.bf16.msra.mxu0 %v1054
        %1513 = vmatpush.bf16.msra.mxu0 %v1052
        %1514 = vmatpush.bf16.msra.mxu0 %v1050
        %1515 = vmatmul.bf16.gmra.mxu0 %v534
        %v1516 = vpop.f32.mrf.mxu0
        %v1517 = vadd.f32 %v1503, %v1516
        %v1518 = vpop.f32.mrf.mxu0
        %v1519 = vadd.f32 %v1505, %v1518
        %1520 = vdwg.mxu0
        %1521 = vmatpush.bf16.msra.mxu0 %v1080
        %1522 = vmatpush.bf16.msra.mxu0 %v1078
        %1523 = vmatpush.bf16.msra.mxu0 %v1076
        %1524 = vmatpush.bf16.msra.mxu0 %v1074
        %1525 = vmatpush.bf16.msra.mxu0 %v1072
        %1526 = vmatpush.bf16.msra.mxu0 %v1070
        %1527 = vmatpush.bf16.msra.mxu0 %v1068
        %1528 = vmatpush.bf16.msra.mxu0 %v1066
        %1529 = vmatmul.bf16.gmra.mxu0 %v535
        %v1530 = vpop.f32.mrf.mxu0
        %v1531 = vadd.f32 %v1517, %v1530
        %v1532 = vpop.f32.mrf.mxu0
        %v1533 = vadd.f32 %v1519, %v1532
        %1534 = vdwg.mxu0
        %1535 = vmatpush.bf16.msra.mxu0 %v1096
        %1536 = vmatpush.bf16.msra.mxu0 %v1094
        %1537 = vmatpush.bf16.msra.mxu0 %v1092
        %1538 = vmatpush.bf16.msra.mxu0 %v1090
        %1539 = vmatpush.bf16.msra.mxu0 %v1088
        %1540 = vmatpush.bf16.msra.mxu0 %v1086
        %1541 = vmatpush.bf16.msra.mxu0 %v1084
        %1542 = vmatpush.bf16.msra.mxu0 %v1082
        %1543 = vmatmul.bf16.gmra.mxu0 %v536
        %v1544 = vpop.f32.mrf.mxu0
        %v1545 = vadd.f32 %v1531, %v1544
        %v1546 = vpop.f32.mrf.mxu0
        %v1547 = vadd.f32 %v1533, %v1546
        %1548 = vdwg.mxu0
        %1549 = vmatpush.bf16.msra.mxu0 %v1112
        %1550 = vmatpush.bf16.msra.mxu0 %v1110
        %1551 = vmatpush.bf16.msra.mxu0 %v1108
        %1552 = vmatpush.bf16.msra.mxu0 %v1106
        %1553 = vmatpush.bf16.msra.mxu0 %v1104
        %1554 = vmatpush.bf16.msra.mxu0 %v1102
        %1555 = vmatpush.bf16.msra.mxu0 %v1100
        %1556 = vmatpush.bf16.msra.mxu0 %v1098
        %1557 = vmatmul.bf16.gmra.mxu0 %v537
        %v1558 = vpop.f32.mrf.mxu0
        %v1559 = vadd.f32 %v1545, %v1558
        %v1560 = vpop.f32.mrf.mxu0
        %v1561 = vadd.f32 %v1547, %v1560
        %1562 = vdwg.mxu0
        %1563 = vmatpush.bf16.msra.mxu0 %v1128
        %1564 = vmatpush.bf16.msra.mxu0 %v1126
        %1565 = vmatpush.bf16.msra.mxu0 %v1124
        %1566 = vmatpush.bf16.msra.mxu0 %v1122
        %1567 = vmatpush.bf16.msra.mxu0 %v1120
        %1568 = vmatpush.bf16.msra.mxu0 %v1118
        %1569 = vmatpush.bf16.msra.mxu0 %v1116
        %1570 = vmatpush.bf16.msra.mxu0 %v1114
        %1571 = vmatmul.bf16.gmra.mxu0 %v538
        %v1572 = vpop.f32.mrf.mxu0
        %v1573 = vadd.f32 %v1559, %v1572
        %v1574 = vpop.f32.mrf.mxu0
        %v1575 = vadd.f32 %v1561, %v1574
        %1576 = vdwg.mxu0
        %1577 = vmatpush.bf16.msra.mxu0 %v1144
        %1578 = vmatpush.bf16.msra.mxu0 %v1142
        %1579 = vmatpush.bf16.msra.mxu0 %v1140
        %1580 = vmatpush.bf16.msra.mxu0 %v1138
        %1581 = vmatpush.bf16.msra.mxu0 %v1136
        %1582 = vmatpush.bf16.msra.mxu0 %v1134
        %1583 = vmatpush.bf16.msra.mxu0 %v1132
        %1584 = vmatpush.bf16.msra.mxu0 %v1130
        %1585 = vmatmul.bf16.gmra.mxu0 %v539
        %v1586 = vpop.f32.mrf.mxu0
        %v1587 = vadd.f32 %v1573, %v1586
        %v1588 = vpop.f32.mrf.mxu0
        %v1589 = vadd.f32 %v1575, %v1588
        %1590 = vdwg.mxu0
        %1591 = vmatpush.bf16.msra.mxu0 %v1160
        %1592 = vmatpush.bf16.msra.mxu0 %v1158
        %1593 = vmatpush.bf16.msra.mxu0 %v1156
        %1594 = vmatpush.bf16.msra.mxu0 %v1154
        %1595 = vmatpush.bf16.msra.mxu0 %v1152
        %1596 = vmatpush.bf16.msra.mxu0 %v1150
        %1597 = vmatpush.bf16.msra.mxu0 %v1148
        %1598 = vmatpush.bf16.msra.mxu0 %v1146
        %1599 = vmatmul.bf16.gmra.mxu0 %v540
        %v1600 = vpop.f32.mrf.mxu0
        %v1601 = vadd.f32 %v1587, %v1600
        %v1602 = vpop.f32.mrf.mxu0
        %v1603 = vadd.f32 %v1589, %v1602
        %1604 = vdwg.mxu0
        %1605 = vmatpush.bf16.msra.mxu0 %v1176
        %1606 = vmatpush.bf16.msra.mxu0 %v1174
        %1607 = vmatpush.bf16.msra.mxu0 %v1172
        %1608 = vmatpush.bf16.msra.mxu0 %v1170
        %1609 = vmatpush.bf16.msra.mxu0 %v1168
        %1610 = vmatpush.bf16.msra.mxu0 %v1166
        %1611 = vmatpush.bf16.msra.mxu0 %v1164
        %1612 = vmatpush.bf16.msra.mxu0 %v1162
        %1613 = vmatmul.bf16.gmra.mxu0 %v541
        %v1614 = vpop.f32.mrf.mxu0
        %v1615 = vadd.f32 %v1601, %v1614
        %v1616 = vpop.f32.mrf.mxu0
        %v1617 = vadd.f32 %v1603, %v1616
        %1618 = vdwg.mxu0
        %1619 = vmatpush.bf16.msra.mxu0 %v1192
        %1620 = vmatpush.bf16.msra.mxu0 %v1190
        %1621 = vmatpush.bf16.msra.mxu0 %v1188
        %1622 = vmatpush.bf16.msra.mxu0 %v1186
        %1623 = vmatpush.bf16.msra.mxu0 %v1184
        %1624 = vmatpush.bf16.msra.mxu0 %v1182
        %1625 = vmatpush.bf16.msra.mxu0 %v1180
        %1626 = vmatpush.bf16.msra.mxu0 %v1178
        %1627 = vmatmul.bf16.gmra.mxu0 %v542
        %v1628 = vpop.f32.mrf.mxu0
        %v1629 = vadd.f32 %v1615, %v1628
        %v1630 = vpop.f32.mrf.mxu0
        %v1631 = vadd.f32 %v1617, %v1630
        %1632 = vdwg.mxu0
        %v1633 = vadd.f32 %v329, %v1489
        %v1634 = vadd.f32 %v330, %v1629
        %v1635 = vadd.f32 %v331, %v1491
        %v1636 = vadd.f32 %v332, %v1631
        %1637 = vst [vmem:[#allocation2] sm:$0xff] %v1633
        %1638 = vst [vmem:[#allocation2 + $0x8] sm:$0xff] %v1634
        %1639 = vst [vmem:[#allocation2 + $0x10] sm:$0xff] %v1635
        %1640 = vst [vmem:[#allocation2 + $0x18] sm:$0xff] %v1636
        %p1641 = scmp.eq.s32.totalorder %s25, 1
        // Predicated region
        $region68: #{roi_box_head_forward.6} parent=50 // pred_check
          %p1642 = pneg %p1641
        $region69: #{roi_box_head_forward.6} parent=50 // pred_check_branch
          %1644 = sbr.rel (%p1642) target = $region71
        $region70: #{roi_box_head_forward.6} parent=50 // pred_region
          %v1645 = vld [vmem:[#allocation2] sm:$0xff]
          %v1646 = vld [vmem:[#allocation2 + $0x8] sm:$0xff]
          %v1647 = vld [vmem:[#allocation2 + $0x10] sm:$0xff]
          %v1648 = vld [vmem:[#allocation2 + $0x18] sm:$0xff]
          %v1649 = vld [vmem:[#allocation6] sm:$0x3]
          %v1651 = vperm.slane %v1649, 0
          %v1652 = vperm.slane %v1649, 1
          %v1655 = vadd.f32 %v1645, %v1651
          %v1656 = vadd.f32 %v1646, %v1652
          %v1657 = vadd.f32 %v1647, %v1651
          %v1658 = vadd.f32 %v1648, %v1652
          %vm1659 = vcmp.ge.f32.partialorder %v1655, 0.0
          %vm1660 = vcmp.ge.f32.partialorder %v1656, 0.0
          %vm1661 = vcmp.ge.f32.partialorder %v1657, 0.0
          %vm1662 = vcmp.ge.f32.partialorder %v1658, 0.0
          %v1663 = vmul.f32 %v1655, 0.2
          %v1664 = vmul.f32 %v1656, 0.2
          %v1665 = vmul.f32 %v1657, 0.2
          %v1666 = vmul.f32 %v1658, 0.2
          %v1667 = vsel %vm1659, %v1655, %v1663
          %v1668 = vsel %vm1660, %v1656, %v1664
          %v1669 = vsel %vm1661, %v1657, %v1665
          %v1670 = vsel %vm1662, %v1658, %v1666
          %v1671 = vpack.c.bf16 %v1668, %v1667
          %v1672 = vpack.c.bf16 %v1670, %v1669
          %1673 = vst [vmem:[%s318] sm:$0xff] %v1671
          %1674 = vst [vmem:[%s318 + $0x8] sm:$0xff] %v1672
        $region71: #{roi_box_head_forward.6} parent=50 // pred_fallthru
          _
        %s1675 = smul.u32 2, %s23
        %s1676 = smul.u32 2, %s24
        %p1677 = scmp.lt.s32.totalorder %s1675, 1
        %s1678 = scalar_select %p1677, %s1675, 1
        %p1679 = scmp.lt.s32.totalorder %s1676, 1
        %s1680 = scalar_select %p1679, %s1676, 1
        %s1681 = smul.addr %s1678, 2
        %s1682 = sadd.s32 %s1680, %s1681
        %s1683 = smul.addr %s1682, 4
        %s1684 = scalar_lea.vmem %s3, %s1683
        // Predicated region
        $region72: #{roi_box_head_forward.6} parent=50 // pred_check
          %p1685 = pneg %p139
        $region73: #{roi_box_head_forward.6} parent=50 // pred_check_branch
          %1687 = sbr.rel (%p1685) target = $region75
        $region74: #{roi_box_head_forward.6} parent=50 // pred_region
          %s1688 = smul.u32 2, %s23
          %s1689 = smul.u32 2, %s24
        $region75: #{roi_box_head_forward.6} parent=50 // pred_fallthru
          _
        // Predicated region
        $region76: #{roi_box_head_forward.6} parent=50 // pred_check
          %p1690 = pneg %p139
        $region77: #{roi_box_head_forward.6} parent=50 // pred_check_branch
          %1692 = sbr.rel (%p1690) target = $region79
        $region78: #{roi_box_head_forward.6} parent=50 // pred_region
          %s1693 = smul.u32 2, %s23
          %s1694 = smul.u32 2, %s24
          %p1695 = scmp.lt.s32.totalorder %s1693, 1
          %s1696 = scalar_select %p1695, %s1693, 1
          %p1697 = scmp.lt.s32.totalorder %s1694, 1
          %s1698 = scalar_select %p1697, %s1694, 1
          %s1699 = smul.addr %s1696, 2
          %s1700 = sadd.s32 %s1698, %s1699
          %s1701 = smul.addr %s1700, 4
          %s1702 = scalar_lea.vmem %s3, %s1701
        $region79: #{roi_box_head_forward.6} parent=50 // pred_fallthru
          _
      $region51: #{roi_box_head_forward.6} parent=5 // pred_fallthru
        _
      %p1703 = scmp.le.s32.totalorder 2, %s13
      // Predicated region
      $region80: #{roi_box_head_forward.6} parent=5 // pred_check
        %p1704 = pneg %p1703
      $region81: #{roi_box_head_forward.6} parent=5 // pred_check_branch
        %1706 = sbr.rel (%p1704) target = $region83
      $region82: #{roi_box_head_forward.6} parent=5 // pred_region
        %s1707 = ssub.s32 %s13, 2
      $region83: #{roi_box_head_forward.6} parent=5 // pred_fallthru
        _
    $region6: #{roi_box_head_forward.6} parent=1 // loop_footer
      %s17 = sadd.s32 1, %s13
    $region7: #{roi_box_head_forward.6} parent=1 // loop_footer_branch
      %12 = sbr.rel target = $region3
    $region8: #{roi_box_head_forward.6} parent=1 // loop_exit
      _
    %1708 = vsyncpa [#allocation5], 1
    %s1709 = scalar_lea.sflag [#allocation5], 1
    %1710 = vsyncpa %s1709, 1
    %1711 = vsyncpa [#allocation7], 1

// kernel: roi_box_head_forward.8
$region0: #{roi_box_head_forward.8}
  #allocation0 [shape = 'u32[]', space=smem, size = 0x4, offset = 0x4, fixed_abs, tag = 'smem constant byte address 0x4 - core index']
  #allocation1 [shape = 'u32[72,128]{1,0:T(1,128)}', space=vmem, size = 0x9000, scoped, tag = 'internal scratch']
  %s0 = inlined_call_operand.vmem [shape: bf16[16,128], index: 0, kind: input, shape index: {}]
  %s1 = inlined_call_operand.hbm [shape: bf16[128,256], index: 1, kind: input, shape index: {}]
  %s2 = inlined_call_operand.hbm [shape: f32[1,256], index: 2, kind: input, shape index: {}]
  %s3 = inlined_call_operand.hbm [shape: bf16[256,256], index: 3, kind: input, shape index: {}]
  %s4 = inlined_call_operand.hbm [shape: f32[1,256], index: 4, kind: input, shape index: {}]
  %s5 = inlined_call_operand.hbm [shape: bf16[256,256], index: 5, kind: input, shape index: {}]
  %s6 = inlined_call_operand.hbm [shape: f32[1,256], index: 6, kind: input, shape index: {}]
  %s7 = inlined_call_operand.vmem [shape: bf16[16,256], index: 7, kind: output, shape index: {}]
  %s8 = sld [smem:[#allocation0]]
  $region62: #{roi_box_head_forward.8} parent=0
    _
  %s10 = ssub.s32 1, %s8
  %s11 = scalar_select 0, %s10, %s8
  $region1: #{roi_box_head_forward.8} parent=0
    #allocation2 [shape = 'u8[65536]{0}', space=vmem, size = 0x10000, scoped, tag = 'input window, operand 1, single buffered']
    #allocation3 [shape = 's32[1]{0}', space=sflag, size = 0x4, scoped, tag = 'scoped memory for roi_box_head_forward.8']
    #allocation4 [shape = 'u8[1024]{0}', space=vmem, size = 0x400, scoped, tag = 'input window, operand 2, single buffered']
    #allocation5 [shape = 's32[1]{0}', space=sflag, size = 0x4, scoped, tag = 'scoped memory for roi_box_head_forward.8']
    #allocation6 [shape = 'u8[131072]{0}', space=vmem, size = 0x20000, scoped, tag = 'input window, operand 3, single buffered']
    #allocation7 [shape = 'u8[1024]{0}', space=vmem, size = 0x400, scoped, tag = 'input window, operand 4, single buffered']
    #allocation8 [shape = 's32[1]{0}', space=sflag, size = 0x4, scoped, tag = 'scoped memory for roi_box_head_forward.8']
    #allocation9 [shape = 'u8[131072]{0}', space=vmem, size = 0x20000, scoped, tag = 'input window, operand 5, single buffered']
    #allocation10 [shape = 'u8[1024]{0}', space=vmem, size = 0x400, scoped, tag = 'input window, operand 6, single buffered']
    #allocation11 [shape = 's32[1]{0}', space=sflag, size = 0x4, scoped, tag = 'scoped memory for roi_box_head_forward.8']
    %12 = vsyncpa [#allocation3], 0
    %13 = vsyncpa [#allocation5], 0
    %14 = vsyncpa [#allocation8], 0
    %15 = vsyncpa [#allocation11], 0
    // Predicated region
    $region2: #{roi_box_head_forward.8} parent=1 // pred_check
      _
    $region3: #{roi_box_head_forward.8} parent=1 // pred_check_branch
      %17 = sbr.rel (0) target = $region5
    $region4: #{roi_box_head_forward.8} parent=1 // pred_region
      _
    $region5: #{roi_box_head_forward.8} parent=1 // pred_fallthru
      _
    // Predicated region
    $region6: #{roi_box_head_forward.8} parent=1 // pred_check
      _
    $region7: #{roi_box_head_forward.8} parent=1 // pred_check_branch
      %19 = sbr.rel (0) target = $region9
    $region8: #{roi_box_head_forward.8} parent=1 // pred_region
      %21 = vsyncadd [#allocation3], 0
      %s22 = sshll.u32 %s1, 4
      %s23 = int_to_ptr.hbm [resolvable:$true] %s22
      %s24 = sshll.u32 [#allocation2], 4
      %s25 = int_to_ptr.vmem [resolvable:$true] %s24
      %30 = dma.hbm_to_vmem [thread:$0]  %s23, 2048, %s25, [#allocation3], 128, 128, 8
    $region9: #{roi_box_head_forward.8} parent=1 // pred_fallthru
      _
    // Predicated region
    $region10: #{roi_box_head_forward.8} parent=1 // pred_check
      _
    $region11: #{roi_box_head_forward.8} parent=1 // pred_check_branch
      %32 = sbr.rel (0) target = $region13
    $region12: #{roi_box_head_forward.8} parent=1 // pred_region
      %34 = vsyncadd [#allocation5], 0
      %s36 = sshll.u32 %s2, 4
      %s37 = int_to_ptr.hbm [resolvable:$true] %s36
      %s38 = sshll.u32 [#allocation4], 4
      %s39 = int_to_ptr.vmem [resolvable:$true] %s38
      %41 = dma.hbm_to_vmem [thread:$0]  %s37, 32, %s39, [#allocation5]
    $region13: #{roi_box_head_forward.8} parent=1 // pred_fallthru
      _
    // Predicated region
    $region14: #{roi_box_head_forward.8} parent=1 // pred_check
      _
    $region15: #{roi_box_head_forward.8} parent=1 // pred_check_branch
      %43 = sbr.rel (0) target = $region17
    $region16: #{roi_box_head_forward.8} parent=1 // pred_region
      %45 = vsyncadd [#allocation5], 0
      %s46 = sshll.u32 %s3, 4
      %s47 = int_to_ptr.hbm [resolvable:$true] %s46
      %s48 = sshll.u32 [#allocation6], 4
      %s49 = int_to_ptr.vmem [resolvable:$true] %s48
      %54 = dma.hbm_to_vmem [thread:$0]  %s47, 4096, %s49, [#allocation5], 128, 128, 8
    $region17: #{roi_box_head_forward.8} parent=1 // pred_fallthru
      _
    // Predicated region
    $region18: #{roi_box_head_forward.8} parent=1 // pred_check
      _
    $region19: #{roi_box_head_forward.8} parent=1 // pred_check_branch
      %56 = sbr.rel (0) target = $region21
    $region20: #{roi_box_head_forward.8} parent=1 // pred_region
      %58 = vsyncadd [#allocation8], 0
      %s60 = sshll.u32 %s4, 4
      %s61 = int_to_ptr.hbm [resolvable:$true] %s60
      %s62 = sshll.u32 [#allocation7], 4
      %s63 = int_to_ptr.vmem [resolvable:$true] %s62
      %65 = dma.hbm_to_vmem [thread:$0]  %s61, 32, %s63, [#allocation8]
    $region21: #{roi_box_head_forward.8} parent=1 // pred_fallthru
      _
    // Predicated region
    $region22: #{roi_box_head_forward.8} parent=1 // pred_check
      _
    $region23: #{roi_box_head_forward.8} parent=1 // pred_check_branch
      %67 = sbr.rel (0) target = $region25
    $region24: #{roi_box_head_forward.8} parent=1 // pred_region
      %69 = vsyncadd [#allocation8], 0
      %s70 = sshll.u32 %s5, 4
      %s71 = int_to_ptr.hbm [resolvable:$true] %s70
      %s72 = sshll.u32 [#allocation9], 4
      %s73 = int_to_ptr.vmem [resolvable:$true] %s72
      %78 = dma.hbm_to_vmem [thread:$0]  %s71, 4096, %s73, [#allocation8], 128, 128, 8
    $region25: #{roi_box_head_forward.8} parent=1 // pred_fallthru
      _
    // Predicated region
    $region26: #{roi_box_head_forward.8} parent=1 // pred_check
      _
    $region27: #{roi_box_head_forward.8} parent=1 // pred_check_branch
      %80 = sbr.rel (0) target = $region29
    $region28: #{roi_box_head_forward.8} parent=1 // pred_region
      %82 = vsyncadd [#allocation11], 0
      %s84 = sshll.u32 %s6, 4
      %s85 = int_to_ptr.hbm [resolvable:$true] %s84
      %s86 = sshll.u32 [#allocation10], 4
      %s87 = int_to_ptr.vmem [resolvable:$true] %s86
      %89 = dma.hbm_to_vmem [thread:$0]  %s85, 32, %s87, [#allocation11]
    $region29: #{roi_box_head_forward.8} parent=1 // pred_fallthru
      _
    // Predicated region
    $region30: #{roi_box_head_forward.8} parent=1 // pred_check
      _
    $region31: #{roi_box_head_forward.8} parent=1 // pred_check_branch
      %91 = sbr.rel (0) target = $region33
    $region32: #{roi_box_head_forward.8} parent=1 // pred_region
      %93 = dma.done [#allocation3], 2048
    $region33: #{roi_box_head_forward.8} parent=1 // pred_fallthru
      _
    // Predicated region
    $region34: #{roi_box_head_forward.8} parent=1 // pred_check
      _
    $region35: #{roi_box_head_forward.8} parent=1 // pred_check_branch
      %95 = sbr.rel (0) target = $region37
    $region36: #{roi_box_head_forward.8} parent=1 // pred_region
      %97 = dma.done [#allocation5], 32
    $region37: #{roi_box_head_forward.8} parent=1 // pred_fallthru
      _
    // Predicated region
    $region38: #{roi_box_head_forward.8} parent=1 // pred_check
      _
    $region39: #{roi_box_head_forward.8} parent=1 // pred_check_branch
      %99 = sbr.rel (0) target = $region41
    $region40: #{roi_box_head_forward.8} parent=1 // pred_region
      %101 = dma.done [#allocation5], 4096
    $region41: #{roi_box_head_forward.8} parent=1 // pred_fallthru
      _
    // Predicated region
    $region42: #{roi_box_head_forward.8} parent=1 // pred_check
      _
    $region43: #{roi_box_head_forward.8} parent=1 // pred_check_branch
      %103 = sbr.rel (0) target = $region45
    $region44: #{roi_box_head_forward.8} parent=1 // pred_region
      %105 = dma.done [#allocation8], 32
    $region45: #{roi_box_head_forward.8} parent=1 // pred_fallthru
      _
    // Predicated region
    $region46: #{roi_box_head_forward.8} parent=1 // pred_check
      _
    $region47: #{roi_box_head_forward.8} parent=1 // pred_check_branch
      %107 = sbr.rel (0) target = $region49
    $region48: #{roi_box_head_forward.8} parent=1 // pred_region
      %109 = dma.done [#allocation8], 4096
    $region49: #{roi_box_head_forward.8} parent=1 // pred_fallthru
      _
    // Predicated region
    $region50: #{roi_box_head_forward.8} parent=1 // pred_check
      _
    $region51: #{roi_box_head_forward.8} parent=1 // pred_check_branch
      %111 = sbr.rel (0) target = $region53
    $region52: #{roi_box_head_forward.8} parent=1 // pred_region
      %113 = dma.done [#allocation11], 32
    $region53: #{roi_box_head_forward.8} parent=1 // pred_fallthru
      _
    %v114 = vld [vmem:[%s0] sm:$0xf]
    %v115 = vld [vmem:[%s0 + $0x4] sm:$0xf]
    %v116 = vld [vmem:[#allocation2] sm:$0xff]
    %v117 = vld [vmem:[#allocation2 + $0x8] sm:$0xff]
    %v118 = vld [vmem:[#allocation2 + $0x10] sm:$0xff]
    %v119 = vld [vmem:[#allocation2 + $0x18] sm:$0xff]
    %v120 = vld [vmem:[#allocation2 + $0x20] sm:$0xff]
    %v121 = vld [vmem:[#allocation2 + $0x28] sm:$0xff]
    %v122 = vld [vmem:[#allocation2 + $0x30] sm:$0xff]
    %v123 = vld [vmem:[#allocation2 + $0x38] sm:$0xff]
    %v124 = vld [vmem:[#allocation2 + $0x40] sm:$0xff]
    %v125 = vld [vmem:[#allocation2 + $0x48] sm:$0xff]
    %v126 = vld [vmem:[#allocation2 + $0x50] sm:$0xff]
    %v127 = vld [vmem:[#allocation2 + $0x58] sm:$0xff]
    %v128 = vld [vmem:[#allocation2 + $0x60] sm:$0xff]
    %v129 = vld [vmem:[#allocation2 + $0x68] sm:$0xff]
    %v130 = vld [vmem:[#allocation2 + $0x70] sm:$0xff]
    %v131 = vld [vmem:[#allocation2 + $0x78] sm:$0xff]
    %v132 = vld [vmem:[#allocation4] sm:$0x3]
    %v134 = vperm.slane %v132, 0
    %v135 = vperm.slane %v132, 1
    %v140 = vunpack.c.l.b16 %v114
    %v141 = vunpack.c.l.b16 %v115
    %v142 = vpack.c.b16 %v141, %v140
    %v160 = vunpack.c.l.b16 %v116
    %v161 = vunpack.c.h.b16 %v116
    %v162 = vunpack.c.l.b16 %v117
    %v163 = vunpack.c.h.b16 %v117
    %v164 = vunpack.c.l.b16 %v118
    %v165 = vunpack.c.h.b16 %v118
    %v166 = vunpack.c.l.b16 %v119
    %v167 = vunpack.c.h.b16 %v119
    %v168 = vunpack.c.l.b16 %v120
    %v169 = vunpack.c.h.b16 %v120
    %v170 = vunpack.c.l.b16 %v121
    %v171 = vunpack.c.h.b16 %v121
    %v172 = vunpack.c.l.b16 %v122
    %v173 = vunpack.c.h.b16 %v122
    %v174 = vunpack.c.l.b16 %v123
    %v175 = vunpack.c.h.b16 %v123
    %v176 = vunpack.c.l.b16 %v124
    %v177 = vunpack.c.h.b16 %v124
    %v178 = vunpack.c.l.b16 %v125
    %v179 = vunpack.c.h.b16 %v125
    %v180 = vunpack.c.l.b16 %v126
    %v181 = vunpack.c.h.b16 %v126
    %v182 = vunpack.c.l.b16 %v127
    %v183 = vunpack.c.h.b16 %v127
    %v184 = vunpack.c.l.b16 %v128
    %v185 = vunpack.c.h.b16 %v128
    %v186 = vunpack.c.l.b16 %v129
    %v187 = vunpack.c.h.b16 %v129
    %v188 = vunpack.c.l.b16 %v130
    %v189 = vunpack.c.h.b16 %v130
    %v190 = vunpack.c.l.b16 %v131
    %v191 = vunpack.c.h.b16 %v131
    %v192 = vpack.c.b16 %v162, %v160
    %v193 = vpack.c.b16 %v163, %v161
    %v194 = vpack.c.b16 %v166, %v164
    %v195 = vpack.c.b16 %v167, %v165
    %v196 = vpack.c.b16 %v170, %v168
    %v197 = vpack.c.b16 %v171, %v169
    %v198 = vpack.c.b16 %v174, %v172
    %v199 = vpack.c.b16 %v175, %v173
    %v200 = vpack.c.b16 %v178, %v176
    %v201 = vpack.c.b16 %v179, %v177
    %v202 = vpack.c.b16 %v182, %v180
    %v203 = vpack.c.b16 %v183, %v181
    %v204 = vpack.c.b16 %v186, %v184
    %v205 = vpack.c.b16 %v187, %v185
    %v206 = vpack.c.b16 %v190, %v188
    %v207 = vpack.c.b16 %v191, %v189
    %224 = vmatpush.bf16.msra.mxu0 %v206
    %225 = vmatpush.bf16.msra.mxu0 %v204
    %226 = vmatpush.bf16.msra.mxu0 %v202
    %227 = vmatpush.bf16.msra.mxu0 %v200
    %228 = vmatpush.bf16.msra.mxu0 %v198
    %229 = vmatpush.bf16.msra.mxu0 %v196
    %230 = vmatpush.bf16.msra.mxu0 %v194
    %231 = vmatpush.bf16.msra.mxu0 %v192
    %232 = vmatmul.bf16.gmra.mxu0 %v142
    %v233 = vpop.f32.mrf.mxu0
    %v234 = vadd.f32 %v134, %v233
    %v235 = vpop.f32.mrf.mxu0
    %v236 = vadd.f32 %v134, %v235
    %237 = vdwg.mxu0
    %238 = vmatpush.bf16.msra.mxu0 %v207
    %239 = vmatpush.bf16.msra.mxu0 %v205
    %240 = vmatpush.bf16.msra.mxu0 %v203
    %241 = vmatpush.bf16.msra.mxu0 %v201
    %242 = vmatpush.bf16.msra.mxu0 %v199
    %243 = vmatpush.bf16.msra.mxu0 %v197
    %244 = vmatpush.bf16.msra.mxu0 %v195
    %245 = vmatpush.bf16.msra.mxu0 %v193
    %246 = vmatmul.bf16.gmra.mxu0 %v142
    %v247 = vpop.f32.mrf.mxu0
    %v248 = vadd.f32 %v135, %v247
    %v249 = vpop.f32.mrf.mxu0
    %v250 = vadd.f32 %v135, %v249
    %251 = vdwg.mxu0
    %vm252 = vcmp.ge.f32.partialorder %v234, 0.0
    %vm253 = vcmp.ge.f32.partialorder %v248, 0.0
    %vm254 = vcmp.ge.f32.partialorder %v236, 0.0
    %vm255 = vcmp.ge.f32.partialorder %v250, 0.0
    %v256 = vmul.f32 %v234, 0.2
    %v257 = vmul.f32 %v248, 0.2
    %v258 = vmul.f32 %v236, 0.2
    %v259 = vmul.f32 %v250, 0.2
    %v260 = vsel %vm252, %v234, %v256
    %v261 = vsel %vm253, %v248, %v257
    %v262 = vsel %vm254, %v236, %v258
    %v263 = vsel %vm255, %v250, %v259
    %v264 = vpack.c.bf16 %v262, %v260
    %v265 = vpack.c.bf16 %v263, %v261
    %v266 = vld [vmem:[#allocation6] sm:$0xff]
    %v267 = vld [vmem:[#allocation6 + $0x8] sm:$0xff]
    %v268 = vld [vmem:[#allocation6 + $0x10] sm:$0xff]
    %v269 = vld [vmem:[#allocation6 + $0x18] sm:$0xff]
    %v270 = vld [vmem:[#allocation6 + $0x20] sm:$0xff]
    %v271 = vld [vmem:[#allocation6 + $0x28] sm:$0xff]
    %v272 = vld [vmem:[#allocation6 + $0x30] sm:$0xff]
    %v273 = vld [vmem:[#allocation6 + $0x38] sm:$0xff]
    %v274 = vld [vmem:[#allocation6 + $0x40] sm:$0xff]
    %v275 = vld [vmem:[#allocation6 + $0x48] sm:$0xff]
    %v276 = vld [vmem:[#allocation6 + $0x50] sm:$0xff]
    %v277 = vld [vmem:[#allocation6 + $0x58] sm:$0xff]
    %v278 = vld [vmem:[#allocation6 + $0x60] sm:$0xff]
    %v279 = vld [vmem:[#allocation6 + $0x68] sm:$0xff]
    %v280 = vld [vmem:[#allocation6 + $0x70] sm:$0xff]
    %v281 = vld [vmem:[#allocation6 + $0x78] sm:$0xff]
    %v282 = vld [vmem:[#allocation6 + $0x80] sm:$0xff]
    %v283 = vld [vmem:[#allocation6 + $0x88] sm:$0xff]
    %v284 = vld [vmem:[#allocation6 + $0x90] sm:$0xff]
    %v285 = vld [vmem:[#allocation6 + $0x98] sm:$0xff]
    %v286 = vld [vmem:[#allocation6 + $0xa0] sm:$0xff]
    %v287 = vld [vmem:[#allocation6 + $0xa8] sm:$0xff]
    %v288 = vld [vmem:[#allocation6 + $0xb0] sm:$0xff]
    %v289 = vld [vmem:[#allocation6 + $0xb8] sm:$0xff]
    %v290 = vld [vmem:[#allocation6 + $0xc0] sm:$0xff]
    %v291 = vld [vmem:[#allocation6 + $0xc8] sm:$0xff]
    %v292 = vld [vmem:[#allocation6 + $0xd0] sm:$0xff]
    %v293 = vld [vmem:[#allocation6 + $0xd8] sm:$0xff]
    %v294 = vld [vmem:[#allocation6 + $0xe0] sm:$0xff]
    %v295 = vld [vmem:[#allocation6 + $0xe8] sm:$0xff]
    %v296 = vld [vmem:[#allocation6 + $0xf0] sm:$0xff]
    %v297 = vld [vmem:[#allocation6 + $0xf8] sm:$0xff]
    %v298 = vld [vmem:[#allocation7] sm:$0x3]
    %v300 = vperm.slane %v298, 0
    %v301 = vperm.slane %v298, 1
    %v336 = vunpack.c.l.b16 %v266
    %v337 = vunpack.c.h.b16 %v266
    %v338 = vunpack.c.l.b16 %v267
    %v339 = vunpack.c.h.b16 %v267
    %v340 = vunpack.c.l.b16 %v268
    %v341 = vunpack.c.h.b16 %v268
    %v342 = vunpack.c.l.b16 %v269
    %v343 = vunpack.c.h.b16 %v269
    %v344 = vunpack.c.l.b16 %v270
    %v345 = vunpack.c.h.b16 %v270
    %v346 = vunpack.c.l.b16 %v271
    %v347 = vunpack.c.h.b16 %v271
    %v348 = vunpack.c.l.b16 %v272
    %v349 = vunpack.c.h.b16 %v272
    %v350 = vunpack.c.l.b16 %v273
    %v351 = vunpack.c.h.b16 %v273
    %v352 = vunpack.c.l.b16 %v274
    %v353 = vunpack.c.h.b16 %v274
    %v354 = vunpack.c.l.b16 %v275
    %v355 = vunpack.c.h.b16 %v275
    %v356 = vunpack.c.l.b16 %v276
    %v357 = vunpack.c.h.b16 %v276
    %v358 = vunpack.c.l.b16 %v277
    %v359 = vunpack.c.h.b16 %v277
    %v360 = vunpack.c.l.b16 %v278
    %v361 = vunpack.c.h.b16 %v278
    %v362 = vunpack.c.l.b16 %v279
    %v363 = vunpack.c.h.b16 %v279
    %v364 = vunpack.c.l.b16 %v280
    %v365 = vunpack.c.h.b16 %v280
    %v366 = vunpack.c.l.b16 %v281
    %v367 = vunpack.c.h.b16 %v281
    %v368 = vunpack.c.l.b16 %v282
    %v369 = vunpack.c.h.b16 %v282
    %v370 = vunpack.c.l.b16 %v283
    %v371 = vunpack.c.h.b16 %v283
    %v372 = vunpack.c.l.b16 %v284
    %v373 = vunpack.c.h.b16 %v284
    %v374 = vunpack.c.l.b16 %v285
    %v375 = vunpack.c.h.b16 %v285
    %v376 = vunpack.c.l.b16 %v286
    %v377 = vunpack.c.h.b16 %v286
    %v378 = vunpack.c.l.b16 %v287
    %v379 = vunpack.c.h.b16 %v287
    %v380 = vunpack.c.l.b16 %v288
    %v381 = vunpack.c.h.b16 %v288
    %v382 = vunpack.c.l.b16 %v289
    %v383 = vunpack.c.h.b16 %v289
    %v384 = vunpack.c.l.b16 %v290
    %v385 = vunpack.c.h.b16 %v290
    %v386 = vunpack.c.l.b16 %v291
    %v387 = vunpack.c.h.b16 %v291
    %v388 = vunpack.c.l.b16 %v292
    %v389 = vunpack.c.h.b16 %v292
    %v390 = vunpack.c.l.b16 %v293
    %v391 = vunpack.c.h.b16 %v293
    %v392 = vunpack.c.l.b16 %v294
    %v393 = vunpack.c.h.b16 %v294
    %v394 = vunpack.c.l.b16 %v295
    %v395 = vunpack.c.h.b16 %v295
    %v396 = vunpack.c.l.b16 %v296
    %v397 = vunpack.c.h.b16 %v296
    %v398 = vunpack.c.l.b16 %v297
    %v399 = vunpack.c.h.b16 %v297
    %v400 = vpack.c.b16 %v338, %v336
    %v401 = vpack.c.b16 %v339, %v337
    %v402 = vpack.c.b16 %v342, %v340
    %v403 = vpack.c.b16 %v343, %v341
    %v404 = vpack.c.b16 %v346, %v344
    %v405 = vpack.c.b16 %v347, %v345
    %v406 = vpack.c.b16 %v350, %v348
    %v407 = vpack.c.b16 %v351, %v349
    %v408 = vpack.c.b16 %v354, %v352
    %v409 = vpack.c.b16 %v355, %v353
    %v410 = vpack.c.b16 %v358, %v356
    %v411 = vpack.c.b16 %v359, %v357
    %v412 = vpack.c.b16 %v362, %v360
    %v413 = vpack.c.b16 %v363, %v361
    %v414 = vpack.c.b16 %v366, %v364
    %v415 = vpack.c.b16 %v367, %v365
    %v416 = vpack.c.b16 %v370, %v368
    %v417 = vpack.c.b16 %v371, %v369
    %v418 = vpack.c.b16 %v374, %v372
    %v419 = vpack.c.b16 %v375, %v373
    %v420 = vpack.c.b16 %v378, %v376
    %v421 = vpack.c.b16 %v379, %v377
    %v422 = vpack.c.b16 %v382, %v380
    %v423 = vpack.c.b16 %v383, %v381
    %v424 = vpack.c.b16 %v386, %v384
    %v425 = vpack.c.b16 %v387, %v385
    %v426 = vpack.c.b16 %v390, %v388
    %v427 = vpack.c.b16 %v391, %v389
    %v428 = vpack.c.b16 %v394, %v392
    %v429 = vpack.c.b16 %v395, %v393
    %v430 = vpack.c.b16 %v398, %v396
    %v431 = vpack.c.b16 %v399, %v397
    %464 = vmatpush.bf16.msra.mxu0 %v414
    %465 = vmatpush.bf16.msra.mxu0 %v412
    %466 = vmatpush.bf16.msra.mxu0 %v410
    %467 = vmatpush.bf16.msra.mxu0 %v408
    %468 = vmatpush.bf16.msra.mxu0 %v406
    %469 = vmatpush.bf16.msra.mxu0 %v404
    %470 = vmatpush.bf16.msra.mxu0 %v402
    %471 = vmatpush.bf16.msra.mxu0 %v400
    %472 = vmatmul.bf16.gmra.mxu0 %v264
    %v473 = vpop.f32.mrf.mxu0
    %v474 = vadd.f32 %v300, %v473
    %v475 = vpop.f32.mrf.mxu0
    %v476 = vadd.f32 %v300, %v475
    %477 = vdwg.mxu0
    %478 = vmatpush.bf16.msra.mxu0 %v430
    %479 = vmatpush.bf16.msra.mxu0 %v428
    %480 = vmatpush.bf16.msra.mxu0 %v426
    %481 = vmatpush.bf16.msra.mxu0 %v424
    %482 = vmatpush.bf16.msra.mxu0 %v422
    %483 = vmatpush.bf16.msra.mxu0 %v420
    %484 = vmatpush.bf16.msra.mxu0 %v418
    %485 = vmatpush.bf16.msra.mxu0 %v416
    %486 = vmatmul.bf16.gmra.mxu0 %v265
    %v487 = vpop.f32.mrf.mxu0
    %v488 = vadd.f32 %v474, %v487
    %v489 = vpop.f32.mrf.mxu0
    %v490 = vadd.f32 %v476, %v489
    %491 = vdwg.mxu0
    %492 = vmatpush.bf16.msra.mxu0 %v415
    %493 = vmatpush.bf16.msra.mxu0 %v413
    %494 = vmatpush.bf16.msra.mxu0 %v411
    %495 = vmatpush.bf16.msra.mxu0 %v409
    %496 = vmatpush.bf16.msra.mxu0 %v407
    %497 = vmatpush.bf16.msra.mxu0 %v405
    %498 = vmatpush.bf16.msra.mxu0 %v403
    %499 = vmatpush.bf16.msra.mxu0 %v401
    %500 = vmatmul.bf16.gmra.mxu0 %v264
    %v501 = vpop.f32.mrf.mxu0
    %v502 = vadd.f32 %v301, %v501
    %v503 = vpop.f32.mrf.mxu0
    %v504 = vadd.f32 %v301, %v503
    %505 = vdwg.mxu0
    %506 = vmatpush.bf16.msra.mxu0 %v431
    %507 = vmatpush.bf16.msra.mxu0 %v429
    %508 = vmatpush.bf16.msra.mxu0 %v427
    %509 = vmatpush.bf16.msra.mxu0 %v425
    %510 = vmatpush.bf16.msra.mxu0 %v423
    %511 = vmatpush.bf16.msra.mxu0 %v421
    %512 = vmatpush.bf16.msra.mxu0 %v419
    %513 = vmatpush.bf16.msra.mxu0 %v417
    %514 = vmatmul.bf16.gmra.mxu0 %v265
    %v515 = vpop.f32.mrf.mxu0
    %v516 = vadd.f32 %v502, %v515
    %v517 = vpop.f32.mrf.mxu0
    %v518 = vadd.f32 %v504, %v517
    %519 = vdwg.mxu0
    %vm520 = vcmp.ge.f32.partialorder %v488, 0.0
    %vm521 = vcmp.ge.f32.partialorder %v516, 0.0
    %vm522 = vcmp.ge.f32.partialorder %v490, 0.0
    %vm523 = vcmp.ge.f32.partialorder %v518, 0.0
    %v524 = vmul.f32 %v488, 0.2
    %v525 = vmul.f32 %v516, 0.2
    %v526 = vmul.f32 %v490, 0.2
    %v527 = vmul.f32 %v518, 0.2
    %v528 = vsel %vm520, %v488, %v524
    %v529 = vsel %vm521, %v516, %v525
    %v530 = vsel %vm522, %v490, %v526
    %v531 = vsel %vm523, %v518, %v527
    %v532 = vpack.c.bf16 %v530, %v528
    %v533 = vpack.c.bf16 %v531, %v529
    %v534 = vld [vmem:[#allocation9] sm:$0xff]
    %v535 = vld [vmem:[#allocation9 + $0x8] sm:$0xff]
    %v536 = vld [vmem:[#allocation9 + $0x10] sm:$0xff]
    %v537 = vld [vmem:[#allocation9 + $0x18] sm:$0xff]
    %v538 = vld [vmem:[#allocation9 + $0x20] sm:$0xff]
    %v539 = vld [vmem:[#allocation9 + $0x28] sm:$0xff]
    %v540 = vld [vmem:[#allocation9 + $0x30] sm:$0xff]
    %v541 = vld [vmem:[#allocation9 + $0x38] sm:$0xff]
    %v542 = vld [vmem:[#allocation9 + $0x40] sm:$0xff]
    %v543 = vld [vmem:[#allocation9 + $0x48] sm:$0xff]
    %v544 = vld [vmem:[#allocation9 + $0x50] sm:$0xff]
    %v545 = vld [vmem:[#allocation9 + $0x58] sm:$0xff]
    %v546 = vld [vmem:[#allocation9 + $0x60] sm:$0xff]
    %v547 = vld [vmem:[#allocation9 + $0x68] sm:$0xff]
    %v548 = vld [vmem:[#allocation9 + $0x70] sm:$0xff]
    %v549 = vld [vmem:[#allocation9 + $0x78] sm:$0xff]
    %v550 = vld [vmem:[#allocation9 + $0x80] sm:$0xff]
    %v551 = vld [vmem:[#allocation9 + $0x88] sm:$0xff]
    %v552 = vld [vmem:[#allocation9 + $0x90] sm:$0xff]
    %v553 = vld [vmem:[#allocation9 + $0x98] sm:$0xff]
    %v554 = vld [vmem:[#allocation9 + $0xa0] sm:$0xff]
    %v555 = vld [vmem:[#allocation9 + $0xa8] sm:$0xff]
    %v556 = vld [vmem:[#allocation9 + $0xb0] sm:$0xff]
    %v557 = vld [vmem:[#allocation9 + $0xb8] sm:$0xff]
    %v558 = vld [vmem:[#allocation9 + $0xc0] sm:$0xff]
    %v559 = vld [vmem:[#allocation9 + $0xc8] sm:$0xff]
    %v560 = vld [vmem:[#allocation9 + $0xd0] sm:$0xff]
    %v561 = vld [vmem:[#allocation9 + $0xd8] sm:$0xff]
    %v562 = vld [vmem:[#allocation9 + $0xe0] sm:$0xff]
    %v563 = vld [vmem:[#allocation9 + $0xe8] sm:$0xff]
    %v564 = vld [vmem:[#allocation9 + $0xf0] sm:$0xff]
    %v565 = vld [vmem:[#allocation9 + $0xf8] sm:$0xff]
    %v566 = vld [vmem:[#allocation10] sm:$0x3]
    %v568 = vperm.slane %v566, 0
    %v569 = vperm.slane %v566, 1
    %v604 = vunpack.c.l.b16 %v534
    %v605 = vunpack.c.h.b16 %v534
    %v606 = vunpack.c.l.b16 %v535
    %v607 = vunpack.c.h.b16 %v535
    %v608 = vunpack.c.l.b16 %v536
    %v609 = vunpack.c.h.b16 %v536
    %v610 = vunpack.c.l.b16 %v537
    %v611 = vunpack.c.h.b16 %v537
    %v612 = vunpack.c.l.b16 %v538
    %v613 = vunpack.c.h.b16 %v538
    %v614 = vunpack.c.l.b16 %v539
    %v615 = vunpack.c.h.b16 %v539
    %v616 = vunpack.c.l.b16 %v540
    %v617 = vunpack.c.h.b16 %v540
    %v618 = vunpack.c.l.b16 %v541
    %v619 = vunpack.c.h.b16 %v541
    %v620 = vunpack.c.l.b16 %v542
    %v621 = vunpack.c.h.b16 %v542
    %v622 = vunpack.c.l.b16 %v543
    %v623 = vunpack.c.h.b16 %v543
    %v624 = vunpack.c.l.b16 %v544
    %v625 = vunpack.c.h.b16 %v544
    %v626 = vunpack.c.l.b16 %v545
    %v627 = vunpack.c.h.b16 %v545
    %v628 = vunpack.c.l.b16 %v546
    %v629 = vunpack.c.h.b16 %v546
    %v630 = vunpack.c.l.b16 %v547
    %v631 = vunpack.c.h.b16 %v547
    %v632 = vunpack.c.l.b16 %v548
    %v633 = vunpack.c.h.b16 %v548
    %v634 = vunpack.c.l.b16 %v549
    %v635 = vunpack.c.h.b16 %v549
    %v636 = vunpack.c.l.b16 %v550
    %v637 = vunpack.c.h.b16 %v550
    %v638 = vunpack.c.l.b16 %v551
    %v639 = vunpack.c.h.b16 %v551
    %v640 = vunpack.c.l.b16 %v552
    %v641 = vunpack.c.h.b16 %v552
    %v642 = vunpack.c.l.b16 %v553
    %v643 = vunpack.c.h.b16 %v553
    %v644 = vunpack.c.l.b16 %v554
    %v645 = vunpack.c.h.b16 %v554
    %v646 = vunpack.c.l.b16 %v555
    %v647 = vunpack.c.h.b16 %v555
    %v648 = vunpack.c.l.b16 %v556
    %v649 = vunpack.c.h.b16 %v556
    %v650 = vunpack.c.l.b16 %v557
    %v651 = vunpack.c.h.b16 %v557
    %v652 = vunpack.c.l.b16 %v558
    %v653 = vunpack.c.h.b16 %v558
    %v654 = vunpack.c.l.b16 %v559
    %v655 = vunpack.c.h.b16 %v559
    %v656 = vunpack.c.l.b16 %v560
    %v657 = vunpack.c.h.b16 %v560
    %v658 = vunpack.c.l.b16 %v561
    %v659 = vunpack.c.h.b16 %v561
    %v660 = vunpack.c.l.b16 %v562
    %v661 = vunpack.c.h.b16 %v562
    %v662 = vunpack.c.l.b16 %v563
    %v663 = vunpack.c.h.b16 %v563
    %v664 = vunpack.c.l.b16 %v564
    %v665 = vunpack.c.h.b16 %v564
    %v666 = vunpack.c.l.b16 %v565
    %v667 = vunpack.c.h.b16 %v565
    %v668 = vpack.c.b16 %v606, %v604
    %v669 = vpack.c.b16 %v607, %v605
    %v670 = vpack.c.b16 %v610, %v608
    %v671 = vpack.c.b16 %v611, %v609
    %v672 = vpack.c.b16 %v614, %v612
    %v673 = vpack.c.b16 %v615, %v613
    %v674 = vpack.c.b16 %v618, %v616
    %v675 = vpack.c.b16 %v619, %v617
    %v676 = vpack.c.b16 %v622, %v620
    %v677 = vpack.c.b16 %v623, %v621
    %v678 = vpack.c.b16 %v626, %v624
    %v679 = vpack.c.b16 %v627, %v625
    %v680 = vpack.c.b16 %v630, %v628
    %v681 = vpack.c.b16 %v631, %v629
    %v682 = vpack.c.b16 %v634, %v632
    %v683 = vpack.c.b16 %v635, %v633
    %v684 = vpack.c.b16 %v638, %v636
    %v685 = vpack.c.b16 %v639, %v637
    %v686 = vpack.c.b16 %v642, %v640
    %v687 = vpack.c.b16 %v643, %v641
    %v688 = vpack.c.b16 %v646, %v644
    %v689 = vpack.c.b16 %v647, %v645
    %v690 = vpack.c.b16 %v650, %v648
    %v691 = vpack.c.b16 %v651, %v649
    %v692 = vpack.c.b16 %v654, %v652
    %v693 = vpack.c.b16 %v655, %v653
    %v694 = vpack.c.b16 %v658, %v656
    %v695 = vpack.c.b16 %v659, %v657
    %v696 = vpack.c.b16 %v662, %v660
    %v697 = vpack.c.b16 %v663, %v661
    %v698 = vpack.c.b16 %v666, %v664
    %v699 = vpack.c.b16 %v667, %v665
    %732 = vmatpush.bf16.msra.mxu0 %v682
    %733 = vmatpush.bf16.msra.mxu0 %v680
    %734 = vmatpush.bf16.msra.mxu0 %v678
    %735 = vmatpush.bf16.msra.mxu0 %v676
    %736 = vmatpush.bf16.msra.mxu0 %v674
    %737 = vmatpush.bf16.msra.mxu0 %v672
    %738 = vmatpush.bf16.msra.mxu0 %v670
    %739 = vmatpush.bf16.msra.mxu0 %v668
    %740 = vmatmul.bf16.gmra.mxu0 %v532
    %v741 = vpop.f32.mrf.mxu0
    %v742 = vadd.f32 %v568, %v741
    %v743 = vpop.f32.mrf.mxu0
    %v744 = vadd.f32 %v568, %v743
    %745 = vdwg.mxu0
    %746 = vmatpush.bf16.msra.mxu0 %v698
    %747 = vmatpush.bf16.msra.mxu0 %v696
    %748 = vmatpush.bf16.msra.mxu0 %v694
    %749 = vmatpush.bf16.msra.mxu0 %v692
    %750 = vmatpush.bf16.msra.mxu0 %v690
    %751 = vmatpush.bf16.msra.mxu0 %v688
    %752 = vmatpush.bf16.msra.mxu0 %v686
    %753 = vmatpush.bf16.msra.mxu0 %v684
    %754 = vmatmul.bf16.gmra.mxu0 %v533
    %v755 = vpop.f32.mrf.mxu0
    %v756 = vadd.f32 %v742, %v755
    %v757 = vpop.f32.mrf.mxu0
    %v758 = vadd.f32 %v744, %v757
    %759 = vdwg.mxu0
    %760 = vmatpush.bf16.msra.mxu0 %v683
    %761 = vmatpush.bf16.msra.mxu0 %v681
    %762 = vmatpush.bf16.msra.mxu0 %v679
    %763 = vmatpush.bf16.msra.mxu0 %v677
    %764 = vmatpush.bf16.msra.mxu0 %v675
    %765 = vmatpush.bf16.msra.mxu0 %v673
    %766 = vmatpush.bf16.msra.mxu0 %v671
    %767 = vmatpush.bf16.msra.mxu0 %v669
    %768 = vmatmul.bf16.gmra.mxu0 %v532
    %v769 = vpop.f32.mrf.mxu0
    %v770 = vadd.f32 %v569, %v769
    %v771 = vpop.f32.mrf.mxu0
    %v772 = vadd.f32 %v569, %v771
    %773 = vdwg.mxu0
    %774 = vmatpush.bf16.msra.mxu0 %v699
    %775 = vmatpush.bf16.msra.mxu0 %v697
    %776 = vmatpush.bf16.msra.mxu0 %v695
    %777 = vmatpush.bf16.msra.mxu0 %v693
    %778 = vmatpush.bf16.msra.mxu0 %v691
    %779 = vmatpush.bf16.msra.mxu0 %v689
    %780 = vmatpush.bf16.msra.mxu0 %v687
    %781 = vmatpush.bf16.msra.mxu0 %v685
    %782 = vmatmul.bf16.gmra.mxu0 %v533
    %v783 = vpop.f32.mrf.mxu0
    %v784 = vadd.f32 %v770, %v783
    %v785 = vpop.f32.mrf.mxu0
    %v786 = vadd.f32 %v772, %v785
    %787 = vdwg.mxu0
    %vm788 = vcmp.ge.f32.partialorder %v756, 0.0
    %vm789 = vcmp.ge.f32.partialorder %v784, 0.0
    %vm790 = vcmp.ge.f32.partialorder %v758, 0.0
    %vm791 = vcmp.ge.f32.partialorder %v786, 0.0
    %v792 = vmul.f32 %v756, 0.2
    %v793 = vmul.f32 %v784, 0.2
    %v794 = vmul.f32 %v758, 0.2
    %v795 = vmul.f32 %v786, 0.2
    %v796 = vsel %vm788, %v756, %v792
    %v797 = vsel %vm789, %v784, %v793
    %v798 = vsel %vm790, %v758, %v794
    %v799 = vsel %vm791, %v786, %v795
    %v800 = vpack.c.bf16 %v797, %v796
    %v801 = vpack.c.bf16 %v799, %v798
    %802 = vst [vmem:[%s7] sm:$0xff] %v800
    %803 = vst [vmem:[%s7 + $0x8] sm:$0xff] %v801
    // Predicated region
    $region54: #{roi_box_head_forward.8} parent=1 // pred_check
      _
    $region55: #{roi_box_head_forward.8} parent=1 // pred_check_branch
      %805 = sbr.rel (0) target = $region57
    $region56: #{roi_box_head_forward.8} parent=1 // pred_region
      _
    $region57: #{roi_box_head_forward.8} parent=1 // pred_fallthru
      _
    // Predicated region
    $region58: #{roi_box_head_forward.8} parent=1 // pred_check
      _
    $region59: #{roi_box_head_forward.8} parent=1 // pred_check_branch
      %807 = sbr.rel (0) target = $region61
    $region60: #{roi_box_head_forward.8} parent=1 // pred_region
      _
    $region61: #{roi_box_head_forward.8} parent=1 // pred_fallthru
      _
    %808 = vsyncpa [#allocation3], 1
    %809 = vsyncpa [#allocation5], 1
    %810 = vsyncpa [#allocation8], 1
    %811 = vsyncpa [#allocation11], 1

// kernel: roi_box_head_forward.9
$region0: #{roi_box_head_forward.9}
  #allocation0 [shape = 'u32[]', space=smem, size = 0x4, offset = 0x4, fixed_abs, tag = 'smem constant byte address 0x4 - core index']
  #allocation1 [shape = 'u32[72,128]{1,0:T(1,128)}', space=vmem, size = 0x9000, scoped, tag = 'internal scratch']
  %s0 = inlined_call_operand.vmem [shape: bf16[16,512], index: 0, kind: input, shape index: {}]
  %s1 = inlined_call_operand.hbm [shape: bf16[512,768], index: 1, kind: input, shape index: {}]
  %s2 = inlined_call_operand.vmem [shape: f32[1,768], index: 2, kind: input, shape index: {}]
  %s3 = inlined_call_operand.vmem [shape: bf16[16,768], index: 3, kind: output, shape index: {}]
  %s4 = sld [smem:[#allocation0]]
  $region26: #{roi_box_head_forward.9} parent=0
    _
  %s6 = ssub.s32 1, %s4
  %s7 = scalar_select 0, %s6, %s4
  $region1: #{roi_box_head_forward.9} parent=0
    #allocation2 [shape = 'u8[786432]{0}', space=vmem, size = 0xc0000, scoped, tag = 'input window, operand 1, single buffered']
    #allocation3 [shape = 's32[1]{0}', space=sflag, size = 0x4, scoped, tag = 'scoped memory for roi_box_head_forward.9']
    %8 = vsyncpa [#allocation3], 0
    // Predicated region
    $region2: #{roi_box_head_forward.9} parent=1 // pred_check
      _
    $region3: #{roi_box_head_forward.9} parent=1 // pred_check_branch
      %10 = sbr.rel (0) target = $region5
    $region4: #{roi_box_head_forward.9} parent=1 // pred_region
      _
    $region5: #{roi_box_head_forward.9} parent=1 // pred_fallthru
      _
    // Predicated region
    $region6: #{roi_box_head_forward.9} parent=1 // pred_check
      _
    $region7: #{roi_box_head_forward.9} parent=1 // pred_check_branch
      %12 = sbr.rel (0) target = $region9
    $region8: #{roi_box_head_forward.9} parent=1 // pred_region
      %14 = vsyncadd [#allocation3], 0
      %s15 = sshll.u32 %s1, 4
      %s16 = int_to_ptr.hbm [resolvable:$true] %s15
      %s17 = sshll.u32 [#allocation2], 4
      %s18 = int_to_ptr.vmem [resolvable:$true] %s17
      %23 = dma.hbm_to_vmem [thread:$0]  %s16, 24576, %s18, [#allocation3], 384, 384, 24
    $region9: #{roi_box_head_forward.9} parent=1 // pred_fallthru
      _
    // Predicated region
    $region10: #{roi_box_head_forward.9} parent=1 // pred_check
      _
    $region11: #{roi_box_head_forward.9} parent=1 // pred_check_branch
      %25 = sbr.rel (0) target = $region13
    $region12: #{roi_box_head_forward.9} parent=1 // pred_region
      _
    $region13: #{roi_box_head_forward.9} parent=1 // pred_fallthru
      _
    // Predicated region
    $region14: #{roi_box_head_forward.9} parent=1 // pred_check
      _
    $region15: #{roi_box_head_forward.9} parent=1 // pred_check_branch
      %27 = sbr.rel (0) target = $region17
    $region16: #{roi_box_head_forward.9} parent=1 // pred_region
      %29 = dma.done [#allocation3], 24576
    $region17: #{roi_box_head_forward.9} parent=1 // pred_fallthru
      _
    %v30 = vld [vmem:[%s0] sm:$0xff]
    %v31 = vld [vmem:[%s0 + $0x8] sm:$0xff]
    %v32 = vld [vmem:[%s0 + $0x10] sm:$0xff]
    %v33 = vld [vmem:[%s0 + $0x18] sm:$0xff]
    %v34 = vld [vmem:[#allocation2] sm:$0xff]
    %v35 = vld [vmem:[#allocation2 + $0x8] sm:$0xff]
    %v36 = vld [vmem:[#allocation2 + $0x10] sm:$0xff]
    %v37 = vld [vmem:[#allocation2 + $0x18] sm:$0xff]
    %v38 = vld [vmem:[#allocation2 + $0x20] sm:$0xff]
    %v39 = vld [vmem:[#allocation2 + $0x28] sm:$0xff]
    %v40 = vld [vmem:[#allocation2 + $0x30] sm:$0xff]
    %v41 = vld [vmem:[#allocation2 + $0x38] sm:$0xff]
    %v42 = vld [vmem:[#allocation2 + $0x40] sm:$0xff]
    %v43 = vld [vmem:[#allocation2 + $0x48] sm:$0xff]
    %v44 = vld [vmem:[#allocation2 + $0x50] sm:$0xff]
    %v45 = vld [vmem:[#allocation2 + $0x58] sm:$0xff]
    %v46 = vld [vmem:[#allocation2 + $0x60] sm:$0xff]
    %v47 = vld [vmem:[#allocation2 + $0x68] sm:$0xff]
    %v48 = vld [vmem:[#allocation2 + $0x70] sm:$0xff]
    %v49 = vld [vmem:[#allocation2 + $0x78] sm:$0xff]
    %v50 = vld [vmem:[#allocation2 + $0x80] sm:$0xff]
    %v51 = vld [vmem:[#allocation2 + $0x88] sm:$0xff]
    %v52 = vld [vmem:[#allocation2 + $0x90] sm:$0xff]
    %v53 = vld [vmem:[#allocation2 + $0x98] sm:$0xff]
    %v54 = vld [vmem:[#allocation2 + $0xa0] sm:$0xff]
    %v55 = vld [vmem:[#allocation2 + $0xa8] sm:$0xff]
    %v56 = vld [vmem:[#allocation2 + $0xb0] sm:$0xff]
    %v57 = vld [vmem:[#allocation2 + $0xb8] sm:$0xff]
    %v58 = vld [vmem:[#allocation2 + $0xc0] sm:$0xff]
    %v59 = vld [vmem:[#allocation2 + $0xc8] sm:$0xff]
    %v60 = vld [vmem:[#allocation2 + $0xd0] sm:$0xff]
    %v61 = vld [vmem:[#allocation2 + $0xd8] sm:$0xff]
    %v62 = vld [vmem:[#allocation2 + $0xe0] sm:$0xff]
    %v63 = vld [vmem:[#allocation2 + $0xe8] sm:$0xff]
    %v64 = vld [vmem:[#allocation2 + $0xf0] sm:$0xff]
    %v65 = vld [vmem:[#allocation2 + $0xf8] sm:$0xff]
    %v66 = vld [vmem:[#allocation2 + $0x100] sm:$0xff]
    %v67 = vld [vmem:[#allocation2 + $0x108] sm:$0xff]
    %v68 = vld [vmem:[#allocation2 + $0x110] sm:$0xff]
    %v69 = vld [vmem:[#allocation2 + $0x118] sm:$0xff]
    %v70 = vld [vmem:[#allocation2 + $0x120] sm:$0xff]
    %v71 = vld [vmem:[#allocation2 + $0x128] sm:$0xff]
    %v72 = vld [vmem:[#allocation2 + $0x130] sm:$0xff]
    %v73 = vld [vmem:[#allocation2 + $0x138] sm:$0xff]
    %v74 = vld [vmem:[#allocation2 + $0x140] sm:$0xff]
    %v75 = vld [vmem:[#allocation2 + $0x148] sm:$0xff]
    %v76 = vld [vmem:[#allocation2 + $0x150] sm:$0xff]
    %v77 = vld [vmem:[#allocation2 + $0x158] sm:$0xff]
    %v78 = vld [vmem:[#allocation2 + $0x160] sm:$0xff]
    %v79 = vld [vmem:[#allocation2 + $0x168] sm:$0xff]
    %v80 = vld [vmem:[#allocation2 + $0x170] sm:$0xff]
    %v81 = vld [vmem:[#allocation2 + $0x178] sm:$0xff]
    %v82 = vld [vmem:[#allocation2 + $0x180] sm:$0xff]
    %v83 = vld [vmem:[#allocation2 + $0x188] sm:$0xff]
    %v84 = vld [vmem:[#allocation2 + $0x190] sm:$0xff]
    %v85 = vld [vmem:[#allocation2 + $0x198] sm:$0xff]
    %v86 = vld [vmem:[#allocation2 + $0x1a0] sm:$0xff]
    %v87 = vld [vmem:[#allocation2 + $0x1a8] sm:$0xff]
    %v88 = vld [vmem:[#allocation2 + $0x1b0] sm:$0xff]
    %v89 = vld [vmem:[#allocation2 + $0x1b8] sm:$0xff]
    %v90 = vld [vmem:[#allocation2 + $0x1c0] sm:$0xff]
    %v91 = vld [vmem:[#allocation2 + $0x1c8] sm:$0xff]
    %v92 = vld [vmem:[#allocation2 + $0x1d0] sm:$0xff]
    %v93 = vld [vmem:[#allocation2 + $0x1d8] sm:$0xff]
    %v94 = vld [vmem:[#allocation2 + $0x1e0] sm:$0xff]
    %v95 = vld [vmem:[#allocation2 + $0x1e8] sm:$0xff]
    %v96 = vld [vmem:[#allocation2 + $0x1f0] sm:$0xff]
    %v97 = vld [vmem:[#allocation2 + $0x1f8] sm:$0xff]
    %v98 = vld [vmem:[#allocation2 + $0x200] sm:$0xff]
    %v99 = vld [vmem:[#allocation2 + $0x208] sm:$0xff]
    %v100 = vld [vmem:[#allocation2 + $0x210] sm:$0xff]
    %v101 = vld [vmem:[#allocation2 + $0x218] sm:$0xff]
    %v102 = vld [vmem:[#allocation2 + $0x220] sm:$0xff]
    %v103 = vld [vmem:[#allocation2 + $0x228] sm:$0xff]
    %v104 = vld [vmem:[#allocation2 + $0x230] sm:$0xff]
    %v105 = vld [vmem:[#allocation2 + $0x238] sm:$0xff]
    %v106 = vld [vmem:[#allocation2 + $0x240] sm:$0xff]
    %v107 = vld [vmem:[#allocation2 + $0x248] sm:$0xff]
    %v108 = vld [vmem:[#allocation2 + $0x250] sm:$0xff]
    %v109 = vld [vmem:[#allocation2 + $0x258] sm:$0xff]
    %v110 = vld [vmem:[#allocation2 + $0x260] sm:$0xff]
    %v111 = vld [vmem:[#allocation2 + $0x268] sm:$0xff]
    %v112 = vld [vmem:[#allocation2 + $0x270] sm:$0xff]
    %v113 = vld [vmem:[#allocation2 + $0x278] sm:$0xff]
    %v114 = vld [vmem:[#allocation2 + $0x280] sm:$0xff]
    %v115 = vld [vmem:[#allocation2 + $0x288] sm:$0xff]
    %v116 = vld [vmem:[#allocation2 + $0x290] sm:$0xff]
    %v117 = vld [vmem:[#allocation2 + $0x298] sm:$0xff]
    %v118 = vld [vmem:[#allocation2 + $0x2a0] sm:$0xff]
    %v119 = vld [vmem:[#allocation2 + $0x2a8] sm:$0xff]
    %v120 = vld [vmem:[#allocation2 + $0x2b0] sm:$0xff]
    %v121 = vld [vmem:[#allocation2 + $0x2b8] sm:$0xff]
    %v122 = vld [vmem:[#allocation2 + $0x2c0] sm:$0xff]
    %v123 = vld [vmem:[#allocation2 + $0x2c8] sm:$0xff]
    %v124 = vld [vmem:[#allocation2 + $0x2d0] sm:$0xff]
    %v125 = vld [vmem:[#allocation2 + $0x2d8] sm:$0xff]
    %v126 = vld [vmem:[#allocation2 + $0x2e0] sm:$0xff]
    %v127 = vld [vmem:[#allocation2 + $0x2e8] sm:$0xff]
    %v128 = vld [vmem:[#allocation2 + $0x2f0] sm:$0xff]
    %v129 = vld [vmem:[#allocation2 + $0x2f8] sm:$0xff]
    %v130 = vld [vmem:[#allocation2 + $0x300] sm:$0xff]
    %v131 = vld [vmem:[#allocation2 + $0x308] sm:$0xff]
    %v132 = vld [vmem:[#allocation2 + $0x310] sm:$0xff]
    %v133 = vld [vmem:[#allocation2 + $0x318] sm:$0xff]
    %v134 = vld [vmem:[#allocation2 + $0x320] sm:$0xff]
    %v135 = vld [vmem:[#allocation2 + $0x328] sm:$0xff]
    %v136 = vld [vmem:[#allocation2 + $0x330] sm:$0xff]
    %v137 = vld [vmem:[#allocation2 + $0x338] sm:$0xff]
    %v138 = vld [vmem:[#allocation2 + $0x340] sm:$0xff]
    %v139 = vld [vmem:[#allocation2 + $0x348] sm:$0xff]
    %v140 = vld [vmem:[#allocation2 + $0x350] sm:$0xff]
    %v141 = vld [vmem:[#allocation2 + $0x358] sm:$0xff]
    %v142 = vld [vmem:[#allocation2 + $0x360] sm:$0xff]
    %v143 = vld [vmem:[#allocation2 + $0x368] sm:$0xff]
    %v144 = vld [vmem:[#allocation2 + $0x370] sm:$0xff]
    %v145 = vld [vmem:[#allocation2 + $0x378] sm:$0xff]
    %v146 = vld [vmem:[#allocation2 + $0x380] sm:$0xff]
    %v147 = vld [vmem:[#allocation2 + $0x388] sm:$0xff]
    %v148 = vld [vmem:[#allocation2 + $0x390] sm:$0xff]
    %v149 = vld [vmem:[#allocation2 + $0x398] sm:$0xff]
    %v150 = vld [vmem:[#allocation2 + $0x3a0] sm:$0xff]
    %v151 = vld [vmem:[#allocation2 + $0x3a8] sm:$0xff]
    %v152 = vld [vmem:[#allocation2 + $0x3b0] sm:$0xff]
    %v153 = vld [vmem:[#allocation2 + $0x3b8] sm:$0xff]
    %v154 = vld [vmem:[#allocation2 + $0x3c0] sm:$0xff]
    %v155 = vld [vmem:[#allocation2 + $0x3c8] sm:$0xff]
    %v156 = vld [vmem:[#allocation2 + $0x3d0] sm:$0xff]
    %v157 = vld [vmem:[#allocation2 + $0x3d8] sm:$0xff]
    %v158 = vld [vmem:[#allocation2 + $0x3e0] sm:$0xff]
    %v159 = vld [vmem:[#allocation2 + $0x3e8] sm:$0xff]
    %v160 = vld [vmem:[#allocation2 + $0x3f0] sm:$0xff]
    %v161 = vld [vmem:[#allocation2 + $0x3f8] sm:$0xff]
    %v162 = vld [vmem:[#allocation2 + $0x400] sm:$0xff]
    %v163 = vld [vmem:[#allocation2 + $0x408] sm:$0xff]
    %v164 = vld [vmem:[#allocation2 + $0x410] sm:$0xff]
    %v165 = vld [vmem:[#allocation2 + $0x418] sm:$0xff]
    %v166 = vld [vmem:[#allocation2 + $0x420] sm:$0xff]
    %v167 = vld [vmem:[#allocation2 + $0x428] sm:$0xff]
    %v168 = vld [vmem:[#allocation2 + $0x430] sm:$0xff]
    %v169 = vld [vmem:[#allocation2 + $0x438] sm:$0xff]
    %v170 = vld [vmem:[#allocation2 + $0x440] sm:$0xff]
    %v171 = vld [vmem:[#allocation2 + $0x448] sm:$0xff]
    %v172 = vld [vmem:[#allocation2 + $0x450] sm:$0xff]
    %v173 = vld [vmem:[#allocation2 + $0x458] sm:$0xff]
    %v174 = vld [vmem:[#allocation2 + $0x460] sm:$0xff]
    %v175 = vld [vmem:[#allocation2 + $0x468] sm:$0xff]
    %v176 = vld [vmem:[#allocation2 + $0x470] sm:$0xff]
    %v177 = vld [vmem:[#allocation2 + $0x478] sm:$0xff]
    %v178 = vld [vmem:[#allocation2 + $0x480] sm:$0xff]
    %v179 = vld [vmem:[#allocation2 + $0x488] sm:$0xff]
    %v180 = vld [vmem:[#allocation2 + $0x490] sm:$0xff]
    %v181 = vld [vmem:[#allocation2 + $0x498] sm:$0xff]
    %v182 = vld [vmem:[#allocation2 + $0x4a0] sm:$0xff]
    %v183 = vld [vmem:[#allocation2 + $0x4a8] sm:$0xff]
    %v184 = vld [vmem:[#allocation2 + $0x4b0] sm:$0xff]
    %v185 = vld [vmem:[#allocation2 + $0x4b8] sm:$0xff]
    %v186 = vld [vmem:[#allocation2 + $0x4c0] sm:$0xff]
    %v187 = vld [vmem:[#allocation2 + $0x4c8] sm:$0xff]
    %v188 = vld [vmem:[#allocation2 + $0x4d0] sm:$0xff]
    %v189 = vld [vmem:[#allocation2 + $0x4d8] sm:$0xff]
    %v190 = vld [vmem:[#allocation2 + $0x4e0] sm:$0xff]
    %v191 = vld [vmem:[#allocation2 + $0x4e8] sm:$0xff]
    %v192 = vld [vmem:[#allocation2 + $0x4f0] sm:$0xff]
    %v193 = vld [vmem:[#allocation2 + $0x4f8] sm:$0xff]
    %v194 = vld [vmem:[#allocation2 + $0x500] sm:$0xff]
    %v195 = vld [vmem:[#allocation2 + $0x508] sm:$0xff]
    %v196 = vld [vmem:[#allocation2 + $0x510] sm:$0xff]
    %v197 = vld [vmem:[#allocation2 + $0x518] sm:$0xff]
    %v198 = vld [vmem:[#allocation2 + $0x520] sm:$0xff]
    %v199 = vld [vmem:[#allocation2 + $0x528] sm:$0xff]
    %v200 = vld [vmem:[#allocation2 + $0x530] sm:$0xff]
    %v201 = vld [vmem:[#allocation2 + $0x538] sm:$0xff]
    %v202 = vld [vmem:[#allocation2 + $0x540] sm:$0xff]
    %v203 = vld [vmem:[#allocation2 + $0x548] sm:$0xff]
    %v204 = vld [vmem:[#allocation2 + $0x550] sm:$0xff]
    %v205 = vld [vmem:[#allocation2 + $0x558] sm:$0xff]
    %v206 = vld [vmem:[#allocation2 + $0x560] sm:$0xff]
    %v207 = vld [vmem:[#allocation2 + $0x568] sm:$0xff]
    %v208 = vld [vmem:[#allocation2 + $0x570] sm:$0xff]
    %v209 = vld [vmem:[#allocation2 + $0x578] sm:$0xff]
    %v210 = vld [vmem:[#allocation2 + $0x580] sm:$0xff]
    %v211 = vld [vmem:[#allocation2 + $0x588] sm:$0xff]
    %v212 = vld [vmem:[#allocation2 + $0x590] sm:$0xff]
    %v213 = vld [vmem:[#allocation2 + $0x598] sm:$0xff]
    %v214 = vld [vmem:[#allocation2 + $0x5a0] sm:$0xff]
    %v215 = vld [vmem:[#allocation2 + $0x5a8] sm:$0xff]
    %v216 = vld [vmem:[#allocation2 + $0x5b0] sm:$0xff]
    %v217 = vld [vmem:[#allocation2 + $0x5b8] sm:$0xff]
    %v218 = vld [vmem:[#allocation2 + $0x5c0] sm:$0xff]
    %v219 = vld [vmem:[#allocation2 + $0x5c8] sm:$0xff]
    %v220 = vld [vmem:[#allocation2 + $0x5d0] sm:$0xff]
    %v221 = vld [vmem:[#allocation2 + $0x5d8] sm:$0xff]
    %v222 = vld [vmem:[#allocation2 + $0x5e0] sm:$0xff]
    %v223 = vld [vmem:[#allocation2 + $0x5e8] sm:$0xff]
    %v224 = vld [vmem:[#allocation2 + $0x5f0] sm:$0xff]
    %v225 = vld [vmem:[#allocation2 + $0x5f8] sm:$0xff]
    %v226 = vld [vmem:[%s2] sm:$0x3f]
    %v228 = vperm.slane %v226, 0
    %v229 = vperm.slane %v226, 1
    %v230 = vperm.slane %v226, 2
    %v231 = vperm.slane %v226, 3
    %v232 = vperm.slane %v226, 4
    %v233 = vperm.slane %v226, 5
    %v244 = vunpack.c.l.b16 %v30
    %v245 = vunpack.c.h.b16 %v30
    %v246 = vunpack.c.l.b16 %v31
    %v247 = vunpack.c.h.b16 %v31
    %v248 = vunpack.c.l.b16 %v32
    %v249 = vunpack.c.h.b16 %v32
    %v250 = vunpack.c.l.b16 %v33
    %v251 = vunpack.c.h.b16 %v33
    %v252 = vpack.c.b16 %v248, %v244
    %v253 = vpack.c.b16 %v249, %v245
    %v254 = vpack.c.b16 %v250, %v246
    %v255 = vpack.c.b16 %v251, %v247
    %v452 = vunpack.c.l.b16 %v34
    %v453 = vunpack.c.h.b16 %v34
    %v454 = vunpack.c.l.b16 %v35
    %v455 = vunpack.c.h.b16 %v35
    %v456 = vunpack.c.l.b16 %v36
    %v457 = vunpack.c.h.b16 %v36
    %v458 = vunpack.c.l.b16 %v37
    %v459 = vunpack.c.h.b16 %v37
    %v460 = vunpack.c.l.b16 %v38
    %v461 = vunpack.c.h.b16 %v38
    %v462 = vunpack.c.l.b16 %v39
    %v463 = vunpack.c.h.b16 %v39
    %v464 = vunpack.c.l.b16 %v40
    %v465 = vunpack.c.h.b16 %v40
    %v466 = vunpack.c.l.b16 %v41
    %v467 = vunpack.c.h.b16 %v41
    %v468 = vunpack.c.l.b16 %v42
    %v469 = vunpack.c.h.b16 %v42
    %v470 = vunpack.c.l.b16 %v43
    %v471 = vunpack.c.h.b16 %v43
    %v472 = vunpack.c.l.b16 %v44
    %v473 = vunpack.c.h.b16 %v44
    %v474 = vunpack.c.l.b16 %v45
    %v475 = vunpack.c.h.b16 %v45
    %v476 = vunpack.c.l.b16 %v46
    %v477 = vunpack.c.h.b16 %v46
    %v478 = vunpack.c.l.b16 %v47
    %v479 = vunpack.c.h.b16 %v47
    %v480 = vunpack.c.l.b16 %v48
    %v481 = vunpack.c.h.b16 %v48
    %v482 = vunpack.c.l.b16 %v49
    %v483 = vunpack.c.h.b16 %v49
    %v484 = vunpack.c.l.b16 %v50
    %v485 = vunpack.c.h.b16 %v50
    %v486 = vunpack.c.l.b16 %v51
    %v487 = vunpack.c.h.b16 %v51
    %v488 = vunpack.c.l.b16 %v52
    %v489 = vunpack.c.h.b16 %v52
    %v490 = vunpack.c.l.b16 %v53
    %v491 = vunpack.c.h.b16 %v53
    %v492 = vunpack.c.l.b16 %v54
    %v493 = vunpack.c.h.b16 %v54
    %v494 = vunpack.c.l.b16 %v55
    %v495 = vunpack.c.h.b16 %v55
    %v496 = vunpack.c.l.b16 %v56
    %v497 = vunpack.c.h.b16 %v56
    %v498 = vunpack.c.l.b16 %v57
    %v499 = vunpack.c.h.b16 %v57
    %v500 = vunpack.c.l.b16 %v58
    %v501 = vunpack.c.h.b16 %v58
    %v502 = vunpack.c.l.b16 %v59
    %v503 = vunpack.c.h.b16 %v59
    %v504 = vunpack.c.l.b16 %v60
    %v505 = vunpack.c.h.b16 %v60
    %v506 = vunpack.c.l.b16 %v61
    %v507 = vunpack.c.h.b16 %v61
    %v508 = vunpack.c.l.b16 %v62
    %v509 = vunpack.c.h.b16 %v62
    %v510 = vunpack.c.l.b16 %v63
    %v511 = vunpack.c.h.b16 %v63
    %v512 = vunpack.c.l.b16 %v64
    %v513 = vunpack.c.h.b16 %v64
    %v514 = vunpack.c.l.b16 %v65
    %v515 = vunpack.c.h.b16 %v65
    %v516 = vunpack.c.l.b16 %v66
    %v517 = vunpack.c.h.b16 %v66
    %v518 = vunpack.c.l.b16 %v67
    %v519 = vunpack.c.h.b16 %v67
    %v520 = vunpack.c.l.b16 %v68
    %v521 = vunpack.c.h.b16 %v68
    %v522 = vunpack.c.l.b16 %v69
    %v523 = vunpack.c.h.b16 %v69
    %v524 = vunpack.c.l.b16 %v70
    %v525 = vunpack.c.h.b16 %v70
    %v526 = vunpack.c.l.b16 %v71
    %v527 = vunpack.c.h.b16 %v71
    %v528 = vunpack.c.l.b16 %v72
    %v529 = vunpack.c.h.b16 %v72
    %v530 = vunpack.c.l.b16 %v73
    %v531 = vunpack.c.h.b16 %v73
    %v532 = vunpack.c.l.b16 %v74
    %v533 = vunpack.c.h.b16 %v74
    %v534 = vunpack.c.l.b16 %v75
    %v535 = vunpack.c.h.b16 %v75
    %v536 = vunpack.c.l.b16 %v76
    %v537 = vunpack.c.h.b16 %v76
    %v538 = vunpack.c.l.b16 %v77
    %v539 = vunpack.c.h.b16 %v77
    %v540 = vunpack.c.l.b16 %v78
    %v541 = vunpack.c.h.b16 %v78
    %v542 = vunpack.c.l.b16 %v79
    %v543 = vunpack.c.h.b16 %v79
    %v544 = vunpack.c.l.b16 %v80
    %v545 = vunpack.c.h.b16 %v80
    %v546 = vunpack.c.l.b16 %v81
    %v547 = vunpack.c.h.b16 %v81
    %v548 = vunpack.c.l.b16 %v82
    %v549 = vunpack.c.h.b16 %v82
    %v550 = vunpack.c.l.b16 %v83
    %v551 = vunpack.c.h.b16 %v83
    %v552 = vunpack.c.l.b16 %v84
    %v553 = vunpack.c.h.b16 %v84
    %v554 = vunpack.c.l.b16 %v85
    %v555 = vunpack.c.h.b16 %v85
    %v556 = vunpack.c.l.b16 %v86
    %v557 = vunpack.c.h.b16 %v86
    %v558 = vunpack.c.l.b16 %v87
    %v559 = vunpack.c.h.b16 %v87
    %v560 = vunpack.c.l.b16 %v88
    %v561 = vunpack.c.h.b16 %v88
    %v562 = vunpack.c.l.b16 %v89
    %v563 = vunpack.c.h.b16 %v89
    %v564 = vunpack.c.l.b16 %v90
    %v565 = vunpack.c.h.b16 %v90
    %v566 = vunpack.c.l.b16 %v91
    %v567 = vunpack.c.h.b16 %v91
    %v568 = vunpack.c.l.b16 %v92
    %v569 = vunpack.c.h.b16 %v92
    %v570 = vunpack.c.l.b16 %v93
    %v571 = vunpack.c.h.b16 %v93
    %v572 = vunpack.c.l.b16 %v94
    %v573 = vunpack.c.h.b16 %v94
    %v574 = vunpack.c.l.b16 %v95
    %v575 = vunpack.c.h.b16 %v95
    %v576 = vunpack.c.l.b16 %v96
    %v577 = vunpack.c.h.b16 %v96
    %v578 = vunpack.c.l.b16 %v97
    %v579 = vunpack.c.h.b16 %v97
    %v580 = vunpack.c.l.b16 %v98
    %v581 = vunpack.c.h.b16 %v98
    %v582 = vunpack.c.l.b16 %v99
    %v583 = vunpack.c.h.b16 %v99
    %v584 = vunpack.c.l.b16 %v100
    %v585 = vunpack.c.h.b16 %v100
    %v586 = vunpack.c.l.b16 %v101
    %v587 = vunpack.c.h.b16 %v101
    %v588 = vunpack.c.l.b16 %v102
    %v589 = vunpack.c.h.b16 %v102
    %v590 = vunpack.c.l.b16 %v103
    %v591 = vunpack.c.h.b16 %v103
    %v592 = vunpack.c.l.b16 %v104
    %v593 = vunpack.c.h.b16 %v104
    %v594 = vunpack.c.l.b16 %v105
    %v595 = vunpack.c.h.b16 %v105
    %v596 = vunpack.c.l.b16 %v106
    %v597 = vunpack.c.h.b16 %v106
    %v598 = vunpack.c.l.b16 %v107
    %v599 = vunpack.c.h.b16 %v107
    %v600 = vunpack.c.l.b16 %v108
    %v601 = vunpack.c.h.b16 %v108
    %v602 = vunpack.c.l.b16 %v109
    %v603 = vunpack.c.h.b16 %v109
    %v604 = vunpack.c.l.b16 %v110
    %v605 = vunpack.c.h.b16 %v110
    %v606 = vunpack.c.l.b16 %v111
    %v607 = vunpack.c.h.b16 %v111
    %v608 = vunpack.c.l.b16 %v112
    %v609 = vunpack.c.h.b16 %v112
    %v610 = vunpack.c.l.b16 %v113
    %v611 = vunpack.c.h.b16 %v113
    %v612 = vunpack.c.l.b16 %v114
    %v613 = vunpack.c.h.b16 %v114
    %v614 = vunpack.c.l.b16 %v115
    %v615 = vunpack.c.h.b16 %v115
    %v616 = vunpack.c.l.b16 %v116
    %v617 = vunpack.c.h.b16 %v116
    %v618 = vunpack.c.l.b16 %v117
    %v619 = vunpack.c.h.b16 %v117
    %v620 = vunpack.c.l.b16 %v118
    %v621 = vunpack.c.h.b16 %v118
    %v622 = vunpack.c.l.b16 %v119
    %v623 = vunpack.c.h.b16 %v119
    %v624 = vunpack.c.l.b16 %v120
    %v625 = vunpack.c.h.b16 %v120
    %v626 = vunpack.c.l.b16 %v121
    %v627 = vunpack.c.h.b16 %v121
    %v628 = vunpack.c.l.b16 %v122
    %v629 = vunpack.c.h.b16 %v122
    %v630 = vunpack.c.l.b16 %v123
    %v631 = vunpack.c.h.b16 %v123
    %v632 = vunpack.c.l.b16 %v124
    %v633 = vunpack.c.h.b16 %v124
    %v634 = vunpack.c.l.b16 %v125
    %v635 = vunpack.c.h.b16 %v125
    %v636 = vunpack.c.l.b16 %v126
    %v637 = vunpack.c.h.b16 %v126
    %v638 = vunpack.c.l.b16 %v127
    %v639 = vunpack.c.h.b16 %v127
    %v640 = vunpack.c.l.b16 %v128
    %v641 = vunpack.c.h.b16 %v128
    %v642 = vunpack.c.l.b16 %v129
    %v643 = vunpack.c.h.b16 %v129
    %v644 = vunpack.c.l.b16 %v130
    %v645 = vunpack.c.h.b16 %v130
    %v646 = vunpack.c.l.b16 %v131
    %v647 = vunpack.c.h.b16 %v131
    %v648 = vunpack.c.l.b16 %v132
    %v649 = vunpack.c.h.b16 %v132
    %v650 = vunpack.c.l.b16 %v133
    %v651 = vunpack.c.h.b16 %v133
    %v652 = vunpack.c.l.b16 %v134
    %v653 = vunpack.c.h.b16 %v134
    %v654 = vunpack.c.l.b16 %v135
    %v655 = vunpack.c.h.b16 %v135
    %v656 = vunpack.c.l.b16 %v136
    %v657 = vunpack.c.h.b16 %v136
    %v658 = vunpack.c.l.b16 %v137
    %v659 = vunpack.c.h.b16 %v137
    %v660 = vunpack.c.l.b16 %v138
    %v661 = vunpack.c.h.b16 %v138
    %v662 = vunpack.c.l.b16 %v139
    %v663 = vunpack.c.h.b16 %v139
    %v664 = vunpack.c.l.b16 %v140
    %v665 = vunpack.c.h.b16 %v140
    %v666 = vunpack.c.l.b16 %v141
    %v667 = vunpack.c.h.b16 %v141
    %v668 = vunpack.c.l.b16 %v142
    %v669 = vunpack.c.h.b16 %v142
    %v670 = vunpack.c.l.b16 %v143
    %v671 = vunpack.c.h.b16 %v143
    %v672 = vunpack.c.l.b16 %v144
    %v673 = vunpack.c.h.b16 %v144
    %v674 = vunpack.c.l.b16 %v145
    %v675 = vunpack.c.h.b16 %v145
    %v676 = vunpack.c.l.b16 %v146
    %v677 = vunpack.c.h.b16 %v146
    %v678 = vunpack.c.l.b16 %v147
    %v679 = vunpack.c.h.b16 %v147
    %v680 = vunpack.c.l.b16 %v148
    %v681 = vunpack.c.h.b16 %v148
    %v682 = vunpack.c.l.b16 %v149
    %v683 = vunpack.c.h.b16 %v149
    %v684 = vunpack.c.l.b16 %v150
    %v685 = vunpack.c.h.b16 %v150
    %v686 = vunpack.c.l.b16 %v151
    %v687 = vunpack.c.h.b16 %v151
    %v688 = vunpack.c.l.b16 %v152
    %v689 = vunpack.c.h.b16 %v152
    %v690 = vunpack.c.l.b16 %v153
    %v691 = vunpack.c.h.b16 %v153
    %v692 = vunpack.c.l.b16 %v154
    %v693 = vunpack.c.h.b16 %v154
    %v694 = vunpack.c.l.b16 %v155
    %v695 = vunpack.c.h.b16 %v155
    %v696 = vunpack.c.l.b16 %v156
    %v697 = vunpack.c.h.b16 %v156
    %v698 = vunpack.c.l.b16 %v157
    %v699 = vunpack.c.h.b16 %v157
    %v700 = vunpack.c.l.b16 %v158
    %v701 = vunpack.c.h.b16 %v158
    %v702 = vunpack.c.l.b16 %v159
    %v703 = vunpack.c.h.b16 %v159
    %v704 = vunpack.c.l.b16 %v160
    %v705 = vunpack.c.h.b16 %v160
    %v706 = vunpack.c.l.b16 %v161
    %v707 = vunpack.c.h.b16 %v161
    %v708 = vunpack.c.l.b16 %v162
    %v709 = vunpack.c.h.b16 %v162
    %v710 = vunpack.c.l.b16 %v163
    %v711 = vunpack.c.h.b16 %v163
    %v712 = vunpack.c.l.b16 %v164
    %v713 = vunpack.c.h.b16 %v164
    %v714 = vunpack.c.l.b16 %v165
    %v715 = vunpack.c.h.b16 %v165
    %v716 = vunpack.c.l.b16 %v166
    %v717 = vunpack.c.h.b16 %v166
    %v718 = vunpack.c.l.b16 %v167
    %v719 = vunpack.c.h.b16 %v167
    %v720 = vunpack.c.l.b16 %v168
    %v721 = vunpack.c.h.b16 %v168
    %v722 = vunpack.c.l.b16 %v169
    %v723 = vunpack.c.h.b16 %v169
    %v724 = vunpack.c.l.b16 %v170
    %v725 = vunpack.c.h.b16 %v170
    %v726 = vunpack.c.l.b16 %v171
    %v727 = vunpack.c.h.b16 %v171
    %v728 = vunpack.c.l.b16 %v172
    %v729 = vunpack.c.h.b16 %v172
    %v730 = vunpack.c.l.b16 %v173
    %v731 = vunpack.c.h.b16 %v173
    %v732 = vunpack.c.l.b16 %v174
    %v733 = vunpack.c.h.b16 %v174
    %v734 = vunpack.c.l.b16 %v175
    %v735 = vunpack.c.h.b16 %v175
    %v736 = vunpack.c.l.b16 %v176
    %v737 = vunpack.c.h.b16 %v176
    %v738 = vunpack.c.l.b16 %v177
    %v739 = vunpack.c.h.b16 %v177
    %v740 = vunpack.c.l.b16 %v178
    %v741 = vunpack.c.h.b16 %v178
    %v742 = vunpack.c.l.b16 %v179
    %v743 = vunpack.c.h.b16 %v179
    %v744 = vunpack.c.l.b16 %v180
    %v745 = vunpack.c.h.b16 %v180
    %v746 = vunpack.c.l.b16 %v181
    %v747 = vunpack.c.h.b16 %v181
    %v748 = vunpack.c.l.b16 %v182
    %v749 = vunpack.c.h.b16 %v182
    %v750 = vunpack.c.l.b16 %v183
    %v751 = vunpack.c.h.b16 %v183
    %v752 = vunpack.c.l.b16 %v184
    %v753 = vunpack.c.h.b16 %v184
    %v754 = vunpack.c.l.b16 %v185
    %v755 = vunpack.c.h.b16 %v185
    %v756 = vunpack.c.l.b16 %v186
    %v757 = vunpack.c.h.b16 %v186
    %v758 = vunpack.c.l.b16 %v187
    %v759 = vunpack.c.h.b16 %v187
    %v760 = vunpack.c.l.b16 %v188
    %v761 = vunpack.c.h.b16 %v188
    %v762 = vunpack.c.l.b16 %v189
    %v763 = vunpack.c.h.b16 %v189
    %v764 = vunpack.c.l.b16 %v190
    %v765 = vunpack.c.h.b16 %v190
    %v766 = vunpack.c.l.b16 %v191
    %v767 = vunpack.c.h.b16 %v191
    %v768 = vunpack.c.l.b16 %v192
    %v769 = vunpack.c.h.b16 %v192
    %v770 = vunpack.c.l.b16 %v193
    %v771 = vunpack.c.h.b16 %v193
    %v772 = vunpack.c.l.b16 %v194
    %v773 = vunpack.c.h.b16 %v194
    %v774 = vunpack.c.l.b16 %v195
    %v775 = vunpack.c.h.b16 %v195
    %v776 = vunpack.c.l.b16 %v196
    %v777 = vunpack.c.h.b16 %v196
    %v778 = vunpack.c.l.b16 %v197
    %v779 = vunpack.c.h.b16 %v197
    %v780 = vunpack.c.l.b16 %v198
    %v781 = vunpack.c.h.b16 %v198
    %v782 = vunpack.c.l.b16 %v199
    %v783 = vunpack.c.h.b16 %v199
    %v784 = vunpack.c.l.b16 %v200
    %v785 = vunpack.c.h.b16 %v200
    %v786 = vunpack.c.l.b16 %v201
    %v787 = vunpack.c.h.b16 %v201
    %v788 = vunpack.c.l.b16 %v202
    %v789 = vunpack.c.h.b16 %v202
    %v790 = vunpack.c.l.b16 %v203
    %v791 = vunpack.c.h.b16 %v203
    %v792 = vunpack.c.l.b16 %v204
    %v793 = vunpack.c.h.b16 %v204
    %v794 = vunpack.c.l.b16 %v205
    %v795 = vunpack.c.h.b16 %v205
    %v796 = vunpack.c.l.b16 %v206
    %v797 = vunpack.c.h.b16 %v206
    %v798 = vunpack.c.l.b16 %v207
    %v799 = vunpack.c.h.b16 %v207
    %v800 = vunpack.c.l.b16 %v208
    %v801 = vunpack.c.h.b16 %v208
    %v802 = vunpack.c.l.b16 %v209
    %v803 = vunpack.c.h.b16 %v209
    %v804 = vunpack.c.l.b16 %v210
    %v805 = vunpack.c.h.b16 %v210
    %v806 = vunpack.c.l.b16 %v211
    %v807 = vunpack.c.h.b16 %v211
    %v808 = vunpack.c.l.b16 %v212
    %v809 = vunpack.c.h.b16 %v212
    %v810 = vunpack.c.l.b16 %v213
    %v811 = vunpack.c.h.b16 %v213
    %v812 = vunpack.c.l.b16 %v214
    %v813 = vunpack.c.h.b16 %v214
    %v814 = vunpack.c.l.b16 %v215
    %v815 = vunpack.c.h.b16 %v215
    %v816 = vunpack.c.l.b16 %v216
    %v817 = vunpack.c.h.b16 %v216
    %v818 = vunpack.c.l.b16 %v217
    %v819 = vunpack.c.h.b16 %v217
    %v820 = vunpack.c.l.b16 %v218
    %v821 = vunpack.c.h.b16 %v218
    %v822 = vunpack.c.l.b16 %v219
    %v823 = vunpack.c.h.b16 %v219
    %v824 = vunpack.c.l.b16 %v220
    %v825 = vunpack.c.h.b16 %v220
    %v826 = vunpack.c.l.b16 %v221
    %v827 = vunpack.c.h.b16 %v221
    %v828 = vunpack.c.l.b16 %v222
    %v829 = vunpack.c.h.b16 %v222
    %v830 = vunpack.c.l.b16 %v223
    %v831 = vunpack.c.h.b16 %v223
    %v832 = vunpack.c.l.b16 %v224
    %v833 = vunpack.c.h.b16 %v224
    %v834 = vunpack.c.l.b16 %v225
    %v835 = vunpack.c.h.b16 %v225
    %v836 = vpack.c.b16 %v458, %v452
    %v837 = vpack.c.b16 %v459, %v453
    %v838 = vpack.c.b16 %v460, %v454
    %v839 = vpack.c.b16 %v461, %v455
    %v840 = vpack.c.b16 %v462, %v456
    %v841 = vpack.c.b16 %v463, %v457
    %v842 = vpack.c.b16 %v470, %v464
    %v843 = vpack.c.b16 %v471, %v465
    %v844 = vpack.c.b16 %v472, %v466
    %v845 = vpack.c.b16 %v473, %v467
    %v846 = vpack.c.b16 %v474, %v468
    %v847 = vpack.c.b16 %v475, %v469
    %v848 = vpack.c.b16 %v482, %v476
    %v849 = vpack.c.b16 %v483, %v477
    %v850 = vpack.c.b16 %v484, %v478
    %v851 = vpack.c.b16 %v485, %v479
    %v852 = vpack.c.b16 %v486, %v480
    %v853 = vpack.c.b16 %v487, %v481
    %v854 = vpack.c.b16 %v494, %v488
    %v855 = vpack.c.b16 %v495, %v489
    %v856 = vpack.c.b16 %v496, %v490
    %v857 = vpack.c.b16 %v497, %v491
    %v858 = vpack.c.b16 %v498, %v492
    %v859 = vpack.c.b16 %v499, %v493
    %v860 = vpack.c.b16 %v506, %v500
    %v861 = vpack.c.b16 %v507, %v501
    %v862 = vpack.c.b16 %v508, %v502
    %v863 = vpack.c.b16 %v509, %v503
    %v864 = vpack.c.b16 %v510, %v504
    %v865 = vpack.c.b16 %v511, %v505
    %v866 = vpack.c.b16 %v518, %v512
    %v867 = vpack.c.b16 %v519, %v513
    %v868 = vpack.c.b16 %v520, %v514
    %v869 = vpack.c.b16 %v521, %v515
    %v870 = vpack.c.b16 %v522, %v516
    %v871 = vpack.c.b16 %v523, %v517
    %v872 = vpack.c.b16 %v530, %v524
    %v873 = vpack.c.b16 %v531, %v525
    %v874 = vpack.c.b16 %v532, %v526
    %v875 = vpack.c.b16 %v533, %v527
    %v876 = vpack.c.b16 %v534, %v528
    %v877 = vpack.c.b16 %v535, %v529
    %v878 = vpack.c.b16 %v542, %v536
    %v879 = vpack.c.b16 %v543, %v537
    %v880 = vpack.c.b16 %v544, %v538
    %v881 = vpack.c.b16 %v545, %v539
    %v882 = vpack.c.b16 %v546, %v540
    %v883 = vpack.c.b16 %v547, %v541
    %v884 = vpack.c.b16 %v554, %v548
    %v885 = vpack.c.b16 %v555, %v549
    %v886 = vpack.c.b16 %v556, %v550
    %v887 = vpack.c.b16 %v557, %v551
    %v888 = vpack.c.b16 %v558, %v552
    %v889 = vpack.c.b16 %v559, %v553
    %v890 = vpack.c.b16 %v566, %v560
    %v891 = vpack.c.b16 %v567, %v561
    %v892 = vpack.c.b16 %v568, %v562
    %v893 = vpack.c.b16 %v569, %v563
    %v894 = vpack.c.b16 %v570, %v564
    %v895 = vpack.c.b16 %v571, %v565
    %v896 = vpack.c.b16 %v578, %v572
    %v897 = vpack.c.b16 %v579, %v573
    %v898 = vpack.c.b16 %v580, %v574
    %v899 = vpack.c.b16 %v581, %v575
    %v900 = vpack.c.b16 %v582, %v576
    %v901 = vpack.c.b16 %v583, %v577
    %v902 = vpack.c.b16 %v590, %v584
    %v903 = vpack.c.b16 %v591, %v585
    %v904 = vpack.c.b16 %v592, %v586
    %v905 = vpack.c.b16 %v593, %v587
    %v906 = vpack.c.b16 %v594, %v588
    %v907 = vpack.c.b16 %v595, %v589
    %v908 = vpack.c.b16 %v602, %v596
    %v909 = vpack.c.b16 %v603, %v597
    %v910 = vpack.c.b16 %v604, %v598
    %v911 = vpack.c.b16 %v605, %v599
    %v912 = vpack.c.b16 %v606, %v600
    %v913 = vpack.c.b16 %v607, %v601
    %v914 = vpack.c.b16 %v614, %v608
    %v915 = vpack.c.b16 %v615, %v609
    %v916 = vpack.c.b16 %v616, %v610
    %v917 = vpack.c.b16 %v617, %v611
    %v918 = vpack.c.b16 %v618, %v612
    %v919 = vpack.c.b16 %v619, %v613
    %v920 = vpack.c.b16 %v626, %v620
    %v921 = vpack.c.b16 %v627, %v621
    %v922 = vpack.c.b16 %v628, %v622
    %v923 = vpack.c.b16 %v629, %v623
    %v924 = vpack.c.b16 %v630, %v624
    %v925 = vpack.c.b16 %v631, %v625
    %v926 = vpack.c.b16 %v638, %v632
    %v927 = vpack.c.b16 %v639, %v633
    %v928 = vpack.c.b16 %v640, %v634
    %v929 = vpack.c.b16 %v641, %v635
    %v930 = vpack.c.b16 %v642, %v636
    %v931 = vpack.c.b16 %v643, %v637
    %v932 = vpack.c.b16 %v650, %v644
    %v933 = vpack.c.b16 %v651, %v645
    %v934 = vpack.c.b16 %v652, %v646
    %v935 = vpack.c.b16 %v653, %v647
    %v936 = vpack.c.b16 %v654, %v648
    %v937 = vpack.c.b16 %v655, %v649
    %v938 = vpack.c.b16 %v662, %v656
    %v939 = vpack.c.b16 %v663, %v657
    %v940 = vpack.c.b16 %v664, %v658
    %v941 = vpack.c.b16 %v665, %v659
    %v942 = vpack.c.b16 %v666, %v660
    %v943 = vpack.c.b16 %v667, %v661
    %v944 = vpack.c.b16 %v674, %v668
    %v945 = vpack.c.b16 %v675, %v669
    %v946 = vpack.c.b16 %v676, %v670
    %v947 = vpack.c.b16 %v677, %v671
    %v948 = vpack.c.b16 %v678, %v672
    %v949 = vpack.c.b16 %v679, %v673
    %v950 = vpack.c.b16 %v686, %v680
    %v951 = vpack.c.b16 %v687, %v681
    %v952 = vpack.c.b16 %v688, %v682
    %v953 = vpack.c.b16 %v689, %v683
    %v954 = vpack.c.b16 %v690, %v684
    %v955 = vpack.c.b16 %v691, %v685
    %v956 = vpack.c.b16 %v698, %v692
    %v957 = vpack.c.b16 %v699, %v693
    %v958 = vpack.c.b16 %v700, %v694
    %v959 = vpack.c.b16 %v701, %v695
    %v960 = vpack.c.b16 %v702, %v696
    %v961 = vpack.c.b16 %v703, %v697
    %v962 = vpack.c.b16 %v710, %v704
    %v963 = vpack.c.b16 %v711, %v705
    %v964 = vpack.c.b16 %v712, %v706
    %v965 = vpack.c.b16 %v713, %v707
    %v966 = vpack.c.b16 %v714, %v708
    %v967 = vpack.c.b16 %v715, %v709
    %v968 = vpack.c.b16 %v722, %v716
    %v969 = vpack.c.b16 %v723, %v717
    %v970 = vpack.c.b16 %v724, %v718
    %v971 = vpack.c.b16 %v725, %v719
    %v972 = vpack.c.b16 %v726, %v720
    %v973 = vpack.c.b16 %v727, %v721
    %v974 = vpack.c.b16 %v734, %v728
    %v975 = vpack.c.b16 %v735, %v729
    %v976 = vpack.c.b16 %v736, %v730
    %v977 = vpack.c.b16 %v737, %v731
    %v978 = vpack.c.b16 %v738, %v732
    %v979 = vpack.c.b16 %v739, %v733
    %v980 = vpack.c.b16 %v746, %v740
    %v981 = vpack.c.b16 %v747, %v741
    %v982 = vpack.c.b16 %v748, %v742
    %v983 = vpack.c.b16 %v749, %v743
    %v984 = vpack.c.b16 %v750, %v744
    %v985 = vpack.c.b16 %v751, %v745
    %v986 = vpack.c.b16 %v758, %v752
    %v987 = vpack.c.b16 %v759, %v753
    %v988 = vpack.c.b16 %v760, %v754
    %v989 = vpack.c.b16 %v761, %v755
    %v990 = vpack.c.b16 %v762, %v756
    %v991 = vpack.c.b16 %v763, %v757
    %v992 = vpack.c.b16 %v770, %v764
    %v993 = vpack.c.b16 %v771, %v765
    %v994 = vpack.c.b16 %v772, %v766
    %v995 = vpack.c.b16 %v773, %v767
    %v996 = vpack.c.b16 %v774, %v768
    %v997 = vpack.c.b16 %v775, %v769
    %v998 = vpack.c.b16 %v782, %v776
    %v999 = vpack.c.b16 %v783, %v777
    %v1000 = vpack.c.b16 %v784, %v778
    %v1001 = vpack.c.b16 %v785, %v779
    %v1002 = vpack.c.b16 %v786, %v780
    %v1003 = vpack.c.b16 %v787, %v781
    %v1004 = vpack.c.b16 %v794, %v788
    %v1005 = vpack.c.b16 %v795, %v789
    %v1006 = vpack.c.b16 %v796, %v790
    %v1007 = vpack.c.b16 %v797, %v791
    %v1008 = vpack.c.b16 %v798, %v792
    %v1009 = vpack.c.b16 %v799, %v793
    %v1010 = vpack.c.b16 %v806, %v800
    %v1011 = vpack.c.b16 %v807, %v801
    %v1012 = vpack.c.b16 %v808, %v802
    %v1013 = vpack.c.b16 %v809, %v803
    %v1014 = vpack.c.b16 %v810, %v804
    %v1015 = vpack.c.b16 %v811, %v805
    %v1016 = vpack.c.b16 %v818, %v812
    %v1017 = vpack.c.b16 %v819, %v813
    %v1018 = vpack.c.b16 %v820, %v814
    %v1019 = vpack.c.b16 %v821, %v815
    %v1020 = vpack.c.b16 %v822, %v816
    %v1021 = vpack.c.b16 %v823, %v817
    %v1022 = vpack.c.b16 %v830, %v824
    %v1023 = vpack.c.b16 %v831, %v825
    %v1024 = vpack.c.b16 %v832, %v826
    %v1025 = vpack.c.b16 %v833, %v827
    %v1026 = vpack.c.b16 %v834, %v828
    %v1027 = vpack.c.b16 %v835, %v829
    %1220 = vmatpush.bf16.msra.mxu0 %v878
    %1221 = vmatpush.bf16.msra.mxu0 %v872
    %1222 = vmatpush.bf16.msra.mxu0 %v866
    %1223 = vmatpush.bf16.msra.mxu0 %v860
    %1224 = vmatpush.bf16.msra.mxu0 %v854
    %1225 = vmatpush.bf16.msra.mxu0 %v848
    %1226 = vmatpush.bf16.msra.mxu0 %v842
    %1227 = vmatpush.bf16.msra.mxu0 %v836
    %1228 = vmatmul.bf16.gmra.mxu0 %v252
    %v1229 = vpop.f32.mrf.mxu0
    %v1230 = vadd.f32 %v228, %v1229
    %v1231 = vpop.f32.mrf.mxu0
    %v1232 = vadd.f32 %v228, %v1231
    %1233 = vdwg.mxu0
    %1234 = vmatpush.bf16.msra.mxu0 %v926
    %1235 = vmatpush.bf16.msra.mxu0 %v920
    %1236 = vmatpush.bf16.msra.mxu0 %v914
    %1237 = vmatpush.bf16.msra.mxu0 %v908
    %1238 = vmatpush.bf16.msra.mxu0 %v902
    %1239 = vmatpush.bf16.msra.mxu0 %v896
    %1240 = vmatpush.bf16.msra.mxu0 %v890
    %1241 = vmatpush.bf16.msra.mxu0 %v884
    %1242 = vmatmul.bf16.gmra.mxu0 %v253
    %v1243 = vpop.f32.mrf.mxu0
    %v1244 = vadd.f32 %v1230, %v1243
    %v1245 = vpop.f32.mrf.mxu0
    %v1246 = vadd.f32 %v1232, %v1245
    %1247 = vdwg.mxu0
    %1248 = vmatpush.bf16.msra.mxu0 %v974
    %1249 = vmatpush.bf16.msra.mxu0 %v968
    %1250 = vmatpush.bf16.msra.mxu0 %v962
    %1251 = vmatpush.bf16.msra.mxu0 %v956
    %1252 = vmatpush.bf16.msra.mxu0 %v950
    %1253 = vmatpush.bf16.msra.mxu0 %v944
    %1254 = vmatpush.bf16.msra.mxu0 %v938
    %1255 = vmatpush.bf16.msra.mxu0 %v932
    %1256 = vmatmul.bf16.gmra.mxu0 %v254
    %v1257 = vpop.f32.mrf.mxu0
    %v1258 = vadd.f32 %v1244, %v1257
    %v1259 = vpop.f32.mrf.mxu0
    %v1260 = vadd.f32 %v1246, %v1259
    %1261 = vdwg.mxu0
    %1262 = vmatpush.bf16.msra.mxu0 %v1022
    %1263 = vmatpush.bf16.msra.mxu0 %v1016
    %1264 = vmatpush.bf16.msra.mxu0 %v1010
    %1265 = vmatpush.bf16.msra.mxu0 %v1004
    %1266 = vmatpush.bf16.msra.mxu0 %v998
    %1267 = vmatpush.bf16.msra.mxu0 %v992
    %1268 = vmatpush.bf16.msra.mxu0 %v986
    %1269 = vmatpush.bf16.msra.mxu0 %v980
    %1270 = vmatmul.bf16.gmra.mxu0 %v255
    %v1271 = vpop.f32.mrf.mxu0
    %v1272 = vadd.f32 %v1258, %v1271
    %v1273 = vpop.f32.mrf.mxu0
    %v1274 = vadd.f32 %v1260, %v1273
    %1275 = vdwg.mxu0
    %1276 = vmatpush.bf16.msra.mxu0 %v879
    %1277 = vmatpush.bf16.msra.mxu0 %v873
    %1278 = vmatpush.bf16.msra.mxu0 %v867
    %1279 = vmatpush.bf16.msra.mxu0 %v861
    %1280 = vmatpush.bf16.msra.mxu0 %v855
    %1281 = vmatpush.bf16.msra.mxu0 %v849
    %1282 = vmatpush.bf16.msra.mxu0 %v843
    %1283 = vmatpush.bf16.msra.mxu0 %v837
    %1284 = vmatmul.bf16.gmra.mxu0 %v252
    %v1285 = vpop.f32.mrf.mxu0
    %v1286 = vadd.f32 %v229, %v1285
    %v1287 = vpop.f32.mrf.mxu0
    %v1288 = vadd.f32 %v229, %v1287
    %1289 = vdwg.mxu0
    %1290 = vmatpush.bf16.msra.mxu0 %v927
    %1291 = vmatpush.bf16.msra.mxu0 %v921
    %1292 = vmatpush.bf16.msra.mxu0 %v915
    %1293 = vmatpush.bf16.msra.mxu0 %v909
    %1294 = vmatpush.bf16.msra.mxu0 %v903
    %1295 = vmatpush.bf16.msra.mxu0 %v897
    %1296 = vmatpush.bf16.msra.mxu0 %v891
    %1297 = vmatpush.bf16.msra.mxu0 %v885
    %1298 = vmatmul.bf16.gmra.mxu0 %v253
    %v1299 = vpop.f32.mrf.mxu0
    %v1300 = vadd.f32 %v1286, %v1299
    %v1301 = vpop.f32.mrf.mxu0
    %v1302 = vadd.f32 %v1288, %v1301
    %1303 = vdwg.mxu0
    %1304 = vmatpush.bf16.msra.mxu0 %v975
    %1305 = vmatpush.bf16.msra.mxu0 %v969
    %1306 = vmatpush.bf16.msra.mxu0 %v963
    %1307 = vmatpush.bf16.msra.mxu0 %v957
    %1308 = vmatpush.bf16.msra.mxu0 %v951
    %1309 = vmatpush.bf16.msra.mxu0 %v945
    %1310 = vmatpush.bf16.msra.mxu0 %v939
    %1311 = vmatpush.bf16.msra.mxu0 %v933
    %1312 = vmatmul.bf16.gmra.mxu0 %v254
    %v1313 = vpop.f32.mrf.mxu0
    %v1314 = vadd.f32 %v1300, %v1313
    %v1315 = vpop.f32.mrf.mxu0
    %v1316 = vadd.f32 %v1302, %v1315
    %1317 = vdwg.mxu0
    %1318 = vmatpush.bf16.msra.mxu0 %v1023
    %1319 = vmatpush.bf16.msra.mxu0 %v1017
    %1320 = vmatpush.bf16.msra.mxu0 %v1011
    %1321 = vmatpush.bf16.msra.mxu0 %v1005
    %1322 = vmatpush.bf16.msra.mxu0 %v999
    %1323 = vmatpush.bf16.msra.mxu0 %v993
    %1324 = vmatpush.bf16.msra.mxu0 %v987
    %1325 = vmatpush.bf16.msra.mxu0 %v981
    %1326 = vmatmul.bf16.gmra.mxu0 %v255
    %v1327 = vpop.f32.mrf.mxu0
    %v1328 = vadd.f32 %v1314, %v1327
    %v1329 = vpop.f32.mrf.mxu0
    %v1330 = vadd.f32 %v1316, %v1329
    %1331 = vdwg.mxu0
    %1332 = vmatpush.bf16.msra.mxu0 %v880
    %1333 = vmatpush.bf16.msra.mxu0 %v874
    %1334 = vmatpush.bf16.msra.mxu0 %v868
    %1335 = vmatpush.bf16.msra.mxu0 %v862
    %1336 = vmatpush.bf16.msra.mxu0 %v856
    %1337 = vmatpush.bf16.msra.mxu0 %v850
    %1338 = vmatpush.bf16.msra.mxu0 %v844
    %1339 = vmatpush.bf16.msra.mxu0 %v838
    %1340 = vmatmul.bf16.gmra.mxu0 %v252
    %v1341 = vpop.f32.mrf.mxu0
    %v1342 = vadd.f32 %v230, %v1341
    %v1343 = vpop.f32.mrf.mxu0
    %v1344 = vadd.f32 %v230, %v1343
    %1345 = vdwg.mxu0
    %1346 = vmatpush.bf16.msra.mxu0 %v928
    %1347 = vmatpush.bf16.msra.mxu0 %v922
    %1348 = vmatpush.bf16.msra.mxu0 %v916
    %1349 = vmatpush.bf16.msra.mxu0 %v910
    %1350 = vmatpush.bf16.msra.mxu0 %v904
    %1351 = vmatpush.bf16.msra.mxu0 %v898
    %1352 = vmatpush.bf16.msra.mxu0 %v892
    %1353 = vmatpush.bf16.msra.mxu0 %v886
    %1354 = vmatmul.bf16.gmra.mxu0 %v253
    %v1355 = vpop.f32.mrf.mxu0
    %v1356 = vadd.f32 %v1342, %v1355
    %v1357 = vpop.f32.mrf.mxu0
    %v1358 = vadd.f32 %v1344, %v1357
    %1359 = vdwg.mxu0
    %1360 = vmatpush.bf16.msra.mxu0 %v976
    %1361 = vmatpush.bf16.msra.mxu0 %v970
    %1362 = vmatpush.bf16.msra.mxu0 %v964
    %1363 = vmatpush.bf16.msra.mxu0 %v958
    %1364 = vmatpush.bf16.msra.mxu0 %v952
    %1365 = vmatpush.bf16.msra.mxu0 %v946
    %1366 = vmatpush.bf16.msra.mxu0 %v940
    %1367 = vmatpush.bf16.msra.mxu0 %v934
    %1368 = vmatmul.bf16.gmra.mxu0 %v254
    %v1369 = vpop.f32.mrf.mxu0
    %v1370 = vadd.f32 %v1356, %v1369
    %v1371 = vpop.f32.mrf.mxu0
    %v1372 = vadd.f32 %v1358, %v1371
    %1373 = vdwg.mxu0
    %1374 = vmatpush.bf16.msra.mxu0 %v1024
    %1375 = vmatpush.bf16.msra.mxu0 %v1018
    %1376 = vmatpush.bf16.msra.mxu0 %v1012
    %1377 = vmatpush.bf16.msra.mxu0 %v1006
    %1378 = vmatpush.bf16.msra.mxu0 %v1000
    %1379 = vmatpush.bf16.msra.mxu0 %v994
    %1380 = vmatpush.bf16.msra.mxu0 %v988
    %1381 = vmatpush.bf16.msra.mxu0 %v982
    %1382 = vmatmul.bf16.gmra.mxu0 %v255
    %v1383 = vpop.f32.mrf.mxu0
    %v1384 = vadd.f32 %v1370, %v1383
    %v1385 = vpop.f32.mrf.mxu0
    %v1386 = vadd.f32 %v1372, %v1385
    %1387 = vdwg.mxu0
    %1388 = vmatpush.bf16.msra.mxu0 %v881
    %1389 = vmatpush.bf16.msra.mxu0 %v875
    %1390 = vmatpush.bf16.msra.mxu0 %v869
    %1391 = vmatpush.bf16.msra.mxu0 %v863
    %1392 = vmatpush.bf16.msra.mxu0 %v857
    %1393 = vmatpush.bf16.msra.mxu0 %v851
    %1394 = vmatpush.bf16.msra.mxu0 %v845
    %1395 = vmatpush.bf16.msra.mxu0 %v839
    %1396 = vmatmul.bf16.gmra.mxu0 %v252
    %v1397 = vpop.f32.mrf.mxu0
    %v1398 = vadd.f32 %v231, %v1397
    %v1399 = vpop.f32.mrf.mxu0
    %v1400 = vadd.f32 %v231, %v1399
    %1401 = vdwg.mxu0
    %1402 = vmatpush.bf16.msra.mxu0 %v929
    %1403 = vmatpush.bf16.msra.mxu0 %v923
    %1404 = vmatpush.bf16.msra.mxu0 %v917
    %1405 = vmatpush.bf16.msra.mxu0 %v911
    %1406 = vmatpush.bf16.msra.mxu0 %v905
    %1407 = vmatpush.bf16.msra.mxu0 %v899
    %1408 = vmatpush.bf16.msra.mxu0 %v893
    %1409 = vmatpush.bf16.msra.mxu0 %v887
    %1410 = vmatmul.bf16.gmra.mxu0 %v253
    %v1411 = vpop.f32.mrf.mxu0
    %v1412 = vadd.f32 %v1398, %v1411
    %v1413 = vpop.f32.mrf.mxu0
    %v1414 = vadd.f32 %v1400, %v1413
    %1415 = vdwg.mxu0
    %1416 = vmatpush.bf16.msra.mxu0 %v977
    %1417 = vmatpush.bf16.msra.mxu0 %v971
    %1418 = vmatpush.bf16.msra.mxu0 %v965
    %1419 = vmatpush.bf16.msra.mxu0 %v959
    %1420 = vmatpush.bf16.msra.mxu0 %v953
    %1421 = vmatpush.bf16.msra.mxu0 %v947
    %1422 = vmatpush.bf16.msra.mxu0 %v941
    %1423 = vmatpush.bf16.msra.mxu0 %v935
    %1424 = vmatmul.bf16.gmra.mxu0 %v254
    %v1425 = vpop.f32.mrf.mxu0
    %v1426 = vadd.f32 %v1412, %v1425
    %v1427 = vpop.f32.mrf.mxu0
    %v1428 = vadd.f32 %v1414, %v1427
    %1429 = vdwg.mxu0
    %1430 = vmatpush.bf16.msra.mxu0 %v1025
    %1431 = vmatpush.bf16.msra.mxu0 %v1019
    %1432 = vmatpush.bf16.msra.mxu0 %v1013
    %1433 = vmatpush.bf16.msra.mxu0 %v1007
    %1434 = vmatpush.bf16.msra.mxu0 %v1001
    %1435 = vmatpush.bf16.msra.mxu0 %v995
    %1436 = vmatpush.bf16.msra.mxu0 %v989
    %1437 = vmatpush.bf16.msra.mxu0 %v983
    %1438 = vmatmul.bf16.gmra.mxu0 %v255
    %v1439 = vpop.f32.mrf.mxu0
    %v1440 = vadd.f32 %v1426, %v1439
    %v1441 = vpop.f32.mrf.mxu0
    %v1442 = vadd.f32 %v1428, %v1441
    %1443 = vdwg.mxu0
    %1444 = vmatpush.bf16.msra.mxu0 %v882
    %1445 = vmatpush.bf16.msra.mxu0 %v876
    %1446 = vmatpush.bf16.msra.mxu0 %v870
    %1447 = vmatpush.bf16.msra.mxu0 %v864
    %1448 = vmatpush.bf16.msra.mxu0 %v858
    %1449 = vmatpush.bf16.msra.mxu0 %v852
    %1450 = vmatpush.bf16.msra.mxu0 %v846
    %1451 = vmatpush.bf16.msra.mxu0 %v840
    %1452 = vmatmul.bf16.gmra.mxu0 %v252
    %v1453 = vpop.f32.mrf.mxu0
    %v1454 = vadd.f32 %v232, %v1453
    %v1455 = vpop.f32.mrf.mxu0
    %v1456 = vadd.f32 %v232, %v1455
    %1457 = vdwg.mxu0
    %1458 = vmatpush.bf16.msra.mxu0 %v930
    %1459 = vmatpush.bf16.msra.mxu0 %v924
    %1460 = vmatpush.bf16.msra.mxu0 %v918
    %1461 = vmatpush.bf16.msra.mxu0 %v912
    %1462 = vmatpush.bf16.msra.mxu0 %v906
    %1463 = vmatpush.bf16.msra.mxu0 %v900
    %1464 = vmatpush.bf16.msra.mxu0 %v894
    %1465 = vmatpush.bf16.msra.mxu0 %v888
    %1466 = vmatmul.bf16.gmra.mxu0 %v253
    %v1467 = vpop.f32.mrf.mxu0
    %v1468 = vadd.f32 %v1454, %v1467
    %v1469 = vpop.f32.mrf.mxu0
    %v1470 = vadd.f32 %v1456, %v1469
    %1471 = vdwg.mxu0
    %1472 = vmatpush.bf16.msra.mxu0 %v978
    %1473 = vmatpush.bf16.msra.mxu0 %v972
    %1474 = vmatpush.bf16.msra.mxu0 %v966
    %1475 = vmatpush.bf16.msra.mxu0 %v960
    %1476 = vmatpush.bf16.msra.mxu0 %v954
    %1477 = vmatpush.bf16.msra.mxu0 %v948
    %1478 = vmatpush.bf16.msra.mxu0 %v942
    %1479 = vmatpush.bf16.msra.mxu0 %v936
    %1480 = vmatmul.bf16.gmra.mxu0 %v254
    %v1481 = vpop.f32.mrf.mxu0
    %v1482 = vadd.f32 %v1468, %v1481
    %v1483 = vpop.f32.mrf.mxu0
    %v1484 = vadd.f32 %v1470, %v1483
    %1485 = vdwg.mxu0
    %1486 = vmatpush.bf16.msra.mxu0 %v1026
    %1487 = vmatpush.bf16.msra.mxu0 %v1020
    %1488 = vmatpush.bf16.msra.mxu0 %v1014
    %1489 = vmatpush.bf16.msra.mxu0 %v1008
    %1490 = vmatpush.bf16.msra.mxu0 %v1002
    %1491 = vmatpush.bf16.msra.mxu0 %v996
    %1492 = vmatpush.bf16.msra.mxu0 %v990
    %1493 = vmatpush.bf16.msra.mxu0 %v984
    %1494 = vmatmul.bf16.gmra.mxu0 %v255
    %v1495 = vpop.f32.mrf.mxu0
    %v1496 = vadd.f32 %v1482, %v1495
    %v1497 = vpop.f32.mrf.mxu0
    %v1498 = vadd.f32 %v1484, %v1497
    %1499 = vdwg.mxu0
    %1500 = vmatpush.bf16.msra.mxu0 %v883
    %1501 = vmatpush.bf16.msra.mxu0 %v877
    %1502 = vmatpush.bf16.msra.mxu0 %v871
    %1503 = vmatpush.bf16.msra.mxu0 %v865
    %1504 = vmatpush.bf16.msra.mxu0 %v859
    %1505 = vmatpush.bf16.msra.mxu0 %v853
    %1506 = vmatpush.bf16.msra.mxu0 %v847
    %1507 = vmatpush.bf16.msra.mxu0 %v841
    %1508 = vmatmul.bf16.gmra.mxu0 %v252
    %v1509 = vpop.f32.mrf.mxu0
    %v1510 = vadd.f32 %v233, %v1509
    %v1511 = vpop.f32.mrf.mxu0
    %v1512 = vadd.f32 %v233, %v1511
    %1513 = vdwg.mxu0
    %1514 = vmatpush.bf16.msra.mxu0 %v931
    %1515 = vmatpush.bf16.msra.mxu0 %v925
    %1516 = vmatpush.bf16.msra.mxu0 %v919
    %1517 = vmatpush.bf16.msra.mxu0 %v913
    %1518 = vmatpush.bf16.msra.mxu0 %v907
    %1519 = vmatpush.bf16.msra.mxu0 %v901
    %1520 = vmatpush.bf16.msra.mxu0 %v895
    %1521 = vmatpush.bf16.msra.mxu0 %v889
    %1522 = vmatmul.bf16.gmra.mxu0 %v253
    %v1523 = vpop.f32.mrf.mxu0
    %v1524 = vadd.f32 %v1510, %v1523
    %v1525 = vpop.f32.mrf.mxu0
    %v1526 = vadd.f32 %v1512, %v1525
    %1527 = vdwg.mxu0
    %1528 = vmatpush.bf16.msra.mxu0 %v979
    %1529 = vmatpush.bf16.msra.mxu0 %v973
    %1530 = vmatpush.bf16.msra.mxu0 %v967
    %1531 = vmatpush.bf16.msra.mxu0 %v961
    %1532 = vmatpush.bf16.msra.mxu0 %v955
    %1533 = vmatpush.bf16.msra.mxu0 %v949
    %1534 = vmatpush.bf16.msra.mxu0 %v943
    %1535 = vmatpush.bf16.msra.mxu0 %v937
    %1536 = vmatmul.bf16.gmra.mxu0 %v254
    %v1537 = vpop.f32.mrf.mxu0
    %v1538 = vadd.f32 %v1524, %v1537
    %v1539 = vpop.f32.mrf.mxu0
    %v1540 = vadd.f32 %v1526, %v1539
    %1541 = vdwg.mxu0
    %1542 = vmatpush.bf16.msra.mxu0 %v1027
    %1543 = vmatpush.bf16.msra.mxu0 %v1021
    %1544 = vmatpush.bf16.msra.mxu0 %v1015
    %1545 = vmatpush.bf16.msra.mxu0 %v1009
    %1546 = vmatpush.bf16.msra.mxu0 %v1003
    %1547 = vmatpush.bf16.msra.mxu0 %v997
    %1548 = vmatpush.bf16.msra.mxu0 %v991
    %1549 = vmatpush.bf16.msra.mxu0 %v985
    %1550 = vmatmul.bf16.gmra.mxu0 %v255
    %v1551 = vpop.f32.mrf.mxu0
    %v1552 = vadd.f32 %v1538, %v1551
    %v1553 = vpop.f32.mrf.mxu0
    %v1554 = vadd.f32 %v1540, %v1553
    %1555 = vdwg.mxu0
    %vm1556 = vcmp.ge.f32.partialorder %v1272, 0.0
    %vm1557 = vcmp.ge.f32.partialorder %v1328, 0.0
    %vm1558 = vcmp.ge.f32.partialorder %v1384, 0.0
    %vm1559 = vcmp.ge.f32.partialorder %v1440, 0.0
    %vm1560 = vcmp.ge.f32.partialorder %v1496, 0.0
    %vm1561 = vcmp.ge.f32.partialorder %v1552, 0.0
    %vm1562 = vcmp.ge.f32.partialorder %v1274, 0.0
    %vm1563 = vcmp.ge.f32.partialorder %v1330, 0.0
    %vm1564 = vcmp.ge.f32.partialorder %v1386, 0.0
    %vm1565 = vcmp.ge.f32.partialorder %v1442, 0.0
    %vm1566 = vcmp.ge.f32.partialorder %v1498, 0.0
    %vm1567 = vcmp.ge.f32.partialorder %v1554, 0.0
    %v1568 = vmul.f32 %v1272, 0.2
    %v1569 = vmul.f32 %v1328, 0.2
    %v1570 = vmul.f32 %v1384, 0.2
    %v1571 = vmul.f32 %v1440, 0.2
    %v1572 = vmul.f32 %v1496, 0.2
    %v1573 = vmul.f32 %v1552, 0.2
    %v1574 = vmul.f32 %v1274, 0.2
    %v1575 = vmul.f32 %v1330, 0.2
    %v1576 = vmul.f32 %v1386, 0.2
    %v1577 = vmul.f32 %v1442, 0.2
    %v1578 = vmul.f32 %v1498, 0.2
    %v1579 = vmul.f32 %v1554, 0.2
    %v1580 = vsel %vm1556, %v1272, %v1568
    %v1581 = vsel %vm1557, %v1328, %v1569
    %v1582 = vsel %vm1558, %v1384, %v1570
    %v1583 = vsel %vm1559, %v1440, %v1571
    %v1584 = vsel %vm1560, %v1496, %v1572
    %v1585 = vsel %vm1561, %v1552, %v1573
    %v1586 = vsel %vm1562, %v1274, %v1574
    %v1587 = vsel %vm1563, %v1330, %v1575
    %v1588 = vsel %vm1564, %v1386, %v1576
    %v1589 = vsel %vm1565, %v1442, %v1577
    %v1590 = vsel %vm1566, %v1498, %v1578
    %v1591 = vsel %vm1567, %v1554, %v1579
    %v1592 = vpack.c.bf16 %v1581, %v1580
    %v1593 = vpack.c.bf16 %v1583, %v1582
    %v1594 = vpack.c.bf16 %v1585, %v1584
    %v1595 = vpack.c.bf16 %v1587, %v1586
    %v1596 = vpack.c.bf16 %v1589, %v1588
    %v1597 = vpack.c.bf16 %v1591, %v1590
    %1598 = vst [vmem:[%s3] sm:$0xff] %v1592
    %1599 = vst [vmem:[%s3 + $0x8] sm:$0xff] %v1593
    %1600 = vst [vmem:[%s3 + $0x10] sm:$0xff] %v1594
    %1601 = vst [vmem:[%s3 + $0x18] sm:$0xff] %v1595
    %1602 = vst [vmem:[%s3 + $0x20] sm:$0xff] %v1596
    %1603 = vst [vmem:[%s3 + $0x28] sm:$0xff] %v1597
    // Predicated region
    $region18: #{roi_box_head_forward.9} parent=1 // pred_check
      _
    $region19: #{roi_box_head_forward.9} parent=1 // pred_check_branch
      %1605 = sbr.rel (0) target = $region21
    $region20: #{roi_box_head_forward.9} parent=1 // pred_region
      _
    $region21: #{roi_box_head_forward.9} parent=1 // pred_fallthru
      _
    // Predicated region
    $region22: #{roi_box_head_forward.9} parent=1 // pred_check
      _
    $region23: #{roi_box_head_forward.9} parent=1 // pred_check_branch
      %1607 = sbr.rel (0) target = $region25
    $region24: #{roi_box_head_forward.9} parent=1 // pred_region
      _
    $region25: #{roi_box_head_forward.9} parent=1 // pred_fallthru
      _
    %1608 = vsyncpa [#allocation3], 1

// kernel: roi_box_head_forward.11
$region0: #{roi_box_head_forward.11}
  #allocation0 [shape = 'u32[]', space=smem, size = 0x4, offset = 0x4, fixed_abs, tag = 'smem constant byte address 0x4 - core index']
  #allocation1 [shape = 'u32[72,128]{1,0:T(1,128)}', space=vmem, size = 0x9000, scoped, tag = 'internal scratch']
  %s0 = inlined_call_operand.vmem [shape: bf16[16,768], index: 0, kind: input, shape index: {}]
  %s1 = inlined_call_operand.hbm [shape: bf16[768,128], index: 1, kind: input, shape index: {}]
  %s2 = inlined_call_operand.hbm [shape: f32[1,128], index: 2, kind: input, shape index: {}]
  %s3 = inlined_call_operand.vmem [shape: f32[16,128], index: 3, kind: output, shape index: {}]
  %s4 = sld [smem:[#allocation0]]
  $region30: #{roi_box_head_forward.11} parent=0
    _
  %s6 = ssub.s32 1, %s4
  %s7 = scalar_select 0, %s6, %s4
  $region1: #{roi_box_head_forward.11} parent=0
    #allocation2 [shape = 'u8[196608]{0}', space=vmem, size = 0x30000, scoped, tag = 'input window, operand 1, single buffered']
    #allocation3 [shape = 's32[1]{0}', space=sflag, size = 0x4, scoped, tag = 'scoped memory for roi_box_head_forward.11']
    #allocation4 [shape = 'u8[512]{0}', space=vmem, size = 0x400, scoped, tag = 'input window, operand 2, single buffered']
    #allocation5 [shape = 's32[1]{0}', space=sflag, size = 0x4, scoped, tag = 'scoped memory for roi_box_head_forward.11']
    %8 = vsyncpa [#allocation3], 0
    %9 = vsyncpa [#allocation5], 0
    // Predicated region
    $region2: #{roi_box_head_forward.11} parent=1 // pred_check
      _
    $region3: #{roi_box_head_forward.11} parent=1 // pred_check_branch
      %11 = sbr.rel (0) target = $region5
    $region4: #{roi_box_head_forward.11} parent=1 // pred_region
      _
    $region5: #{roi_box_head_forward.11} parent=1 // pred_fallthru
      _
    // Predicated region
    $region6: #{roi_box_head_forward.11} parent=1 // pred_check
      _
    $region7: #{roi_box_head_forward.11} parent=1 // pred_check_branch
      %13 = sbr.rel (0) target = $region9
    $region8: #{roi_box_head_forward.11} parent=1 // pred_region
      %15 = vsyncadd [#allocation3], 0
      %s16 = sshll.u32 %s1, 4
      %s17 = int_to_ptr.hbm [resolvable:$true] %s16
      %s18 = sshll.u32 [#allocation2], 4
      %s19 = int_to_ptr.vmem [resolvable:$true] %s18
      %24 = dma.hbm_to_vmem [thread:$0]  %s17, 6144, %s19, [#allocation3], 64, 64, 4
    $region9: #{roi_box_head_forward.11} parent=1 // pred_fallthru
      _
    // Predicated region
    $region10: #{roi_box_head_forward.11} parent=1 // pred_check
      _
    $region11: #{roi_box_head_forward.11} parent=1 // pred_check_branch
      %26 = sbr.rel (0) target = $region13
    $region12: #{roi_box_head_forward.11} parent=1 // pred_region
      %28 = vsyncadd [#allocation5], 0
      %s30 = sshll.u32 %s2, 4
      %s31 = int_to_ptr.hbm [resolvable:$true] %s30
      %s32 = sshll.u32 [#allocation4], 4
      %s33 = int_to_ptr.vmem [resolvable:$true] %s32
      %35 = dma.hbm_to_vmem [thread:$0]  %s31, 16, %s33, [#allocation5]
    $region13: #{roi_box_head_forward.11} parent=1 // pred_fallthru
      _
    // Predicated region
    $region14: #{roi_box_head_forward.11} parent=1 // pred_check
      _
    $region15: #{roi_box_head_forward.11} parent=1 // pred_check_branch
      %37 = sbr.rel (0) target = $region17
    $region16: #{roi_box_head_forward.11} parent=1 // pred_region
      %39 = dma.done [#allocation3], 6144
    $region17: #{roi_box_head_forward.11} parent=1 // pred_fallthru
      _
    // Predicated region
    $region18: #{roi_box_head_forward.11} parent=1 // pred_check
      _
    $region19: #{roi_box_head_forward.11} parent=1 // pred_check_branch
      %41 = sbr.rel (0) target = $region21
    $region20: #{roi_box_head_forward.11} parent=1 // pred_region
      %43 = dma.done [#allocation5], 16
    $region21: #{roi_box_head_forward.11} parent=1 // pred_fallthru
      _
    %v44 = vld [vmem:[%s0] sm:$0xff]
    %v45 = vld [vmem:[%s0 + $0x8] sm:$0xff]
    %v46 = vld [vmem:[%s0 + $0x10] sm:$0xff]
    %v47 = vld [vmem:[%s0 + $0x18] sm:$0xff]
    %v48 = vld [vmem:[%s0 + $0x20] sm:$0xff]
    %v49 = vld [vmem:[%s0 + $0x28] sm:$0xff]
    %v50 = vld [vmem:[#allocation2] sm:$0xf]
    %v51 = vld [vmem:[#allocation2 + $0x4] sm:$0xf]
    %v52 = vld [vmem:[#allocation2 + $0x8] sm:$0xf]
    %v53 = vld [vmem:[#allocation2 + $0xc] sm:$0xf]
    %v54 = vld [vmem:[#allocation2 + $0x10] sm:$0xf]
    %v55 = vld [vmem:[#allocation2 + $0x14] sm:$0xf]
    %v56 = vld [vmem:[#allocation2 + $0x18] sm:$0xf]
    %v57 = vld [vmem:[#allocation2 + $0x1c] sm:$0xf]
    %v58 = vld [vmem:[#allocation2 + $0x20] sm:$0xf]
    %v59 = vld [vmem:[#allocation2 + $0x24] sm:$0xf]
    %v60 = vld [vmem:[#allocation2 + $0x28] sm:$0xf]
    %v61 = vld [vmem:[#allocation2 + $0x2c] sm:$0xf]
    %v62 = vld [vmem:[#allocation2 + $0x30] sm:$0xf]
    %v63 = vld [vmem:[#allocation2 + $0x34] sm:$0xf]
    %v64 = vld [vmem:[#allocation2 + $0x38] sm:$0xf]
    %v65 = vld [vmem:[#allocation2 + $0x3c] sm:$0xf]
    %v66 = vld [vmem:[#allocation2 + $0x40] sm:$0xf]
    %v67 = vld [vmem:[#allocation2 + $0x44] sm:$0xf]
    %v68 = vld [vmem:[#allocation2 + $0x48] sm:$0xf]
    %v69 = vld [vmem:[#allocation2 + $0x4c] sm:$0xf]
    %v70 = vld [vmem:[#allocation2 + $0x50] sm:$0xf]
    %v71 = vld [vmem:[#allocation2 + $0x54] sm:$0xf]
    %v72 = vld [vmem:[#allocation2 + $0x58] sm:$0xf]
    %v73 = vld [vmem:[#allocation2 + $0x5c] sm:$0xf]
    %v74 = vld [vmem:[#allocation2 + $0x60] sm:$0xf]
    %v75 = vld [vmem:[#allocation2 + $0x64] sm:$0xf]
    %v76 = vld [vmem:[#allocation2 + $0x68] sm:$0xf]
    %v77 = vld [vmem:[#allocation2 + $0x6c] sm:$0xf]
    %v78 = vld [vmem:[#allocation2 + $0x70] sm:$0xf]
    %v79 = vld [vmem:[#allocation2 + $0x74] sm:$0xf]
    %v80 = vld [vmem:[#allocation2 + $0x78] sm:$0xf]
    %v81 = vld [vmem:[#allocation2 + $0x7c] sm:$0xf]
    %v82 = vld [vmem:[#allocation2 + $0x80] sm:$0xf]
    %v83 = vld [vmem:[#allocation2 + $0x84] sm:$0xf]
    %v84 = vld [vmem:[#allocation2 + $0x88] sm:$0xf]
    %v85 = vld [vmem:[#allocation2 + $0x8c] sm:$0xf]
    %v86 = vld [vmem:[#allocation2 + $0x90] sm:$0xf]
    %v87 = vld [vmem:[#allocation2 + $0x94] sm:$0xf]
    %v88 = vld [vmem:[#allocation2 + $0x98] sm:$0xf]
    %v89 = vld [vmem:[#allocation2 + $0x9c] sm:$0xf]
    %v90 = vld [vmem:[#allocation2 + $0xa0] sm:$0xf]
    %v91 = vld [vmem:[#allocation2 + $0xa4] sm:$0xf]
    %v92 = vld [vmem:[#allocation2 + $0xa8] sm:$0xf]
    %v93 = vld [vmem:[#allocation2 + $0xac] sm:$0xf]
    %v94 = vld [vmem:[#allocation2 + $0xb0] sm:$0xf]
    %v95 = vld [vmem:[#allocation2 + $0xb4] sm:$0xf]
    %v96 = vld [vmem:[#allocation2 + $0xb8] sm:$0xf]
    %v97 = vld [vmem:[#allocation2 + $0xbc] sm:$0xf]
    %v98 = vld [vmem:[#allocation2 + $0xc0] sm:$0xf]
    %v99 = vld [vmem:[#allocation2 + $0xc4] sm:$0xf]
    %v100 = vld [vmem:[#allocation2 + $0xc8] sm:$0xf]
    %v101 = vld [vmem:[#allocation2 + $0xcc] sm:$0xf]
    %v102 = vld [vmem:[#allocation2 + $0xd0] sm:$0xf]
    %v103 = vld [vmem:[#allocation2 + $0xd4] sm:$0xf]
    %v104 = vld [vmem:[#allocation2 + $0xd8] sm:$0xf]
    %v105 = vld [vmem:[#allocation2 + $0xdc] sm:$0xf]
    %v106 = vld [vmem:[#allocation2 + $0xe0] sm:$0xf]
    %v107 = vld [vmem:[#allocation2 + $0xe4] sm:$0xf]
    %v108 = vld [vmem:[#allocation2 + $0xe8] sm:$0xf]
    %v109 = vld [vmem:[#allocation2 + $0xec] sm:$0xf]
    %v110 = vld [vmem:[#allocation2 + $0xf0] sm:$0xf]
    %v111 = vld [vmem:[#allocation2 + $0xf4] sm:$0xf]
    %v112 = vld [vmem:[#allocation2 + $0xf8] sm:$0xf]
    %v113 = vld [vmem:[#allocation2 + $0xfc] sm:$0xf]
    %v114 = vld [vmem:[#allocation2 + $0x100] sm:$0xf]
    %v115 = vld [vmem:[#allocation2 + $0x104] sm:$0xf]
    %v116 = vld [vmem:[#allocation2 + $0x108] sm:$0xf]
    %v117 = vld [vmem:[#allocation2 + $0x10c] sm:$0xf]
    %v118 = vld [vmem:[#allocation2 + $0x110] sm:$0xf]
    %v119 = vld [vmem:[#allocation2 + $0x114] sm:$0xf]
    %v120 = vld [vmem:[#allocation2 + $0x118] sm:$0xf]
    %v121 = vld [vmem:[#allocation2 + $0x11c] sm:$0xf]
    %v122 = vld [vmem:[#allocation2 + $0x120] sm:$0xf]
    %v123 = vld [vmem:[#allocation2 + $0x124] sm:$0xf]
    %v124 = vld [vmem:[#allocation2 + $0x128] sm:$0xf]
    %v125 = vld [vmem:[#allocation2 + $0x12c] sm:$0xf]
    %v126 = vld [vmem:[#allocation2 + $0x130] sm:$0xf]
    %v127 = vld [vmem:[#allocation2 + $0x134] sm:$0xf]
    %v128 = vld [vmem:[#allocation2 + $0x138] sm:$0xf]
    %v129 = vld [vmem:[#allocation2 + $0x13c] sm:$0xf]
    %v130 = vld [vmem:[#allocation2 + $0x140] sm:$0xf]
    %v131 = vld [vmem:[#allocation2 + $0x144] sm:$0xf]
    %v132 = vld [vmem:[#allocation2 + $0x148] sm:$0xf]
    %v133 = vld [vmem:[#allocation2 + $0x14c] sm:$0xf]
    %v134 = vld [vmem:[#allocation2 + $0x150] sm:$0xf]
    %v135 = vld [vmem:[#allocation2 + $0x154] sm:$0xf]
    %v136 = vld [vmem:[#allocation2 + $0x158] sm:$0xf]
    %v137 = vld [vmem:[#allocation2 + $0x15c] sm:$0xf]
    %v138 = vld [vmem:[#allocation2 + $0x160] sm:$0xf]
    %v139 = vld [vmem:[#allocation2 + $0x164] sm:$0xf]
    %v140 = vld [vmem:[#allocation2 + $0x168] sm:$0xf]
    %v141 = vld [vmem:[#allocation2 + $0x16c] sm:$0xf]
    %v142 = vld [vmem:[#allocation2 + $0x170] sm:$0xf]
    %v143 = vld [vmem:[#allocation2 + $0x174] sm:$0xf]
    %v144 = vld [vmem:[#allocation2 + $0x178] sm:$0xf]
    %v145 = vld [vmem:[#allocation2 + $0x17c] sm:$0xf]
    %v146 = vld [vmem:[#allocation4] sm:$0x1]
    %v148 = vperm.slane %v146, 0
    %v156 = vunpack.c.l.b16 %v44
    %v157 = vunpack.c.h.b16 %v44
    %v158 = vunpack.c.l.b16 %v45
    %v159 = vunpack.c.h.b16 %v45
    %v160 = vunpack.c.l.b16 %v46
    %v161 = vunpack.c.h.b16 %v46
    %v162 = vunpack.c.l.b16 %v47
    %v163 = vunpack.c.h.b16 %v47
    %v164 = vunpack.c.l.b16 %v48
    %v165 = vunpack.c.h.b16 %v48
    %v166 = vunpack.c.l.b16 %v49
    %v167 = vunpack.c.h.b16 %v49
    %v168 = vpack.c.b16 %v162, %v156
    %v169 = vpack.c.b16 %v163, %v157
    %v170 = vpack.c.b16 %v164, %v158
    %v171 = vpack.c.b16 %v165, %v159
    %v172 = vpack.c.b16 %v166, %v160
    %v173 = vpack.c.b16 %v167, %v161
    %v276 = vunpack.c.l.b16 %v50
    %v277 = vunpack.c.l.b16 %v51
    %v278 = vunpack.c.l.b16 %v52
    %v279 = vunpack.c.l.b16 %v53
    %v280 = vunpack.c.l.b16 %v54
    %v281 = vunpack.c.l.b16 %v55
    %v282 = vunpack.c.l.b16 %v56
    %v283 = vunpack.c.l.b16 %v57
    %v284 = vunpack.c.l.b16 %v58
    %v285 = vunpack.c.l.b16 %v59
    %v286 = vunpack.c.l.b16 %v60
    %v287 = vunpack.c.l.b16 %v61
    %v288 = vunpack.c.l.b16 %v62
    %v289 = vunpack.c.l.b16 %v63
    %v290 = vunpack.c.l.b16 %v64
    %v291 = vunpack.c.l.b16 %v65
    %v292 = vunpack.c.l.b16 %v66
    %v293 = vunpack.c.l.b16 %v67
    %v294 = vunpack.c.l.b16 %v68
    %v295 = vunpack.c.l.b16 %v69
    %v296 = vunpack.c.l.b16 %v70
    %v297 = vunpack.c.l.b16 %v71
    %v298 = vunpack.c.l.b16 %v72
    %v299 = vunpack.c.l.b16 %v73
    %v300 = vunpack.c.l.b16 %v74
    %v301 = vunpack.c.l.b16 %v75
    %v302 = vunpack.c.l.b16 %v76
    %v303 = vunpack.c.l.b16 %v77
    %v304 = vunpack.c.l.b16 %v78
    %v305 = vunpack.c.l.b16 %v79
    %v306 = vunpack.c.l.b16 %v80
    %v307 = vunpack.c.l.b16 %v81
    %v308 = vunpack.c.l.b16 %v82
    %v309 = vunpack.c.l.b16 %v83
    %v310 = vunpack.c.l.b16 %v84
    %v311 = vunpack.c.l.b16 %v85
    %v312 = vunpack.c.l.b16 %v86
    %v313 = vunpack.c.l.b16 %v87
    %v314 = vunpack.c.l.b16 %v88
    %v315 = vunpack.c.l.b16 %v89
    %v316 = vunpack.c.l.b16 %v90
    %v317 = vunpack.c.l.b16 %v91
    %v318 = vunpack.c.l.b16 %v92
    %v319 = vunpack.c.l.b16 %v93
    %v320 = vunpack.c.l.b16 %v94
    %v321 = vunpack.c.l.b16 %v95
    %v322 = vunpack.c.l.b16 %v96
    %v323 = vunpack.c.l.b16 %v97
    %v324 = vunpack.c.l.b16 %v98
    %v325 = vunpack.c.l.b16 %v99
    %v326 = vunpack.c.l.b16 %v100
    %v327 = vunpack.c.l.b16 %v101
    %v328 = vunpack.c.l.b16 %v102
    %v329 = vunpack.c.l.b16 %v103
    %v330 = vunpack.c.l.b16 %v104
    %v331 = vunpack.c.l.b16 %v105
    %v332 = vunpack.c.l.b16 %v106
    %v333 = vunpack.c.l.b16 %v107
    %v334 = vunpack.c.l.b16 %v108
    %v335 = vunpack.c.l.b16 %v109
    %v336 = vunpack.c.l.b16 %v110
    %v337 = vunpack.c.l.b16 %v111
    %v338 = vunpack.c.l.b16 %v112
    %v339 = vunpack.c.l.b16 %v113
    %v340 = vunpack.c.l.b16 %v114
    %v341 = vunpack.c.l.b16 %v115
    %v342 = vunpack.c.l.b16 %v116
    %v343 = vunpack.c.l.b16 %v117
    %v344 = vunpack.c.l.b16 %v118
    %v345 = vunpack.c.l.b16 %v119
    %v346 = vunpack.c.l.b16 %v120
    %v347 = vunpack.c.l.b16 %v121
    %v348 = vunpack.c.l.b16 %v122
    %v349 = vunpack.c.l.b16 %v123
    %v350 = vunpack.c.l.b16 %v124
    %v351 = vunpack.c.l.b16 %v125
    %v352 = vunpack.c.l.b16 %v126
    %v353 = vunpack.c.l.b16 %v127
    %v354 = vunpack.c.l.b16 %v128
    %v355 = vunpack.c.l.b16 %v129
    %v356 = vunpack.c.l.b16 %v130
    %v357 = vunpack.c.l.b16 %v131
    %v358 = vunpack.c.l.b16 %v132
    %v359 = vunpack.c.l.b16 %v133
    %v360 = vunpack.c.l.b16 %v134
    %v361 = vunpack.c.l.b16 %v135
    %v362 = vunpack.c.l.b16 %v136
    %v363 = vunpack.c.l.b16 %v137
    %v364 = vunpack.c.l.b16 %v138
    %v365 = vunpack.c.l.b16 %v139
    %v366 = vunpack.c.l.b16 %v140
    %v367 = vunpack.c.l.b16 %v141
    %v368 = vunpack.c.l.b16 %v142
    %v369 = vunpack.c.l.b16 %v143
    %v370 = vunpack.c.l.b16 %v144
    %v371 = vunpack.c.l.b16 %v145
    %v372 = vpack.c.b16 %v277, %v276
    %v373 = vpack.c.b16 %v279, %v278
    %v374 = vpack.c.b16 %v281, %v280
    %v375 = vpack.c.b16 %v283, %v282
    %v376 = vpack.c.b16 %v285, %v284
    %v377 = vpack.c.b16 %v287, %v286
    %v378 = vpack.c.b16 %v289, %v288
    %v379 = vpack.c.b16 %v291, %v290
    %v380 = vpack.c.b16 %v293, %v292
    %v381 = vpack.c.b16 %v295, %v294
    %v382 = vpack.c.b16 %v297, %v296
    %v383 = vpack.c.b16 %v299, %v298
    %v384 = vpack.c.b16 %v301, %v300
    %v385 = vpack.c.b16 %v303, %v302
    %v386 = vpack.c.b16 %v305, %v304
    %v387 = vpack.c.b16 %v307, %v306
    %v388 = vpack.c.b16 %v309, %v308
    %v389 = vpack.c.b16 %v311, %v310
    %v390 = vpack.c.b16 %v313, %v312
    %v391 = vpack.c.b16 %v315, %v314
    %v392 = vpack.c.b16 %v317, %v316
    %v393 = vpack.c.b16 %v319, %v318
    %v394 = vpack.c.b16 %v321, %v320
    %v395 = vpack.c.b16 %v323, %v322
    %v396 = vpack.c.b16 %v325, %v324
    %v397 = vpack.c.b16 %v327, %v326
    %v398 = vpack.c.b16 %v329, %v328
    %v399 = vpack.c.b16 %v331, %v330
    %v400 = vpack.c.b16 %v333, %v332
    %v401 = vpack.c.b16 %v335, %v334
    %v402 = vpack.c.b16 %v337, %v336
    %v403 = vpack.c.b16 %v339, %v338
    %v404 = vpack.c.b16 %v341, %v340
    %v405 = vpack.c.b16 %v343, %v342
    %v406 = vpack.c.b16 %v345, %v344
    %v407 = vpack.c.b16 %v347, %v346
    %v408 = vpack.c.b16 %v349, %v348
    %v409 = vpack.c.b16 %v351, %v350
    %v410 = vpack.c.b16 %v353, %v352
    %v411 = vpack.c.b16 %v355, %v354
    %v412 = vpack.c.b16 %v357, %v356
    %v413 = vpack.c.b16 %v359, %v358
    %v414 = vpack.c.b16 %v361, %v360
    %v415 = vpack.c.b16 %v363, %v362
    %v416 = vpack.c.b16 %v365, %v364
    %v417 = vpack.c.b16 %v367, %v366
    %v418 = vpack.c.b16 %v369, %v368
    %v419 = vpack.c.b16 %v371, %v370
    %468 = vmatpush.bf16.msra.mxu0 %v379
    %469 = vmatpush.bf16.msra.mxu0 %v378
    %470 = vmatpush.bf16.msra.mxu0 %v377
    %471 = vmatpush.bf16.msra.mxu0 %v376
    %472 = vmatpush.bf16.msra.mxu0 %v375
    %473 = vmatpush.bf16.msra.mxu0 %v374
    %474 = vmatpush.bf16.msra.mxu0 %v373
    %475 = vmatpush.bf16.msra.mxu0 %v372
    %476 = vmatmul.bf16.gmra.mxu0 %v168
    %v477 = vpop.f32.mrf.mxu0
    %v478 = vadd.f32 %v148, %v477
    %v479 = vpop.f32.mrf.mxu0
    %v480 = vadd.f32 %v148, %v479
    %481 = vdwg.mxu0
    %482 = vmatpush.bf16.msra.mxu0 %v387
    %483 = vmatpush.bf16.msra.mxu0 %v386
    %484 = vmatpush.bf16.msra.mxu0 %v385
    %485 = vmatpush.bf16.msra.mxu0 %v384
    %486 = vmatpush.bf16.msra.mxu0 %v383
    %487 = vmatpush.bf16.msra.mxu0 %v382
    %488 = vmatpush.bf16.msra.mxu0 %v381
    %489 = vmatpush.bf16.msra.mxu0 %v380
    %490 = vmatmul.bf16.gmra.mxu0 %v169
    %v491 = vpop.f32.mrf.mxu0
    %v492 = vadd.f32 %v478, %v491
    %v493 = vpop.f32.mrf.mxu0
    %v494 = vadd.f32 %v480, %v493
    %495 = vdwg.mxu0
    %496 = vmatpush.bf16.msra.mxu0 %v395
    %497 = vmatpush.bf16.msra.mxu0 %v394
    %498 = vmatpush.bf16.msra.mxu0 %v393
    %499 = vmatpush.bf16.msra.mxu0 %v392
    %500 = vmatpush.bf16.msra.mxu0 %v391
    %501 = vmatpush.bf16.msra.mxu0 %v390
    %502 = vmatpush.bf16.msra.mxu0 %v389
    %503 = vmatpush.bf16.msra.mxu0 %v388
    %504 = vmatmul.bf16.gmra.mxu0 %v170
    %v505 = vpop.f32.mrf.mxu0
    %v506 = vadd.f32 %v492, %v505
    %v507 = vpop.f32.mrf.mxu0
    %v508 = vadd.f32 %v494, %v507
    %509 = vdwg.mxu0
    %510 = vmatpush.bf16.msra.mxu0 %v403
    %511 = vmatpush.bf16.msra.mxu0 %v402
    %512 = vmatpush.bf16.msra.mxu0 %v401
    %513 = vmatpush.bf16.msra.mxu0 %v400
    %514 = vmatpush.bf16.msra.mxu0 %v399
    %515 = vmatpush.bf16.msra.mxu0 %v398
    %516 = vmatpush.bf16.msra.mxu0 %v397
    %517 = vmatpush.bf16.msra.mxu0 %v396
    %518 = vmatmul.bf16.gmra.mxu0 %v171
    %v519 = vpop.f32.mrf.mxu0
    %v520 = vadd.f32 %v506, %v519
    %v521 = vpop.f32.mrf.mxu0
    %v522 = vadd.f32 %v508, %v521
    %523 = vdwg.mxu0
    %524 = vmatpush.bf16.msra.mxu0 %v411
    %525 = vmatpush.bf16.msra.mxu0 %v410
    %526 = vmatpush.bf16.msra.mxu0 %v409
    %527 = vmatpush.bf16.msra.mxu0 %v408
    %528 = vmatpush.bf16.msra.mxu0 %v407
    %529 = vmatpush.bf16.msra.mxu0 %v406
    %530 = vmatpush.bf16.msra.mxu0 %v405
    %531 = vmatpush.bf16.msra.mxu0 %v404
    %532 = vmatmul.bf16.gmra.mxu0 %v172
    %v533 = vpop.f32.mrf.mxu0
    %v534 = vadd.f32 %v520, %v533
    %v535 = vpop.f32.mrf.mxu0
    %v536 = vadd.f32 %v522, %v535
    %537 = vdwg.mxu0
    %538 = vmatpush.bf16.msra.mxu0 %v419
    %539 = vmatpush.bf16.msra.mxu0 %v418
    %540 = vmatpush.bf16.msra.mxu0 %v417
    %541 = vmatpush.bf16.msra.mxu0 %v416
    %542 = vmatpush.bf16.msra.mxu0 %v415
    %543 = vmatpush.bf16.msra.mxu0 %v414
    %544 = vmatpush.bf16.msra.mxu0 %v413
    %545 = vmatpush.bf16.msra.mxu0 %v412
    %546 = vmatmul.bf16.gmra.mxu0 %v173
    %v547 = vpop.f32.mrf.mxu0
    %v548 = vadd.f32 %v534, %v547
    %v549 = vpop.f32.mrf.mxu0
    %v550 = vadd.f32 %v536, %v549
    %551 = vdwg.mxu0
    %552 = vst [vmem:[%s3] sm:$0xff] %v548
    %553 = vst [vmem:[%s3 + $0x8] sm:$0xff] %v550
    // Predicated region
    $region22: #{roi_box_head_forward.11} parent=1 // pred_check
      _
    $region23: #{roi_box_head_forward.11} parent=1 // pred_check_branch
      %555 = sbr.rel (0) target = $region25
    $region24: #{roi_box_head_forward.11} parent=1 // pred_region
      _
    $region25: #{roi_box_head_forward.11} parent=1 // pred_fallthru
      _
    // Predicated region
    $region26: #{roi_box_head_forward.11} parent=1 // pred_check
      _
    $region27: #{roi_box_head_forward.11} parent=1 // pred_check_branch
      %557 = sbr.rel (0) target = $region29
    $region28: #{roi_box_head_forward.11} parent=1 // pred_region
      _
    $region29: #{roi_box_head_forward.11} parent=1 // pred_fallthru
      _
    %558 = vsyncpa [#allocation3], 1
    %559 = vsyncpa [#allocation5], 1

// kernel: roi_box_head_forward.10
$region0: #{roi_box_head_forward.10}
  #allocation0 [shape = 'u32[]', space=smem, size = 0x4, offset = 0x4, fixed_abs, tag = 'smem constant byte address 0x4 - core index']
  #allocation1 [shape = 'u32[72,128]{1,0:T(1,128)}', space=vmem, size = 0x9000, scoped, tag = 'internal scratch']
  %s0 = inlined_call_operand.vmem [shape: bf16[16,768], index: 0, kind: input, shape index: {}]
  %s1 = inlined_call_operand.hbm [shape: bf16[768,768], index: 1, kind: input, shape index: {}]
  %s2 = inlined_call_operand.hbm [shape: f32[1,768], index: 2, kind: input, shape index: {}]
  %s3 = inlined_call_operand.vmem [shape: bf16[16,768], index: 3, kind: output, shape index: {}]
  %s4 = sld [smem:[#allocation0]]
  $region30: #{roi_box_head_forward.10} parent=0
    _
  %s6 = ssub.s32 1, %s4
  %s7 = scalar_select 0, %s6, %s4
  $region1: #{roi_box_head_forward.10} parent=0
    #allocation2 [shape = 'u8[1179648]{0}', space=vmem, size = 0x120000, scoped, tag = 'input window, operand 1, single buffered']
    #allocation3 [shape = 's32[1]{0}', space=sflag, size = 0x4, scoped, tag = 'scoped memory for roi_box_head_forward.10']
    #allocation4 [shape = 'u8[3072]{0}', space=vmem, size = 0xc00, scoped, tag = 'input window, operand 2, single buffered']
    #allocation5 [shape = 's32[1]{0}', space=sflag, size = 0x4, scoped, tag = 'scoped memory for roi_box_head_forward.10']
    %8 = vsyncpa [#allocation3], 0
    %9 = vsyncpa [#allocation5], 0
    // Predicated region
    $region2: #{roi_box_head_forward.10} parent=1 // pred_check
      _
    $region3: #{roi_box_head_forward.10} parent=1 // pred_check_branch
      %11 = sbr.rel (0) target = $region5
    $region4: #{roi_box_head_forward.10} parent=1 // pred_region
      _
    $region5: #{roi_box_head_forward.10} parent=1 // pred_fallthru
      _
    // Predicated region
    $region6: #{roi_box_head_forward.10} parent=1 // pred_check
      _
    $region7: #{roi_box_head_forward.10} parent=1 // pred_check_branch
      %13 = sbr.rel (0) target = $region9
    $region8: #{roi_box_head_forward.10} parent=1 // pred_region
      %15 = vsyncadd [#allocation3], 0
      %s16 = sshll.u32 %s1, 4
      %s17 = int_to_ptr.hbm [resolvable:$true] %s16
      %s18 = sshll.u32 [#allocation2], 4
      %s19 = int_to_ptr.vmem [resolvable:$true] %s18
      %24 = dma.hbm_to_vmem [thread:$0]  %s17, 36864, %s19, [#allocation3], 384, 384, 24
    $region9: #{roi_box_head_forward.10} parent=1 // pred_fallthru
      _
    // Predicated region
    $region10: #{roi_box_head_forward.10} parent=1 // pred_check
      _
    $region11: #{roi_box_head_forward.10} parent=1 // pred_check_branch
      %26 = sbr.rel (0) target = $region13
    $region12: #{roi_box_head_forward.10} parent=1 // pred_region
      %28 = vsyncadd [#allocation5], 0
      %s30 = sshll.u32 %s2, 4
      %s31 = int_to_ptr.hbm [resolvable:$true] %s30
      %s32 = sshll.u32 [#allocation4], 4
      %s33 = int_to_ptr.vmem [resolvable:$true] %s32
      %35 = dma.hbm_to_vmem [thread:$0]  %s31, 96, %s33, [#allocation5]
    $region13: #{roi_box_head_forward.10} parent=1 // pred_fallthru
      _
    // Predicated region
    $region14: #{roi_box_head_forward.10} parent=1 // pred_check
      _
    $region15: #{roi_box_head_forward.10} parent=1 // pred_check_branch
      %37 = sbr.rel (0) target = $region17
    $region16: #{roi_box_head_forward.10} parent=1 // pred_region
      %39 = dma.done [#allocation3], 36864
    $region17: #{roi_box_head_forward.10} parent=1 // pred_fallthru
      _
    // Predicated region
    $region18: #{roi_box_head_forward.10} parent=1 // pred_check
      _
    $region19: #{roi_box_head_forward.10} parent=1 // pred_check_branch
      %41 = sbr.rel (0) target = $region21
    $region20: #{roi_box_head_forward.10} parent=1 // pred_region
      %43 = dma.done [#allocation5], 96
    $region21: #{roi_box_head_forward.10} parent=1 // pred_fallthru
      _
    %v44 = vld [vmem:[%s0] sm:$0xff]
    %v45 = vld [vmem:[%s0 + $0x8] sm:$0xff]
    %v46 = vld [vmem:[%s0 + $0x10] sm:$0xff]
    %v47 = vld [vmem:[%s0 + $0x18] sm:$0xff]
    %v48 = vld [vmem:[%s0 + $0x20] sm:$0xff]
    %v49 = vld [vmem:[%s0 + $0x28] sm:$0xff]
    %v50 = vld [vmem:[#allocation2] sm:$0xff]
    %v51 = vld [vmem:[#allocation2 + $0x8] sm:$0xff]
    %v52 = vld [vmem:[#allocation2 + $0x10] sm:$0xff]
    %v53 = vld [vmem:[#allocation2 + $0x18] sm:$0xff]
    %v54 = vld [vmem:[#allocation2 + $0x20] sm:$0xff]
    %v55 = vld [vmem:[#allocation2 + $0x28] sm:$0xff]
    %v56 = vld [vmem:[#allocation2 + $0x30] sm:$0xff]
    %v57 = vld [vmem:[#allocation2 + $0x38] sm:$0xff]
    %v58 = vld [vmem:[#allocation2 + $0x40] sm:$0xff]
    %v59 = vld [vmem:[#allocation2 + $0x48] sm:$0xff]
    %v60 = vld [vmem:[#allocation2 + $0x50] sm:$0xff]
    %v61 = vld [vmem:[#allocation2 + $0x58] sm:$0xff]
    %v62 = vld [vmem:[#allocation2 + $0x60] sm:$0xff]
    %v63 = vld [vmem:[#allocation2 + $0x68] sm:$0xff]
    %v64 = vld [vmem:[#allocation2 + $0x70] sm:$0xff]
    %v65 = vld [vmem:[#allocation2 + $0x78] sm:$0xff]
    %v66 = vld [vmem:[#allocation2 + $0x80] sm:$0xff]
    %v67 = vld [vmem:[#allocation2 + $0x88] sm:$0xff]
    %v68 = vld [vmem:[#allocation2 + $0x90] sm:$0xff]
    %v69 = vld [vmem:[#allocation2 + $0x98] sm:$0xff]
    %v70 = vld [vmem:[#allocation2 + $0xa0] sm:$0xff]
    %v71 = vld [vmem:[#allocation2 + $0xa8] sm:$0xff]
    %v72 = vld [vmem:[#allocation2 + $0xb0] sm:$0xff]
    %v73 = vld [vmem:[#allocation2 + $0xb8] sm:$0xff]
    %v74 = vld [vmem:[#allocation2 + $0xc0] sm:$0xff]
    %v75 = vld [vmem:[#allocation2 + $0xc8] sm:$0xff]
    %v76 = vld [vmem:[#allocation2 + $0xd0] sm:$0xff]
    %v77 = vld [vmem:[#allocation2 + $0xd8] sm:$0xff]
    %v78 = vld [vmem:[#allocation2 + $0xe0] sm:$0xff]
    %v79 = vld [vmem:[#allocation2 + $0xe8] sm:$0xff]
    %v80 = vld [vmem:[#allocation2 + $0xf0] sm:$0xff]
    %v81 = vld [vmem:[#allocation2 + $0xf8] sm:$0xff]
    %v82 = vld [vmem:[#allocation2 + $0x100] sm:$0xff]
    %v83 = vld [vmem:[#allocation2 + $0x108] sm:$0xff]
    %v84 = vld [vmem:[#allocation2 + $0x110] sm:$0xff]
    %v85 = vld [vmem:[#allocation2 + $0x118] sm:$0xff]
    %v86 = vld [vmem:[#allocation2 + $0x120] sm:$0xff]
    %v87 = vld [vmem:[#allocation2 + $0x128] sm:$0xff]
    %v88 = vld [vmem:[#allocation2 + $0x130] sm:$0xff]
    %v89 = vld [vmem:[#allocation2 + $0x138] sm:$0xff]
    %v90 = vld [vmem:[#allocation2 + $0x140] sm:$0xff]
    %v91 = vld [vmem:[#allocation2 + $0x148] sm:$0xff]
    %v92 = vld [vmem:[#allocation2 + $0x150] sm:$0xff]
    %v93 = vld [vmem:[#allocation2 + $0x158] sm:$0xff]
    %v94 = vld [vmem:[#allocation2 + $0x160] sm:$0xff]
    %v95 = vld [vmem:[#allocation2 + $0x168] sm:$0xff]
    %v96 = vld [vmem:[#allocation2 + $0x170] sm:$0xff]
    %v97 = vld [vmem:[#allocation2 + $0x178] sm:$0xff]
    %v98 = vld [vmem:[#allocation2 + $0x180] sm:$0xff]
    %v99 = vld [vmem:[#allocation2 + $0x188] sm:$0xff]
    %v100 = vld [vmem:[#allocation2 + $0x190] sm:$0xff]
    %v101 = vld [vmem:[#allocation2 + $0x198] sm:$0xff]
    %v102 = vld [vmem:[#allocation2 + $0x1a0] sm:$0xff]
    %v103 = vld [vmem:[#allocation2 + $0x1a8] sm:$0xff]
    %v104 = vld [vmem:[#allocation2 + $0x1b0] sm:$0xff]
    %v105 = vld [vmem:[#allocation2 + $0x1b8] sm:$0xff]
    %v106 = vld [vmem:[#allocation2 + $0x1c0] sm:$0xff]
    %v107 = vld [vmem:[#allocation2 + $0x1c8] sm:$0xff]
    %v108 = vld [vmem:[#allocation2 + $0x1d0] sm:$0xff]
    %v109 = vld [vmem:[#allocation2 + $0x1d8] sm:$0xff]
    %v110 = vld [vmem:[#allocation2 + $0x1e0] sm:$0xff]
    %v111 = vld [vmem:[#allocation2 + $0x1e8] sm:$0xff]
    %v112 = vld [vmem:[#allocation2 + $0x1f0] sm:$0xff]
    %v113 = vld [vmem:[#allocation2 + $0x1f8] sm:$0xff]
    %v114 = vld [vmem:[#allocation2 + $0x200] sm:$0xff]
    %v115 = vld [vmem:[#allocation2 + $0x208] sm:$0xff]
    %v116 = vld [vmem:[#allocation2 + $0x210] sm:$0xff]
    %v117 = vld [vmem:[#allocation2 + $0x218] sm:$0xff]
    %v118 = vld [vmem:[#allocation2 + $0x220] sm:$0xff]
    %v119 = vld [vmem:[#allocation2 + $0x228] sm:$0xff]
    %v120 = vld [vmem:[#allocation2 + $0x230] sm:$0xff]
    %v121 = vld [vmem:[#allocation2 + $0x238] sm:$0xff]
    %v122 = vld [vmem:[#allocation2 + $0x240] sm:$0xff]
    %v123 = vld [vmem:[#allocation2 + $0x248] sm:$0xff]
    %v124 = vld [vmem:[#allocation2 + $0x250] sm:$0xff]
    %v125 = vld [vmem:[#allocation2 + $0x258] sm:$0xff]
    %v126 = vld [vmem:[#allocation2 + $0x260] sm:$0xff]
    %v127 = vld [vmem:[#allocation2 + $0x268] sm:$0xff]
    %v128 = vld [vmem:[#allocation2 + $0x270] sm:$0xff]
    %v129 = vld [vmem:[#allocation2 + $0x278] sm:$0xff]
    %v130 = vld [vmem:[#allocation2 + $0x280] sm:$0xff]
    %v131 = vld [vmem:[#allocation2 + $0x288] sm:$0xff]
    %v132 = vld [vmem:[#allocation2 + $0x290] sm:$0xff]
    %v133 = vld [vmem:[#allocation2 + $0x298] sm:$0xff]
    %v134 = vld [vmem:[#allocation2 + $0x2a0] sm:$0xff]
    %v135 = vld [vmem:[#allocation2 + $0x2a8] sm:$0xff]
    %v136 = vld [vmem:[#allocation2 + $0x2b0] sm:$0xff]
    %v137 = vld [vmem:[#allocation2 + $0x2b8] sm:$0xff]
    %v138 = vld [vmem:[#allocation2 + $0x2c0] sm:$0xff]
    %v139 = vld [vmem:[#allocation2 + $0x2c8] sm:$0xff]
    %v140 = vld [vmem:[#allocation2 + $0x2d0] sm:$0xff]
    %v141 = vld [vmem:[#allocation2 + $0x2d8] sm:$0xff]
    %v142 = vld [vmem:[#allocation2 + $0x2e0] sm:$0xff]
    %v143 = vld [vmem:[#allocation2 + $0x2e8] sm:$0xff]
    %v144 = vld [vmem:[#allocation2 + $0x2f0] sm:$0xff]
    %v145 = vld [vmem:[#allocation2 + $0x2f8] sm:$0xff]
    %v146 = vld [vmem:[#allocation2 + $0x300] sm:$0xff]
    %v147 = vld [vmem:[#allocation2 + $0x308] sm:$0xff]
    %v148 = vld [vmem:[#allocation2 + $0x310] sm:$0xff]
    %v149 = vld [vmem:[#allocation2 + $0x318] sm:$0xff]
    %v150 = vld [vmem:[#allocation2 + $0x320] sm:$0xff]
    %v151 = vld [vmem:[#allocation2 + $0x328] sm:$0xff]
    %v152 = vld [vmem:[#allocation2 + $0x330] sm:$0xff]
    %v153 = vld [vmem:[#allocation2 + $0x338] sm:$0xff]
    %v154 = vld [vmem:[#allocation2 + $0x340] sm:$0xff]
    %v155 = vld [vmem:[#allocation2 + $0x348] sm:$0xff]
    %v156 = vld [vmem:[#allocation2 + $0x350] sm:$0xff]
    %v157 = vld [vmem:[#allocation2 + $0x358] sm:$0xff]
    %v158 = vld [vmem:[#allocation2 + $0x360] sm:$0xff]
    %v159 = vld [vmem:[#allocation2 + $0x368] sm:$0xff]
    %v160 = vld [vmem:[#allocation2 + $0x370] sm:$0xff]
    %v161 = vld [vmem:[#allocation2 + $0x378] sm:$0xff]
    %v162 = vld [vmem:[#allocation2 + $0x380] sm:$0xff]
    %v163 = vld [vmem:[#allocation2 + $0x388] sm:$0xff]
    %v164 = vld [vmem:[#allocation2 + $0x390] sm:$0xff]
    %v165 = vld [vmem:[#allocation2 + $0x398] sm:$0xff]
    %v166 = vld [vmem:[#allocation2 + $0x3a0] sm:$0xff]
    %v167 = vld [vmem:[#allocation2 + $0x3a8] sm:$0xff]
    %v168 = vld [vmem:[#allocation2 + $0x3b0] sm:$0xff]
    %v169 = vld [vmem:[#allocation2 + $0x3b8] sm:$0xff]
    %v170 = vld [vmem:[#allocation2 + $0x3c0] sm:$0xff]
    %v171 = vld [vmem:[#allocation2 + $0x3c8] sm:$0xff]
    %v172 = vld [vmem:[#allocation2 + $0x3d0] sm:$0xff]
    %v173 = vld [vmem:[#allocation2 + $0x3d8] sm:$0xff]
    %v174 = vld [vmem:[#allocation2 + $0x3e0] sm:$0xff]
    %v175 = vld [vmem:[#allocation2 + $0x3e8] sm:$0xff]
    %v176 = vld [vmem:[#allocation2 + $0x3f0] sm:$0xff]
    %v177 = vld [vmem:[#allocation2 + $0x3f8] sm:$0xff]
    %v178 = vld [vmem:[#allocation2 + $0x400] sm:$0xff]
    %v179 = vld [vmem:[#allocation2 + $0x408] sm:$0xff]
    %v180 = vld [vmem:[#allocation2 + $0x410] sm:$0xff]
    %v181 = vld [vmem:[#allocation2 + $0x418] sm:$0xff]
    %v182 = vld [vmem:[#allocation2 + $0x420] sm:$0xff]
    %v183 = vld [vmem:[#allocation2 + $0x428] sm:$0xff]
    %v184 = vld [vmem:[#allocation2 + $0x430] sm:$0xff]
    %v185 = vld [vmem:[#allocation2 + $0x438] sm:$0xff]
    %v186 = vld [vmem:[#allocation2 + $0x440] sm:$0xff]
    %v187 = vld [vmem:[#allocation2 + $0x448] sm:$0xff]
    %v188 = vld [vmem:[#allocation2 + $0x450] sm:$0xff]
    %v189 = vld [vmem:[#allocation2 + $0x458] sm:$0xff]
    %v190 = vld [vmem:[#allocation2 + $0x460] sm:$0xff]
    %v191 = vld [vmem:[#allocation2 + $0x468] sm:$0xff]
    %v192 = vld [vmem:[#allocation2 + $0x470] sm:$0xff]
    %v193 = vld [vmem:[#allocation2 + $0x478] sm:$0xff]
    %v194 = vld [vmem:[#allocation2 + $0x480] sm:$0xff]
    %v195 = vld [vmem:[#allocation2 + $0x488] sm:$0xff]
    %v196 = vld [vmem:[#allocation2 + $0x490] sm:$0xff]
    %v197 = vld [vmem:[#allocation2 + $0x498] sm:$0xff]
    %v198 = vld [vmem:[#allocation2 + $0x4a0] sm:$0xff]
    %v199 = vld [vmem:[#allocation2 + $0x4a8] sm:$0xff]
    %v200 = vld [vmem:[#allocation2 + $0x4b0] sm:$0xff]
    %v201 = vld [vmem:[#allocation2 + $0x4b8] sm:$0xff]
    %v202 = vld [vmem:[#allocation2 + $0x4c0] sm:$0xff]
    %v203 = vld [vmem:[#allocation2 + $0x4c8] sm:$0xff]
    %v204 = vld [vmem:[#allocation2 + $0x4d0] sm:$0xff]
    %v205 = vld [vmem:[#allocation2 + $0x4d8] sm:$0xff]
    %v206 = vld [vmem:[#allocation2 + $0x4e0] sm:$0xff]
    %v207 = vld [vmem:[#allocation2 + $0x4e8] sm:$0xff]
    %v208 = vld [vmem:[#allocation2 + $0x4f0] sm:$0xff]
    %v209 = vld [vmem:[#allocation2 + $0x4f8] sm:$0xff]
    %v210 = vld [vmem:[#allocation2 + $0x500] sm:$0xff]
    %v211 = vld [vmem:[#allocation2 + $0x508] sm:$0xff]
    %v212 = vld [vmem:[#allocation2 + $0x510] sm:$0xff]
    %v213 = vld [vmem:[#allocation2 + $0x518] sm:$0xff]
    %v214 = vld [vmem:[#allocation2 + $0x520] sm:$0xff]
    %v215 = vld [vmem:[#allocation2 + $0x528] sm:$0xff]
    %v216 = vld [vmem:[#allocation2 + $0x530] sm:$0xff]
    %v217 = vld [vmem:[#allocation2 + $0x538] sm:$0xff]
    %v218 = vld [vmem:[#allocation2 + $0x540] sm:$0xff]
    %v219 = vld [vmem:[#allocation2 + $0x548] sm:$0xff]
    %v220 = vld [vmem:[#allocation2 + $0x550] sm:$0xff]
    %v221 = vld [vmem:[#allocation2 + $0x558] sm:$0xff]
    %v222 = vld [vmem:[#allocation2 + $0x560] sm:$0xff]
    %v223 = vld [vmem:[#allocation2 + $0x568] sm:$0xff]
    %v224 = vld [vmem:[#allocation2 + $0x570] sm:$0xff]
    %v225 = vld [vmem:[#allocation2 + $0x578] sm:$0xff]
    %v226 = vld [vmem:[#allocation2 + $0x580] sm:$0xff]
    %v227 = vld [vmem:[#allocation2 + $0x588] sm:$0xff]
    %v228 = vld [vmem:[#allocation2 + $0x590] sm:$0xff]
    %v229 = vld [vmem:[#allocation2 + $0x598] sm:$0xff]
    %v230 = vld [vmem:[#allocation2 + $0x5a0] sm:$0xff]
    %v231 = vld [vmem:[#allocation2 + $0x5a8] sm:$0xff]
    %v232 = vld [vmem:[#allocation2 + $0x5b0] sm:$0xff]
    %v233 = vld [vmem:[#allocation2 + $0x5b8] sm:$0xff]
    %v234 = vld [vmem:[#allocation2 + $0x5c0] sm:$0xff]
    %v235 = vld [vmem:[#allocation2 + $0x5c8] sm:$0xff]
    %v236 = vld [vmem:[#allocation2 + $0x5d0] sm:$0xff]
    %v237 = vld [vmem:[#allocation2 + $0x5d8] sm:$0xff]
    %v238 = vld [vmem:[#allocation2 + $0x5e0] sm:$0xff]
    %v239 = vld [vmem:[#allocation2 + $0x5e8] sm:$0xff]
    %v240 = vld [vmem:[#allocation2 + $0x5f0] sm:$0xff]
    %v241 = vld [vmem:[#allocation2 + $0x5f8] sm:$0xff]
    %v242 = vld [vmem:[#allocation2 + $0x600] sm:$0xff]
    %v243 = vld [vmem:[#allocation2 + $0x608] sm:$0xff]
    %v244 = vld [vmem:[#allocation2 + $0x610] sm:$0xff]
    %v245 = vld [vmem:[#allocation2 + $0x618] sm:$0xff]
    %v246 = vld [vmem:[#allocation2 + $0x620] sm:$0xff]
    %v247 = vld [vmem:[#allocation2 + $0x628] sm:$0xff]
    %v248 = vld [vmem:[#allocation2 + $0x630] sm:$0xff]
    %v249 = vld [vmem:[#allocation2 + $0x638] sm:$0xff]
    %v250 = vld [vmem:[#allocation2 + $0x640] sm:$0xff]
    %v251 = vld [vmem:[#allocation2 + $0x648] sm:$0xff]
    %v252 = vld [vmem:[#allocation2 + $0x650] sm:$0xff]
    %v253 = vld [vmem:[#allocation2 + $0x658] sm:$0xff]
    %v254 = vld [vmem:[#allocation2 + $0x660] sm:$0xff]
    %v255 = vld [vmem:[#allocation2 + $0x668] sm:$0xff]
    %v256 = vld [vmem:[#allocation2 + $0x670] sm:$0xff]
    %v257 = vld [vmem:[#allocation2 + $0x678] sm:$0xff]
    %v258 = vld [vmem:[#allocation2 + $0x680] sm:$0xff]
    %v259 = vld [vmem:[#allocation2 + $0x688] sm:$0xff]
    %v260 = vld [vmem:[#allocation2 + $0x690] sm:$0xff]
    %v261 = vld [vmem:[#allocation2 + $0x698] sm:$0xff]
    %v262 = vld [vmem:[#allocation2 + $0x6a0] sm:$0xff]
    %v263 = vld [vmem:[#allocation2 + $0x6a8] sm:$0xff]
    %v264 = vld [vmem:[#allocation2 + $0x6b0] sm:$0xff]
    %v265 = vld [vmem:[#allocation2 + $0x6b8] sm:$0xff]
    %v266 = vld [vmem:[#allocation2 + $0x6c0] sm:$0xff]
    %v267 = vld [vmem:[#allocation2 + $0x6c8] sm:$0xff]
    %v268 = vld [vmem:[#allocation2 + $0x6d0] sm:$0xff]
    %v269 = vld [vmem:[#allocation2 + $0x6d8] sm:$0xff]
    %v270 = vld [vmem:[#allocation2 + $0x6e0] sm:$0xff]
    %v271 = vld [vmem:[#allocation2 + $0x6e8] sm:$0xff]
    %v272 = vld [vmem:[#allocation2 + $0x6f0] sm:$0xff]
    %v273 = vld [vmem:[#allocation2 + $0x6f8] sm:$0xff]
    %v274 = vld [vmem:[#allocation2 + $0x700] sm:$0xff]
    %v275 = vld [vmem:[#allocation2 + $0x708] sm:$0xff]
    %v276 = vld [vmem:[#allocation2 + $0x710] sm:$0xff]
    %v277 = vld [vmem:[#allocation2 + $0x718] sm:$0xff]
    %v278 = vld [vmem:[#allocation2 + $0x720] sm:$0xff]
    %v279 = vld [vmem:[#allocation2 + $0x728] sm:$0xff]
    %v280 = vld [vmem:[#allocation2 + $0x730] sm:$0xff]
    %v281 = vld [vmem:[#allocation2 + $0x738] sm:$0xff]
    %v282 = vld [vmem:[#allocation2 + $0x740] sm:$0xff]
    %v283 = vld [vmem:[#allocation2 + $0x748] sm:$0xff]
    %v284 = vld [vmem:[#allocation2 + $0x750] sm:$0xff]
    %v285 = vld [vmem:[#allocation2 + $0x758] sm:$0xff]
    %v286 = vld [vmem:[#allocation2 + $0x760] sm:$0xff]
    %v287 = vld [vmem:[#allocation2 + $0x768] sm:$0xff]
    %v288 = vld [vmem:[#allocation2 + $0x770] sm:$0xff]
    %v289 = vld [vmem:[#allocation2 + $0x778] sm:$0xff]
    %v290 = vld [vmem:[#allocation2 + $0x780] sm:$0xff]
    %v291 = vld [vmem:[#allocation2 + $0x788] sm:$0xff]
    %v292 = vld [vmem:[#allocation2 + $0x790] sm:$0xff]
    %v293 = vld [vmem:[#allocation2 + $0x798] sm:$0xff]
    %v294 = vld [vmem:[#allocation2 + $0x7a0] sm:$0xff]
    %v295 = vld [vmem:[#allocation2 + $0x7a8] sm:$0xff]
    %v296 = vld [vmem:[#allocation2 + $0x7b0] sm:$0xff]
    %v297 = vld [vmem:[#allocation2 + $0x7b8] sm:$0xff]
    %v298 = vld [vmem:[#allocation2 + $0x7c0] sm:$0xff]
    %v299 = vld [vmem:[#allocation2 + $0x7c8] sm:$0xff]
    %v300 = vld [vmem:[#allocation2 + $0x7d0] sm:$0xff]
    %v301 = vld [vmem:[#allocation2 + $0x7d8] sm:$0xff]
    %v302 = vld [vmem:[#allocation2 + $0x7e0] sm:$0xff]
    %v303 = vld [vmem:[#allocation2 + $0x7e8] sm:$0xff]
    %v304 = vld [vmem:[#allocation2 + $0x7f0] sm:$0xff]
    %v305 = vld [vmem:[#allocation2 + $0x7f8] sm:$0xff]
    %v306 = vld [vmem:[#allocation2 + $0x800] sm:$0xff]
    %v307 = vld [vmem:[#allocation2 + $0x808] sm:$0xff]
    %v308 = vld [vmem:[#allocation2 + $0x810] sm:$0xff]
    %v309 = vld [vmem:[#allocation2 + $0x818] sm:$0xff]
    %v310 = vld [vmem:[#allocation2 + $0x820] sm:$0xff]
    %v311 = vld [vmem:[#allocation2 + $0x828] sm:$0xff]
    %v312 = vld [vmem:[#allocation2 + $0x830] sm:$0xff]
    %v313 = vld [vmem:[#allocation2 + $0x838] sm:$0xff]
    %v314 = vld [vmem:[#allocation2 + $0x840] sm:$0xff]
    %v315 = vld [vmem:[#allocation2 + $0x848] sm:$0xff]
    %v316 = vld [vmem:[#allocation2 + $0x850] sm:$0xff]
    %v317 = vld [vmem:[#allocation2 + $0x858] sm:$0xff]
    %v318 = vld [vmem:[#allocation2 + $0x860] sm:$0xff]
    %v319 = vld [vmem:[#allocation2 + $0x868] sm:$0xff]
    %v320 = vld [vmem:[#allocation2 + $0x870] sm:$0xff]
    %v321 = vld [vmem:[#allocation2 + $0x878] sm:$0xff]
    %v322 = vld [vmem:[#allocation2 + $0x880] sm:$0xff]
    %v323 = vld [vmem:[#allocation2 + $0x888] sm:$0xff]
    %v324 = vld [vmem:[#allocation2 + $0x890] sm:$0xff]
    %v325 = vld [vmem:[#allocation2 + $0x898] sm:$0xff]
    %v326 = vld [vmem:[#allocation2 + $0x8a0] sm:$0xff]
    %v327 = vld [vmem:[#allocation2 + $0x8a8] sm:$0xff]
    %v328 = vld [vmem:[#allocation2 + $0x8b0] sm:$0xff]
    %v329 = vld [vmem:[#allocation2 + $0x8b8] sm:$0xff]
    %v330 = vld [vmem:[#allocation2 + $0x8c0] sm:$0xff]
    %v331 = vld [vmem:[#allocation2 + $0x8c8] sm:$0xff]
    %v332 = vld [vmem:[#allocation2 + $0x8d0] sm:$0xff]
    %v333 = vld [vmem:[#allocation2 + $0x8d8] sm:$0xff]
    %v334 = vld [vmem:[#allocation2 + $0x8e0] sm:$0xff]
    %v335 = vld [vmem:[#allocation2 + $0x8e8] sm:$0xff]
    %v336 = vld [vmem:[#allocation2 + $0x8f0] sm:$0xff]
    %v337 = vld [vmem:[#allocation2 + $0x8f8] sm:$0xff]
    %v338 = vld [vmem:[#allocation4] sm:$0x3f]
    %v340 = vperm.slane %v338, 0
    %v341 = vperm.slane %v338, 1
    %v342 = vperm.slane %v338, 2
    %v343 = vperm.slane %v338, 3
    %v344 = vperm.slane %v338, 4
    %v345 = vperm.slane %v338, 5
    %v358 = vunpack.c.l.b16 %v44
    %v359 = vunpack.c.h.b16 %v44
    %v360 = vunpack.c.l.b16 %v45
    %v361 = vunpack.c.h.b16 %v45
    %v362 = vunpack.c.l.b16 %v46
    %v363 = vunpack.c.h.b16 %v46
    %v364 = vunpack.c.l.b16 %v47
    %v365 = vunpack.c.h.b16 %v47
    %v366 = vunpack.c.l.b16 %v48
    %v367 = vunpack.c.h.b16 %v48
    %v368 = vunpack.c.l.b16 %v49
    %v369 = vunpack.c.h.b16 %v49
    %v370 = vpack.c.b16 %v364, %v358
    %v371 = vpack.c.b16 %v365, %v359
    %v372 = vpack.c.b16 %v366, %v360
    %v373 = vpack.c.b16 %v367, %v361
    %v374 = vpack.c.b16 %v368, %v362
    %v375 = vpack.c.b16 %v369, %v363
    %v670 = vunpack.c.l.b16 %v50
    %v671 = vunpack.c.h.b16 %v50
    %v672 = vunpack.c.l.b16 %v51
    %v673 = vunpack.c.h.b16 %v51
    %v674 = vunpack.c.l.b16 %v52
    %v675 = vunpack.c.h.b16 %v52
    %v676 = vunpack.c.l.b16 %v53
    %v677 = vunpack.c.h.b16 %v53
    %v678 = vunpack.c.l.b16 %v54
    %v679 = vunpack.c.h.b16 %v54
    %v680 = vunpack.c.l.b16 %v55
    %v681 = vunpack.c.h.b16 %v55
    %v682 = vunpack.c.l.b16 %v56
    %v683 = vunpack.c.h.b16 %v56
    %v684 = vunpack.c.l.b16 %v57
    %v685 = vunpack.c.h.b16 %v57
    %v686 = vunpack.c.l.b16 %v58
    %v687 = vunpack.c.h.b16 %v58
    %v688 = vunpack.c.l.b16 %v59
    %v689 = vunpack.c.h.b16 %v59
    %v690 = vunpack.c.l.b16 %v60
    %v691 = vunpack.c.h.b16 %v60
    %v692 = vunpack.c.l.b16 %v61
    %v693 = vunpack.c.h.b16 %v61
    %v694 = vunpack.c.l.b16 %v62
    %v695 = vunpack.c.h.b16 %v62
    %v696 = vunpack.c.l.b16 %v63
    %v697 = vunpack.c.h.b16 %v63
    %v698 = vunpack.c.l.b16 %v64
    %v699 = vunpack.c.h.b16 %v64
    %v700 = vunpack.c.l.b16 %v65
    %v701 = vunpack.c.h.b16 %v65
    %v702 = vunpack.c.l.b16 %v66
    %v703 = vunpack.c.h.b16 %v66
    %v704 = vunpack.c.l.b16 %v67
    %v705 = vunpack.c.h.b16 %v67
    %v706 = vunpack.c.l.b16 %v68
    %v707 = vunpack.c.h.b16 %v68
    %v708 = vunpack.c.l.b16 %v69
    %v709 = vunpack.c.h.b16 %v69
    %v710 = vunpack.c.l.b16 %v70
    %v711 = vunpack.c.h.b16 %v70
    %v712 = vunpack.c.l.b16 %v71
    %v713 = vunpack.c.h.b16 %v71
    %v714 = vunpack.c.l.b16 %v72
    %v715 = vunpack.c.h.b16 %v72
    %v716 = vunpack.c.l.b16 %v73
    %v717 = vunpack.c.h.b16 %v73
    %v718 = vunpack.c.l.b16 %v74
    %v719 = vunpack.c.h.b16 %v74
    %v720 = vunpack.c.l.b16 %v75
    %v721 = vunpack.c.h.b16 %v75
    %v722 = vunpack.c.l.b16 %v76
    %v723 = vunpack.c.h.b16 %v76
    %v724 = vunpack.c.l.b16 %v77
    %v725 = vunpack.c.h.b16 %v77
    %v726 = vunpack.c.l.b16 %v78
    %v727 = vunpack.c.h.b16 %v78
    %v728 = vunpack.c.l.b16 %v79
    %v729 = vunpack.c.h.b16 %v79
    %v730 = vunpack.c.l.b16 %v80
    %v731 = vunpack.c.h.b16 %v80
    %v732 = vunpack.c.l.b16 %v81
    %v733 = vunpack.c.h.b16 %v81
    %v734 = vunpack.c.l.b16 %v82
    %v735 = vunpack.c.h.b16 %v82
    %v736 = vunpack.c.l.b16 %v83
    %v737 = vunpack.c.h.b16 %v83
    %v738 = vunpack.c.l.b16 %v84
    %v739 = vunpack.c.h.b16 %v84
    %v740 = vunpack.c.l.b16 %v85
    %v741 = vunpack.c.h.b16 %v85
    %v742 = vunpack.c.l.b16 %v86
    %v743 = vunpack.c.h.b16 %v86
    %v744 = vunpack.c.l.b16 %v87
    %v745 = vunpack.c.h.b16 %v87
    %v746 = vunpack.c.l.b16 %v88
    %v747 = vunpack.c.h.b16 %v88
    %v748 = vunpack.c.l.b16 %v89
    %v749 = vunpack.c.h.b16 %v89
    %v750 = vunpack.c.l.b16 %v90
    %v751 = vunpack.c.h.b16 %v90
    %v752 = vunpack.c.l.b16 %v91
    %v753 = vunpack.c.h.b16 %v91
    %v754 = vunpack.c.l.b16 %v92
    %v755 = vunpack.c.h.b16 %v92
    %v756 = vunpack.c.l.b16 %v93
    %v757 = vunpack.c.h.b16 %v93
    %v758 = vunpack.c.l.b16 %v94
    %v759 = vunpack.c.h.b16 %v94
    %v760 = vunpack.c.l.b16 %v95
    %v761 = vunpack.c.h.b16 %v95
    %v762 = vunpack.c.l.b16 %v96
    %v763 = vunpack.c.h.b16 %v96
    %v764 = vunpack.c.l.b16 %v97
    %v765 = vunpack.c.h.b16 %v97
    %v766 = vunpack.c.l.b16 %v98
    %v767 = vunpack.c.h.b16 %v98
    %v768 = vunpack.c.l.b16 %v99
    %v769 = vunpack.c.h.b16 %v99
    %v770 = vunpack.c.l.b16 %v100
    %v771 = vunpack.c.h.b16 %v100
    %v772 = vunpack.c.l.b16 %v101
    %v773 = vunpack.c.h.b16 %v101
    %v774 = vunpack.c.l.b16 %v102
    %v775 = vunpack.c.h.b16 %v102
    %v776 = vunpack.c.l.b16 %v103
    %v777 = vunpack.c.h.b16 %v103
    %v778 = vunpack.c.l.b16 %v104
    %v779 = vunpack.c.h.b16 %v104
    %v780 = vunpack.c.l.b16 %v105
    %v781 = vunpack.c.h.b16 %v105
    %v782 = vunpack.c.l.b16 %v106
    %v783 = vunpack.c.h.b16 %v106
    %v784 = vunpack.c.l.b16 %v107
    %v785 = vunpack.c.h.b16 %v107
    %v786 = vunpack.c.l.b16 %v108
    %v787 = vunpack.c.h.b16 %v108
    %v788 = vunpack.c.l.b16 %v109
    %v789 = vunpack.c.h.b16 %v109
    %v790 = vunpack.c.l.b16 %v110
    %v791 = vunpack.c.h.b16 %v110
    %v792 = vunpack.c.l.b16 %v111
    %v793 = vunpack.c.h.b16 %v111
    %v794 = vunpack.c.l.b16 %v112
    %v795 = vunpack.c.h.b16 %v112
    %v796 = vunpack.c.l.b16 %v113
    %v797 = vunpack.c.h.b16 %v113
    %v798 = vunpack.c.l.b16 %v114
    %v799 = vunpack.c.h.b16 %v114
    %v800 = vunpack.c.l.b16 %v115
    %v801 = vunpack.c.h.b16 %v115
    %v802 = vunpack.c.l.b16 %v116
    %v803 = vunpack.c.h.b16 %v116
    %v804 = vunpack.c.l.b16 %v117
    %v805 = vunpack.c.h.b16 %v117
    %v806 = vunpack.c.l.b16 %v118
    %v807 = vunpack.c.h.b16 %v118
    %v808 = vunpack.c.l.b16 %v119
    %v809 = vunpack.c.h.b16 %v119
    %v810 = vunpack.c.l.b16 %v120
    %v811 = vunpack.c.h.b16 %v120
    %v812 = vunpack.c.l.b16 %v121
    %v813 = vunpack.c.h.b16 %v121
    %v814 = vunpack.c.l.b16 %v122
    %v815 = vunpack.c.h.b16 %v122
    %v816 = vunpack.c.l.b16 %v123
    %v817 = vunpack.c.h.b16 %v123
    %v818 = vunpack.c.l.b16 %v124
    %v819 = vunpack.c.h.b16 %v124
    %v820 = vunpack.c.l.b16 %v125
    %v821 = vunpack.c.h.b16 %v125
    %v822 = vunpack.c.l.b16 %v126
    %v823 = vunpack.c.h.b16 %v126
    %v824 = vunpack.c.l.b16 %v127
    %v825 = vunpack.c.h.b16 %v127
    %v826 = vunpack.c.l.b16 %v128
    %v827 = vunpack.c.h.b16 %v128
    %v828 = vunpack.c.l.b16 %v129
    %v829 = vunpack.c.h.b16 %v129
    %v830 = vunpack.c.l.b16 %v130
    %v831 = vunpack.c.h.b16 %v130
    %v832 = vunpack.c.l.b16 %v131
    %v833 = vunpack.c.h.b16 %v131
    %v834 = vunpack.c.l.b16 %v132
    %v835 = vunpack.c.h.b16 %v132
    %v836 = vunpack.c.l.b16 %v133
    %v837 = vunpack.c.h.b16 %v133
    %v838 = vunpack.c.l.b16 %v134
    %v839 = vunpack.c.h.b16 %v134
    %v840 = vunpack.c.l.b16 %v135
    %v841 = vunpack.c.h.b16 %v135
    %v842 = vunpack.c.l.b16 %v136
    %v843 = vunpack.c.h.b16 %v136
    %v844 = vunpack.c.l.b16 %v137
    %v845 = vunpack.c.h.b16 %v137
    %v846 = vunpack.c.l.b16 %v138
    %v847 = vunpack.c.h.b16 %v138
    %v848 = vunpack.c.l.b16 %v139
    %v849 = vunpack.c.h.b16 %v139
    %v850 = vunpack.c.l.b16 %v140
    %v851 = vunpack.c.h.b16 %v140
    %v852 = vunpack.c.l.b16 %v141
    %v853 = vunpack.c.h.b16 %v141
    %v854 = vunpack.c.l.b16 %v142
    %v855 = vunpack.c.h.b16 %v142
    %v856 = vunpack.c.l.b16 %v143
    %v857 = vunpack.c.h.b16 %v143
    %v858 = vunpack.c.l.b16 %v144
    %v859 = vunpack.c.h.b16 %v144
    %v860 = vunpack.c.l.b16 %v145
    %v861 = vunpack.c.h.b16 %v145
    %v862 = vunpack.c.l.b16 %v146
    %v863 = vunpack.c.h.b16 %v146
    %v864 = vunpack.c.l.b16 %v147
    %v865 = vunpack.c.h.b16 %v147
    %v866 = vunpack.c.l.b16 %v148
    %v867 = vunpack.c.h.b16 %v148
    %v868 = vunpack.c.l.b16 %v149
    %v869 = vunpack.c.h.b16 %v149
    %v870 = vunpack.c.l.b16 %v150
    %v871 = vunpack.c.h.b16 %v150
    %v872 = vunpack.c.l.b16 %v151
    %v873 = vunpack.c.h.b16 %v151
    %v874 = vunpack.c.l.b16 %v152
    %v875 = vunpack.c.h.b16 %v152
    %v876 = vunpack.c.l.b16 %v153
    %v877 = vunpack.c.h.b16 %v153
    %v878 = vunpack.c.l.b16 %v154
    %v879 = vunpack.c.h.b16 %v154
    %v880 = vunpack.c.l.b16 %v155
    %v881 = vunpack.c.h.b16 %v155
    %v882 = vunpack.c.l.b16 %v156
    %v883 = vunpack.c.h.b16 %v156
    %v884 = vunpack.c.l.b16 %v157
    %v885 = vunpack.c.h.b16 %v157
    %v886 = vunpack.c.l.b16 %v158
    %v887 = vunpack.c.h.b16 %v158
    %v888 = vunpack.c.l.b16 %v159
    %v889 = vunpack.c.h.b16 %v159
    %v890 = vunpack.c.l.b16 %v160
    %v891 = vunpack.c.h.b16 %v160
    %v892 = vunpack.c.l.b16 %v161
    %v893 = vunpack.c.h.b16 %v161
    %v894 = vunpack.c.l.b16 %v162
    %v895 = vunpack.c.h.b16 %v162
    %v896 = vunpack.c.l.b16 %v163
    %v897 = vunpack.c.h.b16 %v163
    %v898 = vunpack.c.l.b16 %v164
    %v899 = vunpack.c.h.b16 %v164
    %v900 = vunpack.c.l.b16 %v165
    %v901 = vunpack.c.h.b16 %v165
    %v902 = vunpack.c.l.b16 %v166
    %v903 = vunpack.c.h.b16 %v166
    %v904 = vunpack.c.l.b16 %v167
    %v905 = vunpack.c.h.b16 %v167
    %v906 = vunpack.c.l.b16 %v168
    %v907 = vunpack.c.h.b16 %v168
    %v908 = vunpack.c.l.b16 %v169
    %v909 = vunpack.c.h.b16 %v169
    %v910 = vunpack.c.l.b16 %v170
    %v911 = vunpack.c.h.b16 %v170
    %v912 = vunpack.c.l.b16 %v171
    %v913 = vunpack.c.h.b16 %v171
    %v914 = vunpack.c.l.b16 %v172
    %v915 = vunpack.c.h.b16 %v172
    %v916 = vunpack.c.l.b16 %v173
    %v917 = vunpack.c.h.b16 %v173
    %v918 = vunpack.c.l.b16 %v174
    %v919 = vunpack.c.h.b16 %v174
    %v920 = vunpack.c.l.b16 %v175
    %v921 = vunpack.c.h.b16 %v175
    %v922 = vunpack.c.l.b16 %v176
    %v923 = vunpack.c.h.b16 %v176
    %v924 = vunpack.c.l.b16 %v177
    %v925 = vunpack.c.h.b16 %v177
    %v926 = vunpack.c.l.b16 %v178
    %v927 = vunpack.c.h.b16 %v178
    %v928 = vunpack.c.l.b16 %v179
    %v929 = vunpack.c.h.b16 %v179
    %v930 = vunpack.c.l.b16 %v180
    %v931 = vunpack.c.h.b16 %v180
    %v932 = vunpack.c.l.b16 %v181
    %v933 = vunpack.c.h.b16 %v181
    %v934 = vunpack.c.l.b16 %v182
    %v935 = vunpack.c.h.b16 %v182
    %v936 = vunpack.c.l.b16 %v183
    %v937 = vunpack.c.h.b16 %v183
    %v938 = vunpack.c.l.b16 %v184
    %v939 = vunpack.c.h.b16 %v184
    %v940 = vunpack.c.l.b16 %v185
    %v941 = vunpack.c.h.b16 %v185
    %v942 = vunpack.c.l.b16 %v186
    %v943 = vunpack.c.h.b16 %v186
    %v944 = vunpack.c.l.b16 %v187
    %v945 = vunpack.c.h.b16 %v187
    %v946 = vunpack.c.l.b16 %v188
    %v947 = vunpack.c.h.b16 %v188
    %v948 = vunpack.c.l.b16 %v189
    %v949 = vunpack.c.h.b16 %v189
    %v950 = vunpack.c.l.b16 %v190
    %v951 = vunpack.c.h.b16 %v190
    %v952 = vunpack.c.l.b16 %v191
    %v953 = vunpack.c.h.b16 %v191
    %v954 = vunpack.c.l.b16 %v192
    %v955 = vunpack.c.h.b16 %v192
    %v956 = vunpack.c.l.b16 %v193
    %v957 = vunpack.c.h.b16 %v193
    %v958 = vunpack.c.l.b16 %v194
    %v959 = vunpack.c.h.b16 %v194
    %v960 = vunpack.c.l.b16 %v195
    %v961 = vunpack.c.h.b16 %v195
    %v962 = vunpack.c.l.b16 %v196
    %v963 = vunpack.c.h.b16 %v196
    %v964 = vunpack.c.l.b16 %v197
    %v965 = vunpack.c.h.b16 %v197
    %v966 = vunpack.c.l.b16 %v198
    %v967 = vunpack.c.h.b16 %v198
    %v968 = vunpack.c.l.b16 %v199
    %v969 = vunpack.c.h.b16 %v199
    %v970 = vunpack.c.l.b16 %v200
    %v971 = vunpack.c.h.b16 %v200
    %v972 = vunpack.c.l.b16 %v201
    %v973 = vunpack.c.h.b16 %v201
    %v974 = vunpack.c.l.b16 %v202
    %v975 = vunpack.c.h.b16 %v202
    %v976 = vunpack.c.l.b16 %v203
    %v977 = vunpack.c.h.b16 %v203
    %v978 = vunpack.c.l.b16 %v204
    %v979 = vunpack.c.h.b16 %v204
    %v980 = vunpack.c.l.b16 %v205
    %v981 = vunpack.c.h.b16 %v205
    %v982 = vunpack.c.l.b16 %v206
    %v983 = vunpack.c.h.b16 %v206
    %v984 = vunpack.c.l.b16 %v207
    %v985 = vunpack.c.h.b16 %v207
    %v986 = vunpack.c.l.b16 %v208
    %v987 = vunpack.c.h.b16 %v208
    %v988 = vunpack.c.l.b16 %v209
    %v989 = vunpack.c.h.b16 %v209
    %v990 = vunpack.c.l.b16 %v210
    %v991 = vunpack.c.h.b16 %v210
    %v992 = vunpack.c.l.b16 %v211
    %v993 = vunpack.c.h.b16 %v211
    %v994 = vunpack.c.l.b16 %v212
    %v995 = vunpack.c.h.b16 %v212
    %v996 = vunpack.c.l.b16 %v213
    %v997 = vunpack.c.h.b16 %v213
    %v998 = vunpack.c.l.b16 %v214
    %v999 = vunpack.c.h.b16 %v214
    %v1000 = vunpack.c.l.b16 %v215
    %v1001 = vunpack.c.h.b16 %v215
    %v1002 = vunpack.c.l.b16 %v216
    %v1003 = vunpack.c.h.b16 %v216
    %v1004 = vunpack.c.l.b16 %v217
    %v1005 = vunpack.c.h.b16 %v217
    %v1006 = vunpack.c.l.b16 %v218
    %v1007 = vunpack.c.h.b16 %v218
    %v1008 = vunpack.c.l.b16 %v219
    %v1009 = vunpack.c.h.b16 %v219
    %v1010 = vunpack.c.l.b16 %v220
    %v1011 = vunpack.c.h.b16 %v220
    %v1012 = vunpack.c.l.b16 %v221
    %v1013 = vunpack.c.h.b16 %v221
    %v1014 = vunpack.c.l.b16 %v222
    %v1015 = vunpack.c.h.b16 %v222
    %v1016 = vunpack.c.l.b16 %v223
    %v1017 = vunpack.c.h.b16 %v223
    %v1018 = vunpack.c.l.b16 %v224
    %v1019 = vunpack.c.h.b16 %v224
    %v1020 = vunpack.c.l.b16 %v225
    %v1021 = vunpack.c.h.b16 %v225
    %v1022 = vunpack.c.l.b16 %v226
    %v1023 = vunpack.c.h.b16 %v226
    %v1024 = vunpack.c.l.b16 %v227
    %v1025 = vunpack.c.h.b16 %v227
    %v1026 = vunpack.c.l.b16 %v228
    %v1027 = vunpack.c.h.b16 %v228
    %v1028 = vunpack.c.l.b16 %v229
    %v1029 = vunpack.c.h.b16 %v229
    %v1030 = vunpack.c.l.b16 %v230
    %v1031 = vunpack.c.h.b16 %v230
    %v1032 = vunpack.c.l.b16 %v231
    %v1033 = vunpack.c.h.b16 %v231
    %v1034 = vunpack.c.l.b16 %v232
    %v1035 = vunpack.c.h.b16 %v232
    %v1036 = vunpack.c.l.b16 %v233
    %v1037 = vunpack.c.h.b16 %v233
    %v1038 = vunpack.c.l.b16 %v234
    %v1039 = vunpack.c.h.b16 %v234
    %v1040 = vunpack.c.l.b16 %v235
    %v1041 = vunpack.c.h.b16 %v235
    %v1042 = vunpack.c.l.b16 %v236
    %v1043 = vunpack.c.h.b16 %v236
    %v1044 = vunpack.c.l.b16 %v237
    %v1045 = vunpack.c.h.b16 %v237
    %v1046 = vunpack.c.l.b16 %v238
    %v1047 = vunpack.c.h.b16 %v238
    %v1048 = vunpack.c.l.b16 %v239
    %v1049 = vunpack.c.h.b16 %v239
    %v1050 = vunpack.c.l.b16 %v240
    %v1051 = vunpack.c.h.b16 %v240
    %v1052 = vunpack.c.l.b16 %v241
    %v1053 = vunpack.c.h.b16 %v241
    %v1054 = vunpack.c.l.b16 %v242
    %v1055 = vunpack.c.h.b16 %v242
    %v1056 = vunpack.c.l.b16 %v243
    %v1057 = vunpack.c.h.b16 %v243
    %v1058 = vunpack.c.l.b16 %v244
    %v1059 = vunpack.c.h.b16 %v244
    %v1060 = vunpack.c.l.b16 %v245
    %v1061 = vunpack.c.h.b16 %v245
    %v1062 = vunpack.c.l.b16 %v246
    %v1063 = vunpack.c.h.b16 %v246
    %v1064 = vunpack.c.l.b16 %v247
    %v1065 = vunpack.c.h.b16 %v247
    %v1066 = vunpack.c.l.b16 %v248
    %v1067 = vunpack.c.h.b16 %v248
    %v1068 = vunpack.c.l.b16 %v249
    %v1069 = vunpack.c.h.b16 %v249
    %v1070 = vunpack.c.l.b16 %v250
    %v1071 = vunpack.c.h.b16 %v250
    %v1072 = vunpack.c.l.b16 %v251
    %v1073 = vunpack.c.h.b16 %v251
    %v1074 = vunpack.c.l.b16 %v252
    %v1075 = vunpack.c.h.b16 %v252
    %v1076 = vunpack.c.l.b16 %v253
    %v1077 = vunpack.c.h.b16 %v253
    %v1078 = vunpack.c.l.b16 %v254
    %v1079 = vunpack.c.h.b16 %v254
    %v1080 = vunpack.c.l.b16 %v255
    %v1081 = vunpack.c.h.b16 %v255
    %v1082 = vunpack.c.l.b16 %v256
    %v1083 = vunpack.c.h.b16 %v256
    %v1084 = vunpack.c.l.b16 %v257
    %v1085 = vunpack.c.h.b16 %v257
    %v1086 = vunpack.c.l.b16 %v258
    %v1087 = vunpack.c.h.b16 %v258
    %v1088 = vunpack.c.l.b16 %v259
    %v1089 = vunpack.c.h.b16 %v259
    %v1090 = vunpack.c.l.b16 %v260
    %v1091 = vunpack.c.h.b16 %v260
    %v1092 = vunpack.c.l.b16 %v261
    %v1093 = vunpack.c.h.b16 %v261
    %v1094 = vunpack.c.l.b16 %v262
    %v1095 = vunpack.c.h.b16 %v262
    %v1096 = vunpack.c.l.b16 %v263
    %v1097 = vunpack.c.h.b16 %v263
    %v1098 = vunpack.c.l.b16 %v264
    %v1099 = vunpack.c.h.b16 %v264
    %v1100 = vunpack.c.l.b16 %v265
    %v1101 = vunpack.c.h.b16 %v265
    %v1102 = vunpack.c.l.b16 %v266
    %v1103 = vunpack.c.h.b16 %v266
    %v1104 = vunpack.c.l.b16 %v267
    %v1105 = vunpack.c.h.b16 %v267
    %v1106 = vunpack.c.l.b16 %v268
    %v1107 = vunpack.c.h.b16 %v268
    %v1108 = vunpack.c.l.b16 %v269
    %v1109 = vunpack.c.h.b16 %v269
    %v1110 = vunpack.c.l.b16 %v270
    %v1111 = vunpack.c.h.b16 %v270
    %v1112 = vunpack.c.l.b16 %v271
    %v1113 = vunpack.c.h.b16 %v271
    %v1114 = vunpack.c.l.b16 %v272
    %v1115 = vunpack.c.h.b16 %v272
    %v1116 = vunpack.c.l.b16 %v273
    %v1117 = vunpack.c.h.b16 %v273
    %v1118 = vunpack.c.l.b16 %v274
    %v1119 = vunpack.c.h.b16 %v274
    %v1120 = vunpack.c.l.b16 %v275
    %v1121 = vunpack.c.h.b16 %v275
    %v1122 = vunpack.c.l.b16 %v276
    %v1123 = vunpack.c.h.b16 %v276
    %v1124 = vunpack.c.l.b16 %v277
    %v1125 = vunpack.c.h.b16 %v277
    %v1126 = vunpack.c.l.b16 %v278
    %v1127 = vunpack.c.h.b16 %v278
    %v1128 = vunpack.c.l.b16 %v279
    %v1129 = vunpack.c.h.b16 %v279
    %v1130 = vunpack.c.l.b16 %v280
    %v1131 = vunpack.c.h.b16 %v280
    %v1132 = vunpack.c.l.b16 %v281
    %v1133 = vunpack.c.h.b16 %v281
    %v1134 = vunpack.c.l.b16 %v282
    %v1135 = vunpack.c.h.b16 %v282
    %v1136 = vunpack.c.l.b16 %v283
    %v1137 = vunpack.c.h.b16 %v283
    %v1138 = vunpack.c.l.b16 %v284
    %v1139 = vunpack.c.h.b16 %v284
    %v1140 = vunpack.c.l.b16 %v285
    %v1141 = vunpack.c.h.b16 %v285
    %v1142 = vunpack.c.l.b16 %v286
    %v1143 = vunpack.c.h.b16 %v286
    %v1144 = vunpack.c.l.b16 %v287
    %v1145 = vunpack.c.h.b16 %v287
    %v1146 = vunpack.c.l.b16 %v288
    %v1147 = vunpack.c.h.b16 %v288
    %v1148 = vunpack.c.l.b16 %v289
    %v1149 = vunpack.c.h.b16 %v289
    %v1150 = vunpack.c.l.b16 %v290
    %v1151 = vunpack.c.h.b16 %v290
    %v1152 = vunpack.c.l.b16 %v291
    %v1153 = vunpack.c.h.b16 %v291
    %v1154 = vunpack.c.l.b16 %v292
    %v1155 = vunpack.c.h.b16 %v292
    %v1156 = vunpack.c.l.b16 %v293
    %v1157 = vunpack.c.h.b16 %v293
    %v1158 = vunpack.c.l.b16 %v294
    %v1159 = vunpack.c.h.b16 %v294
    %v1160 = vunpack.c.l.b16 %v295
    %v1161 = vunpack.c.h.b16 %v295
    %v1162 = vunpack.c.l.b16 %v296
    %v1163 = vunpack.c.h.b16 %v296
    %v1164 = vunpack.c.l.b16 %v297
    %v1165 = vunpack.c.h.b16 %v297
    %v1166 = vunpack.c.l.b16 %v298
    %v1167 = vunpack.c.h.b16 %v298
    %v1168 = vunpack.c.l.b16 %v299
    %v1169 = vunpack.c.h.b16 %v299
    %v1170 = vunpack.c.l.b16 %v300
    %v1171 = vunpack.c.h.b16 %v300
    %v1172 = vunpack.c.l.b16 %v301
    %v1173 = vunpack.c.h.b16 %v301
    %v1174 = vunpack.c.l.b16 %v302
    %v1175 = vunpack.c.h.b16 %v302
    %v1176 = vunpack.c.l.b16 %v303
    %v1177 = vunpack.c.h.b16 %v303
    %v1178 = vunpack.c.l.b16 %v304
    %v1179 = vunpack.c.h.b16 %v304
    %v1180 = vunpack.c.l.b16 %v305
    %v1181 = vunpack.c.h.b16 %v305
    %v1182 = vunpack.c.l.b16 %v306
    %v1183 = vunpack.c.h.b16 %v306
    %v1184 = vunpack.c.l.b16 %v307
    %v1185 = vunpack.c.h.b16 %v307
    %v1186 = vunpack.c.l.b16 %v308
    %v1187 = vunpack.c.h.b16 %v308
    %v1188 = vunpack.c.l.b16 %v309
    %v1189 = vunpack.c.h.b16 %v309
    %v1190 = vunpack.c.l.b16 %v310
    %v1191 = vunpack.c.h.b16 %v310
    %v1192 = vunpack.c.l.b16 %v311
    %v1193 = vunpack.c.h.b16 %v311
    %v1194 = vunpack.c.l.b16 %v312
    %v1195 = vunpack.c.h.b16 %v312
    %v1196 = vunpack.c.l.b16 %v313
    %v1197 = vunpack.c.h.b16 %v313
    %v1198 = vunpack.c.l.b16 %v314
    %v1199 = vunpack.c.h.b16 %v314
    %v1200 = vunpack.c.l.b16 %v315
    %v1201 = vunpack.c.h.b16 %v315
    %v1202 = vunpack.c.l.b16 %v316
    %v1203 = vunpack.c.h.b16 %v316
    %v1204 = vunpack.c.l.b16 %v317
    %v1205 = vunpack.c.h.b16 %v317
    %v1206 = vunpack.c.l.b16 %v318
    %v1207 = vunpack.c.h.b16 %v318
    %v1208 = vunpack.c.l.b16 %v319
    %v1209 = vunpack.c.h.b16 %v319
    %v1210 = vunpack.c.l.b16 %v320
    %v1211 = vunpack.c.h.b16 %v320
    %v1212 = vunpack.c.l.b16 %v321
    %v1213 = vunpack.c.h.b16 %v321
    %v1214 = vunpack.c.l.b16 %v322
    %v1215 = vunpack.c.h.b16 %v322
    %v1216 = vunpack.c.l.b16 %v323
    %v1217 = vunpack.c.h.b16 %v323
    %v1218 = vunpack.c.l.b16 %v324
    %v1219 = vunpack.c.h.b16 %v324
    %v1220 = vunpack.c.l.b16 %v325
    %v1221 = vunpack.c.h.b16 %v325
    %v1222 = vunpack.c.l.b16 %v326
    %v1223 = vunpack.c.h.b16 %v326
    %v1224 = vunpack.c.l.b16 %v327
    %v1225 = vunpack.c.h.b16 %v327
    %v1226 = vunpack.c.l.b16 %v328
    %v1227 = vunpack.c.h.b16 %v328
    %v1228 = vunpack.c.l.b16 %v329
    %v1229 = vunpack.c.h.b16 %v329
    %v1230 = vunpack.c.l.b16 %v330
    %v1231 = vunpack.c.h.b16 %v330
    %v1232 = vunpack.c.l.b16 %v331
    %v1233 = vunpack.c.h.b16 %v331
    %v1234 = vunpack.c.l.b16 %v332
    %v1235 = vunpack.c.h.b16 %v332
    %v1236 = vunpack.c.l.b16 %v333
    %v1237 = vunpack.c.h.b16 %v333
    %v1238 = vunpack.c.l.b16 %v334
    %v1239 = vunpack.c.h.b16 %v334
    %v1240 = vunpack.c.l.b16 %v335
    %v1241 = vunpack.c.h.b16 %v335
    %v1242 = vunpack.c.l.b16 %v336
    %v1243 = vunpack.c.h.b16 %v336
    %v1244 = vunpack.c.l.b16 %v337
    %v1245 = vunpack.c.h.b16 %v337
    %v1246 = vpack.c.b16 %v676, %v670
    %v1247 = vpack.c.b16 %v677, %v671
    %v1248 = vpack.c.b16 %v678, %v672
    %v1249 = vpack.c.b16 %v679, %v673
    %v1250 = vpack.c.b16 %v680, %v674
    %v1251 = vpack.c.b16 %v681, %v675
    %v1252 = vpack.c.b16 %v688, %v682
    %v1253 = vpack.c.b16 %v689, %v683
    %v1254 = vpack.c.b16 %v690, %v684
    %v1255 = vpack.c.b16 %v691, %v685
    %v1256 = vpack.c.b16 %v692, %v686
    %v1257 = vpack.c.b16 %v693, %v687
    %v1258 = vpack.c.b16 %v700, %v694
    %v1259 = vpack.c.b16 %v701, %v695
    %v1260 = vpack.c.b16 %v702, %v696
    %v1261 = vpack.c.b16 %v703, %v697
    %v1262 = vpack.c.b16 %v704, %v698
    %v1263 = vpack.c.b16 %v705, %v699
    %v1264 = vpack.c.b16 %v712, %v706
    %v1265 = vpack.c.b16 %v713, %v707
    %v1266 = vpack.c.b16 %v714, %v708
    %v1267 = vpack.c.b16 %v715, %v709
    %v1268 = vpack.c.b16 %v716, %v710
    %v1269 = vpack.c.b16 %v717, %v711
    %v1270 = vpack.c.b16 %v724, %v718
    %v1271 = vpack.c.b16 %v725, %v719
    %v1272 = vpack.c.b16 %v726, %v720
    %v1273 = vpack.c.b16 %v727, %v721
    %v1274 = vpack.c.b16 %v728, %v722
    %v1275 = vpack.c.b16 %v729, %v723
    %v1276 = vpack.c.b16 %v736, %v730
    %v1277 = vpack.c.b16 %v737, %v731
    %v1278 = vpack.c.b16 %v738, %v732
    %v1279 = vpack.c.b16 %v739, %v733
    %v1280 = vpack.c.b16 %v740, %v734
    %v1281 = vpack.c.b16 %v741, %v735
    %v1282 = vpack.c.b16 %v748, %v742
    %v1283 = vpack.c.b16 %v749, %v743
    %v1284 = vpack.c.b16 %v750, %v744
    %v1285 = vpack.c.b16 %v751, %v745
    %v1286 = vpack.c.b16 %v752, %v746
    %v1287 = vpack.c.b16 %v753, %v747
    %v1288 = vpack.c.b16 %v760, %v754
    %v1289 = vpack.c.b16 %v761, %v755
    %v1290 = vpack.c.b16 %v762, %v756
    %v1291 = vpack.c.b16 %v763, %v757
    %v1292 = vpack.c.b16 %v764, %v758
    %v1293 = vpack.c.b16 %v765, %v759
    %v1294 = vpack.c.b16 %v772, %v766
    %v1295 = vpack.c.b16 %v773, %v767
    %v1296 = vpack.c.b16 %v774, %v768
    %v1297 = vpack.c.b16 %v775, %v769
    %v1298 = vpack.c.b16 %v776, %v770
    %v1299 = vpack.c.b16 %v777, %v771
    %v1300 = vpack.c.b16 %v784, %v778
    %v1301 = vpack.c.b16 %v785, %v779
    %v1302 = vpack.c.b16 %v786, %v780
    %v1303 = vpack.c.b16 %v787, %v781
    %v1304 = vpack.c.b16 %v788, %v782
    %v1305 = vpack.c.b16 %v789, %v783
    %v1306 = vpack.c.b16 %v796, %v790
    %v1307 = vpack.c.b16 %v797, %v791
    %v1308 = vpack.c.b16 %v798, %v792
    %v1309 = vpack.c.b16 %v799, %v793
    %v1310 = vpack.c.b16 %v800, %v794
    %v1311 = vpack.c.b16 %v801, %v795
    %v1312 = vpack.c.b16 %v808, %v802
    %v1313 = vpack.c.b16 %v809, %v803
    %v1314 = vpack.c.b16 %v810, %v804
    %v1315 = vpack.c.b16 %v811, %v805
    %v1316 = vpack.c.b16 %v812, %v806
    %v1317 = vpack.c.b16 %v813, %v807
    %v1318 = vpack.c.b16 %v820, %v814
    %v1319 = vpack.c.b16 %v821, %v815
    %v1320 = vpack.c.b16 %v822, %v816
    %v1321 = vpack.c.b16 %v823, %v817
    %v1322 = vpack.c.b16 %v824, %v818
    %v1323 = vpack.c.b16 %v825, %v819
    %v1324 = vpack.c.b16 %v832, %v826
    %v1325 = vpack.c.b16 %v833, %v827
    %v1326 = vpack.c.b16 %v834, %v828
    %v1327 = vpack.c.b16 %v835, %v829
    %v1328 = vpack.c.b16 %v836, %v830
    %v1329 = vpack.c.b16 %v837, %v831
    %v1330 = vpack.c.b16 %v844, %v838
    %v1331 = vpack.c.b16 %v845, %v839
    %v1332 = vpack.c.b16 %v846, %v840
    %v1333 = vpack.c.b16 %v847, %v841
    %v1334 = vpack.c.b16 %v848, %v842
    %v1335 = vpack.c.b16 %v849, %v843
    %v1336 = vpack.c.b16 %v856, %v850
    %v1337 = vpack.c.b16 %v857, %v851
    %v1338 = vpack.c.b16 %v858, %v852
    %v1339 = vpack.c.b16 %v859, %v853
    %v1340 = vpack.c.b16 %v860, %v854
    %v1341 = vpack.c.b16 %v861, %v855
    %v1342 = vpack.c.b16 %v868, %v862
    %v1343 = vpack.c.b16 %v869, %v863
    %v1344 = vpack.c.b16 %v870, %v864
    %v1345 = vpack.c.b16 %v871, %v865
    %v1346 = vpack.c.b16 %v872, %v866
    %v1347 = vpack.c.b16 %v873, %v867
    %v1348 = vpack.c.b16 %v880, %v874
    %v1349 = vpack.c.b16 %v881, %v875
    %v1350 = vpack.c.b16 %v882, %v876
    %v1351 = vpack.c.b16 %v883, %v877
    %v1352 = vpack.c.b16 %v884, %v878
    %v1353 = vpack.c.b16 %v885, %v879
    %v1354 = vpack.c.b16 %v892, %v886
    %v1355 = vpack.c.b16 %v893, %v887
    %v1356 = vpack.c.b16 %v894, %v888
    %v1357 = vpack.c.b16 %v895, %v889
    %v1358 = vpack.c.b16 %v896, %v890
    %v1359 = vpack.c.b16 %v897, %v891
    %v1360 = vpack.c.b16 %v904, %v898
    %v1361 = vpack.c.b16 %v905, %v899
    %v1362 = vpack.c.b16 %v906, %v900
    %v1363 = vpack.c.b16 %v907, %v901
    %v1364 = vpack.c.b16 %v908, %v902
    %v1365 = vpack.c.b16 %v909, %v903
    %v1366 = vpack.c.b16 %v916, %v910
    %v1367 = vpack.c.b16 %v917, %v911
    %v1368 = vpack.c.b16 %v918, %v912
    %v1369 = vpack.c.b16 %v919, %v913
    %v1370 = vpack.c.b16 %v920, %v914
    %v1371 = vpack.c.b16 %v921, %v915
    %v1372 = vpack.c.b16 %v928, %v922
    %v1373 = vpack.c.b16 %v929, %v923
    %v1374 = vpack.c.b16 %v930, %v924
    %v1375 = vpack.c.b16 %v931, %v925
    %v1376 = vpack.c.b16 %v932, %v926
    %v1377 = vpack.c.b16 %v933, %v927
    %v1378 = vpack.c.b16 %v940, %v934
    %v1379 = vpack.c.b16 %v941, %v935
    %v1380 = vpack.c.b16 %v942, %v936
    %v1381 = vpack.c.b16 %v943, %v937
    %v1382 = vpack.c.b16 %v944, %v938
    %v1383 = vpack.c.b16 %v945, %v939
    %v1384 = vpack.c.b16 %v952, %v946
    %v1385 = vpack.c.b16 %v953, %v947
    %v1386 = vpack.c.b16 %v954, %v948
    %v1387 = vpack.c.b16 %v955, %v949
    %v1388 = vpack.c.b16 %v956, %v950
    %v1389 = vpack.c.b16 %v957, %v951
    %v1390 = vpack.c.b16 %v964, %v958
    %v1391 = vpack.c.b16 %v965, %v959
    %v1392 = vpack.c.b16 %v966, %v960
    %v1393 = vpack.c.b16 %v967, %v961
    %v1394 = vpack.c.b16 %v968, %v962
    %v1395 = vpack.c.b16 %v969, %v963
    %v1396 = vpack.c.b16 %v976, %v970
    %v1397 = vpack.c.b16 %v977, %v971
    %v1398 = vpack.c.b16 %v978, %v972
    %v1399 = vpack.c.b16 %v979, %v973
    %v1400 = vpack.c.b16 %v980, %v974
    %v1401 = vpack.c.b16 %v981, %v975
    %v1402 = vpack.c.b16 %v988, %v982
    %v1403 = vpack.c.b16 %v989, %v983
    %v1404 = vpack.c.b16 %v990, %v984
    %v1405 = vpack.c.b16 %v991, %v985
    %v1406 = vpack.c.b16 %v992, %v986
    %v1407 = vpack.c.b16 %v993, %v987
    %v1408 = vpack.c.b16 %v1000, %v994
    %v1409 = vpack.c.b16 %v1001, %v995
    %v1410 = vpack.c.b16 %v1002, %v996
    %v1411 = vpack.c.b16 %v1003, %v997
    %v1412 = vpack.c.b16 %v1004, %v998
    %v1413 = vpack.c.b16 %v1005, %v999
    %v1414 = vpack.c.b16 %v1012, %v1006
    %v1415 = vpack.c.b16 %v1013, %v1007
    %v1416 = vpack.c.b16 %v1014, %v1008
    %v1417 = vpack.c.b16 %v1015, %v1009
    %v1418 = vpack.c.b16 %v1016, %v1010
    %v1419 = vpack.c.b16 %v1017, %v1011
    %v1420 = vpack.c.b16 %v1024, %v1018
    %v1421 = vpack.c.b16 %v1025, %v1019
    %v1422 = vpack.c.b16 %v1026, %v1020
    %v1423 = vpack.c.b16 %v1027, %v1021
    %v1424 = vpack.c.b16 %v1028, %v1022
    %v1425 = vpack.c.b16 %v1029, %v1023
    %v1426 = vpack.c.b16 %v1036, %v1030
    %v1427 = vpack.c.b16 %v1037, %v1031
    %v1428 = vpack.c.b16 %v1038, %v1032
    %v1429 = vpack.c.b16 %v1039, %v1033
    %v1430 = vpack.c.b16 %v1040, %v1034
    %v1431 = vpack.c.b16 %v1041, %v1035
    %v1432 = vpack.c.b16 %v1048, %v1042
    %v1433 = vpack.c.b16 %v1049, %v1043
    %v1434 = vpack.c.b16 %v1050, %v1044
    %v1435 = vpack.c.b16 %v1051, %v1045
    %v1436 = vpack.c.b16 %v1052, %v1046
    %v1437 = vpack.c.b16 %v1053, %v1047
    %v1438 = vpack.c.b16 %v1060, %v1054
    %v1439 = vpack.c.b16 %v1061, %v1055
    %v1440 = vpack.c.b16 %v1062, %v1056
    %v1441 = vpack.c.b16 %v1063, %v1057
    %v1442 = vpack.c.b16 %v1064, %v1058
    %v1443 = vpack.c.b16 %v1065, %v1059
    %v1444 = vpack.c.b16 %v1072, %v1066
    %v1445 = vpack.c.b16 %v1073, %v1067
    %v1446 = vpack.c.b16 %v1074, %v1068
    %v1447 = vpack.c.b16 %v1075, %v1069
    %v1448 = vpack.c.b16 %v1076, %v1070
    %v1449 = vpack.c.b16 %v1077, %v1071
    %v1450 = vpack.c.b16 %v1084, %v1078
    %v1451 = vpack.c.b16 %v1085, %v1079
    %v1452 = vpack.c.b16 %v1086, %v1080
    %v1453 = vpack.c.b16 %v1087, %v1081
    %v1454 = vpack.c.b16 %v1088, %v1082
    %v1455 = vpack.c.b16 %v1089, %v1083
    %v1456 = vpack.c.b16 %v1096, %v1090
    %v1457 = vpack.c.b16 %v1097, %v1091
    %v1458 = vpack.c.b16 %v1098, %v1092
    %v1459 = vpack.c.b16 %v1099, %v1093
    %v1460 = vpack.c.b16 %v1100, %v1094
    %v1461 = vpack.c.b16 %v1101, %v1095
    %v1462 = vpack.c.b16 %v1108, %v1102
    %v1463 = vpack.c.b16 %v1109, %v1103
    %v1464 = vpack.c.b16 %v1110, %v1104
    %v1465 = vpack.c.b16 %v1111, %v1105
    %v1466 = vpack.c.b16 %v1112, %v1106
    %v1467 = vpack.c.b16 %v1113, %v1107
    %v1468 = vpack.c.b16 %v1120, %v1114
    %v1469 = vpack.c.b16 %v1121, %v1115
    %v1470 = vpack.c.b16 %v1122, %v1116
    %v1471 = vpack.c.b16 %v1123, %v1117
    %v1472 = vpack.c.b16 %v1124, %v1118
    %v1473 = vpack.c.b16 %v1125, %v1119
    %v1474 = vpack.c.b16 %v1132, %v1126
    %v1475 = vpack.c.b16 %v1133, %v1127
    %v1476 = vpack.c.b16 %v1134, %v1128
    %v1477 = vpack.c.b16 %v1135, %v1129
    %v1478 = vpack.c.b16 %v1136, %v1130
    %v1479 = vpack.c.b16 %v1137, %v1131
    %v1480 = vpack.c.b16 %v1144, %v1138
    %v1481 = vpack.c.b16 %v1145, %v1139
    %v1482 = vpack.c.b16 %v1146, %v1140
    %v1483 = vpack.c.b16 %v1147, %v1141
    %v1484 = vpack.c.b16 %v1148, %v1142
    %v1485 = vpack.c.b16 %v1149, %v1143
    %v1486 = vpack.c.b16 %v1156, %v1150
    %v1487 = vpack.c.b16 %v1157, %v1151
    %v1488 = vpack.c.b16 %v1158, %v1152
    %v1489 = vpack.c.b16 %v1159, %v1153
    %v1490 = vpack.c.b16 %v1160, %v1154
    %v1491 = vpack.c.b16 %v1161, %v1155
    %v1492 = vpack.c.b16 %v1168, %v1162
    %v1493 = vpack.c.b16 %v1169, %v1163
    %v1494 = vpack.c.b16 %v1170, %v1164
    %v1495 = vpack.c.b16 %v1171, %v1165
    %v1496 = vpack.c.b16 %v1172, %v1166
    %v1497 = vpack.c.b16 %v1173, %v1167
    %v1498 = vpack.c.b16 %v1180, %v1174
    %v1499 = vpack.c.b16 %v1181, %v1175
    %v1500 = vpack.c.b16 %v1182, %v1176
    %v1501 = vpack.c.b16 %v1183, %v1177
    %v1502 = vpack.c.b16 %v1184, %v1178
    %v1503 = vpack.c.b16 %v1185, %v1179
    %v1504 = vpack.c.b16 %v1192, %v1186
    %v1505 = vpack.c.b16 %v1193, %v1187
    %v1506 = vpack.c.b16 %v1194, %v1188
    %v1507 = vpack.c.b16 %v1195, %v1189
    %v1508 = vpack.c.b16 %v1196, %v1190
    %v1509 = vpack.c.b16 %v1197, %v1191
    %v1510 = vpack.c.b16 %v1204, %v1198
    %v1511 = vpack.c.b16 %v1205, %v1199
    %v1512 = vpack.c.b16 %v1206, %v1200
    %v1513 = vpack.c.b16 %v1207, %v1201
    %v1514 = vpack.c.b16 %v1208, %v1202
    %v1515 = vpack.c.b16 %v1209, %v1203
    %v1516 = vpack.c.b16 %v1216, %v1210
    %v1517 = vpack.c.b16 %v1217, %v1211
    %v1518 = vpack.c.b16 %v1218, %v1212
    %v1519 = vpack.c.b16 %v1219, %v1213
    %v1520 = vpack.c.b16 %v1220, %v1214
    %v1521 = vpack.c.b16 %v1221, %v1215
    %v1522 = vpack.c.b16 %v1228, %v1222
    %v1523 = vpack.c.b16 %v1229, %v1223
    %v1524 = vpack.c.b16 %v1230, %v1224
    %v1525 = vpack.c.b16 %v1231, %v1225
    %v1526 = vpack.c.b16 %v1232, %v1226
    %v1527 = vpack.c.b16 %v1233, %v1227
    %v1528 = vpack.c.b16 %v1240, %v1234
    %v1529 = vpack.c.b16 %v1241, %v1235
    %v1530 = vpack.c.b16 %v1242, %v1236
    %v1531 = vpack.c.b16 %v1243, %v1237
    %v1532 = vpack.c.b16 %v1244, %v1238
    %v1533 = vpack.c.b16 %v1245, %v1239
    %1822 = vmatpush.bf16.msra.mxu0 %v1288
    %1823 = vmatpush.bf16.msra.mxu0 %v1282
    %1824 = vmatpush.bf16.msra.mxu0 %v1276
    %1825 = vmatpush.bf16.msra.mxu0 %v1270
    %1826 = vmatpush.bf16.msra.mxu0 %v1264
    %1827 = vmatpush.bf16.msra.mxu0 %v1258
    %1828 = vmatpush.bf16.msra.mxu0 %v1252
    %1829 = vmatpush.bf16.msra.mxu0 %v1246
    %1830 = vmatmul.bf16.gmra.mxu0 %v370
    %v1831 = vpop.f32.mrf.mxu0
    %v1832 = vadd.f32 %v340, %v1831
    %v1833 = vpop.f32.mrf.mxu0
    %v1834 = vadd.f32 %v340, %v1833
    %1835 = vdwg.mxu0
    %1836 = vmatpush.bf16.msra.mxu0 %v1336
    %1837 = vmatpush.bf16.msra.mxu0 %v1330
    %1838 = vmatpush.bf16.msra.mxu0 %v1324
    %1839 = vmatpush.bf16.msra.mxu0 %v1318
    %1840 = vmatpush.bf16.msra.mxu0 %v1312
    %1841 = vmatpush.bf16.msra.mxu0 %v1306
    %1842 = vmatpush.bf16.msra.mxu0 %v1300
    %1843 = vmatpush.bf16.msra.mxu0 %v1294
    %1844 = vmatmul.bf16.gmra.mxu0 %v371
    %v1845 = vpop.f32.mrf.mxu0
    %v1846 = vadd.f32 %v1832, %v1845
    %v1847 = vpop.f32.mrf.mxu0
    %v1848 = vadd.f32 %v1834, %v1847
    %1849 = vdwg.mxu0
    %1850 = vmatpush.bf16.msra.mxu0 %v1384
    %1851 = vmatpush.bf16.msra.mxu0 %v1378
    %1852 = vmatpush.bf16.msra.mxu0 %v1372
    %1853 = vmatpush.bf16.msra.mxu0 %v1366
    %1854 = vmatpush.bf16.msra.mxu0 %v1360
    %1855 = vmatpush.bf16.msra.mxu0 %v1354
    %1856 = vmatpush.bf16.msra.mxu0 %v1348
    %1857 = vmatpush.bf16.msra.mxu0 %v1342
    %1858 = vmatmul.bf16.gmra.mxu0 %v372
    %v1859 = vpop.f32.mrf.mxu0
    %v1860 = vadd.f32 %v1846, %v1859
    %v1861 = vpop.f32.mrf.mxu0
    %v1862 = vadd.f32 %v1848, %v1861
    %1863 = vdwg.mxu0
    %1864 = vmatpush.bf16.msra.mxu0 %v1432
    %1865 = vmatpush.bf16.msra.mxu0 %v1426
    %1866 = vmatpush.bf16.msra.mxu0 %v1420
    %1867 = vmatpush.bf16.msra.mxu0 %v1414
    %1868 = vmatpush.bf16.msra.mxu0 %v1408
    %1869 = vmatpush.bf16.msra.mxu0 %v1402
    %1870 = vmatpush.bf16.msra.mxu0 %v1396
    %1871 = vmatpush.bf16.msra.mxu0 %v1390
    %1872 = vmatmul.bf16.gmra.mxu0 %v373
    %v1873 = vpop.f32.mrf.mxu0
    %v1874 = vadd.f32 %v1860, %v1873
    %v1875 = vpop.f32.mrf.mxu0
    %v1876 = vadd.f32 %v1862, %v1875
    %1877 = vdwg.mxu0
    %1878 = vmatpush.bf16.msra.mxu0 %v1480
    %1879 = vmatpush.bf16.msra.mxu0 %v1474
    %1880 = vmatpush.bf16.msra.mxu0 %v1468
    %1881 = vmatpush.bf16.msra.mxu0 %v1462
    %1882 = vmatpush.bf16.msra.mxu0 %v1456
    %1883 = vmatpush.bf16.msra.mxu0 %v1450
    %1884 = vmatpush.bf16.msra.mxu0 %v1444
    %1885 = vmatpush.bf16.msra.mxu0 %v1438
    %1886 = vmatmul.bf16.gmra.mxu0 %v374
    %v1887 = vpop.f32.mrf.mxu0
    %v1888 = vadd.f32 %v1874, %v1887
    %v1889 = vpop.f32.mrf.mxu0
    %v1890 = vadd.f32 %v1876, %v1889
    %1891 = vdwg.mxu0
    %1892 = vmatpush.bf16.msra.mxu0 %v1528
    %1893 = vmatpush.bf16.msra.mxu0 %v1522
    %1894 = vmatpush.bf16.msra.mxu0 %v1516
    %1895 = vmatpush.bf16.msra.mxu0 %v1510
    %1896 = vmatpush.bf16.msra.mxu0 %v1504
    %1897 = vmatpush.bf16.msra.mxu0 %v1498
    %1898 = vmatpush.bf16.msra.mxu0 %v1492
    %1899 = vmatpush.bf16.msra.mxu0 %v1486
    %1900 = vmatmul.bf16.gmra.mxu0 %v375
    %v1901 = vpop.f32.mrf.mxu0
    %v1902 = vadd.f32 %v1888, %v1901
    %v1903 = vpop.f32.mrf.mxu0
    %v1904 = vadd.f32 %v1890, %v1903
    %1905 = vdwg.mxu0
    %1906 = vmatpush.bf16.msra.mxu0 %v1289
    %1907 = vmatpush.bf16.msra.mxu0 %v1283
    %1908 = vmatpush.bf16.msra.mxu0 %v1277
    %1909 = vmatpush.bf16.msra.mxu0 %v1271
    %1910 = vmatpush.bf16.msra.mxu0 %v1265
    %1911 = vmatpush.bf16.msra.mxu0 %v1259
    %1912 = vmatpush.bf16.msra.mxu0 %v1253
    %1913 = vmatpush.bf16.msra.mxu0 %v1247
    %1914 = vmatmul.bf16.gmra.mxu0 %v370
    %v1915 = vpop.f32.mrf.mxu0
    %v1916 = vadd.f32 %v341, %v1915
    %v1917 = vpop.f32.mrf.mxu0
    %v1918 = vadd.f32 %v341, %v1917
    %1919 = vdwg.mxu0
    %1920 = vmatpush.bf16.msra.mxu0 %v1337
    %1921 = vmatpush.bf16.msra.mxu0 %v1331
    %1922 = vmatpush.bf16.msra.mxu0 %v1325
    %1923 = vmatpush.bf16.msra.mxu0 %v1319
    %1924 = vmatpush.bf16.msra.mxu0 %v1313
    %1925 = vmatpush.bf16.msra.mxu0 %v1307
    %1926 = vmatpush.bf16.msra.mxu0 %v1301
    %1927 = vmatpush.bf16.msra.mxu0 %v1295
    %1928 = vmatmul.bf16.gmra.mxu0 %v371
    %v1929 = vpop.f32.mrf.mxu0
    %v1930 = vadd.f32 %v1916, %v1929
    %v1931 = vpop.f32.mrf.mxu0
    %v1932 = vadd.f32 %v1918, %v1931
    %1933 = vdwg.mxu0
    %1934 = vmatpush.bf16.msra.mxu0 %v1385
    %1935 = vmatpush.bf16.msra.mxu0 %v1379
    %1936 = vmatpush.bf16.msra.mxu0 %v1373
    %1937 = vmatpush.bf16.msra.mxu0 %v1367
    %1938 = vmatpush.bf16.msra.mxu0 %v1361
    %1939 = vmatpush.bf16.msra.mxu0 %v1355
    %1940 = vmatpush.bf16.msra.mxu0 %v1349
    %1941 = vmatpush.bf16.msra.mxu0 %v1343
    %1942 = vmatmul.bf16.gmra.mxu0 %v372
    %v1943 = vpop.f32.mrf.mxu0
    %v1944 = vadd.f32 %v1930, %v1943
    %v1945 = vpop.f32.mrf.mxu0
    %v1946 = vadd.f32 %v1932, %v1945
    %1947 = vdwg.mxu0
    %1948 = vmatpush.bf16.msra.mxu0 %v1433
    %1949 = vmatpush.bf16.msra.mxu0 %v1427
    %1950 = vmatpush.bf16.msra.mxu0 %v1421
    %1951 = vmatpush.bf16.msra.mxu0 %v1415
    %1952 = vmatpush.bf16.msra.mxu0 %v1409
    %1953 = vmatpush.bf16.msra.mxu0 %v1403
    %1954 = vmatpush.bf16.msra.mxu0 %v1397
    %1955 = vmatpush.bf16.msra.mxu0 %v1391
    %1956 = vmatmul.bf16.gmra.mxu0 %v373
    %v1957 = vpop.f32.mrf.mxu0
    %v1958 = vadd.f32 %v1944, %v1957
    %v1959 = vpop.f32.mrf.mxu0
    %v1960 = vadd.f32 %v1946, %v1959
    %1961 = vdwg.mxu0
    %1962 = vmatpush.bf16.msra.mxu0 %v1481
    %1963 = vmatpush.bf16.msra.mxu0 %v1475
    %1964 = vmatpush.bf16.msra.mxu0 %v1469
    %1965 = vmatpush.bf16.msra.mxu0 %v1463
    %1966 = vmatpush.bf16.msra.mxu0 %v1457
    %1967 = vmatpush.bf16.msra.mxu0 %v1451
    %1968 = vmatpush.bf16.msra.mxu0 %v1445
    %1969 = vmatpush.bf16.msra.mxu0 %v1439
    %1970 = vmatmul.bf16.gmra.mxu0 %v374
    %v1971 = vpop.f32.mrf.mxu0
    %v1972 = vadd.f32 %v1958, %v1971
    %v1973 = vpop.f32.mrf.mxu0
    %v1974 = vadd.f32 %v1960, %v1973
    %1975 = vdwg.mxu0
    %1976 = vmatpush.bf16.msra.mxu0 %v1529
    %1977 = vmatpush.bf16.msra.mxu0 %v1523
    %1978 = vmatpush.bf16.msra.mxu0 %v1517
    %1979 = vmatpush.bf16.msra.mxu0 %v1511
    %1980 = vmatpush.bf16.msra.mxu0 %v1505
    %1981 = vmatpush.bf16.msra.mxu0 %v1499
    %1982 = vmatpush.bf16.msra.mxu0 %v1493
    %1983 = vmatpush.bf16.msra.mxu0 %v1487
    %1984 = vmatmul.bf16.gmra.mxu0 %v375
    %v1985 = vpop.f32.mrf.mxu0
    %v1986 = vadd.f32 %v1972, %v1985
    %v1987 = vpop.f32.mrf.mxu0
    %v1988 = vadd.f32 %v1974, %v1987
    %1989 = vdwg.mxu0
    %1990 = vmatpush.bf16.msra.mxu0 %v1290
    %1991 = vmatpush.bf16.msra.mxu0 %v1284
    %1992 = vmatpush.bf16.msra.mxu0 %v1278
    %1993 = vmatpush.bf16.msra.mxu0 %v1272
    %1994 = vmatpush.bf16.msra.mxu0 %v1266
    %1995 = vmatpush.bf16.msra.mxu0 %v1260
    %1996 = vmatpush.bf16.msra.mxu0 %v1254
    %1997 = vmatpush.bf16.msra.mxu0 %v1248
    %1998 = vmatmul.bf16.gmra.mxu0 %v370
    %v1999 = vpop.f32.mrf.mxu0
    %v2000 = vadd.f32 %v342, %v1999
    %v2001 = vpop.f32.mrf.mxu0
    %v2002 = vadd.f32 %v342, %v2001
    %2003 = vdwg.mxu0
    %2004 = vmatpush.bf16.msra.mxu0 %v1338
    %2005 = vmatpush.bf16.msra.mxu0 %v1332
    %2006 = vmatpush.bf16.msra.mxu0 %v1326
    %2007 = vmatpush.bf16.msra.mxu0 %v1320
    %2008 = vmatpush.bf16.msra.mxu0 %v1314
    %2009 = vmatpush.bf16.msra.mxu0 %v1308
    %2010 = vmatpush.bf16.msra.mxu0 %v1302
    %2011 = vmatpush.bf16.msra.mxu0 %v1296
    %2012 = vmatmul.bf16.gmra.mxu0 %v371
    %v2013 = vpop.f32.mrf.mxu0
    %v2014 = vadd.f32 %v2000, %v2013
    %v2015 = vpop.f32.mrf.mxu0
    %v2016 = vadd.f32 %v2002, %v2015
    %2017 = vdwg.mxu0
    %2018 = vmatpush.bf16.msra.mxu0 %v1386
    %2019 = vmatpush.bf16.msra.mxu0 %v1380
    %2020 = vmatpush.bf16.msra.mxu0 %v1374
    %2021 = vmatpush.bf16.msra.mxu0 %v1368
    %2022 = vmatpush.bf16.msra.mxu0 %v1362
    %2023 = vmatpush.bf16.msra.mxu0 %v1356
    %2024 = vmatpush.bf16.msra.mxu0 %v1350
    %2025 = vmatpush.bf16.msra.mxu0 %v1344
    %2026 = vmatmul.bf16.gmra.mxu0 %v372
    %v2027 = vpop.f32.mrf.mxu0
    %v2028 = vadd.f32 %v2014, %v2027
    %v2029 = vpop.f32.mrf.mxu0
    %v2030 = vadd.f32 %v2016, %v2029
    %2031 = vdwg.mxu0
    %2032 = vmatpush.bf16.msra.mxu0 %v1434
    %2033 = vmatpush.bf16.msra.mxu0 %v1428
    %2034 = vmatpush.bf16.msra.mxu0 %v1422
    %2035 = vmatpush.bf16.msra.mxu0 %v1416
    %2036 = vmatpush.bf16.msra.mxu0 %v1410
    %2037 = vmatpush.bf16.msra.mxu0 %v1404
    %2038 = vmatpush.bf16.msra.mxu0 %v1398
    %2039 = vmatpush.bf16.msra.mxu0 %v1392
    %2040 = vmatmul.bf16.gmra.mxu0 %v373
    %v2041 = vpop.f32.mrf.mxu0
    %v2042 = vadd.f32 %v2028, %v2041
    %v2043 = vpop.f32.mrf.mxu0
    %v2044 = vadd.f32 %v2030, %v2043
    %2045 = vdwg.mxu0
    %2046 = vmatpush.bf16.msra.mxu0 %v1482
    %2047 = vmatpush.bf16.msra.mxu0 %v1476
    %2048 = vmatpush.bf16.msra.mxu0 %v1470
    %2049 = vmatpush.bf16.msra.mxu0 %v1464
    %2050 = vmatpush.bf16.msra.mxu0 %v1458
    %2051 = vmatpush.bf16.msra.mxu0 %v1452
    %2052 = vmatpush.bf16.msra.mxu0 %v1446
    %2053 = vmatpush.bf16.msra.mxu0 %v1440
    %2054 = vmatmul.bf16.gmra.mxu0 %v374
    %v2055 = vpop.f32.mrf.mxu0
    %v2056 = vadd.f32 %v2042, %v2055
    %v2057 = vpop.f32.mrf.mxu0
    %v2058 = vadd.f32 %v2044, %v2057
    %2059 = vdwg.mxu0
    %2060 = vmatpush.bf16.msra.mxu0 %v1530
    %2061 = vmatpush.bf16.msra.mxu0 %v1524
    %2062 = vmatpush.bf16.msra.mxu0 %v1518
    %2063 = vmatpush.bf16.msra.mxu0 %v1512
    %2064 = vmatpush.bf16.msra.mxu0 %v1506
    %2065 = vmatpush.bf16.msra.mxu0 %v1500
    %2066 = vmatpush.bf16.msra.mxu0 %v1494
    %2067 = vmatpush.bf16.msra.mxu0 %v1488
    %2068 = vmatmul.bf16.gmra.mxu0 %v375
    %v2069 = vpop.f32.mrf.mxu0
    %v2070 = vadd.f32 %v2056, %v2069
    %v2071 = vpop.f32.mrf.mxu0
    %v2072 = vadd.f32 %v2058, %v2071
    %2073 = vdwg.mxu0
    %2074 = vmatpush.bf16.msra.mxu0 %v1291
    %2075 = vmatpush.bf16.msra.mxu0 %v1285
    %2076 = vmatpush.bf16.msra.mxu0 %v1279
    %2077 = vmatpush.bf16.msra.mxu0 %v1273
    %2078 = vmatpush.bf16.msra.mxu0 %v1267
    %2079 = vmatpush.bf16.msra.mxu0 %v1261
    %2080 = vmatpush.bf16.msra.mxu0 %v1255
    %2081 = vmatpush.bf16.msra.mxu0 %v1249
    %2082 = vmatmul.bf16.gmra.mxu0 %v370
    %v2083 = vpop.f32.mrf.mxu0
    %v2084 = vadd.f32 %v343, %v2083
    %v2085 = vpop.f32.mrf.mxu0
    %v2086 = vadd.f32 %v343, %v2085
    %2087 = vdwg.mxu0
    %2088 = vmatpush.bf16.msra.mxu0 %v1339
    %2089 = vmatpush.bf16.msra.mxu0 %v1333
    %2090 = vmatpush.bf16.msra.mxu0 %v1327
    %2091 = vmatpush.bf16.msra.mxu0 %v1321
    %2092 = vmatpush.bf16.msra.mxu0 %v1315
    %2093 = vmatpush.bf16.msra.mxu0 %v1309
    %2094 = vmatpush.bf16.msra.mxu0 %v1303
    %2095 = vmatpush.bf16.msra.mxu0 %v1297
    %2096 = vmatmul.bf16.gmra.mxu0 %v371
    %v2097 = vpop.f32.mrf.mxu0
    %v2098 = vadd.f32 %v2084, %v2097
    %v2099 = vpop.f32.mrf.mxu0
    %v2100 = vadd.f32 %v2086, %v2099
    %2101 = vdwg.mxu0
    %2102 = vmatpush.bf16.msra.mxu0 %v1387
    %2103 = vmatpush.bf16.msra.mxu0 %v1381
    %2104 = vmatpush.bf16.msra.mxu0 %v1375
    %2105 = vmatpush.bf16.msra.mxu0 %v1369
    %2106 = vmatpush.bf16.msra.mxu0 %v1363
    %2107 = vmatpush.bf16.msra.mxu0 %v1357
    %2108 = vmatpush.bf16.msra.mxu0 %v1351
    %2109 = vmatpush.bf16.msra.mxu0 %v1345
    %2110 = vmatmul.bf16.gmra.mxu0 %v372
    %v2111 = vpop.f32.mrf.mxu0
    %v2112 = vadd.f32 %v2098, %v2111
    %v2113 = vpop.f32.mrf.mxu0
    %v2114 = vadd.f32 %v2100, %v2113
    %2115 = vdwg.mxu0
    %2116 = vmatpush.bf16.msra.mxu0 %v1435
    %2117 = vmatpush.bf16.msra.mxu0 %v1429
    %2118 = vmatpush.bf16.msra.mxu0 %v1423
    %2119 = vmatpush.bf16.msra.mxu0 %v1417
    %2120 = vmatpush.bf16.msra.mxu0 %v1411
    %2121 = vmatpush.bf16.msra.mxu0 %v1405
    %2122 = vmatpush.bf16.msra.mxu0 %v1399
    %2123 = vmatpush.bf16.msra.mxu0 %v1393
    %2124 = vmatmul.bf16.gmra.mxu0 %v373
    %v2125 = vpop.f32.mrf.mxu0
    %v2126 = vadd.f32 %v2112, %v2125
    %v2127 = vpop.f32.mrf.mxu0
    %v2128 = vadd.f32 %v2114, %v2127
    %2129 = vdwg.mxu0
    %2130 = vmatpush.bf16.msra.mxu0 %v1483
    %2131 = vmatpush.bf16.msra.mxu0 %v1477
    %2132 = vmatpush.bf16.msra.mxu0 %v1471
    %2133 = vmatpush.bf16.msra.mxu0 %v1465
    %2134 = vmatpush.bf16.msra.mxu0 %v1459
    %2135 = vmatpush.bf16.msra.mxu0 %v1453
    %2136 = vmatpush.bf16.msra.mxu0 %v1447
    %2137 = vmatpush.bf16.msra.mxu0 %v1441
    %2138 = vmatmul.bf16.gmra.mxu0 %v374
    %v2139 = vpop.f32.mrf.mxu0
    %v2140 = vadd.f32 %v2126, %v2139
    %v2141 = vpop.f32.mrf.mxu0
    %v2142 = vadd.f32 %v2128, %v2141
    %2143 = vdwg.mxu0
    %2144 = vmatpush.bf16.msra.mxu0 %v1531
    %2145 = vmatpush.bf16.msra.mxu0 %v1525
    %2146 = vmatpush.bf16.msra.mxu0 %v1519
    %2147 = vmatpush.bf16.msra.mxu0 %v1513
    %2148 = vmatpush.bf16.msra.mxu0 %v1507
    %2149 = vmatpush.bf16.msra.mxu0 %v1501
    %2150 = vmatpush.bf16.msra.mxu0 %v1495
    %2151 = vmatpush.bf16.msra.mxu0 %v1489
    %2152 = vmatmul.bf16.gmra.mxu0 %v375
    %v2153 = vpop.f32.mrf.mxu0
    %v2154 = vadd.f32 %v2140, %v2153
    %v2155 = vpop.f32.mrf.mxu0
    %v2156 = vadd.f32 %v2142, %v2155
    %2157 = vdwg.mxu0
    %2158 = vmatpush.bf16.msra.mxu0 %v1292
    %2159 = vmatpush.bf16.msra.mxu0 %v1286
    %2160 = vmatpush.bf16.msra.mxu0 %v1280
    %2161 = vmatpush.bf16.msra.mxu0 %v1274
    %2162 = vmatpush.bf16.msra.mxu0 %v1268
    %2163 = vmatpush.bf16.msra.mxu0 %v1262
    %2164 = vmatpush.bf16.msra.mxu0 %v1256
    %2165 = vmatpush.bf16.msra.mxu0 %v1250
    %2166 = vmatmul.bf16.gmra.mxu0 %v370
    %v2167 = vpop.f32.mrf.mxu0
    %v2168 = vadd.f32 %v344, %v2167
    %v2169 = vpop.f32.mrf.mxu0
    %v2170 = vadd.f32 %v344, %v2169
    %2171 = vdwg.mxu0
    %2172 = vmatpush.bf16.msra.mxu0 %v1340
    %2173 = vmatpush.bf16.msra.mxu0 %v1334
    %2174 = vmatpush.bf16.msra.mxu0 %v1328
    %2175 = vmatpush.bf16.msra.mxu0 %v1322
    %2176 = vmatpush.bf16.msra.mxu0 %v1316
    %2177 = vmatpush.bf16.msra.mxu0 %v1310
    %2178 = vmatpush.bf16.msra.mxu0 %v1304
    %2179 = vmatpush.bf16.msra.mxu0 %v1298
    %2180 = vmatmul.bf16.gmra.mxu0 %v371
    %v2181 = vpop.f32.mrf.mxu0
    %v2182 = vadd.f32 %v2168, %v2181
    %v2183 = vpop.f32.mrf.mxu0
    %v2184 = vadd.f32 %v2170, %v2183
    %2185 = vdwg.mxu0
    %2186 = vmatpush.bf16.msra.mxu0 %v1388
    %2187 = vmatpush.bf16.msra.mxu0 %v1382
    %2188 = vmatpush.bf16.msra.mxu0 %v1376
    %2189 = vmatpush.bf16.msra.mxu0 %v1370
    %2190 = vmatpush.bf16.msra.mxu0 %v1364
    %2191 = vmatpush.bf16.msra.mxu0 %v1358
    %2192 = vmatpush.bf16.msra.mxu0 %v1352
    %2193 = vmatpush.bf16.msra.mxu0 %v1346
    %2194 = vmatmul.bf16.gmra.mxu0 %v372
    %v2195 = vpop.f32.mrf.mxu0
    %v2196 = vadd.f32 %v2182, %v2195
    %v2197 = vpop.f32.mrf.mxu0
    %v2198 = vadd.f32 %v2184, %v2197
    %2199 = vdwg.mxu0
    %2200 = vmatpush.bf16.msra.mxu0 %v1436
    %2201 = vmatpush.bf16.msra.mxu0 %v1430
    %2202 = vmatpush.bf16.msra.mxu0 %v1424
    %2203 = vmatpush.bf16.msra.mxu0 %v1418
    %2204 = vmatpush.bf16.msra.mxu0 %v1412
    %2205 = vmatpush.bf16.msra.mxu0 %v1406
    %2206 = vmatpush.bf16.msra.mxu0 %v1400
    %2207 = vmatpush.bf16.msra.mxu0 %v1394
    %2208 = vmatmul.bf16.gmra.mxu0 %v373
    %v2209 = vpop.f32.mrf.mxu0
    %v2210 = vadd.f32 %v2196, %v2209
    %v2211 = vpop.f32.mrf.mxu0
    %v2212 = vadd.f32 %v2198, %v2211
    %2213 = vdwg.mxu0
    %2214 = vmatpush.bf16.msra.mxu0 %v1484
    %2215 = vmatpush.bf16.msra.mxu0 %v1478
    %2216 = vmatpush.bf16.msra.mxu0 %v1472
    %2217 = vmatpush.bf16.msra.mxu0 %v1466
    %2218 = vmatpush.bf16.msra.mxu0 %v1460
    %2219 = vmatpush.bf16.msra.mxu0 %v1454
    %2220 = vmatpush.bf16.msra.mxu0 %v1448
    %2221 = vmatpush.bf16.msra.mxu0 %v1442
    %2222 = vmatmul.bf16.gmra.mxu0 %v374
    %v2223 = vpop.f32.mrf.mxu0
    %v2224 = vadd.f32 %v2210, %v2223
    %v2225 = vpop.f32.mrf.mxu0
    %v2226 = vadd.f32 %v2212, %v2225
    %2227 = vdwg.mxu0
    %2228 = vmatpush.bf16.msra.mxu0 %v1532
    %2229 = vmatpush.bf16.msra.mxu0 %v1526
    %2230 = vmatpush.bf16.msra.mxu0 %v1520
    %2231 = vmatpush.bf16.msra.mxu0 %v1514
    %2232 = vmatpush.bf16.msra.mxu0 %v1508
    %2233 = vmatpush.bf16.msra.mxu0 %v1502
    %2234 = vmatpush.bf16.msra.mxu0 %v1496
    %2235 = vmatpush.bf16.msra.mxu0 %v1490
    %2236 = vmatmul.bf16.gmra.mxu0 %v375
    %v2237 = vpop.f32.mrf.mxu0
    %v2238 = vadd.f32 %v2224, %v2237
    %v2239 = vpop.f32.mrf.mxu0
    %v2240 = vadd.f32 %v2226, %v2239
    %2241 = vdwg.mxu0
    %2242 = vmatpush.bf16.msra.mxu0 %v1293
    %2243 = vmatpush.bf16.msra.mxu0 %v1287
    %2244 = vmatpush.bf16.msra.mxu0 %v1281
    %2245 = vmatpush.bf16.msra.mxu0 %v1275
    %2246 = vmatpush.bf16.msra.mxu0 %v1269
    %2247 = vmatpush.bf16.msra.mxu0 %v1263
    %2248 = vmatpush.bf16.msra.mxu0 %v1257
    %2249 = vmatpush.bf16.msra.mxu0 %v1251
    %2250 = vmatmul.bf16.gmra.mxu0 %v370
    %v2251 = vpop.f32.mrf.mxu0
    %v2252 = vadd.f32 %v345, %v2251
    %v2253 = vpop.f32.mrf.mxu0
    %v2254 = vadd.f32 %v345, %v2253
    %2255 = vdwg.mxu0
    %2256 = vmatpush.bf16.msra.mxu0 %v1341
    %2257 = vmatpush.bf16.msra.mxu0 %v1335
    %2258 = vmatpush.bf16.msra.mxu0 %v1329
    %2259 = vmatpush.bf16.msra.mxu0 %v1323
    %2260 = vmatpush.bf16.msra.mxu0 %v1317
    %2261 = vmatpush.bf16.msra.mxu0 %v1311
    %2262 = vmatpush.bf16.msra.mxu0 %v1305
    %2263 = vmatpush.bf16.msra.mxu0 %v1299
    %2264 = vmatmul.bf16.gmra.mxu0 %v371
    %v2265 = vpop.f32.mrf.mxu0
    %v2266 = vadd.f32 %v2252, %v2265
    %v2267 = vpop.f32.mrf.mxu0
    %v2268 = vadd.f32 %v2254, %v2267
    %2269 = vdwg.mxu0
    %2270 = vmatpush.bf16.msra.mxu0 %v1389
    %2271 = vmatpush.bf16.msra.mxu0 %v1383
    %2272 = vmatpush.bf16.msra.mxu0 %v1377
    %2273 = vmatpush.bf16.msra.mxu0 %v1371
    %2274 = vmatpush.bf16.msra.mxu0 %v1365
    %2275 = vmatpush.bf16.msra.mxu0 %v1359
    %2276 = vmatpush.bf16.msra.mxu0 %v1353
    %2277 = vmatpush.bf16.msra.mxu0 %v1347
    %2278 = vmatmul.bf16.gmra.mxu0 %v372
    %v2279 = vpop.f32.mrf.mxu0
    %v2280 = vadd.f32 %v2266, %v2279
    %v2281 = vpop.f32.mrf.mxu0
    %v2282 = vadd.f32 %v2268, %v2281
    %2283 = vdwg.mxu0
    %2284 = vmatpush.bf16.msra.mxu0 %v1437
    %2285 = vmatpush.bf16.msra.mxu0 %v1431
    %2286 = vmatpush.bf16.msra.mxu0 %v1425
    %2287 = vmatpush.bf16.msra.mxu0 %v1419
    %2288 = vmatpush.bf16.msra.mxu0 %v1413
    %2289 = vmatpush.bf16.msra.mxu0 %v1407
    %2290 = vmatpush.bf16.msra.mxu0 %v1401
    %2291 = vmatpush.bf16.msra.mxu0 %v1395
    %2292 = vmatmul.bf16.gmra.mxu0 %v373
    %v2293 = vpop.f32.mrf.mxu0
    %v2294 = vadd.f32 %v2280, %v2293
    %v2295 = vpop.f32.mrf.mxu0
    %v2296 = vadd.f32 %v2282, %v2295
    %2297 = vdwg.mxu0
    %2298 = vmatpush.bf16.msra.mxu0 %v1485
    %2299 = vmatpush.bf16.msra.mxu0 %v1479
    %2300 = vmatpush.bf16.msra.mxu0 %v1473
    %2301 = vmatpush.bf16.msra.mxu0 %v1467
    %2302 = vmatpush.bf16.msra.mxu0 %v1461
    %2303 = vmatpush.bf16.msra.mxu0 %v1455
    %2304 = vmatpush.bf16.msra.mxu0 %v1449
    %2305 = vmatpush.bf16.msra.mxu0 %v1443
    %2306 = vmatmul.bf16.gmra.mxu0 %v374
    %v2307 = vpop.f32.mrf.mxu0
    %v2308 = vadd.f32 %v2294, %v2307
    %v2309 = vpop.f32.mrf.mxu0
    %v2310 = vadd.f32 %v2296, %v2309
    %2311 = vdwg.mxu0
    %2312 = vmatpush.bf16.msra.mxu0 %v1533
    %2313 = vmatpush.bf16.msra.mxu0 %v1527
    %2314 = vmatpush.bf16.msra.mxu0 %v1521
    %2315 = vmatpush.bf16.msra.mxu0 %v1515
    %2316 = vmatpush.bf16.msra.mxu0 %v1509
    %2317 = vmatpush.bf16.msra.mxu0 %v1503
    %2318 = vmatpush.bf16.msra.mxu0 %v1497
    %2319 = vmatpush.bf16.msra.mxu0 %v1491
    %2320 = vmatmul.bf16.gmra.mxu0 %v375
    %v2321 = vpop.f32.mrf.mxu0
    %v2322 = vadd.f32 %v2308, %v2321
    %v2323 = vpop.f32.mrf.mxu0
    %v2324 = vadd.f32 %v2310, %v2323
    %2325 = vdwg.mxu0
    %vm2326 = vcmp.ge.f32.partialorder %v1902, 0.0
    %vm2327 = vcmp.ge.f32.partialorder %v1986, 0.0
    %vm2328 = vcmp.ge.f32.partialorder %v2070, 0.0
    %vm2329 = vcmp.ge.f32.partialorder %v2154, 0.0
    %vm2330 = vcmp.ge.f32.partialorder %v2238, 0.0
    %vm2331 = vcmp.ge.f32.partialorder %v2322, 0.0
    %vm2332 = vcmp.ge.f32.partialorder %v1904, 0.0
    %vm2333 = vcmp.ge.f32.partialorder %v1988, 0.0
    %vm2334 = vcmp.ge.f32.partialorder %v2072, 0.0
    %vm2335 = vcmp.ge.f32.partialorder %v2156, 0.0
    %vm2336 = vcmp.ge.f32.partialorder %v2240, 0.0
    %vm2337 = vcmp.ge.f32.partialorder %v2324, 0.0
    %v2338 = vmul.f32 %v1902, 0.2
    %v2339 = vmul.f32 %v1986, 0.2
    %v2340 = vmul.f32 %v2070, 0.2
    %v2341 = vmul.f32 %v2154, 0.2
    %v2342 = vmul.f32 %v2238, 0.2
    %v2343 = vmul.f32 %v2322, 0.2
    %v2344 = vmul.f32 %v1904, 0.2
    %v2345 = vmul.f32 %v1988, 0.2
    %v2346 = vmul.f32 %v2072, 0.2
    %v2347 = vmul.f32 %v2156, 0.2
    %v2348 = vmul.f32 %v2240, 0.2
    %v2349 = vmul.f32 %v2324, 0.2
    %v2350 = vsel %vm2326, %v1902, %v2338
    %v2351 = vsel %vm2327, %v1986, %v2339
    %v2352 = vsel %vm2328, %v2070, %v2340
    %v2353 = vsel %vm2329, %v2154, %v2341
    %v2354 = vsel %vm2330, %v2238, %v2342
    %v2355 = vsel %vm2331, %v2322, %v2343
    %v2356 = vsel %vm2332, %v1904, %v2344
    %v2357 = vsel %vm2333, %v1988, %v2345
    %v2358 = vsel %vm2334, %v2072, %v2346
    %v2359 = vsel %vm2335, %v2156, %v2347
    %v2360 = vsel %vm2336, %v2240, %v2348
    %v2361 = vsel %vm2337, %v2324, %v2349
    %v2362 = vpack.c.bf16 %v2351, %v2350
    %v2363 = vpack.c.bf16 %v2353, %v2352
    %v2364 = vpack.c.bf16 %v2355, %v2354
    %v2365 = vpack.c.bf16 %v2357, %v2356
    %v2366 = vpack.c.bf16 %v2359, %v2358
    %v2367 = vpack.c.bf16 %v2361, %v2360
    %2368 = vst [vmem:[%s3] sm:$0xff] %v2362
    %2369 = vst [vmem:[%s3 + $0x8] sm:$0xff] %v2363
    %2370 = vst [vmem:[%s3 + $0x10] sm:$0xff] %v2364
    %2371 = vst [vmem:[%s3 + $0x18] sm:$0xff] %v2365
    %2372 = vst [vmem:[%s3 + $0x20] sm:$0xff] %v2366
    %2373 = vst [vmem:[%s3 + $0x28] sm:$0xff] %v2367
    // Predicated region
    $region22: #{roi_box_head_forward.10} parent=1 // pred_check
      _
    $region23: #{roi_box_head_forward.10} parent=1 // pred_check_branch
      %2375 = sbr.rel (0) target = $region25
    $region24: #{roi_box_head_forward.10} parent=1 // pred_region
      _
    $region25: #{roi_box_head_forward.10} parent=1 // pred_fallthru
      _
    // Predicated region
    $region26: #{roi_box_head_forward.10} parent=1 // pred_check
      _
    $region27: #{roi_box_head_forward.10} parent=1 // pred_check_branch
      %2377 = sbr.rel (0) target = $region29
    $region28: #{roi_box_head_forward.10} parent=1 // pred_region
      _
    $region29: #{roi_box_head_forward.10} parent=1 // pred_fallthru
      _
    %2378 = vsyncpa [#allocation3], 1
    %2379 = vsyncpa [#allocation5], 1

</llo_original>
